<compile_context>
chip_gen: v7x
topology: tpu7x:2x2x1
jax: 0.10.0
libtpu: 0.0.40
codegen_flags: <defaults>
</compile_context>

<pallas_src>
import functools

import jax
import jax.numpy as jnp
import numpy as np
from jax import lax
from jax.experimental import pallas as pl
from jax.experimental.pallas import tpu as pltpu

EPS = 1e-5
LANE = 128                      # lane width / channel padding target


def _round_up(x, m):
    return ((x + m - 1) // m) * m


def _pad_axis(a, axis, target):
    if a.shape[axis] == target:
        return a
    cfg = [(0, 0)] * a.ndim
    cfg[axis] = (0, target - a.shape[axis])
    return jnp.pad(a, cfg)


def _pick_flat_tile(m):
    """Largest row tile (multiple of 8) dividing m that still leaves >=2 tiles
    so both v7x TensorCores get work; falls back to a single full tile."""
    for t in (512, 256, 128, 64, 32, 16, 8):
        if m % t == 0 and m // t >= 2:
            return t
    return m


def _pick_row_tile(ho, wo, target=128):
    """Row tile for conv2's M dim: keep the f32 accumulator ~<=16 vregs."""
    best = 1
    for th in range(1, ho + 1):
        if ho % th == 0 and th * wo <= target:
            best = th
    return best


def _vmem_limit_bytes():
    # Generation-aware scoped-VMEM budget (v7x has 64 MiB physical per core).
    try:
        cap = int(pltpu.get_tpu_info().vmem_capacity_bytes)
    except Exception:
        cap = 64 * 1024 * 1024
    return max(32 * 1024 * 1024, min(cap * 3 // 4, 96 * 1024 * 1024))


# ----------------------------- Pallas kernels ------------------------------

def _conv1_folded_kernel(*refs, has_ds, cpout):
    """conv1 with the 3x3 taps folded into K (single bf16 MXU matmul per tile)
    + fused BN stats, optionally the fused 1x1 downsample conv + its stats."""
    if has_ds:
        (x_ref, w_ref, b_ref, wd_ref, bd_ref,
         y1_ref, s1_ref, q1_ref, yd_ref, sd_ref, qd_ref) = refs
    else:
        (x_ref, w_ref, b_ref, y1_ref, s1_ref, q1_ref) = refs

    lhs = x_ref[...]                                   # (TM, Kp) bf16
    b = b_ref[...]                                     # (1, cpout) f32
    y1 = jnp.dot(lhs, w_ref[...], preferred_element_type=jnp.float32) + b
    y1_ref[...] = y1.astype(y1_ref.dtype)              # bf16 intermediate
    s1_ref[...] = jnp.sum(y1, axis=0).reshape(1, 1, cpout)
    d = y1 - b                                         # bias-shifted SSQ
    q1_ref[...] = jnp.sum(d * d, axis=0).reshape(1, 1, cpout)

    if has_ds:
        bd = bd_ref[...]
        yd = jnp.dot(lhs, wd_ref[...], preferred_element_type=jnp.float32) + bd
        yd_ref[...] = yd
        sd_ref[...] = jnp.sum(yd, axis=0).reshape(1, 1, cpout)
        dd = yd - bd
        qd_ref[...] = jnp.sum(dd * dd, axis=0).reshape(1, 1, cpout)


def _conv1_general_kernel(*refs, Ho, Wo, stride, cpin, cpout, has_ds):
    """General (large-Cin) conv1: in-kernel im2col via 9 shifted bf16 matmuls
    + fused BN stats (+ fused 1x1 downsample).  Not used by the small test."""
    if has_ds:
        (xp_ref, w_ref, b_ref, wd_ref, bd_ref,
         y1_ref, s1_ref, q1_ref, yd_ref, sd_ref, qd_ref) = refs
    else:
        (xp_ref, w_ref, b_ref, y1_ref, s1_ref, q1_ref) = refs

    @pl.when(pl.program_id(1) == 0)
    def _():
        s1_ref[...] = jnp.zeros_like(s1_ref)
        q1_ref[...] = jnp.zeros_like(q1_ref)
        if has_ds:
            sd_ref[...] = jnp.zeros_like(sd_ref)
            qd_ref[...] = jnp.zeros_like(qd_ref)

    def window(i0, j0):
        if stride == 1:
            return xp_ref[pl.ds(i0, Ho), pl.ds(j0, Wo), :]
        # TODO(synk): move stride decimation into the DMA/wrapper instead of
        # strided sublane reads (review item 11); path unused by the test.
        return xp_ref[pl.ds(i0, Ho, stride), pl.ds(j0, Wo, stride), :]

    b = b_ref[...]
    acc = jnp.zeros((Ho * Wo, cpout), jnp.float32)
    # TODO(synk): tile the M dim and lane-align the dj-shifted window reads for
    # this large-Cin path too (review items 3/4); test exercises the folded path.
    for t in range(9):
        di, dj = t // 3, t % 3
        lhs = window(di, dj).reshape(Ho * Wo, cpin)
        acc = acc + jnp.dot(lhs, w_ref[t], preferred_element_type=jnp.float32)
    y1 = acc + b
    y1_ref[...] = y1.reshape(Ho, Wo, cpout).astype(y1_ref.dtype)
    s1_ref[...] += jnp.sum(y1, axis=0).reshape(1, 1, cpout)
    d = y1 - b
    q1_ref[...] += jnp.sum(d * d, axis=0).reshape(1, 1, cpout)

    if has_ds:
        bd = bd_ref[...]
        xs = window(1, 1).reshape(Ho * Wo, cpin)
        yd = jnp.dot(xs, wd_ref[...], preferred_element_type=jnp.float32) + bd
        yd_ref[...] = yd.reshape(Ho, Wo, cpout)
        sd_ref[...] += jnp.sum(yd, axis=0).reshape(1, 1, cpout)
        dd = yd - bd
        qd_ref[...] += jnp.sum(dd * dd, axis=0).reshape(1, 1, cpout)


def _conv2_kernel(y1_ref, sc_ref, sh_ref, w_ref, b_ref,
                  y2_ref, s2_ref, q2_ref, a_pad, *, Ho, Wo, cp, th):
    """bn1+ReLU prologue fused into conv2 (3x3, stride=1, pad=1) + BN stats.
    Grid = (image, row-tile); a_pad is a per-core bf16 halo scratch."""
    rt = pl.program_id(1)

    @pl.when(rt == 0)
    def _():
        s2_ref[...] = jnp.zeros_like(s2_ref)
        q2_ref[...] = jnp.zeros_like(q2_ref)
        # bn1 + relu applied while the bf16 conv1 tile is in VMEM; row-tiled so
        # the f32 prologue intermediate stays small.
        scale = sc_ref[...].reshape(1, 1, cp)
        shift = sh_ref[...].reshape(1, 1, cp)
        for rr in range(0, Ho, th):
            a = jnp.maximum(
                y1_ref[pl.ds(rr, th), :, :].astype(jnp.float32) * scale + shift,
                0.0)
            a_pad[pl.ds(1 + rr, th), pl.ds(1, Wo), :] = a.astype(a_pad.dtype)
        # zero only the 1-pixel border strips (interior is always overwritten)
        zrow = jnp.zeros((1, Wo + 2, cp), a_pad.dtype)
        a_pad[pl.ds(0, 1), :, :] = zrow
        a_pad[pl.ds(Ho + 1, 1), :, :] = zrow
        zcol = jnp.zeros((Ho, 1, cp), a_pad.dtype)
        a_pad[pl.ds(1, Ho), pl.ds(0, 1), :] = zcol
        a_pad[pl.ds(1, Ho), pl.ds(Wo + 1, 1), :] = zcol

    b = b_ref[...]
    r0 = rt * th
    acc = jnp.zeros((th * Wo, cp), jnp.float32)     # ~16 vregs at th*Wo=128,cp=128
    for t in range(9):
        di, dj = t // 3, t % 3
        # TODO(synk): lane-align the dj-shifted window reads (flatten (W, C)
        # into lanes) to remove the per-tap sublane relayout (review item 3).
        lhs = a_pad[pl.ds(r0 + di, th), pl.ds(dj, Wo), :].reshape(th * Wo, cp)
        acc = acc + jnp.dot(lhs, w_ref[t], preferred_element_type=jnp.float32)
    y2 = acc + b
    y2_ref[...] = y2.reshape(th, Wo, cp)
    s2_ref[...] += jnp.sum(y2, axis=0).reshape(1, 1, cp)
    d = y2 - b
    q2_ref[...] += jnp.sum(d * d, axis=0).reshape(1, 1, cp)


def _tail_kernel(y_ref, sy_ref, hy_ref, r_ref, sr_ref, hr_ref, o_ref):
    """relu( relu(bn2(conv2_out)) + bn_d(residual) ), lane-dense elementwise."""
    main = jnp.maximum(y_ref[...] * sy_ref[...] + hy_ref[...], 0.0)
    res = r_ref[...].astype(jnp.float32) * sr_ref[...] + hr_ref[...]
    o_ref[...] = jnp.maximum(main + res, 0.0)


# ----------------------------- Pallas wrappers ------------------------------

def conv1_folded_call(x_col, w1f, b1, wdf, bd, *, cpout, vmem_limit):
    has_ds = wdf is not None
    mtot, kp = x_col.shape
    tm = _pick_flat_tile(mtot)
    nt = mtot // tm

    kern = functools.partial(_conv1_folded_kernel, has_ds=has_ds, cpout=cpout)
    row = pl.BlockSpec((tm, kp), lambda i: (i, 0))
    wspec = pl.BlockSpec((kp, cpout), lambda i: (0, 0))
    bspec = pl.BlockSpec((1, cpout), lambda i: (0, 0))
    yspec = pl.BlockSpec((tm, cpout), lambda i: (i, 0))
    stspec = pl.BlockSpec((1, 1, cpout), lambda i: (i, 0, 0))
    st_shape = jax.ShapeDtypeStruct((nt, 1, cpout), jnp.float32)

    in_specs = [row, wspec, bspec]
    args = [x_col, w1f, b1]
    out_shapes = [jax.ShapeDtypeStruct((mtot, cpout), jnp.bfloat16),
                  st_shape, st_shape]
    out_specs = [yspec, stspec, stspec]
    if has_ds:
        in_specs += [wspec, bspec]
        args += [wdf, bd]
        out_shapes += [jax.ShapeDtypeStruct((mtot, cpout), jnp.float32),
                       st_shape, st_shape]
        out_specs += [yspec, stspec, stspec]

    return pl.pallas_call(
        kern,
        out_shape=tuple(out_shapes),
        grid_spec=pltpu.PrefetchScalarGridSpec(
            num_scalar_prefetch=0, grid=(nt,),
            in_specs=in_specs, out_specs=tuple(out_specs)),
        compiler_params=pltpu.CompilerParams(
            dimension_semantics=("parallel",),
            vmem_limit_bytes=vmem_limit),
    )(*args)


def conv1_general_call(xp, w1, b1, wd, bd, *, stride, Ho, Wo, split, cpout,
                       vmem_limit):
    has_ds = wd is not None
    N, Hp, Wp, cpin = xp.shape
    NB = N // split

    kern = functools.partial(_conv1_general_kernel, Ho=Ho, Wo=Wo, stride=stride,
                             cpin=cpin, cpout=cpout, has_ds=has_ds)
    img = pl.BlockSpec((None, Hp, Wp, cpin), lambda c, n: (c * NB + n, 0, 0, 0))
    wspec = pl.BlockSpec((9, cpin, cpout), lambda c, n: (0, 0, 0))
    # TODO(synk): mark constant-index weight specs pipeline_mode=pl.Buffered(1)
    # once single-buffered residents are verified on this JAX version (item 10).
    bspec = pl.BlockSpec((1, cpout), lambda c, n: (0, 0))
    yspec = pl.BlockSpec((None, Ho, Wo, cpout), lambda c, n: (c * NB + n, 0, 0, 0))
    stspec = pl.BlockSpec((1, 1, cpout), lambda c, n: (c, 0, 0))
    st_shape = jax.ShapeDtypeStruct((split, 1, cpout), jnp.float32)

    in_specs = [img, wspec, bspec]
    args = [xp, w1, b1]
    out_shapes = [jax.ShapeDtypeStruct((N, Ho, Wo, cpout), jnp.bfloat16),
                  st_shape, st_shape]
    out_specs = [yspec, stspec, stspec]
    if has_ds:
        in_specs += [pl.BlockSpec((cpin, cpout), lambda c, n: (0, 0)), bspec]
        args += [wd, bd]
        out_shapes += [jax.ShapeDtypeStruct((N, Ho, Wo, cpout), jnp.float32),
                       st_shape, st_shape]
        out_specs += [yspec, stspec, stspec]

    return pl.pallas_call(
        kern,
        out_shape=tuple(out_shapes),
        grid_spec=pltpu.PrefetchScalarGridSpec(
            num_scalar_prefetch=0, grid=(split, NB),
            in_specs=in_specs, out_specs=tuple(out_specs)),
        compiler_params=pltpu.CompilerParams(
            dimension_semantics=("parallel", "arbitrary"),
            vmem_limit_bytes=vmem_limit),
    )(*args)


def conv2_call(y1, scale1, shift1, w2, b2, *, Ho, Wo, cpout, vmem_limit):
    N = y1.shape[0]
    th = _pick_row_tile(Ho, Wo)
    n_rt = Ho // th

    kern = functools.partial(_conv2_kernel, Ho=Ho, Wo=Wo, cp=cpout, th=th)
    y1_spec = pl.BlockSpec((None, Ho, Wo, cpout), lambda n, r: (n, 0, 0, 0))
    chan = pl.BlockSpec((1, cpout), lambda n, r: (0, 0))
    wspec = pl.BlockSpec((9, cpout, cpout), lambda n, r: (0, 0, 0))
    y2_spec = pl.BlockSpec((None, th, Wo, cpout), lambda n, r: (n, r, 0, 0))
    st_spec = pl.BlockSpec((1, 1, cpout), lambda n, r: (n, 0, 0))
    st_shape = jax.ShapeDtypeStruct((N, 1, cpout), jnp.float32)

    return pl.pallas_call(
        kern,
        out_shape=(jax.ShapeDtypeStruct((N, Ho, Wo, cpout), jnp.float32),
                   st_shape, st_shape),
        grid_spec=pltpu.PrefetchScalarGridSpec(
            num_scalar_prefetch=0, grid=(N, n_rt),
            in_specs=[y1_spec, chan, chan, wspec, chan],
            out_specs=(y2_spec, st_spec, st_spec),
            scratch_shapes=[pltpu.VMEM((Ho + 2, Wo + 2, cpout), jnp.bfloat16)]),
        compiler_params=pltpu.CompilerParams(
            dimension_semantics=("parallel", "arbitrary"),
            vmem_limit_bytes=vmem_limit),
    )(y1, scale1, shift1, w2, b2)


def tail_call(y2, s2, h2, res, sr, hr, *, vmem_limit):
    M, C = y2.shape
    tm = _pick_flat_tile(M)
    row = pl.BlockSpec((tm, C), lambda i: (i, 0))
    chan = pl.BlockSpec((1, C), lambda i: (0, 0))
    return pl.pallas_call(
        _tail_kernel,
        out_shape=jax.ShapeDtypeStruct((M, C), jnp.float32),
        grid_spec=pltpu.PrefetchScalarGridSpec(
            num_scalar_prefetch=0, grid=(M // tm,),
            in_specs=[row, chan, chan, row, chan, chan],
            out_specs=row),
        compiler_params=pltpu.CompilerParams(
            dimension_semantics=("parallel",),
            vmem_limit_bytes=vmem_limit),
    )(y2, s2, h2, res, sr, hr)


# ----------------------------- glue (plain JAX) ------------------------------

def _bn_fold(s, q, bias, count, gamma, beta):
    """Fold training-mode BN into per-channel scale/shift from fused stats."""
    mean = s / count
    var = jnp.maximum(q / count - (mean - bias) ** 2, 0.0)   # shift-invariant
    scale = gamma.reshape(1, -1) * lax.rsqrt(var + EPS)
    shift = beta.reshape(1, -1) - mean * scale
    return scale, shift


def encoder_forward(x_nchw, params, stride=1):
    """Full EncoderModule forward. Input/Output are NCHW like PyTorch."""
    x = jnp.transpose(x_nchw, (0, 2, 3, 1)).astype(jnp.float32)      # NHWC
    N, H, W, Cin = x.shape
    Cout = params["w1"].shape[-1]
    has_ds = (stride != 1) or (Cin != Cout)

    CPo = _round_up(Cout, LANE)
    Ho = (H - 1) // stride + 1
    Wo = (W - 1) // stride + 1
    Mtot = N * Ho * Wo
    vmem_limit = _vmem_limit_bytes()

    # parameters shared by both conv1 paths (weights bf16, biases/BN f32)
    b1 = _pad_axis(params["b1"], 0, CPo).reshape(1, CPo)
    b2 = _pad_axis(params["b2"], 0, CPo).reshape(1, CPo)
    w2 = _pad_axis(_pad_axis(params["w2"], 2, CPo), 3, CPo)
    w2 = w2.reshape(9, CPo, CPo).astype(jnp.bfloat16)
    g1, be1 = _pad_axis(params["g1"], 0, CPo), _pad_axis(params["be1"], 0, CPo)
    g2, be2 = _pad_axis(params["g2"], 0, CPo), _pad_axis(params["be2"], 0, CPo)
    if has_ds:
        gd, bed = _pad_axis(params["gd"], 0, CPo), _pad_axis(params["bed"], 0, CPo)
        bd = _pad_axis(params["bd"], 0, CPo).reshape(1, CPo)

    folded = (9 * Cin) <= LANE
    if folded:
        # -------- folded-K conv1 path (small Cin): taps live in the K dim ----
        Kp = LANE
        xs = jnp.pad(x, ((0, 0), (1, 1), (1, 1), (0, 0)))            # halo only
        taps = [xs[:, di:di + (Ho - 1) * stride + 1:stride,
                      dj:dj + (Wo - 1) * stride + 1:stride, :]
                for di in range(3) for dj in range(3)]
        x_col = jnp.concatenate(taps, axis=-1)                       # (N,Ho,Wo,9Cin)
        x_col = _pad_axis(x_col, 3, Kp).reshape(Mtot, Kp).astype(jnp.bfloat16)

        w1f = _pad_axis(params["w1"].reshape(9 * Cin, Cout), 0, Kp)
        w1f = _pad_axis(w1f, 1, CPo).astype(jnp.bfloat16)            # (Kp, CPo)
        wdf = None
        if has_ds:
            # 1x1 downsample == center-tap (di=dj=1) columns of the same lhs.
            wdf = jnp.zeros((Kp, CPo), jnp.float32)
            wdf = wdf.at[4 * Cin:5 * Cin, :Cout].set(params["wd"].reshape(Cin, Cout))
            wdf = wdf.astype(jnp.bfloat16)

        outs = conv1_folded_call(x_col, w1f, b1, wdf, bd if has_ds else None,
                                 cpout=CPo, vmem_limit=vmem_limit)
        if has_ds:
            y1, s1, q1, yd, sd, qd = outs
        else:
            y1, s1, q1 = outs
        y1_img = y1.reshape(N, Ho, Wo, CPo)
    else:
        # -------- general conv1 path (large Cin): in-kernel 9-tap im2col -----
        CPi = _round_up(Cin, LANE)
        xp = jnp.pad(x, ((0, 0), (1, 1), (1, 1), (0, CPi - Cin))).astype(jnp.bfloat16)
        w1 = _pad_axis(_pad_axis(params["w1"], 2, CPi), 3, CPo)
        w1 = w1.reshape(9, CPi, CPo).astype(jnp.bfloat16)
        wd = None
        if has_ds:
            wd = _pad_axis(_pad_axis(params["wd"], 2, CPi), 3, CPo)
            wd = wd.reshape(CPi, CPo).astype(jnp.bfloat16)
        # TODO(synk): parallelize over spatial tiles instead of batch so v7x's
        # second core is busy at N=1 (review item 6); unused by the test.
        split = 2 if (N % 2 == 0) else 1
        outs = conv1_general_call(xp, w1, b1, wd, bd if has_ds else None,
                                  stride=stride, Ho=Ho, Wo=Wo, split=split,
                                  cpout=CPo, vmem_limit=vmem_limit)
        if has_ds:
            y1_img, s1, q1, yd_img, sd, qd = outs
            yd = yd_img.reshape(Mtot, CPo)
        else:
            y1_img, s1, q1 = outs

    scale1, shift1 = _bn_fold(s1.sum(0), q1.sum(0), b1, Mtot, g1, be1)

    # kernel 2: bn1+relu prologue fused into conv2 + BN stats
    y2, s2, q2 = conv2_call(y1_img, scale1, shift1, w2, b2,
                            Ho=Ho, Wo=Wo, cpout=CPo, vmem_limit=vmem_limit)
    scale2, shift2 = _bn_fold(s2.sum(0), q2.sum(0), b2, Mtot, g2, be2)

    # residual branch
    if has_ds:
        res = yd.reshape(Mtot, CPo)
        sr, hr = _bn_fold(sd.sum(0), qd.sum(0), bd, Mtot, gd, bed)
    else:
        # identity residual: contiguous reshape of the channel-padded input,
        # read directly by the tail kernel (no halo slice+copy through HBM).
        res = _pad_axis(x, 3, CPo).reshape(Mtot, CPo)
        sr = jnp.ones((1, CPo), jnp.float32)
        hr = jnp.zeros((1, CPo), jnp.float32)

    # kernel 3: fused tail relu( relu(bn2(y2)) + bn_d(res) )
    out = tail_call(y2.reshape(Mtot, CPo), scale2, shift2, res, sr, hr,
                    vmem_limit=vmem_limit)
    out = out.reshape(N, Ho, Wo, CPo)[:, :, :, :Cout]
    return jnp.transpose(out, (0, 3, 1, 2))                          # NCHW


# ----------------------------- reference (pure JAX) --------------------------

def reference_forward(x_nchw, params, stride):
    x = jnp.transpose(x_nchw, (0, 2, 3, 1)).astype(jnp.float32)

    def conv(inp, w, b, s, pad):
        y = lax.conv_general_dilated(
            inp, w, (s, s), [(pad, pad), (pad, pad)],
            dimension_numbers=("NHWC", "HWIO", "NHWC"),
            precision=lax.Precision.HIGHEST)
        return y + b

    def bn(y, gamma, beta):
        mean = y.mean(axis=(0, 1, 2))
        var = y.var(axis=(0, 1, 2))      # biased, training-mode BN
        return (y - mean) * (gamma / jnp.sqrt(var + EPS)) + beta

    Cin = x.shape[-1]
    Cout = params["w1"].shape[-1]
    a1 = jax.nn.relu(bn(conv(x, params["w1"], params["b1"], stride, 1),
                        params["g1"], params["be1"]))
    a2 = jax.nn.relu(bn(conv(a1, params["w2"], params["b2"], 1, 1),
                        params["g2"], params["be2"]))
    if stride != 1 or Cin != Cout:
        res = bn(conv(x, params["wd"], params["bd"], stride, 0),
                 params["gd"], params["bed"])
    else:
        res = x
    out = jax.nn.relu(a2 + res)
    return jnp.transpose(out, (0, 3, 1, 2))


# ----------------------------- params ---------------------------------------

def init_params(key, cin, cout):
    ks = jax.random.split(key, 12)

    def cw(k, kh, kw_, ci, co):
        fan = kh * kw_ * ci
        return jax.random.normal(k, (kh, kw_, ci, co), jnp.float32) / np.sqrt(fan)

    def vec(k, c, scale=0.1, offset=0.0):
        return offset + scale * jax.random.normal(k, (c,), jnp.float32)

    return {
        "w1": cw(ks[0], 3, 3, cin, cout), "b1": vec(ks[1], cout),
        "g1": vec(ks[2], cout, offset=1.0), "be1": vec(ks[3], cout),
        "w2": cw(ks[4], 3, 3, cout, cout), "b2": vec(ks[5], cout),
        "g2": vec(ks[6], cout, offset=1.0), "be2": vec(ks[7], cout),
        "wd": cw(ks[8], 1, 1, cin, cout), "bd": vec(ks[9], cout),
        "gd": vec(ks[10], cout, offset=1.0), "bed": vec(ks[11], cout),
    }


# ----------------------------- main ------------------------------------------

if __name__ == "__main__":
    N, Cin, H, W = 2, 4, 16, 16
    Cout, stride = 8, 1          # Cin != Cout -> downsample branch is active

    key = jax.random.PRNGKey(0)
    kx, kp = jax.random.split(key)
    x = jax.random.normal(kx, (N, Cin, H, W), jnp.float32)
    params = init_params(kp, Cin, Cout)

    fwd = jax.jit(encoder_forward, static_argnames=("stride",))
    out = jax.block_until_ready(fwd(x, params, stride=stride))

    ref = jax.block_until_ready(reference_forward(x, params, stride))
    # bf16 MXU operands + bf16 y1 intermediate -> looser tolerance than f32.
    np.testing.assert_allclose(np.asarray(out), np.asarray(ref),
                               rtol=5e-2, atol=5e-2)
    assert out.shape == (N, Cout, H, W)
    print("KERNEL_OK")
</pallas_src>

<mosaic_0001>
module attributes {stable_mosaic.version = 11 : i64} {
  func.func @_conv1_folded_kernel(%arg0: i32, %arg1: memref<256x128xbf16, #tpu.memory_space<vmem>>, %arg2: memref<128x128xbf16, #tpu.memory_space<vmem>>, %arg3: memref<1x128xf32, #tpu.memory_space<vmem>>, %arg4: memref<128x128xbf16, #tpu.memory_space<vmem>>, %arg5: memref<1x128xf32, #tpu.memory_space<vmem>>, %arg6: memref<256x128xbf16, #tpu.memory_space<vmem>>, %arg7: memref<1x1x128xf32, #tpu.memory_space<vmem>>, %arg8: memref<1x1x128xf32, #tpu.memory_space<vmem>>, %arg9: memref<256x128xf32, #tpu.memory_space<vmem>>, %arg10: memref<1x1x128xf32, #tpu.memory_space<vmem>>, %arg11: memref<1x1x128xf32, #tpu.memory_space<vmem>>) attributes {dimension_semantics = [#tpu.dimension_semantics<parallel>], iteration_bounds = array<i64: 2>, scalar_prefetch = 0 : i64, scratch_operands = 0 : i64, tpu.core_type = #tpu.core_type<tc>, window_params = [{transform_indices = @transform_0, window_bounds = array<i64: 256, 128>}, {pipeline_mode = #tpu.pipeline_mode<synchronous>, transform_indices = @transform_1, window_bounds = array<i64: 128, 128>}, {pipeline_mode = #tpu.pipeline_mode<synchronous>, transform_indices = @transform_2, window_bounds = array<i64: 1, 128>}, {pipeline_mode = #tpu.pipeline_mode<synchronous>, transform_indices = @transform_3, window_bounds = array<i64: 128, 128>}, {pipeline_mode = #tpu.pipeline_mode<synchronous>, transform_indices = @transform_4, window_bounds = array<i64: 1, 128>}, {transform_indices = @transform_5, window_bounds = array<i64: 256, 128>}, {transform_indices = @transform_6, window_bounds = array<i64: 1, 1, 128>}, {transform_indices = @transform_7, window_bounds = array<i64: 1, 1, 128>}, {transform_indices = @transform_8, window_bounds = array<i64: 256, 128>}, {transform_indices = @transform_9, window_bounds = array<i64: 1, 1, 128>}, {transform_indices = @transform_10, window_bounds = array<i64: 1, 1, 128>}]} {
    %c0 = arith.constant 0 : index
    %c0_0 = arith.constant 0 : index
    %0 = vector.load %arg1[%c0, %c0_0] : memref<256x128xbf16, #tpu.memory_space<vmem>>, vector<256x128xbf16>
    %c0_1 = arith.constant 0 : index
    %c0_2 = arith.constant 0 : index
    %1 = vector.load %arg3[%c0_1, %c0_2] : memref<1x128xf32, #tpu.memory_space<vmem>>, vector<1x128xf32>
    %c0_3 = arith.constant 0 : index
    %c0_4 = arith.constant 0 : index
    %2 = vector.load %arg2[%c0_3, %c0_4] : memref<128x128xbf16, #tpu.memory_space<vmem>>, vector<128x128xbf16>
    %cst = arith.constant dense<0.000000e+00> : vector<256x128xf32>
    %3 = tpu.matmul %0, %2, %cst {dimension_numbers = #tpu.dot_dimension_numbers<[1], [0], [0], [1], [0, 0, 1, 1], [], []>} : vector<256x128xbf16>, vector<128x128xbf16>, vector<256x128xf32> -> vector<256x128xf32>
    %4 = vector.broadcast %1 : vector<1x128xf32> to vector<256x128xf32>
    %5 = arith.addf %3, %4 : vector<256x128xf32>
    %6 = arith.truncf %5 : vector<256x128xf32> to vector<256x128xbf16>
    %c0_5 = arith.constant 0 : index
    %c0_6 = arith.constant 0 : index
    %7 = vector.load %arg6[%c0_5, %c0_6] : memref<256x128xbf16, #tpu.memory_space<vmem>>, vector<256x128xbf16>
    tpu.vector_store %arg6[%c0_5, %c0_6], %6 {strides = array<i32>} : memref<256x128xbf16, #tpu.memory_space<vmem>>, vector<256x128xbf16>,
    %cst_7 = arith.constant dense<0.000000e+00> : vector<128xf32>
    %8 = vector.multi_reduction <add>, %5, %cst_7 [0] : vector<256x128xf32> to vector<128xf32>
    %9 = vector.shape_cast %8 : vector<128xf32> to vector<1x1x128xf32>
    %c0_8 = arith.constant 0 : index
    %c0_9 = arith.constant 0 : index
    %c0_10 = arith.constant 0 : index
    %10 = vector.load %arg7[%c0_8, %c0_9, %c0_10] : memref<1x1x128xf32, #tpu.memory_space<vmem>>, vector<1x1x128xf32>
    tpu.vector_store %arg7[%c0_8, %c0_9, %c0_10], %9 {strides = array<i32>} : memref<1x1x128xf32, #tpu.memory_space<vmem>>, vector<1x1x128xf32>,
    %11 = vector.broadcast %1 : vector<1x128xf32> to vector<256x128xf32>
    %12 = arith.subf %5, %11 : vector<256x128xf32>
    %13 = arith.mulf %12, %12 : vector<256x128xf32>
    %cst_11 = arith.constant dense<0.000000e+00> : vector<128xf32>
    %14 = vector.multi_reduction <add>, %13, %cst_11 [0] : vector<256x128xf32> to vector<128xf32>
    %15 = vector.shape_cast %14 : vector<128xf32> to vector<1x1x128xf32>
    %c0_12 = arith.constant 0 : index
    %c0_13 = arith.constant 0 : index
    %c0_14 = arith.constant 0 : index
    %16 = vector.load %arg8[%c0_12, %c0_13, %c0_14] : memref<1x1x128xf32, #tpu.memory_space<vmem>>, vector<1x1x128xf32>
    tpu.vector_store %arg8[%c0_12, %c0_13, %c0_14], %15 {strides = array<i32>} : memref<1x1x128xf32, #tpu.memory_space<vmem>>, vector<1x1x128xf32>,
    %c0_15 = arith.constant 0 : index
    %c0_16 = arith.constant 0 : index
    %17 = vector.load %arg5[%c0_15, %c0_16] : memref<1x128xf32, #tpu.memory_space<vmem>>, vector<1x128xf32>
    %c0_17 = arith.constant 0 : index
    %c0_18 = arith.constant 0 : index
    %18 = vector.load %arg4[%c0_17, %c0_18] : memref<128x128xbf16, #tpu.memory_space<vmem>>, vector<128x128xbf16>
    %cst_19 = arith.constant dense<0.000000e+00> : vector<256x128xf32>
    %19 = tpu.matmul %0, %18, %cst_19 {dimension_numbers = #tpu.dot_dimension_numbers<[1], [0], [0], [1], [0, 0, 1, 1], [], []>} : vector<256x128xbf16>, vector<128x128xbf16>, vector<256x128xf32> -> vector<256x128xf32>
    %20 = vector.broadcast %17 : vector<1x128xf32> to vector<256x128xf32>
    %21 = arith.addf %19, %20 : vector<256x128xf32>
    %c0_20 = arith.constant 0 : index
    %c0_21 = arith.constant 0 : index
    %22 = vector.load %arg9[%c0_20, %c0_21] : memref<256x128xf32, #tpu.memory_space<vmem>>, vector<256x128xf32>
    tpu.vector_store %arg9[%c0_20, %c0_21], %21 {strides = array<i32>} : memref<256x128xf32, #tpu.memory_space<vmem>>, vector<256x128xf32>,
    %cst_22 = arith.constant dense<0.000000e+00> : vector<128xf32>
    %23 = vector.multi_reduction <add>, %21, %cst_22 [0] : vector<256x128xf32> to vector<128xf32>
    %24 = vector.shape_cast %23 : vector<128xf32> to vector<1x1x128xf32>
    %c0_23 = arith.constant 0 : index
    %c0_24 = arith.constant 0 : index
    %c0_25 = arith.constant 0 : index
    %25 = vector.load %arg10[%c0_23, %c0_24, %c0_25] : memref<1x1x128xf32, #tpu.memory_space<vmem>>, vector<1x1x128xf32>
    tpu.vector_store %arg10[%c0_23, %c0_24, %c0_25], %24 {strides = array<i32>} : memref<1x1x128xf32, #tpu.memory_space<vmem>>, vector<1x1x128xf32>,
    %26 = vector.broadcast %17 : vector<1x128xf32> to vector<256x128xf32>
    %27 = arith.subf %21, %26 : vector<256x128xf32>
    %28 = arith.mulf %27, %27 : vector<256x128xf32>
    %cst_26 = arith.constant dense<0.000000e+00> : vector<128xf32>
    %29 = vector.multi_reduction <add>, %28, %cst_26 [0] : vector<256x128xf32> to vector<128xf32>
    %30 = vector.shape_cast %29 : vector<128xf32> to vector<1x1x128xf32>
    %c0_27 = arith.constant 0 : index
    %c0_28 = arith.constant 0 : index
    %c0_29 = arith.constant 0 : index
    %31 = vector.load %arg11[%c0_27, %c0_28, %c0_29] : memref<1x1x128xf32, #tpu.memory_space<vmem>>, vector<1x1x128xf32>
    tpu.vector_store %arg11[%c0_27, %c0_28, %c0_29], %30 {strides = array<i32>} : memref<1x1x128xf32, #tpu.memory_space<vmem>>, vector<1x1x128xf32>,
    return
  }
  func.func @transform_0(%arg0: i32) -> (i32, i32) {
    %c0_i32 = arith.constant 0 : i32
    %c0_i32_0 = arith.constant 0 : i32
    return %arg0, %c0_i32 : i32, i32
  }
  func.func @transform_1(%arg0: i32) -> (i32, i32) {
    %c0_i32 = arith.constant 0 : i32
    %c0_i32_0 = arith.constant 0 : i32
    %c0_i32_1 = arith.constant 0 : i32
    return %c0_i32, %c0_i32_0 : i32, i32
  }
  func.func @transform_2(%arg0: i32) -> (i32, i32) {
    %c0_i32 = arith.constant 0 : i32
    %c0_i32_0 = arith.constant 0 : i32
    %c0_i32_1 = arith.constant 0 : i32
    return %c0_i32, %c0_i32_0 : i32, i32
  }
  func.func @transform_3(%arg0: i32) -> (i32, i32) {
    %c0_i32 = arith.constant 0 : i32
    %c0_i32_0 = arith.constant 0 : i32
    %c0_i32_1 = arith.constant 0 : i32
    return %c0_i32, %c0_i32_0 : i32, i32
  }
  func.func @transform_4(%arg0: i32) -> (i32, i32) {
    %c0_i32 = arith.constant 0 : i32
    %c0_i32_0 = arith.constant 0 : i32
    %c0_i32_1 = arith.constant 0 : i32
    return %c0_i32, %c0_i32_0 : i32, i32
  }
  func.func @transform_5(%arg0: i32) -> (i32, i32) {
    %c0_i32 = arith.constant 0 : i32
    %c0_i32_0 = arith.constant 0 : i32
    return %arg0, %c0_i32 : i32, i32
  }
  func.func @transform_6(%arg0: i32) -> (i32, i32, i32) {
    %c0_i32 = arith.constant 0 : i32
    %c0_i32_0 = arith.constant 0 : i32
    %c0_i32_1 = arith.constant 0 : i32
    return %arg0, %c0_i32, %c0_i32_0 : i32, i32, i32
  }
  func.func @transform_7(%arg0: i32) -> (i32, i32, i32) {
    %c0_i32 = arith.constant 0 : i32
    %c0_i32_0 = arith.constant 0 : i32
    %c0_i32_1 = arith.constant 0 : i32
    return %arg0, %c0_i32, %c0_i32_0 : i32, i32, i32
  }
  func.func @transform_8(%arg0: i32) -> (i32, i32) {
    %c0_i32 = arith.constant 0 : i32
    %c0_i32_0 = arith.constant 0 : i32
    return %arg0, %c0_i32 : i32, i32
  }
  func.func @transform_9(%arg0: i32) -> (i32, i32, i32) {
    %c0_i32 = arith.constant 0 : i32
    %c0_i32_0 = arith.constant 0 : i32
    %c0_i32_1 = arith.constant 0 : i32
    return %arg0, %c0_i32, %c0_i32_0 : i32, i32, i32
  }
  func.func @transform_10(%arg0: i32) -> (i32, i32, i32) {
    %c0_i32 = arith.constant 0 : i32
    %c0_i32_0 = arith.constant 0 : i32
    %c0_i32_1 = arith.constant 0 : i32
    return %arg0, %c0_i32, %c0_i32_0 : i32, i32, i32
  }
}

module attributes {stable_mosaic.version = 11 : i64} {
  func.func @_conv2_kernel(%arg0: i32, %arg1: i32, %arg2: memref<1x16x16x128xbf16, #tpu.memory_space<vmem>>, %arg3: memref<1x128xf32, #tpu.memory_space<vmem>>, %arg4: memref<1x128xf32, #tpu.memory_space<vmem>>, %arg5: memref<9x128x128xbf16, #tpu.memory_space<vmem>>, %arg6: memref<1x128xf32, #tpu.memory_space<vmem>>, %arg7: memref<1x8x16x128xf32, #tpu.memory_space<vmem>>, %arg8: memref<1x1x128xf32, #tpu.memory_space<vmem>>, %arg9: memref<1x1x128xf32, #tpu.memory_space<vmem>>, %arg10: memref<18x18x128xbf16, #tpu.memory_space<vmem>>) attributes {dimension_semantics = [#tpu.dimension_semantics<parallel>, #tpu.dimension_semantics<arbitrary>], iteration_bounds = array<i64: 2, 2>, scalar_prefetch = 0 : i64, scratch_operands = 1 : i64, tpu.core_type = #tpu.core_type<tc>, window_params = [{transform_indices = @transform_0, window_bounds = array<i64: 1, 16, 16, 128>}, {pipeline_mode = #tpu.pipeline_mode<synchronous>, transform_indices = @transform_1, window_bounds = array<i64: 1, 128>}, {pipeline_mode = #tpu.pipeline_mode<synchronous>, transform_indices = @transform_2, window_bounds = array<i64: 1, 128>}, {pipeline_mode = #tpu.pipeline_mode<synchronous>, transform_indices = @transform_3, window_bounds = array<i64: 9, 128, 128>}, {pipeline_mode = #tpu.pipeline_mode<synchronous>, transform_indices = @transform_4, window_bounds = array<i64: 1, 128>}, {transform_indices = @transform_5, window_bounds = array<i64: 1, 8, 16, 128>}, {transform_indices = @transform_6, window_bounds = array<i64: 1, 1, 128>}, {transform_indices = @transform_7, window_bounds = array<i64: 1, 1, 128>}]} {
    %c0_i32 = arith.constant 0 : i32
    %0 = arith.cmpi eq, %arg1, %c0_i32 : i32
    %1 = arith.extui %0 : i1 to i32
    %c0_i32_0 = arith.constant 0 : i32
    %2 = arith.cmpi ne, %1, %c0_i32_0 : i32
    scf.if %2 {
      %cst_73 = arith.constant 0.000000e+00 : f32
      %97 = vector.broadcast %cst_73 : f32 to vector<1x1x128xf32>
      %c0_74 = arith.constant 0 : index
      %c0_75 = arith.constant 0 : index
      %c0_76 = arith.constant 0 : index
      %98 = vector.load %arg8[%c0_74, %c0_75, %c0_76] : memref<1x1x128xf32, #tpu.memory_space<vmem>>, vector<1x1x128xf32>
      tpu.vector_store %arg8[%c0_74, %c0_75, %c0_76], %97 {strides = array<i32>} : memref<1x1x128xf32, #tpu.memory_space<vmem>>, vector<1x1x128xf32>,
      %cst_77 = arith.constant 0.000000e+00 : f32
      %99 = vector.broadcast %cst_77 : f32 to vector<1x1x128xf32>
      %c0_78 = arith.constant 0 : index
      %c0_79 = arith.constant 0 : index
      %c0_80 = arith.constant 0 : index
      %100 = vector.load %arg9[%c0_78, %c0_79, %c0_80] : memref<1x1x128xf32, #tpu.memory_space<vmem>>, vector<1x1x128xf32>
      tpu.vector_store %arg9[%c0_78, %c0_79, %c0_80], %99 {strides = array<i32>} : memref<1x1x128xf32, #tpu.memory_space<vmem>>, vector<1x1x128xf32>,
      %c0_81 = arith.constant 0 : index
      %c0_82 = arith.constant 0 : index
      %101 = vector.load %arg3[%c0_81, %c0_82] : memref<1x128xf32, #tpu.memory_space<vmem>>, vector<1x128xf32>
      %102 = vector.shape_cast %101 : vector<1x128xf32> to vector<1x1x128xf32>
      %c0_83 = arith.constant 0 : index
      %c0_84 = arith.constant 0 : index
      %103 = vector.load %arg4[%c0_83, %c0_84] : memref<1x128xf32, #tpu.memory_space<vmem>>, vector<1x128xf32>
      %104 = vector.shape_cast %103 : vector<1x128xf32> to vector<1x1x128xf32>
      %c0_85 = arith.constant 0 : index
      %c0_86 = arith.constant 0 : index
      %c0_87 = arith.constant 0 : index
      %c0_88 = arith.constant 0 : index
      %105 = vector.load %arg2[%c0_85, %c0_86, %c0_87, %c0_88] : memref<1x16x16x128xbf16, #tpu.memory_space<vmem>>, vector<1x8x16x128xbf16>
      %106 = vector.shape_cast %105 : vector<1x8x16x128xbf16> to vector<8x16x128xbf16>
      %107 = arith.extf %106 : vector<8x16x128xbf16> to vector<8x16x128xf32>
      %108 = vector.broadcast %102 : vector<1x1x128xf32> to vector<8x16x128xf32>
      %109 = arith.mulf %107, %108 : vector<8x16x128xf32>
      %110 = vector.broadcast %104 : vector<1x1x128xf32> to vector<8x16x128xf32>
      %111 = arith.addf %109, %110 : vector<8x16x128xf32>
      %cst_89 = arith.constant 0.000000e+00 : f32
      %112 = vector.broadcast %cst_89 : f32 to vector<8x16x128xf32>
      %113 = arith.maximumf %111, %112 : vector<8x16x128xf32>
      %114 = arith.truncf %113 : vector<8x16x128xf32> to vector<8x16x128xbf16>
      %c1_90 = arith.constant 1 : index
      %c1_91 = arith.constant 1 : index
      %c0_92 = arith.constant 0 : index
      %115 = vector.load %arg10[%c1_90, %c1_91, %c0_92] : memref<18x18x128xbf16, #tpu.memory_space<vmem>>, vector<8x16x128xbf16>
      tpu.vector_store %arg10[%c1_90, %c1_91, %c0_92], %114 {strides = array<i32>} : memref<18x18x128xbf16, #tpu.memory_space<vmem>>, vector<8x16x128xbf16>,
      %c0_93 = arith.constant 0 : index
      %c8_94 = arith.constant 8 : index
      %c0_95 = arith.constant 0 : index
      %c0_96 = arith.constant 0 : index
      %116 = vector.load %arg2[%c0_93, %c8_94, %c0_95, %c0_96] : memref<1x16x16x128xbf16, #tpu.memory_space<vmem>>, vector<1x8x16x128xbf16>
      %117 = vector.shape_cast %116 : vector<1x8x16x128xbf16> to vector<8x16x128xbf16>
      %118 = arith.extf %117 : vector<8x16x128xbf16> to vector<8x16x128xf32>
      %119 = vector.broadcast %102 : vector<1x1x128xf32> to vector<8x16x128xf32>
      %120 = arith.mulf %118, %119 : vector<8x16x128xf32>
      %121 = vector.broadcast %104 : vector<1x1x128xf32> to vector<8x16x128xf32>
      %122 = arith.addf %120, %121 : vector<8x16x128xf32>
      %cst_97 = arith.constant 0.000000e+00 : f32
      %123 = vector.broadcast %cst_97 : f32 to vector<8x16x128xf32>
      %124 = arith.maximumf %122, %123 : vector<8x16x128xf32>
      %125 = arith.truncf %124 : vector<8x16x128xf32> to vector<8x16x128xbf16>
      %c9 = arith.constant 9 : index
      %c1_98 = arith.constant 1 : index
      %c0_99 = arith.constant 0 : index
      %126 = vector.load %arg10[%c9, %c1_98, %c0_99] : memref<18x18x128xbf16, #tpu.memory_space<vmem>>, vector<8x16x128xbf16>
      tpu.vector_store %arg10[%c9, %c1_98, %c0_99], %125 {strides = array<i32>} : memref<18x18x128xbf16, #tpu.memory_space<vmem>>, vector<8x16x128xbf16>,
      %cst_100 = arith.constant 0.000000e+00 : bf16
      %127 = vector.broadcast %cst_100 : bf16 to vector<1x18x128xbf16>
      %c0_101 = arith.constant 0 : index
      %c0_102 = arith.constant 0 : index
      %c0_103 = arith.constant 0 : index
      %128 = vector.load %arg10[%c0_101, %c0_102, %c0_103] : memref<18x18x128xbf16, #tpu.memory_space<vmem>>, vector<1x18x128xbf16>
      tpu.vector_store %arg10[%c0_101, %c0_102, %c0_103], %127 {strides = array<i32>} : memref<18x18x128xbf16, #tpu.memory_space<vmem>>, vector<1x18x128xbf16>,
      %c17 = arith.constant 17 : index
      %c0_104 = arith.constant 0 : index
      %c0_105 = arith.constant 0 : index
      %129 = vector.load %arg10[%c17, %c0_104, %c0_105] : memref<18x18x128xbf16, #tpu.memory_space<vmem>>, vector<1x18x128xbf16>
      tpu.vector_store %arg10[%c17, %c0_104, %c0_105], %127 {strides = array<i32>} : memref<18x18x128xbf16, #tpu.memory_space<vmem>>, vector<1x18x128xbf16>,
      %cst_106 = arith.constant 0.000000e+00 : bf16
      %130 = vector.broadcast %cst_106 : bf16 to vector<16x1x128xbf16>
      %c1_107 = arith.constant 1 : index
      %c0_108 = arith.constant 0 : index
      %c0_109 = arith.constant 0 : index
      %131 = vector.load %arg10[%c1_107, %c0_108, %c0_109] : memref<18x18x128xbf16, #tpu.memory_space<vmem>>, vector<16x1x128xbf16>
      tpu.vector_store %arg10[%c1_107, %c0_108, %c0_109], %130 {strides = array<i32>} : memref<18x18x128xbf16, #tpu.memory_space<vmem>>, vector<16x1x128xbf16>,
      %c1_110 = arith.constant 1 : index
      %c17_111 = arith.constant 17 : index
      %c0_112 = arith.constant 0 : index
      %132 = vector.load %arg10[%c1_110, %c17_111, %c0_112] : memref<18x18x128xbf16, #tpu.memory_space<vmem>>, vector<16x1x128xbf16>
      tpu.vector_store %arg10[%c1_110, %c17_111, %c0_112], %130 {strides = array<i32>} : memref<18x18x128xbf16, #tpu.memory_space<vmem>>, vector<16x1x128xbf16>,
    } else {
    }
    %c0 = arith.constant 0 : index
    %c0_1 = arith.constant 0 : index
    %3 = vector.load %arg6[%c0, %c0_1] : memref<1x128xf32, #tpu.memory_space<vmem>>, vector<1x128xf32>
    %c8_i32 = arith.constant 8 : i32
    %4 = arith.muli %arg1, %c8_i32 : i32
    %cst = arith.constant 0.000000e+00 : f32
    %5 = vector.broadcast %cst : f32 to vector<128x128xf32>
    %c0_i32_2 = arith.constant 0 : i32
    %6 = arith.addi %4, %c0_i32_2 : i32
    %7 = arith.index_cast %6 : i32 to index
    %c0_3 = arith.constant 0 : index
    %c0_4 = arith.constant 0 : index
    %8 = vector.load %arg10[%7, %c0_3, %c0_4] : memref<18x18x128xbf16, #tpu.memory_space<vmem>>, vector<8x16x128xbf16>
    %9 = vector.shape_cast %8 : vector<8x16x128xbf16> to vector<128x128xbf16>
    %c0_5 = arith.constant 0 : index
    %c0_6 = arith.constant 0 : index
    %c0_7 = arith.constant 0 : index
    %10 = vector.load %arg5[%c0_5, %c0_6, %c0_7] : memref<9x128x128xbf16, #tpu.memory_space<vmem>>, vector<1x128x128xbf16>
    %11 = vector.shape_cast %10 : vector<1x128x128xbf16> to vector<128x128xbf16>
    %cst_8 = arith.constant dense<0.000000e+00> : vector<128x128xf32>
    %12 = tpu.matmul %9, %11, %cst_8 {dimension_numbers = #tpu.dot_dimension_numbers<[1], [0], [0], [1], [0, 0, 1, 1], [], []>} : vector<128x128xbf16>, vector<128x128xbf16>, vector<128x128xf32> -> vector<128x128xf32>
    %13 = arith.addf %5, %12 : vector<128x128xf32>
    %c0_i32_9 = arith.constant 0 : i32
    %14 = arith.addi %4, %c0_i32_9 : i32
    %15 = arith.index_cast %14 : i32 to index
    %c1 = arith.constant 1 : index
    %c0_10 = arith.constant 0 : index
    %16 = vector.load %arg10[%15, %c1, %c0_10] : memref<18x18x128xbf16, #tpu.memory_space<vmem>>, vector<8x16x128xbf16>
    %17 = vector.shape_cast %16 : vector<8x16x128xbf16> to vector<128x128xbf16>
    %c1_11 = arith.constant 1 : index
    %c0_12 = arith.constant 0 : index
    %c0_13 = arith.constant 0 : index
    %18 = vector.load %arg5[%c1_11, %c0_12, %c0_13] : memref<9x128x128xbf16, #tpu.memory_space<vmem>>, vector<1x128x128xbf16>
    %19 = vector.shape_cast %18 : vector<1x128x128xbf16> to vector<128x128xbf16>
    %cst_14 = arith.constant dense<0.000000e+00> : vector<128x128xf32>
    %20 = tpu.matmul %17, %19, %cst_14 {dimension_numbers = #tpu.dot_dimension_numbers<[1], [0], [0], [1], [0, 0, 1, 1], [], []>} : vector<128x128xbf16>, vector<128x128xbf16>, vector<128x128xf32> -> vector<128x128xf32>
    %21 = arith.addf %13, %20 : vector<128x128xf32>
    %c0_i32_15 = arith.constant 0 : i32
    %22 = arith.addi %4, %c0_i32_15 : i32
    %23 = arith.index_cast %22 : i32 to index
    %c2 = arith.constant 2 : index
    %c0_16 = arith.constant 0 : index
    %24 = vector.load %arg10[%23, %c2, %c0_16] : memref<18x18x128xbf16, #tpu.memory_space<vmem>>, vector<8x16x128xbf16>
    %25 = vector.shape_cast %24 : vector<8x16x128xbf16> to vector<128x128xbf16>
    %c2_17 = arith.constant 2 : index
    %c0_18 = arith.constant 0 : index
    %c0_19 = arith.constant 0 : index
    %26 = vector.load %arg5[%c2_17, %c0_18, %c0_19] : memref<9x128x128xbf16, #tpu.memory_space<vmem>>, vector<1x128x128xbf16>
    %27 = vector.shape_cast %26 : vector<1x128x128xbf16> to vector<128x128xbf16>
    %cst_20 = arith.constant dense<0.000000e+00> : vector<128x128xf32>
    %28 = tpu.matmul %25, %27, %cst_20 {dimension_numbers = #tpu.dot_dimension_numbers<[1], [0], [0], [1], [0, 0, 1, 1], [], []>} : vector<128x128xbf16>, vector<128x128xbf16>, vector<128x128xf32> -> vector<128x128xf32>
    %29 = arith.addf %21, %28 : vector<128x128xf32>
    %c1_i32 = arith.constant 1 : i32
    %30 = arith.addi %4, %c1_i32 : i32
    %31 = arith.index_cast %30 : i32 to index
    %c0_21 = arith.constant 0 : index
    %c0_22 = arith.constant 0 : index
    %32 = vector.load %arg10[%31, %c0_21, %c0_22] : memref<18x18x128xbf16, #tpu.memory_space<vmem>>, vector<8x16x128xbf16>
    %33 = vector.shape_cast %32 : vector<8x16x128xbf16> to vector<128x128xbf16>
    %c3 = arith.constant 3 : index
    %c0_23 = arith.constant 0 : index
    %c0_24 = arith.constant 0 : index
    %34 = vector.load %arg5[%c3, %c0_23, %c0_24] : memref<9x128x128xbf16, #tpu.memory_space<vmem>>, vector<1x128x128xbf16>
    %35 = vector.shape_cast %34 : vector<1x128x128xbf16> to vector<128x128xbf16>
    %cst_25 = arith.constant dense<0.000000e+00> : vector<128x128xf32>
    %36 = tpu.matmul %33, %35, %cst_25 {dimension_numbers = #tpu.dot_dimension_numbers<[1], [0], [0], [1], [0, 0, 1, 1], [], []>} : vector<128x128xbf16>, vector<128x128xbf16>, vector<128x128xf32> -> vector<128x128xf32>
    %37 = arith.addf %29, %36 : vector<128x128xf32>
    %c1_i32_26 = arith.constant 1 : i32
    %38 = arith.addi %4, %c1_i32_26 : i32
    %39 = arith.index_cast %38 : i32 to index
    %c1_27 = arith.constant 1 : index
    %c0_28 = arith.constant 0 : index
    %40 = vector.load %arg10[%39, %c1_27, %c0_28] : memref<18x18x128xbf16, #tpu.memory_space<vmem>>, vector<8x16x128xbf16>
    %41 = vector.shape_cast %40 : vector<8x16x128xbf16> to vector<128x128xbf16>
    %c4 = arith.constant 4 : index
    %c0_29 = arith.constant 0 : index
    %c0_30 = arith.constant 0 : index
    %42 = vector.load %arg5[%c4, %c0_29, %c0_30] : memref<9x128x128xbf16, #tpu.memory_space<vmem>>, vector<1x128x128xbf16>
    %43 = vector.shape_cast %42 : vector<1x128x128xbf16> to vector<128x128xbf16>
    %cst_31 = arith.constant dense<0.000000e+00> : vector<128x128xf32>
    %44 = tpu.matmul %41, %43, %cst_31 {dimension_numbers = #tpu.dot_dimension_numbers<[1], [0], [0], [1], [0, 0, 1, 1], [], []>} : vector<128x128xbf16>, vector<128x128xbf16>, vector<128x128xf32> -> vector<128x128xf32>
    %45 = arith.addf %37, %44 : vector<128x128xf32>
    %c1_i32_32 = arith.constant 1 : i32
    %46 = arith.addi %4, %c1_i32_32 : i32
    %47 = arith.index_cast %46 : i32 to index
    %c2_33 = arith.constant 2 : index
    %c0_34 = arith.constant 0 : index
    %48 = vector.load %arg10[%47, %c2_33, %c0_34] : memref<18x18x128xbf16, #tpu.memory_space<vmem>>, vector<8x16x128xbf16>
    %49 = vector.shape_cast %48 : vector<8x16x128xbf16> to vector<128x128xbf16>
    %c5 = arith.constant 5 : index
    %c0_35 = arith.constant 0 : index
    %c0_36 = arith.constant 0 : index
    %50 = vector.load %arg5[%c5, %c0_35, %c0_36] : memref<9x128x128xbf16, #tpu.memory_space<vmem>>, vector<1x128x128xbf16>
    %51 = vector.shape_cast %50 : vector<1x128x128xbf16> to vector<128x128xbf16>
    %cst_37 = arith.constant dense<0.000000e+00> : vector<128x128xf32>
    %52 = tpu.matmul %49, %51, %cst_37 {dimension_numbers = #tpu.dot_dimension_numbers<[1], [0], [0], [1], [0, 0, 1, 1], [], []>} : vector<128x128xbf16>, vector<128x128xbf16>, vector<128x128xf32> -> vector<128x128xf32>
    %53 = arith.addf %45, %52 : vector<128x128xf32>
    %c2_i32 = arith.constant 2 : i32
    %54 = arith.addi %4, %c2_i32 : i32
    %55 = arith.index_cast %54 : i32 to index
    %c0_38 = arith.constant 0 : index
    %c0_39 = arith.constant 0 : index
    %56 = vector.load %arg10[%55, %c0_38, %c0_39] : memref<18x18x128xbf16, #tpu.memory_space<vmem>>, vector<8x16x128xbf16>
    %57 = vector.shape_cast %56 : vector<8x16x128xbf16> to vector<128x128xbf16>
    %c6 = arith.constant 6 : index
    %c0_40 = arith.constant 0 : index
    %c0_41 = arith.constant 0 : index
    %58 = vector.load %arg5[%c6, %c0_40, %c0_41] : memref<9x128x128xbf16, #tpu.memory_space<vmem>>, vector<1x128x128xbf16>
    %59 = vector.shape_cast %58 : vector<1x128x128xbf16> to vector<128x128xbf16>
    %cst_42 = arith.constant dense<0.000000e+00> : vector<128x128xf32>
    %60 = tpu.matmul %57, %59, %cst_42 {dimension_numbers = #tpu.dot_dimension_numbers<[1], [0], [0], [1], [0, 0, 1, 1], [], []>} : vector<128x128xbf16>, vector<128x128xbf16>, vector<128x128xf32> -> vector<128x128xf32>
    %61 = arith.addf %53, %60 : vector<128x128xf32>
    %c2_i32_43 = arith.constant 2 : i32
    %62 = arith.addi %4, %c2_i32_43 : i32
    %63 = arith.index_cast %62 : i32 to index
    %c1_44 = arith.constant 1 : index
    %c0_45 = arith.constant 0 : index
    %64 = vector.load %arg10[%63, %c1_44, %c0_45] : memref<18x18x128xbf16, #tpu.memory_space<vmem>>, vector<8x16x128xbf16>
    %65 = vector.shape_cast %64 : vector<8x16x128xbf16> to vector<128x128xbf16>
    %c7 = arith.constant 7 : index
    %c0_46 = arith.constant 0 : index
    %c0_47 = arith.constant 0 : index
    %66 = vector.load %arg5[%c7, %c0_46, %c0_47] : memref<9x128x128xbf16, #tpu.memory_space<vmem>>, vector<1x128x128xbf16>
    %67 = vector.shape_cast %66 : vector<1x128x128xbf16> to vector<128x128xbf16>
    %cst_48 = arith.constant dense<0.000000e+00> : vector<128x128xf32>
    %68 = tpu.matmul %65, %67, %cst_48 {dimension_numbers = #tpu.dot_dimension_numbers<[1], [0], [0], [1], [0, 0, 1, 1], [], []>} : vector<128x128xbf16>, vector<128x128xbf16>, vector<128x128xf32> -> vector<128x128xf32>
    %69 = arith.addf %61, %68 : vector<128x128xf32>
    %c2_i32_49 = arith.constant 2 : i32
    %70 = arith.addi %4, %c2_i32_49 : i32
    %71 = arith.index_cast %70 : i32 to index
    %c2_50 = arith.constant 2 : index
    %c0_51 = arith.constant 0 : index
    %72 = vector.load %arg10[%71, %c2_50, %c0_51] : memref<18x18x128xbf16, #tpu.memory_space<vmem>>, vector<8x16x128xbf16>
    %73 = vector.shape_cast %72 : vector<8x16x128xbf16> to vector<128x128xbf16>
    %c8 = arith.constant 8 : index
    %c0_52 = arith.constant 0 : index
    %c0_53 = arith.constant 0 : index
    %74 = vector.load %arg5[%c8, %c0_52, %c0_53] : memref<9x128x128xbf16, #tpu.memory_space<vmem>>, vector<1x128x128xbf16>
    %75 = vector.shape_cast %74 : vector<1x128x128xbf16> to vector<128x128xbf16>
    %cst_54 = arith.constant dense<0.000000e+00> : vector<128x128xf32>
    %76 = tpu.matmul %73, %75, %cst_54 {dimension_numbers = #tpu.dot_dimension_numbers<[1], [0], [0], [1], [0, 0, 1, 1], [], []>} : vector<128x128xbf16>, vector<128x128xbf16>, vector<128x128xf32> -> vector<128x128xf32>
    %77 = arith.addf %69, %76 : vector<128x128xf32>
    %78 = vector.broadcast %3 : vector<1x128xf32> to vector<128x128xf32>
    %79 = arith.addf %77, %78 : vector<128x128xf32>
    %80 = vector.shape_cast %79 : vector<128x128xf32> to vector<8x16x128xf32>
    %c0_55 = arith.constant 0 : index
    %c0_56 = arith.constant 0 : index
    %c0_57 = arith.constant 0 : index
    %c0_58 = arith.constant 0 : index
    %81 = vector.load %arg7[%c0_55, %c0_56, %c0_57, %c0_58] : memref<1x8x16x128xf32, #tpu.memory_space<vmem>>, vector<1x8x16x128xf32>
    %82 = vector.shape_cast %81 : vector<1x8x16x128xf32> to vector<8x16x128xf32>
    %83 = vector.shape_cast %80 : vector<8x16x128xf32> to vector<1x8x16x128xf32>
    tpu.vector_store %arg7[%c0_55, %c0_56, %c0_57, %c0_58], %83 {strides = array<i32>} : memref<1x8x16x128xf32, #tpu.memory_space<vmem>>, vector<1x8x16x128xf32>,
    %c0_59 = arith.constant 0 : index
    %c0_60 = arith.constant 0 : index
    %c0_61 = arith.constant 0 : index
    %84 = vector.load %arg8[%c0_59, %c0_60, %c0_61] : memref<1x1x128xf32, #tpu.memory_space<vmem>>, vector<1x1x128xf32>
    %cst_62 = arith.constant dense<0.000000e+00> : vector<128xf32>
    %85 = vector.multi_reduction <add>, %79, %cst_62 [0] : vector<128x128xf32> to vector<128xf32>
    %86 = vector.shape_cast %85 : vector<128xf32> to vector<1x1x128xf32>
    %87 = arith.addf %84, %86 : vector<1x1x128xf32>
    %c0_63 = arith.constant 0 : index
    %c0_64 = arith.constant 0 : index
    %c0_65 = arith.constant 0 : index
    %88 = vector.load %arg8[%c0_63, %c0_64, %c0_65] : memref<1x1x128xf32, #tpu.memory_space<vmem>>, vector<1x1x128xf32>
    tpu.vector_store %arg8[%c0_63, %c0_64, %c0_65], %87 {strides = array<i32>} : memref<1x1x128xf32, #tpu.memory_space<vmem>>, vector<1x1x128xf32>,
    %89 = vector.broadcast %3 : vector<1x128xf32> to vector<128x128xf32>
    %90 = arith.subf %79, %89 : vector<128x128xf32>
    %c0_66 = arith.constant 0 : index
    %c0_67 = arith.constant 0 : index
    %c0_68 = arith.constant 0 : index
    %91 = vector.load %arg9[%c0_66, %c0_67, %c0_68] : memref<1x1x128xf32, #tpu.memory_space<vmem>>, vector<1x1x128xf32>
    %92 = arith.mulf %90, %90 : vector<128x128xf32>
    %cst_69 = arith.constant dense<0.000000e+00> : vector<128xf32>
    %93 = vector.multi_reduction <add>, %92, %cst_69 [0] : vector<128x128xf32> to vector<128xf32>
    %94 = vector.shape_cast %93 : vector<128xf32> to vector<1x1x128xf32>
    %95 = arith.addf %91, %94 : vector<1x1x128xf32>
    %c0_70 = arith.constant 0 : index
    %c0_71 = arith.constant 0 : index
    %c0_72 = arith.constant 0 : index
    %96 = vector.load %arg9[%c0_70, %c0_71, %c0_72] : memref<1x1x128xf32, #tpu.memory_space<vmem>>, vector<1x1x128xf32>
    tpu.vector_store %arg9[%c0_70, %c0_71, %c0_72], %95 {strides = array<i32>} : memref<1x1x128xf32, #tpu.memory_space<vmem>>, vector<1x1x128xf32>,
    return
  }
  func.func @transform_0(%arg0: i32, %arg1: i32) -> (i32, i32, i32, i32) {
    %c0_i32 = arith.constant 0 : i32
    %c0_i32_0 = arith.constant 0 : i32
    %c0_i32_1 = arith.constant 0 : i32
    %c0_i32_2 = arith.constant 0 : i32
    return %arg0, %c0_i32, %c0_i32_0, %c0_i32_1 : i32, i32, i32, i32
  }
  func.func @transform_1(%arg0: i32, %arg1: i32) -> (i32, i32) {
    %c0_i32 = arith.constant 0 : i32
    %c0_i32_0 = arith.constant 0 : i32
    %c0_i32_1 = arith.constant 0 : i32
    return %c0_i32, %c0_i32_0 : i32, i32
  }
  func.func @transform_2(%arg0: i32, %arg1: i32) -> (i32, i32) {
    %c0_i32 = arith.constant 0 : i32
    %c0_i32_0 = arith.constant 0 : i32
    %c0_i32_1 = arith.constant 0 : i32
    return %c0_i32, %c0_i32_0 : i32, i32
  }
  func.func @transform_3(%arg0: i32, %arg1: i32) -> (i32, i32, i32) {
    %c0_i32 = arith.constant 0 : i32
    %c0_i32_0 = arith.constant 0 : i32
    %c0_i32_1 = arith.constant 0 : i32
    %c0_i32_2 = arith.constant 0 : i32
    return %c0_i32, %c0_i32_0, %c0_i32_1 : i32, i32, i32
  }
  func.func @transform_4(%arg0: i32, %arg1: i32) -> (i32, i32) {
    %c0_i32 = arith.constant 0 : i32
    %c0_i32_0 = arith.constant 0 : i32
    %c0_i32_1 = arith.constant 0 : i32
    return %c0_i32, %c0_i32_0 : i32, i32
  }
  func.func @transform_5(%arg0: i32, %arg1: i32) -> (i32, i32, i32, i32) {
    %c0_i32 = arith.constant 0 : i32
    %c0_i32_0 = arith.constant 0 : i32
    %c0_i32_1 = arith.constant 0 : i32
    return %arg0, %arg1, %c0_i32, %c0_i32_0 : i32, i32, i32, i32
  }
  func.func @transform_6(%arg0: i32, %arg1: i32) -> (i32, i32, i32) {
    %c0_i32 = arith.constant 0 : i32
    %c0_i32_0 = arith.constant 0 : i32
    %c0_i32_1 = arith.constant 0 : i32
    return %arg0, %c0_i32, %c0_i32_0 : i32, i32, i32
  }
  func.func @transform_7(%arg0: i32, %arg1: i32) -> (i32, i32, i32) {
    %c0_i32 = arith.constant 0 : i32
    %c0_i32_0 = arith.constant 0 : i32
    %c0_i32_1 = arith.constant 0 : i32
    return %arg0, %c0_i32, %c0_i32_0 : i32, i32, i32
  }
}

module attributes {stable_mosaic.version = 11 : i64} {
  func.func @_tail_kernel(%arg0: i32, %arg1: memref<256x128xf32, #tpu.memory_space<vmem>>, %arg2: memref<1x128xf32, #tpu.memory_space<vmem>>, %arg3: memref<1x128xf32, #tpu.memory_space<vmem>>, %arg4: memref<256x128xf32, #tpu.memory_space<vmem>>, %arg5: memref<1x128xf32, #tpu.memory_space<vmem>>, %arg6: memref<1x128xf32, #tpu.memory_space<vmem>>, %arg7: memref<256x128xf32, #tpu.memory_space<vmem>>) attributes {dimension_semantics = [#tpu.dimension_semantics<parallel>], iteration_bounds = array<i64: 2>, scalar_prefetch = 0 : i64, scratch_operands = 0 : i64, tpu.core_type = #tpu.core_type<tc>, window_params = [{transform_indices = @transform_0, window_bounds = array<i64: 256, 128>}, {pipeline_mode = #tpu.pipeline_mode<synchronous>, transform_indices = @transform_1, window_bounds = array<i64: 1, 128>}, {pipeline_mode = #tpu.pipeline_mode<synchronous>, transform_indices = @transform_2, window_bounds = array<i64: 1, 128>}, {transform_indices = @transform_3, window_bounds = array<i64: 256, 128>}, {pipeline_mode = #tpu.pipeline_mode<synchronous>, transform_indices = @transform_4, window_bounds = array<i64: 1, 128>}, {pipeline_mode = #tpu.pipeline_mode<synchronous>, transform_indices = @transform_5, window_bounds = array<i64: 1, 128>}, {transform_indices = @transform_6, window_bounds = array<i64: 256, 128>}]} {
    %c0 = arith.constant 0 : index
    %c0_0 = arith.constant 0 : index
    %0 = vector.load %arg1[%c0, %c0_0] : memref<256x128xf32, #tpu.memory_space<vmem>>, vector<256x128xf32>
    %c0_1 = arith.constant 0 : index
    %c0_2 = arith.constant 0 : index
    %1 = vector.load %arg2[%c0_1, %c0_2] : memref<1x128xf32, #tpu.memory_space<vmem>>, vector<1x128xf32>
    %2 = vector.broadcast %1 : vector<1x128xf32> to vector<256x128xf32>
    %3 = arith.mulf %0, %2 : vector<256x128xf32>
    %c0_3 = arith.constant 0 : index
    %c0_4 = arith.constant 0 : index
    %4 = vector.load %arg3[%c0_3, %c0_4] : memref<1x128xf32, #tpu.memory_space<vmem>>, vector<1x128xf32>
    %5 = vector.broadcast %4 : vector<1x128xf32> to vector<256x128xf32>
    %6 = arith.addf %3, %5 : vector<256x128xf32>
    %cst = arith.constant 0.000000e+00 : f32
    %7 = vector.broadcast %cst : f32 to vector<256x128xf32>
    %8 = arith.maximumf %6, %7 : vector<256x128xf32>
    %c0_5 = arith.constant 0 : index
    %c0_6 = arith.constant 0 : index
    %9 = vector.load %arg4[%c0_5, %c0_6] : memref<256x128xf32, #tpu.memory_space<vmem>>, vector<256x128xf32>
    %c0_7 = arith.constant 0 : index
    %c0_8 = arith.constant 0 : index
    %10 = vector.load %arg5[%c0_7, %c0_8] : memref<1x128xf32, #tpu.memory_space<vmem>>, vector<1x128xf32>
    %11 = vector.broadcast %10 : vector<1x128xf32> to vector<256x128xf32>
    %12 = arith.mulf %9, %11 : vector<256x128xf32>
    %c0_9 = arith.constant 0 : index
    %c0_10 = arith.constant 0 : index
    %13 = vector.load %arg6[%c0_9, %c0_10] : memref<1x128xf32, #tpu.memory_space<vmem>>, vector<1x128xf32>
    %14 = vector.broadcast %13 : vector<1x128xf32> to vector<256x128xf32>
    %15 = arith.addf %12, %14 : vector<256x128xf32>
    %16 = arith.addf %8, %15 : vector<256x128xf32>
    %cst_11 = arith.constant 0.000000e+00 : f32
    %17 = vector.broadcast %cst_11 : f32 to vector<256x128xf32>
    %18 = arith.maximumf %16, %17 : vector<256x128xf32>
    %c0_12 = arith.constant 0 : index
    %c0_13 = arith.constant 0 : index
    %19 = vector.load %arg7[%c0_12, %c0_13] : memref<256x128xf32, #tpu.memory_space<vmem>>, vector<256x128xf32>
    tpu.vector_store %arg7[%c0_12, %c0_13], %18 {strides = array<i32>} : memref<256x128xf32, #tpu.memory_space<vmem>>, vector<256x128xf32>,
    return
  }
  func.func @transform_0(%arg0: i32) -> (i32, i32) {
    %c0_i32 = arith.constant 0 : i32
    %c0_i32_0 = arith.constant 0 : i32
    return %arg0, %c0_i32 : i32, i32
  }
  func.func @transform_1(%arg0: i32) -> (i32, i32) {
    %c0_i32 = arith.constant 0 : i32
    %c0_i32_0 = arith.constant 0 : i32
    %c0_i32_1 = arith.constant 0 : i32
    return %c0_i32, %c0_i32_0 : i32, i32
  }
  func.func @transform_2(%arg0: i32) -> (i32, i32) {
    %c0_i32 = arith.constant 0 : i32
    %c0_i32_0 = arith.constant 0 : i32
    %c0_i32_1 = arith.constant 0 : i32
    return %c0_i32, %c0_i32_0 : i32, i32
  }
  func.func @transform_3(%arg0: i32) -> (i32, i32) {
    %c0_i32 = arith.constant 0 : i32
    %c0_i32_0 = arith.constant 0 : i32
    return %arg0, %c0_i32 : i32, i32
  }
  func.func @transform_4(%arg0: i32) -> (i32, i32) {
    %c0_i32 = arith.constant 0 : i32
    %c0_i32_0 = arith.constant 0 : i32
    %c0_i32_1 = arith.constant 0 : i32
    return %c0_i32, %c0_i32_0 : i32, i32
  }
  func.func @transform_5(%arg0: i32) -> (i32, i32) {
    %c0_i32 = arith.constant 0 : i32
    %c0_i32_0 = arith.constant 0 : i32
    %c0_i32_1 = arith.constant 0 : i32
    return %c0_i32, %c0_i32_0 : i32, i32
  }
  func.func @transform_6(%arg0: i32) -> (i32, i32) {
    %c0_i32 = arith.constant 0 : i32
    %c0_i32_0 = arith.constant 0 : i32
    return %arg0, %c0_i32 : i32, i32
  }
}

</mosaic_0001>

<llo_original>
// kernel: encoder_forward.3
$region0: #{encoder_forward.3}
  #allocation0 [shape = 'u32[]', space=smem, size = 0x4, offset = 0x4, fixed_abs, tag = 'smem constant byte address 0x4 - core index']
  #allocation1 [shape = 'u32[144,128]{1,0:T(1,128)}', space=vmem, size = 0x12000, scoped, tag = 'internal scratch']
  %s0 = inlined_call_operand.vmem [shape: bf16[512,128], index: 0, kind: input, shape index: {}]
  %s1 = inlined_call_operand.vmem [shape: bf16[128,128], index: 1, kind: input, shape index: {}]
  %s2 = inlined_call_operand.vmem [shape: f32[1,128], index: 2, kind: input, shape index: {}]
  %s3 = inlined_call_operand.vmem [shape: bf16[128,128], index: 3, kind: input, shape index: {}]
  %s4 = inlined_call_operand.vmem [shape: f32[1,128], index: 4, kind: input, shape index: {}]
  %s5 = inlined_call_operand.vmem [shape: bf16[512,128], index: 5, kind: output, shape index: {0}]
  %s6 = inlined_call_operand.vmem [shape: f32[2,1,128], index: 6, kind: output, shape index: {1}]
  %s7 = inlined_call_operand.vmem [shape: f32[2,1,128], index: 7, kind: output, shape index: {2}]
  %s8 = inlined_call_operand.vmem [shape: f32[512,128], index: 8, kind: output, shape index: {3}]
  %s9 = inlined_call_operand.vmem [shape: f32[2,1,128], index: 9, kind: output, shape index: {4}]
  %s10 = inlined_call_operand.vmem [shape: f32[2,1,128], index: 10, kind: output, shape index: {5}]
  %11 = xla_tuple %s5, %s6, %s7, %s8, %s9, %s10
  %s12 = sld [smem:[#allocation0]]
  $region93: #{encoder_forward.3} parent=0
    _
  %s14 = ssub.s32 1, %s12
  %s15 = scalar_select 0, %s14, %s12
  loop: start=0, step=1, limit=4
  $region2: #{encoder_forward.3} parent=0 // loop_pre_header
    _
  $region3: #{encoder_forward.3} parent=0 // loop_header
    %s17 = sphi 0, %s21
    %p18 = scmp.ge.s32.totalorder %s17, 4
    %s27 = sphi 0, %s29
    %s30 = sphi 0, %s27
    %s31 = sphi 0, %s30
    %s47 = sphi 0, %s31
    %s51 = sphi 0, %s51
    %s53 = sphi 0, %s51
    %s54 = sphi 0, %s53
    %s68 = sphi 0, %s54
    %s72 = sphi 0, %s72
    %s74 = sphi 0, %s72
    %s75 = sphi 0, %s74
    %s89 = sphi 0, %s75
    %s93 = sphi 0, %s93
    %s95 = sphi 0, %s93
    %s96 = sphi 0, %s95
    %s110 = sphi 0, %s96
    %s114 = sphi 0, %s114
    %s116 = sphi 0, %s114
    %s117 = sphi 0, %s116
    %s131 = sphi 0, %s117
    %s137 = sphi 0, %s139
    %s140 = sphi 0, %s137
    %s141 = sphi 0, %s140
    %s157 = sphi 0, %s141
    %s163 = sphi 0, %s165
    %s166 = sphi 0, %s163
    %s167 = sphi 0, %s166
    %s183 = sphi 0, %s167
    %s189 = sphi 0, %s191
    %s192 = sphi 0, %s189
    %s193 = sphi 0, %s192
    %s209 = sphi 0, %s193
    %s215 = sphi 0, %s217
    %s218 = sphi 0, %s215
    %s219 = sphi 0, %s218
    %s235 = sphi 0, %s219
    %s241 = sphi 0, %s243
    %s244 = sphi 0, %s241
    %s245 = sphi 0, %s244
    %s261 = sphi 0, %s245
    %s267 = sphi 0, %s269
    %s270 = sphi 0, %s267
    %s271 = sphi 0, %s270
    %s287 = sphi 0, %s271
  $region4: #{encoder_forward.3} parent=0 // loop_header_branch
    %20 = sbr.rel (%p18) target = $region8
  $region5: #{encoder_forward.3} parent=0 // loop_body
    %s22 = ssub.s32 %s17, 1
    %s23 = ssub.s32 %s17, 2
    %s24 = sadd.s32 %s17, 1
    %s25 = ssub.s32 %s17, %s24
    %p26 = scmp.eq.s32.totalorder %s25, 0
    %s28 = sadd.s32 %s27, 1
    %s29 = scalar_select %p26, %s27, %s28
    %p32 = pneg %p26
    %p33 = scmp.eq.s32.totalorder %s17, 1
    %p34 = por %p32, %p33
    %p35 = scmp.ne.s32.totalorder %s27, %s30
    %p36 = scmp.eq.s32.totalorder %s17, 0
    %p37 = por %p35, %p36
    %p38 = scmp.ne.s32.totalorder %s27, %s30
    %p39 = scmp.eq.s32.totalorder %s22, 1
    %p40 = por %p38, %p39
    %p41 = scmp.ne.s32.totalorder %s30, %s31
    %p42 = scmp.eq.s32.totalorder %s22, 0
    %p43 = por %p41, %p42
    %p44 = scmp.ne.s32.totalorder %s30, %s31
    %p45 = scmp.eq.s32.totalorder %s23, 1
    %p46 = por %p44, %p45
    %p48 = scmp.ne.s32.totalorder %s31, %s47
    %p49 = scmp.eq.s32.totalorder %s23, 0
    %p50 = por %p48, %p49
    %s52 = sadd.s32 %s51, 1
    %p55 = scmp.eq.s32.totalorder %s17, 1
    %p56 = scmp.ne.s32.totalorder %s51, %s53
    %p57 = scmp.eq.s32.totalorder %s17, 0
    %p58 = por %p56, %p57
    %p59 = scmp.ne.s32.totalorder %s51, %s53
    %p60 = scmp.eq.s32.totalorder %s22, 1
    %p61 = por %p59, %p60
    %p62 = scmp.ne.s32.totalorder %s53, %s54
    %p63 = scmp.eq.s32.totalorder %s22, 0
    %p64 = por %p62, %p63
    %p65 = scmp.ne.s32.totalorder %s53, %s54
    %p66 = scmp.eq.s32.totalorder %s23, 1
    %p67 = por %p65, %p66
    %p69 = scmp.ne.s32.totalorder %s54, %s68
    %p70 = scmp.eq.s32.totalorder %s23, 0
    %p71 = por %p69, %p70
    %s73 = sadd.s32 %s72, 1
    %p76 = scmp.eq.s32.totalorder %s17, 1
    %p77 = scmp.ne.s32.totalorder %s72, %s74
    %p78 = scmp.eq.s32.totalorder %s17, 0
    %p79 = por %p77, %p78
    %p80 = scmp.ne.s32.totalorder %s72, %s74
    %p81 = scmp.eq.s32.totalorder %s22, 1
    %p82 = por %p80, %p81
    %p83 = scmp.ne.s32.totalorder %s74, %s75
    %p84 = scmp.eq.s32.totalorder %s22, 0
    %p85 = por %p83, %p84
    %p86 = scmp.ne.s32.totalorder %s74, %s75
    %p87 = scmp.eq.s32.totalorder %s23, 1
    %p88 = por %p86, %p87
    %p90 = scmp.ne.s32.totalorder %s75, %s89
    %p91 = scmp.eq.s32.totalorder %s23, 0
    %p92 = por %p90, %p91
    %s94 = sadd.s32 %s93, 1
    %p97 = scmp.eq.s32.totalorder %s17, 1
    %p98 = scmp.ne.s32.totalorder %s93, %s95
    %p99 = scmp.eq.s32.totalorder %s17, 0
    %p100 = por %p98, %p99
    %p101 = scmp.ne.s32.totalorder %s93, %s95
    %p102 = scmp.eq.s32.totalorder %s22, 1
    %p103 = por %p101, %p102
    %p104 = scmp.ne.s32.totalorder %s95, %s96
    %p105 = scmp.eq.s32.totalorder %s22, 0
    %p106 = por %p104, %p105
    %p107 = scmp.ne.s32.totalorder %s95, %s96
    %p108 = scmp.eq.s32.totalorder %s23, 1
    %p109 = por %p107, %p108
    %p111 = scmp.ne.s32.totalorder %s96, %s110
    %p112 = scmp.eq.s32.totalorder %s23, 0
    %p113 = por %p111, %p112
    %s115 = sadd.s32 %s114, 1
    %p118 = scmp.eq.s32.totalorder %s17, 1
    %p119 = scmp.ne.s32.totalorder %s114, %s116
    %p120 = scmp.eq.s32.totalorder %s17, 0
    %p121 = por %p119, %p120
    %p122 = scmp.ne.s32.totalorder %s114, %s116
    %p123 = scmp.eq.s32.totalorder %s22, 1
    %p124 = por %p122, %p123
    %p125 = scmp.ne.s32.totalorder %s116, %s117
    %p126 = scmp.eq.s32.totalorder %s22, 0
    %p127 = por %p125, %p126
    %p128 = scmp.ne.s32.totalorder %s116, %s117
    %p129 = scmp.eq.s32.totalorder %s23, 1
    %p130 = por %p128, %p129
    %p132 = scmp.ne.s32.totalorder %s117, %s131
    %p133 = scmp.eq.s32.totalorder %s23, 0
    %p134 = por %p132, %p133
    %s135 = ssub.s32 %s17, %s24
    %p136 = scmp.eq.s32.totalorder %s135, 0
    %s138 = sadd.s32 %s137, 1
    %s139 = scalar_select %p136, %s137, %s138
    %p142 = pneg %p136
    %p143 = scmp.eq.s32.totalorder %s17, 1
    %p144 = por %p142, %p143
    %p145 = scmp.ne.s32.totalorder %s137, %s140
    %p146 = scmp.eq.s32.totalorder %s17, 0
    %p147 = por %p145, %p146
    %p148 = scmp.ne.s32.totalorder %s137, %s140
    %p149 = scmp.eq.s32.totalorder %s22, 1
    %p150 = por %p148, %p149
    %p151 = scmp.ne.s32.totalorder %s140, %s141
    %p152 = scmp.eq.s32.totalorder %s22, 0
    %p153 = por %p151, %p152
    %p154 = scmp.ne.s32.totalorder %s140, %s141
    %p155 = scmp.eq.s32.totalorder %s23, 1
    %p156 = por %p154, %p155
    %p158 = scmp.ne.s32.totalorder %s141, %s157
    %p159 = scmp.eq.s32.totalorder %s23, 0
    %p160 = por %p158, %p159
    %s161 = ssub.s32 %s17, %s24
    %p162 = scmp.eq.s32.totalorder %s161, 0
    %s164 = sadd.s32 %s163, 1
    %s165 = scalar_select %p162, %s163, %s164
    %p168 = pneg %p162
    %p169 = scmp.eq.s32.totalorder %s17, 1
    %p170 = por %p168, %p169
    %p171 = scmp.ne.s32.totalorder %s163, %s166
    %p172 = scmp.eq.s32.totalorder %s17, 0
    %p173 = por %p171, %p172
    %p174 = scmp.ne.s32.totalorder %s163, %s166
    %p175 = scmp.eq.s32.totalorder %s22, 1
    %p176 = por %p174, %p175
    %p177 = scmp.ne.s32.totalorder %s166, %s167
    %p178 = scmp.eq.s32.totalorder %s22, 0
    %p179 = por %p177, %p178
    %p180 = scmp.ne.s32.totalorder %s166, %s167
    %p181 = scmp.eq.s32.totalorder %s23, 1
    %p182 = por %p180, %p181
    %p184 = scmp.ne.s32.totalorder %s167, %s183
    %p185 = scmp.eq.s32.totalorder %s23, 0
    %p186 = por %p184, %p185
    %s187 = ssub.s32 %s17, %s24
    %p188 = scmp.eq.s32.totalorder %s187, 0
    %s190 = sadd.s32 %s189, 1
    %s191 = scalar_select %p188, %s189, %s190
    %p194 = pneg %p188
    %p195 = scmp.eq.s32.totalorder %s17, 1
    %p196 = por %p194, %p195
    %p197 = scmp.ne.s32.totalorder %s189, %s192
    %p198 = scmp.eq.s32.totalorder %s17, 0
    %p199 = por %p197, %p198
    %p200 = scmp.ne.s32.totalorder %s189, %s192
    %p201 = scmp.eq.s32.totalorder %s22, 1
    %p202 = por %p200, %p201
    %p203 = scmp.ne.s32.totalorder %s192, %s193
    %p204 = scmp.eq.s32.totalorder %s22, 0
    %p205 = por %p203, %p204
    %p206 = scmp.ne.s32.totalorder %s192, %s193
    %p207 = scmp.eq.s32.totalorder %s23, 1
    %p208 = por %p206, %p207
    %p210 = scmp.ne.s32.totalorder %s193, %s209
    %p211 = scmp.eq.s32.totalorder %s23, 0
    %p212 = por %p210, %p211
    %s213 = ssub.s32 %s17, %s24
    %p214 = scmp.eq.s32.totalorder %s213, 0
    %s216 = sadd.s32 %s215, 1
    %s217 = scalar_select %p214, %s215, %s216
    %p220 = pneg %p214
    %p221 = scmp.eq.s32.totalorder %s17, 1
    %p222 = por %p220, %p221
    %p223 = scmp.ne.s32.totalorder %s215, %s218
    %p224 = scmp.eq.s32.totalorder %s17, 0
    %p225 = por %p223, %p224
    %p226 = scmp.ne.s32.totalorder %s215, %s218
    %p227 = scmp.eq.s32.totalorder %s22, 1
    %p228 = por %p226, %p227
    %p229 = scmp.ne.s32.totalorder %s218, %s219
    %p230 = scmp.eq.s32.totalorder %s22, 0
    %p231 = por %p229, %p230
    %p232 = scmp.ne.s32.totalorder %s218, %s219
    %p233 = scmp.eq.s32.totalorder %s23, 1
    %p234 = por %p232, %p233
    %p236 = scmp.ne.s32.totalorder %s219, %s235
    %p237 = scmp.eq.s32.totalorder %s23, 0
    %p238 = por %p236, %p237
    %s239 = ssub.s32 %s17, %s24
    %p240 = scmp.eq.s32.totalorder %s239, 0
    %s242 = sadd.s32 %s241, 1
    %s243 = scalar_select %p240, %s241, %s242
    %p246 = pneg %p240
    %p247 = scmp.eq.s32.totalorder %s17, 1
    %p248 = por %p246, %p247
    %p249 = scmp.ne.s32.totalorder %s241, %s244
    %p250 = scmp.eq.s32.totalorder %s17, 0
    %p251 = por %p249, %p250
    %p252 = scmp.ne.s32.totalorder %s241, %s244
    %p253 = scmp.eq.s32.totalorder %s22, 1
    %p254 = por %p252, %p253
    %p255 = scmp.ne.s32.totalorder %s244, %s245
    %p256 = scmp.eq.s32.totalorder %s22, 0
    %p257 = por %p255, %p256
    %p258 = scmp.ne.s32.totalorder %s244, %s245
    %p259 = scmp.eq.s32.totalorder %s23, 1
    %p260 = por %p258, %p259
    %p262 = scmp.ne.s32.totalorder %s245, %s261
    %p263 = scmp.eq.s32.totalorder %s23, 0
    %p264 = por %p262, %p263
    %s265 = ssub.s32 %s17, %s24
    %p266 = scmp.eq.s32.totalorder %s265, 0
    %s268 = sadd.s32 %s267, 1
    %s269 = scalar_select %p266, %s267, %s268
    %p272 = pneg %p266
    %p273 = scmp.eq.s32.totalorder %s17, 1
    %p274 = por %p272, %p273
    %p275 = scmp.ne.s32.totalorder %s267, %s270
    %p276 = scmp.eq.s32.totalorder %s17, 0
    %p277 = por %p275, %p276
    %p278 = scmp.ne.s32.totalorder %s267, %s270
    %p279 = scmp.eq.s32.totalorder %s22, 1
    %p280 = por %p278, %p279
    %p281 = scmp.ne.s32.totalorder %s270, %s271
    %p282 = scmp.eq.s32.totalorder %s22, 0
    %p283 = por %p281, %p282
    %p284 = scmp.ne.s32.totalorder %s270, %s271
    %p285 = scmp.eq.s32.totalorder %s23, 1
    %p286 = por %p284, %p285
    %p288 = scmp.ne.s32.totalorder %s271, %s287
    %p289 = scmp.eq.s32.totalorder %s23, 0
    %p290 = por %p288, %p289
    %p291 = scmp.le.s32.totalorder 1, %s17
    %p292 = scmp.lt.s32.totalorder %s17, 3
    %p293 = pnand %p291, %p292
    %p294 = pneg %p293
    // Predicated region
    $region9: #{encoder_forward.3} parent=5 // pred_check
      _
    $region10: #{encoder_forward.3} parent=5 // pred_check_branch
      %296 = sbr.rel (%p293) target = $region12
    $region11: #{encoder_forward.3} parent=5 // pred_region
      %s297 = ssub.s32 %s17, 1
      // Predicated region
      $region13: #{encoder_forward.3} parent=11 // pred_check
        %p298 = pneg %p64
      $region14: #{encoder_forward.3} parent=11 // pred_check_branch
        %300 = sbr.rel (%p298) target = $region16
      $region15: #{encoder_forward.3} parent=11 // pred_region
        _
      $region16: #{encoder_forward.3} parent=11 // pred_fallthru
        _
      // Predicated region
      $region17: #{encoder_forward.3} parent=11 // pred_check
        %p301 = pneg %p85
      $region18: #{encoder_forward.3} parent=11 // pred_check_branch
        %303 = sbr.rel (%p301) target = $region20
      $region19: #{encoder_forward.3} parent=11 // pred_region
        _
      $region20: #{encoder_forward.3} parent=11 // pred_fallthru
        _
      // Predicated region
      $region21: #{encoder_forward.3} parent=11 // pred_check
        %p304 = pneg %p106
      $region22: #{encoder_forward.3} parent=11 // pred_check_branch
        %306 = sbr.rel (%p304) target = $region24
      $region23: #{encoder_forward.3} parent=11 // pred_region
        _
      $region24: #{encoder_forward.3} parent=11 // pred_fallthru
        _
      // Predicated region
      $region25: #{encoder_forward.3} parent=11 // pred_check
        %p307 = pneg %p127
      $region26: #{encoder_forward.3} parent=11 // pred_check_branch
        %309 = sbr.rel (%p307) target = $region28
      $region27: #{encoder_forward.3} parent=11 // pred_region
        _
      $region28: #{encoder_forward.3} parent=11 // pred_fallthru
        _
    $region12: #{encoder_forward.3} parent=5 // pred_fallthru
      _
    %p310 = scmp.lt.s32.totalorder %s17, 2
    // Predicated region
    $region29: #{encoder_forward.3} parent=5 // pred_check
      %p311 = pneg %p310
    $region30: #{encoder_forward.3} parent=5 // pred_check_branch
      %313 = sbr.rel (%p311) target = $region32
    $region31: #{encoder_forward.3} parent=5 // pred_region
      // Predicated region
      $region33: #{encoder_forward.3} parent=31 // pred_check
        %p314 = pneg %p37
      $region34: #{encoder_forward.3} parent=31 // pred_check_branch
        %316 = sbr.rel (%p314) target = $region36
      $region35: #{encoder_forward.3} parent=31 // pred_region
        %s317 = smul.u32 32, %s17
        %p318 = scmp.lt.s32.totalorder %s317, 63
        %s319 = scalar_select %p318, %s317, 63
        %s320 = smul.addr %s319, 4
        %s321 = scalar_lea.vmem %s0, %s320
        %s322 = smul.u32 32, %s17
      $region36: #{encoder_forward.3} parent=31 // pred_fallthru
        _
    $region32: #{encoder_forward.3} parent=5 // pred_fallthru
      _
    %p323 = scmp.le.s32.totalorder 1, %s17
    %p324 = scmp.lt.s32.totalorder %s17, 3
    %p325 = pnand %p323, %p324
    %p326 = pneg %p325
    // Predicated region
    $region37: #{encoder_forward.3} parent=5 // pred_check
      _
    $region38: #{encoder_forward.3} parent=5 // pred_check_branch
      %328 = sbr.rel (%p325) target = $region40
    $region39: #{encoder_forward.3} parent=5 // pred_region
      %s329 = ssub.s32 %s17, 1
      %s330 = smul.u32 32, %s22
      %p331 = scmp.lt.s32.totalorder %s330, 63
      %s332 = scalar_select %p331, %s330, 63
      %s333 = smul.addr %s332, 4
      %s334 = scalar_lea.vmem %s0, %s333
      %p335 = pneg %p43
      %p336 = pneg %p40
      %p337 = pneg %p64
      %p338 = pneg %p61
      %p339 = pneg %p85
      %p340 = pneg %p82
      %p341 = pneg %p106
      %p342 = pneg %p103
      %p343 = pneg %p127
      %p344 = pneg %p124
      %p345 = pneg %p153
      %p346 = pneg %p150
      %s347 = smul.u32 32, %s22
      %p348 = scmp.lt.s32.totalorder %s347, 63
      %s349 = scalar_select %p348, %s347, 63
      %s350 = smul.addr %s349, 4
      %s351 = scalar_lea.vmem %s5, %s350
      %p352 = pneg %p179
      %p353 = pneg %p176
      %p354 = scmp.lt.s32.totalorder %s22, 1
      %s355 = scalar_select %p354, %s22, 1
      %s356 = scalar_lea.vmem %s6, %s355
      %p357 = pneg %p205
      %p358 = pneg %p202
      %p359 = scmp.lt.s32.totalorder %s22, 1
      %s360 = scalar_select %p359, %s22, 1
      %s361 = scalar_lea.vmem %s7, %s360
      %p362 = pneg %p231
      %p363 = pneg %p228
      %s364 = smul.u32 32, %s22
      %p365 = scmp.lt.s32.totalorder %s364, 63
      %s366 = scalar_select %p365, %s364, 63
      %s367 = smul.addr %s366, 8
      %s368 = scalar_lea.vmem %s8, %s367
      %p369 = pneg %p257
      %p370 = pneg %p254
      %p371 = scmp.lt.s32.totalorder %s22, 1
      %s372 = scalar_select %p371, %s22, 1
      %s373 = scalar_lea.vmem %s9, %s372
      %p374 = pneg %p283
      %p375 = pneg %p280
      %p376 = scmp.lt.s32.totalorder %s22, 1
      %s377 = scalar_select %p376, %s22, 1
      %s378 = scalar_lea.vmem %s10, %s377
      %s379 = smul.u32 32, %s22
      %p380 = scmp.lt.s32.totalorder %s379, 63
      %s381 = scalar_select %p380, %s379, 63
      %s382 = smul.addr %s381, 4
      %s383 = scalar_lea.vmem %s0, %s382
      %s384 = smul.u32 32, %s22
      %s385 = smul.u32 32, %s22
      %p386 = scmp.lt.s32.totalorder %s385, 63
      %s387 = scalar_select %p386, %s385, 63
      %s388 = smul.addr %s387, 4
      %s389 = scalar_lea.vmem %s5, %s388
      %s390 = smul.u32 32, %s22
      %p391 = scmp.lt.s32.totalorder %s22, 1
      %s392 = scalar_select %p391, %s22, 1
      %s393 = scalar_lea.vmem %s6, %s392
      %p394 = scmp.lt.s32.totalorder %s22, 1
      %s395 = scalar_select %p394, %s22, 1
      %s396 = scalar_lea.vmem %s7, %s395
      %s397 = smul.u32 32, %s22
      %p398 = scmp.lt.s32.totalorder %s397, 63
      %s399 = scalar_select %p398, %s397, 63
      %s400 = smul.addr %s399, 8
      %s401 = scalar_lea.vmem %s8, %s400
      %s402 = smul.u32 32, %s22
      %p403 = scmp.lt.s32.totalorder %s22, 1
      %s404 = scalar_select %p403, %s22, 1
      %s405 = scalar_lea.vmem %s9, %s404
      %p406 = scmp.lt.s32.totalorder %s22, 1
      %s407 = scalar_select %p406, %s22, 1
      %s408 = scalar_lea.vmem %s10, %s407
      %v410 = vld [vmem:[%s383] sm:$0xf]
      %v411 = vld [vmem:[%s383 + $0x4] sm:$0xf]
      %v412 = vld [vmem:[%s383 + $0x8] sm:$0xf]
      %v413 = vld [vmem:[%s383 + $0xc] sm:$0xf]
      %v414 = vld [vmem:[%s383 + $0x10] sm:$0xf]
      %v415 = vld [vmem:[%s383 + $0x14] sm:$0xf]
      %v416 = vld [vmem:[%s383 + $0x18] sm:$0xf]
      %v417 = vld [vmem:[%s383 + $0x1c] sm:$0xf]
      %v418 = vld [vmem:[%s383 + $0x20] sm:$0xf]
      %v419 = vld [vmem:[%s383 + $0x24] sm:$0xf]
      %v420 = vld [vmem:[%s383 + $0x28] sm:$0xf]
      %v421 = vld [vmem:[%s383 + $0x2c] sm:$0xf]
      %v422 = vld [vmem:[%s383 + $0x30] sm:$0xf]
      %v423 = vld [vmem:[%s383 + $0x34] sm:$0xf]
      %v424 = vld [vmem:[%s383 + $0x38] sm:$0xf]
      %v425 = vld [vmem:[%s383 + $0x3c] sm:$0xf]
      %v426 = vld [vmem:[%s383 + $0x40] sm:$0xf]
      %v427 = vld [vmem:[%s383 + $0x44] sm:$0xf]
      %v428 = vld [vmem:[%s383 + $0x48] sm:$0xf]
      %v429 = vld [vmem:[%s383 + $0x4c] sm:$0xf]
      %v430 = vld [vmem:[%s383 + $0x50] sm:$0xf]
      %v431 = vld [vmem:[%s383 + $0x54] sm:$0xf]
      %v432 = vld [vmem:[%s383 + $0x58] sm:$0xf]
      %v433 = vld [vmem:[%s383 + $0x5c] sm:$0xf]
      %v434 = vld [vmem:[%s383 + $0x60] sm:$0xf]
      %v435 = vld [vmem:[%s383 + $0x64] sm:$0xf]
      %v436 = vld [vmem:[%s383 + $0x68] sm:$0xf]
      %v437 = vld [vmem:[%s383 + $0x6c] sm:$0xf]
      %v438 = vld [vmem:[%s383 + $0x70] sm:$0xf]
      %v439 = vld [vmem:[%s383 + $0x74] sm:$0xf]
      %v440 = vld [vmem:[%s383 + $0x78] sm:$0xf]
      %v441 = vld [vmem:[%s383 + $0x7c] sm:$0xf]
      %v442 = vld [vmem:[%s2] sm:$0x1]
      %v443 = vld [vmem:[%s1] sm:$0xf]
      %v444 = vld [vmem:[%s1 + $0x4] sm:$0xf]
      %v445 = vld [vmem:[%s1 + $0x8] sm:$0xf]
      %v446 = vld [vmem:[%s1 + $0xc] sm:$0xf]
      %v447 = vld [vmem:[%s1 + $0x10] sm:$0xf]
      %v448 = vld [vmem:[%s1 + $0x14] sm:$0xf]
      %v449 = vld [vmem:[%s1 + $0x18] sm:$0xf]
      %v450 = vld [vmem:[%s1 + $0x1c] sm:$0xf]
      %v451 = vld [vmem:[%s1 + $0x20] sm:$0xf]
      %v452 = vld [vmem:[%s1 + $0x24] sm:$0xf]
      %v453 = vld [vmem:[%s1 + $0x28] sm:$0xf]
      %v454 = vld [vmem:[%s1 + $0x2c] sm:$0xf]
      %v455 = vld [vmem:[%s1 + $0x30] sm:$0xf]
      %v456 = vld [vmem:[%s1 + $0x34] sm:$0xf]
      %v457 = vld [vmem:[%s1 + $0x38] sm:$0xf]
      %v458 = vld [vmem:[%s1 + $0x3c] sm:$0xf]
      %v460 = vlaneseq
      %v461 = vshrl.u32 %v460, 7
      %v462 = vsub.s32 0, %v461
      %v463 = vrot.slane %v442, %v462
      %v497 = vunpack.c.l.b16 %v410
      %v498 = vunpack.c.l.b16 %v411
      %v499 = vunpack.c.l.b16 %v412
      %v500 = vunpack.c.l.b16 %v413
      %v501 = vunpack.c.l.b16 %v414
      %v502 = vunpack.c.l.b16 %v415
      %v503 = vunpack.c.l.b16 %v416
      %v504 = vunpack.c.l.b16 %v417
      %v505 = vunpack.c.l.b16 %v418
      %v506 = vunpack.c.l.b16 %v419
      %v507 = vunpack.c.l.b16 %v420
      %v508 = vunpack.c.l.b16 %v421
      %v509 = vunpack.c.l.b16 %v422
      %v510 = vunpack.c.l.b16 %v423
      %v511 = vunpack.c.l.b16 %v424
      %v512 = vunpack.c.l.b16 %v425
      %v513 = vunpack.c.l.b16 %v426
      %v514 = vunpack.c.l.b16 %v427
      %v515 = vunpack.c.l.b16 %v428
      %v516 = vunpack.c.l.b16 %v429
      %v517 = vunpack.c.l.b16 %v430
      %v518 = vunpack.c.l.b16 %v431
      %v519 = vunpack.c.l.b16 %v432
      %v520 = vunpack.c.l.b16 %v433
      %v521 = vunpack.c.l.b16 %v434
      %v522 = vunpack.c.l.b16 %v435
      %v523 = vunpack.c.l.b16 %v436
      %v524 = vunpack.c.l.b16 %v437
      %v525 = vunpack.c.l.b16 %v438
      %v526 = vunpack.c.l.b16 %v439
      %v527 = vunpack.c.l.b16 %v440
      %v528 = vunpack.c.l.b16 %v441
      %v529 = vpack.c.b16 %v498, %v497
      %v530 = vpack.c.b16 %v500, %v499
      %v531 = vpack.c.b16 %v502, %v501
      %v532 = vpack.c.b16 %v504, %v503
      %v533 = vpack.c.b16 %v506, %v505
      %v534 = vpack.c.b16 %v508, %v507
      %v535 = vpack.c.b16 %v510, %v509
      %v536 = vpack.c.b16 %v512, %v511
      %v537 = vpack.c.b16 %v514, %v513
      %v538 = vpack.c.b16 %v516, %v515
      %v539 = vpack.c.b16 %v518, %v517
      %v540 = vpack.c.b16 %v520, %v519
      %v541 = vpack.c.b16 %v522, %v521
      %v542 = vpack.c.b16 %v524, %v523
      %v543 = vpack.c.b16 %v526, %v525
      %v544 = vpack.c.b16 %v528, %v527
      %v577 = vunpack.c.l.b16 %v443
      %v578 = vunpack.c.l.b16 %v444
      %v579 = vunpack.c.l.b16 %v445
      %v580 = vunpack.c.l.b16 %v446
      %v581 = vunpack.c.l.b16 %v447
      %v582 = vunpack.c.l.b16 %v448
      %v583 = vunpack.c.l.b16 %v449
      %v584 = vunpack.c.l.b16 %v450
      %v585 = vunpack.c.l.b16 %v451
      %v586 = vunpack.c.l.b16 %v452
      %v587 = vunpack.c.l.b16 %v453
      %v588 = vunpack.c.l.b16 %v454
      %v589 = vunpack.c.l.b16 %v455
      %v590 = vunpack.c.l.b16 %v456
      %v591 = vunpack.c.l.b16 %v457
      %v592 = vunpack.c.l.b16 %v458
      %v593 = vpack.c.b16 %v578, %v577
      %v594 = vpack.c.b16 %v580, %v579
      %v595 = vpack.c.b16 %v582, %v581
      %v596 = vpack.c.b16 %v584, %v583
      %v597 = vpack.c.b16 %v586, %v585
      %v598 = vpack.c.b16 %v588, %v587
      %v599 = vpack.c.b16 %v590, %v589
      %v600 = vpack.c.b16 %v592, %v591
      %609 = vmatprep.subr.bf16.mxu0 0
      %610 = vmatpush1.bf16.msra.mxu0 %v593
      %611 = vmatprep.subr.bf16.mxu0 0
      %612 = vmatpush1.bf16.msra.mxu0 %v594
      %613 = vmatprep.subr.bf16.mxu0 0
      %614 = vmatpush1.bf16.msra.mxu0 %v595
      %615 = vmatprep.subr.bf16.mxu0 0
      %616 = vmatpush1.bf16.msra.mxu0 %v596
      %617 = vmatprep.subr.bf16.mxu0 0
      %618 = vmatpush1.bf16.msra.mxu0 %v597
      %619 = vmatprep.subr.bf16.mxu0 0
      %620 = vmatpush1.bf16.msra.mxu0 %v598
      %621 = vmatprep.subr.bf16.mxu0 0
      %622 = vmatpush1.bf16.msra.mxu0 %v599
      %623 = vmatprep.subr.bf16.mxu0 0
      %624 = vmatpush1.bf16.msra.mxu0 %v600
      %625 = vmatprep.subr.bf16.mxu0 0
      %626 = vmatpush1.bf16.msra.mxu0 0
      %627 = vmatprep.subr.bf16.mxu0 0
      %628 = vmatpush1.bf16.msra.mxu0 0
      %629 = vmatprep.subr.bf16.mxu0 0
      %630 = vmatpush1.bf16.msra.mxu0 0
      %631 = vmatprep.subr.bf16.mxu0 0
      %632 = vmatpush1.bf16.msra.mxu0 0
      %633 = vmatprep.subr.bf16.mxu0 0
      %634 = vmatpush1.bf16.msra.mxu0 0
      %635 = vmatprep.subr.bf16.mxu0 0
      %636 = vmatpush1.bf16.msra.mxu0 0
      %637 = vmatprep.subr.bf16.mxu0 0
      %638 = vmatpush1.bf16.msra.mxu0 0
      %639 = vmatprep.subr.bf16.mxu0 0
      %640 = vmatpush1.bf16.msra.mxu0 0
      %641 = vmatprep.mubr.bf16.mxu0 0
      %642 = vmatmul.mubr.bf16.gmra.mrb[0].mxu0 %v529
      %v643 = vpop.f32.mrb[0].mxu0
      %v644 = vadd.f32 %v463, %v643
      %v645 = vpop.f32.mrb[0].mxu0
      %v646 = vpop.f32.mrb[0].mxu0
      %v647 = vadd.f32 %v463, %v646
      %v648 = vpop.f32.mrb[0].mxu0
      %649 = vmatprep.mubr.bf16.mxu0 0
      %650 = vmatmul.mubr.bf16.gmra.mrb[0].mxu0 %v530
      %v651 = vpop.f32.mrb[0].mxu0
      %v652 = vadd.f32 %v463, %v651
      %v653 = vpop.f32.mrb[0].mxu0
      %v654 = vpop.f32.mrb[0].mxu0
      %v655 = vadd.f32 %v463, %v654
      %v656 = vpop.f32.mrb[0].mxu0
      %657 = vmatprep.mubr.bf16.mxu0 0
      %658 = vmatmul.mubr.bf16.gmra.mrb[0].mxu0 %v531
      %v659 = vpop.f32.mrb[0].mxu0
      %v660 = vadd.f32 %v463, %v659
      %v661 = vpop.f32.mrb[0].mxu0
      %v662 = vpop.f32.mrb[0].mxu0
      %v663 = vadd.f32 %v463, %v662
      %v664 = vpop.f32.mrb[0].mxu0
      %665 = vmatprep.mubr.bf16.mxu0 0
      %666 = vmatmul.mubr.bf16.gmra.mrb[0].mxu0 %v532
      %v667 = vpop.f32.mrb[0].mxu0
      %v668 = vadd.f32 %v463, %v667
      %v669 = vpop.f32.mrb[0].mxu0
      %v670 = vpop.f32.mrb[0].mxu0
      %v671 = vadd.f32 %v463, %v670
      %v672 = vpop.f32.mrb[0].mxu0
      %673 = vmatprep.mubr.bf16.mxu0 0
      %674 = vmatmul.mubr.bf16.gmra.mrb[0].mxu0 %v533
      %v675 = vpop.f32.mrb[0].mxu0
      %v676 = vadd.f32 %v463, %v675
      %v677 = vpop.f32.mrb[0].mxu0
      %v678 = vpop.f32.mrb[0].mxu0
      %v679 = vadd.f32 %v463, %v678
      %v680 = vpop.f32.mrb[0].mxu0
      %681 = vmatprep.mubr.bf16.mxu0 0
      %682 = vmatmul.mubr.bf16.gmra.mrb[0].mxu0 %v534
      %v683 = vpop.f32.mrb[0].mxu0
      %v684 = vadd.f32 %v463, %v683
      %v685 = vpop.f32.mrb[0].mxu0
      %v686 = vpop.f32.mrb[0].mxu0
      %v687 = vadd.f32 %v463, %v686
      %v688 = vpop.f32.mrb[0].mxu0
      %689 = vmatprep.mubr.bf16.mxu0 0
      %690 = vmatmul.mubr.bf16.gmra.mrb[0].mxu0 %v535
      %v691 = vpop.f32.mrb[0].mxu0
      %v692 = vadd.f32 %v463, %v691
      %v693 = vpop.f32.mrb[0].mxu0
      %v694 = vpop.f32.mrb[0].mxu0
      %v695 = vadd.f32 %v463, %v694
      %v696 = vpop.f32.mrb[0].mxu0
      %697 = vmatprep.mubr.bf16.mxu0 0
      %698 = vmatmul.mubr.bf16.gmra.mrb[0].mxu0 %v536
      %v699 = vpop.f32.mrb[0].mxu0
      %v700 = vadd.f32 %v463, %v699
      %v701 = vpop.f32.mrb[0].mxu0
      %v702 = vpop.f32.mrb[0].mxu0
      %v703 = vadd.f32 %v463, %v702
      %v704 = vpop.f32.mrb[0].mxu0
      %705 = vmatprep.mubr.bf16.mxu0 0
      %706 = vmatmul.mubr.bf16.gmra.mrb[0].mxu0 %v537
      %v707 = vpop.f32.mrb[0].mxu0
      %v708 = vadd.f32 %v463, %v707
      %v709 = vpop.f32.mrb[0].mxu0
      %v710 = vpop.f32.mrb[0].mxu0
      %v711 = vadd.f32 %v463, %v710
      %v712 = vpop.f32.mrb[0].mxu0
      %713 = vmatprep.mubr.bf16.mxu0 0
      %714 = vmatmul.mubr.bf16.gmra.mrb[0].mxu0 %v538
      %v715 = vpop.f32.mrb[0].mxu0
      %v716 = vadd.f32 %v463, %v715
      %v717 = vpop.f32.mrb[0].mxu0
      %v718 = vpop.f32.mrb[0].mxu0
      %v719 = vadd.f32 %v463, %v718
      %v720 = vpop.f32.mrb[0].mxu0
      %721 = vmatprep.mubr.bf16.mxu0 0
      %722 = vmatmul.mubr.bf16.gmra.mrb[0].mxu0 %v539
      %v723 = vpop.f32.mrb[0].mxu0
      %v724 = vadd.f32 %v463, %v723
      %v725 = vpop.f32.mrb[0].mxu0
      %v726 = vpop.f32.mrb[0].mxu0
      %v727 = vadd.f32 %v463, %v726
      %v728 = vpop.f32.mrb[0].mxu0
      %729 = vmatprep.mubr.bf16.mxu0 0
      %730 = vmatmul.mubr.bf16.gmra.mrb[0].mxu0 %v540
      %v731 = vpop.f32.mrb[0].mxu0
      %v732 = vadd.f32 %v463, %v731
      %v733 = vpop.f32.mrb[0].mxu0
      %v734 = vpop.f32.mrb[0].mxu0
      %v735 = vadd.f32 %v463, %v734
      %v736 = vpop.f32.mrb[0].mxu0
      %737 = vmatprep.mubr.bf16.mxu0 0
      %738 = vmatmul.mubr.bf16.gmra.mrb[0].mxu0 %v541
      %v739 = vpop.f32.mrb[0].mxu0
      %v740 = vadd.f32 %v463, %v739
      %v741 = vpop.f32.mrb[0].mxu0
      %v742 = vpop.f32.mrb[0].mxu0
      %v743 = vadd.f32 %v463, %v742
      %v744 = vpop.f32.mrb[0].mxu0
      %745 = vmatprep.mubr.bf16.mxu0 0
      %746 = vmatmul.mubr.bf16.gmra.mrb[0].mxu0 %v542
      %v747 = vpop.f32.mrb[0].mxu0
      %v748 = vadd.f32 %v463, %v747
      %v749 = vpop.f32.mrb[0].mxu0
      %v750 = vpop.f32.mrb[0].mxu0
      %v751 = vadd.f32 %v463, %v750
      %v752 = vpop.f32.mrb[0].mxu0
      %753 = vmatprep.mubr.bf16.mxu0 0
      %754 = vmatmul.mubr.bf16.gmra.mrb[0].mxu0 %v543
      %v755 = vpop.f32.mrb[0].mxu0
      %v756 = vadd.f32 %v463, %v755
      %v757 = vpop.f32.mrb[0].mxu0
      %v758 = vpop.f32.mrb[0].mxu0
      %v759 = vadd.f32 %v463, %v758
      %v760 = vpop.f32.mrb[0].mxu0
      %761 = vmatprep.mubr.bf16.mxu0 0
      %762 = vmatmul.mubr.bf16.gmra.mrb[0].mxu0 %v544
      %v763 = vpop.f32.mrb[0].mxu0
      %v764 = vadd.f32 %v463, %v763
      %v765 = vpop.f32.mrb[0].mxu0
      %v766 = vpop.f32.mrb[0].mxu0
      %v767 = vadd.f32 %v463, %v766
      %v768 = vpop.f32.mrb[0].mxu0
      %769 = vdwg.mxu0
      %v770 = vpack.c.bf16 %v647, %v644
      %v771 = vpack.c.bf16 %v655, %v652
      %v772 = vpack.c.bf16 %v663, %v660
      %v773 = vpack.c.bf16 %v671, %v668
      %v774 = vpack.c.bf16 %v679, %v676
      %v775 = vpack.c.bf16 %v687, %v684
      %v776 = vpack.c.bf16 %v695, %v692
      %v777 = vpack.c.bf16 %v703, %v700
      %v778 = vpack.c.bf16 %v711, %v708
      %v779 = vpack.c.bf16 %v719, %v716
      %v780 = vpack.c.bf16 %v727, %v724
      %v781 = vpack.c.bf16 %v735, %v732
      %v782 = vpack.c.bf16 %v743, %v740
      %v783 = vpack.c.bf16 %v751, %v748
      %v784 = vpack.c.bf16 %v759, %v756
      %v785 = vpack.c.bf16 %v767, %v764
      %v802 = vunpack.c.l.b16 %v770
      %v803 = vunpack.c.h.b16 %v770
      %v804 = vunpack.c.l.b16 %v771
      %v805 = vunpack.c.h.b16 %v771
      %v806 = vunpack.c.l.b16 %v772
      %v807 = vunpack.c.h.b16 %v772
      %v808 = vunpack.c.l.b16 %v773
      %v809 = vunpack.c.h.b16 %v773
      %v810 = vunpack.c.l.b16 %v774
      %v811 = vunpack.c.h.b16 %v774
      %v812 = vunpack.c.l.b16 %v775
      %v813 = vunpack.c.h.b16 %v775
      %v814 = vunpack.c.l.b16 %v776
      %v815 = vunpack.c.h.b16 %v776
      %v816 = vunpack.c.l.b16 %v777
      %v817 = vunpack.c.h.b16 %v777
      %v818 = vunpack.c.l.b16 %v778
      %v819 = vunpack.c.h.b16 %v778
      %v820 = vunpack.c.l.b16 %v779
      %v821 = vunpack.c.h.b16 %v779
      %v822 = vunpack.c.l.b16 %v780
      %v823 = vunpack.c.h.b16 %v780
      %v824 = vunpack.c.l.b16 %v781
      %v825 = vunpack.c.h.b16 %v781
      %v826 = vunpack.c.l.b16 %v782
      %v827 = vunpack.c.h.b16 %v782
      %v828 = vunpack.c.l.b16 %v783
      %v829 = vunpack.c.h.b16 %v783
      %v830 = vunpack.c.l.b16 %v784
      %v831 = vunpack.c.h.b16 %v784
      %v832 = vunpack.c.l.b16 %v785
      %v833 = vunpack.c.h.b16 %v785
      %v834 = vpack.c.b16 %v802, %v802
      %v835 = vpack.c.b16 %v803, %v803
      %v836 = vpack.c.b16 %v804, %v804
      %v837 = vpack.c.b16 %v805, %v805
      %v838 = vpack.c.b16 %v806, %v806
      %v839 = vpack.c.b16 %v807, %v807
      %v840 = vpack.c.b16 %v808, %v808
      %v841 = vpack.c.b16 %v809, %v809
      %v842 = vpack.c.b16 %v810, %v810
      %v843 = vpack.c.b16 %v811, %v811
      %v844 = vpack.c.b16 %v812, %v812
      %v845 = vpack.c.b16 %v813, %v813
      %v846 = vpack.c.b16 %v814, %v814
      %v847 = vpack.c.b16 %v815, %v815
      %v848 = vpack.c.b16 %v816, %v816
      %v849 = vpack.c.b16 %v817, %v817
      %v850 = vpack.c.b16 %v818, %v818
      %v851 = vpack.c.b16 %v819, %v819
      %v852 = vpack.c.b16 %v820, %v820
      %v853 = vpack.c.b16 %v821, %v821
      %v854 = vpack.c.b16 %v822, %v822
      %v855 = vpack.c.b16 %v823, %v823
      %v856 = vpack.c.b16 %v824, %v824
      %v857 = vpack.c.b16 %v825, %v825
      %v858 = vpack.c.b16 %v826, %v826
      %v859 = vpack.c.b16 %v827, %v827
      %v860 = vpack.c.b16 %v828, %v828
      %v861 = vpack.c.b16 %v829, %v829
      %v862 = vpack.c.b16 %v830, %v830
      %v863 = vpack.c.b16 %v831, %v831
      %v864 = vpack.c.b16 %v832, %v832
      %v865 = vpack.c.b16 %v833, %v833
      %898 = vst [vmem:[%s389] sm:$0xf] %v834
      %899 = vst [vmem:[%s389 + $0x4] sm:$0xf] %v835
      %900 = vst [vmem:[%s389 + $0x8] sm:$0xf] %v836
      %901 = vst [vmem:[%s389 + $0xc] sm:$0xf] %v837
      %902 = vst [vmem:[%s389 + $0x10] sm:$0xf] %v838
      %903 = vst [vmem:[%s389 + $0x14] sm:$0xf] %v839
      %904 = vst [vmem:[%s389 + $0x18] sm:$0xf] %v840
      %905 = vst [vmem:[%s389 + $0x1c] sm:$0xf] %v841
      %906 = vst [vmem:[%s389 + $0x20] sm:$0xf] %v842
      %907 = vst [vmem:[%s389 + $0x24] sm:$0xf] %v843
      %908 = vst [vmem:[%s389 + $0x28] sm:$0xf] %v844
      %909 = vst [vmem:[%s389 + $0x2c] sm:$0xf] %v845
      %910 = vst [vmem:[%s389 + $0x30] sm:$0xf] %v846
      %911 = vst [vmem:[%s389 + $0x34] sm:$0xf] %v847
      %912 = vst [vmem:[%s389 + $0x38] sm:$0xf] %v848
      %913 = vst [vmem:[%s389 + $0x3c] sm:$0xf] %v849
      %914 = vst [vmem:[%s389 + $0x40] sm:$0xf] %v850
      %915 = vst [vmem:[%s389 + $0x44] sm:$0xf] %v851
      %916 = vst [vmem:[%s389 + $0x48] sm:$0xf] %v852
      %917 = vst [vmem:[%s389 + $0x4c] sm:$0xf] %v853
      %918 = vst [vmem:[%s389 + $0x50] sm:$0xf] %v854
      %919 = vst [vmem:[%s389 + $0x54] sm:$0xf] %v855
      %920 = vst [vmem:[%s389 + $0x58] sm:$0xf] %v856
      %921 = vst [vmem:[%s389 + $0x5c] sm:$0xf] %v857
      %922 = vst [vmem:[%s389 + $0x60] sm:$0xf] %v858
      %923 = vst [vmem:[%s389 + $0x64] sm:$0xf] %v859
      %924 = vst [vmem:[%s389 + $0x68] sm:$0xf] %v860
      %925 = vst [vmem:[%s389 + $0x6c] sm:$0xf] %v861
      %926 = vst [vmem:[%s389 + $0x70] sm:$0xf] %v862
      %927 = vst [vmem:[%s389 + $0x74] sm:$0xf] %v863
      %928 = vst [vmem:[%s389 + $0x78] sm:$0xf] %v864
      %929 = vst [vmem:[%s389 + $0x7c] sm:$0xf] %v865
      %v930 = vadd.f32 %v644, %v647
      %v931 = vadd.f32 %v930, %v652
      %v932 = vadd.f32 %v931, %v655
      %v933 = vadd.f32 %v932, %v660
      %v934 = vadd.f32 %v933, %v663
      %v935 = vadd.f32 %v934, %v668
      %v936 = vadd.f32 %v935, %v671
      %v937 = vadd.f32 %v936, %v676
      %v938 = vadd.f32 %v937, %v679
      %v939 = vadd.f32 %v938, %v684
      %v940 = vadd.f32 %v939, %v687
      %v941 = vadd.f32 %v940, %v692
      %v942 = vadd.f32 %v941, %v695
      %v943 = vadd.f32 %v942, %v700
      %v944 = vadd.f32 %v943, %v703
      %v945 = vadd.f32 %v944, %v708
      %v946 = vadd.f32 %v945, %v711
      %v947 = vadd.f32 %v946, %v716
      %v948 = vadd.f32 %v947, %v719
      %v949 = vadd.f32 %v948, %v724
      %v950 = vadd.f32 %v949, %v727
      %v951 = vadd.f32 %v950, %v732
      %v952 = vadd.f32 %v951, %v735
      %v953 = vadd.f32 %v952, %v740
      %v954 = vadd.f32 %v953, %v743
      %v955 = vadd.f32 %v954, %v748
      %v956 = vadd.f32 %v955, %v751
      %v957 = vadd.f32 %v956, %v756
      %v958 = vadd.f32 %v957, %v759
      %v959 = vadd.f32 %v958, %v764
      %v960 = vadd.f32 %v959, %v767
      %v961 = vrot.slane %v960, 4
      %v962 = vadd.f32 %v960, %v961
      %v963 = vrot.slane %v962, 2
      %v964 = vadd.f32 %v962, %v963
      %v965 = vrot.slane %v964, 1
      %v966 = vadd.f32 %v964, %v965
      %967 = vst [vmem:[%s393] sm:$0x1] %v966
      %v968 = vsub.f32 %v644, %v463
      %v969 = vsub.f32 %v647, %v463
      %v970 = vsub.f32 %v652, %v463
      %v971 = vsub.f32 %v655, %v463
      %v972 = vsub.f32 %v660, %v463
      %v973 = vsub.f32 %v663, %v463
      %v974 = vsub.f32 %v668, %v463
      %v975 = vsub.f32 %v671, %v463
      %v976 = vsub.f32 %v676, %v463
      %v977 = vsub.f32 %v679, %v463
      %v978 = vsub.f32 %v684, %v463
      %v979 = vsub.f32 %v687, %v463
      %v980 = vsub.f32 %v692, %v463
      %v981 = vsub.f32 %v695, %v463
      %v982 = vsub.f32 %v700, %v463
      %v983 = vsub.f32 %v703, %v463
      %v984 = vsub.f32 %v708, %v463
      %v985 = vsub.f32 %v711, %v463
      %v986 = vsub.f32 %v716, %v463
      %v987 = vsub.f32 %v719, %v463
      %v988 = vsub.f32 %v724, %v463
      %v989 = vsub.f32 %v727, %v463
      %v990 = vsub.f32 %v732, %v463
      %v991 = vsub.f32 %v735, %v463
      %v992 = vsub.f32 %v740, %v463
      %v993 = vsub.f32 %v743, %v463
      %v994 = vsub.f32 %v748, %v463
      %v995 = vsub.f32 %v751, %v463
      %v996 = vsub.f32 %v756, %v463
      %v997 = vsub.f32 %v759, %v463
      %v998 = vsub.f32 %v764, %v463
      %v999 = vsub.f32 %v767, %v463
      %v1000 = vmul.f32 %v968, %v968
      %v1001 = vmul.f32 %v969, %v969
      %v1002 = vmul.f32 %v970, %v970
      %v1003 = vmul.f32 %v971, %v971
      %v1004 = vmul.f32 %v972, %v972
      %v1005 = vmul.f32 %v973, %v973
      %v1006 = vmul.f32 %v974, %v974
      %v1007 = vmul.f32 %v975, %v975
      %v1008 = vmul.f32 %v976, %v976
      %v1009 = vmul.f32 %v977, %v977
      %v1010 = vmul.f32 %v978, %v978
      %v1011 = vmul.f32 %v979, %v979
      %v1012 = vmul.f32 %v980, %v980
      %v1013 = vmul.f32 %v981, %v981
      %v1014 = vmul.f32 %v982, %v982
      %v1015 = vmul.f32 %v983, %v983
      %v1016 = vmul.f32 %v984, %v984
      %v1017 = vmul.f32 %v985, %v985
      %v1018 = vmul.f32 %v986, %v986
      %v1019 = vmul.f32 %v987, %v987
      %v1020 = vmul.f32 %v988, %v988
      %v1021 = vmul.f32 %v989, %v989
      %v1022 = vmul.f32 %v990, %v990
      %v1023 = vmul.f32 %v991, %v991
      %v1024 = vmul.f32 %v992, %v992
      %v1025 = vmul.f32 %v993, %v993
      %v1026 = vmul.f32 %v994, %v994
      %v1027 = vmul.f32 %v995, %v995
      %v1028 = vmul.f32 %v996, %v996
      %v1029 = vmul.f32 %v997, %v997
      %v1030 = vmul.f32 %v998, %v998
      %v1031 = vmul.f32 %v999, %v999
      %v1032 = vadd.f32 %v1000, %v1001
      %v1033 = vadd.f32 %v1032, %v1002
      %v1034 = vadd.f32 %v1033, %v1003
      %v1035 = vadd.f32 %v1034, %v1004
      %v1036 = vadd.f32 %v1035, %v1005
      %v1037 = vadd.f32 %v1036, %v1006
      %v1038 = vadd.f32 %v1037, %v1007
      %v1039 = vadd.f32 %v1038, %v1008
      %v1040 = vadd.f32 %v1039, %v1009
      %v1041 = vadd.f32 %v1040, %v1010
      %v1042 = vadd.f32 %v1041, %v1011
      %v1043 = vadd.f32 %v1042, %v1012
      %v1044 = vadd.f32 %v1043, %v1013
      %v1045 = vadd.f32 %v1044, %v1014
      %v1046 = vadd.f32 %v1045, %v1015
      %v1047 = vadd.f32 %v1046, %v1016
      %v1048 = vadd.f32 %v1047, %v1017
      %v1049 = vadd.f32 %v1048, %v1018
      %v1050 = vadd.f32 %v1049, %v1019
      %v1051 = vadd.f32 %v1050, %v1020
      %v1052 = vadd.f32 %v1051, %v1021
      %v1053 = vadd.f32 %v1052, %v1022
      %v1054 = vadd.f32 %v1053, %v1023
      %v1055 = vadd.f32 %v1054, %v1024
      %v1056 = vadd.f32 %v1055, %v1025
      %v1057 = vadd.f32 %v1056, %v1026
      %v1058 = vadd.f32 %v1057, %v1027
      %v1059 = vadd.f32 %v1058, %v1028
      %v1060 = vadd.f32 %v1059, %v1029
      %v1061 = vadd.f32 %v1060, %v1030
      %v1062 = vadd.f32 %v1061, %v1031
      %v1063 = vrot.slane %v1062, 4
      %v1064 = vadd.f32 %v1062, %v1063
      %v1065 = vrot.slane %v1064, 2
      %v1066 = vadd.f32 %v1064, %v1065
      %v1067 = vrot.slane %v1066, 1
      %v1068 = vadd.f32 %v1066, %v1067
      %1069 = vst [vmem:[%s396] sm:$0x1] %v1068
      %v1070 = vld [vmem:[%s4] sm:$0x1]
      %v1071 = vld [vmem:[%s3] sm:$0xf]
      %v1072 = vld [vmem:[%s3 + $0x4] sm:$0xf]
      %v1073 = vld [vmem:[%s3 + $0x8] sm:$0xf]
      %v1074 = vld [vmem:[%s3 + $0xc] sm:$0xf]
      %v1075 = vld [vmem:[%s3 + $0x10] sm:$0xf]
      %v1076 = vld [vmem:[%s3 + $0x14] sm:$0xf]
      %v1077 = vld [vmem:[%s3 + $0x18] sm:$0xf]
      %v1078 = vld [vmem:[%s3 + $0x1c] sm:$0xf]
      %v1079 = vld [vmem:[%s3 + $0x20] sm:$0xf]
      %v1080 = vld [vmem:[%s3 + $0x24] sm:$0xf]
      %v1081 = vld [vmem:[%s3 + $0x28] sm:$0xf]
      %v1082 = vld [vmem:[%s3 + $0x2c] sm:$0xf]
      %v1083 = vld [vmem:[%s3 + $0x30] sm:$0xf]
      %v1084 = vld [vmem:[%s3 + $0x34] sm:$0xf]
      %v1085 = vld [vmem:[%s3 + $0x38] sm:$0xf]
      %v1086 = vld [vmem:[%s3 + $0x3c] sm:$0xf]
      %v1088 = vlaneseq
      %v1089 = vshrl.u32 %v1088, 7
      %v1090 = vsub.s32 0, %v1089
      %v1091 = vrot.slane %v1070, %v1090
      %v1109 = vunpack.c.l.b16 %v1071
      %v1110 = vunpack.c.l.b16 %v1072
      %v1111 = vunpack.c.l.b16 %v1073
      %v1112 = vunpack.c.l.b16 %v1074
      %v1113 = vunpack.c.l.b16 %v1075
      %v1114 = vunpack.c.l.b16 %v1076
      %v1115 = vunpack.c.l.b16 %v1077
      %v1116 = vunpack.c.l.b16 %v1078
      %v1117 = vunpack.c.l.b16 %v1079
      %v1118 = vunpack.c.l.b16 %v1080
      %v1119 = vunpack.c.l.b16 %v1081
      %v1120 = vunpack.c.l.b16 %v1082
      %v1121 = vunpack.c.l.b16 %v1083
      %v1122 = vunpack.c.l.b16 %v1084
      %v1123 = vunpack.c.l.b16 %v1085
      %v1124 = vunpack.c.l.b16 %v1086
      %v1125 = vpack.c.b16 %v1110, %v1109
      %v1126 = vpack.c.b16 %v1112, %v1111
      %v1127 = vpack.c.b16 %v1114, %v1113
      %v1128 = vpack.c.b16 %v1116, %v1115
      %v1129 = vpack.c.b16 %v1118, %v1117
      %v1130 = vpack.c.b16 %v1120, %v1119
      %v1131 = vpack.c.b16 %v1122, %v1121
      %v1132 = vpack.c.b16 %v1124, %v1123
      %1141 = vmatprep.subr.bf16.mxu0 0
      %1142 = vmatpush1.bf16.msra.mxu0 %v1125
      %1143 = vmatprep.subr.bf16.mxu0 0
      %1144 = vmatpush1.bf16.msra.mxu0 %v1126
      %1145 = vmatprep.subr.bf16.mxu0 0
      %1146 = vmatpush1.bf16.msra.mxu0 %v1127
      %1147 = vmatprep.subr.bf16.mxu0 0
      %1148 = vmatpush1.bf16.msra.mxu0 %v1128
      %1149 = vmatprep.subr.bf16.mxu0 0
      %1150 = vmatpush1.bf16.msra.mxu0 %v1129
      %1151 = vmatprep.subr.bf16.mxu0 0
      %1152 = vmatpush1.bf16.msra.mxu0 %v1130
      %1153 = vmatprep.subr.bf16.mxu0 0
      %1154 = vmatpush1.bf16.msra.mxu0 %v1131
      %1155 = vmatprep.subr.bf16.mxu0 0
      %1156 = vmatpush1.bf16.msra.mxu0 %v1132
      %1157 = vmatprep.subr.bf16.mxu0 0
      %1158 = vmatpush1.bf16.msra.mxu0 0
      %1159 = vmatprep.subr.bf16.mxu0 0
      %1160 = vmatpush1.bf16.msra.mxu0 0
      %1161 = vmatprep.subr.bf16.mxu0 0
      %1162 = vmatpush1.bf16.msra.mxu0 0
      %1163 = vmatprep.subr.bf16.mxu0 0
      %1164 = vmatpush1.bf16.msra.mxu0 0
      %1165 = vmatprep.subr.bf16.mxu0 0
      %1166 = vmatpush1.bf16.msra.mxu0 0
      %1167 = vmatprep.subr.bf16.mxu0 0
      %1168 = vmatpush1.bf16.msra.mxu0 0
      %1169 = vmatprep.subr.bf16.mxu0 0
      %1170 = vmatpush1.bf16.msra.mxu0 0
      %1171 = vmatprep.subr.bf16.mxu0 0
      %1172 = vmatpush1.bf16.msra.mxu0 0
      %1173 = vmatprep.mubr.bf16.mxu0 0
      %1174 = vmatmul.mubr.bf16.gmra.mrb[0].mxu0 %v529
      %v1175 = vpop.f32.mrb[0].mxu0
      %v1176 = vadd.f32 %v1091, %v1175
      %v1177 = vpop.f32.mrb[0].mxu0
      %v1178 = vpop.f32.mrb[0].mxu0
      %v1179 = vadd.f32 %v1091, %v1178
      %v1180 = vpop.f32.mrb[0].mxu0
      %1181 = vmatprep.mubr.bf16.mxu0 0
      %1182 = vmatmul.mubr.bf16.gmra.mrb[0].mxu0 %v530
      %v1183 = vpop.f32.mrb[0].mxu0
      %v1184 = vadd.f32 %v1091, %v1183
      %v1185 = vpop.f32.mrb[0].mxu0
      %v1186 = vpop.f32.mrb[0].mxu0
      %v1187 = vadd.f32 %v1091, %v1186
      %v1188 = vpop.f32.mrb[0].mxu0
      %1189 = vmatprep.mubr.bf16.mxu0 0
      %1190 = vmatmul.mubr.bf16.gmra.mrb[0].mxu0 %v531
      %v1191 = vpop.f32.mrb[0].mxu0
      %v1192 = vadd.f32 %v1091, %v1191
      %v1193 = vpop.f32.mrb[0].mxu0
      %v1194 = vpop.f32.mrb[0].mxu0
      %v1195 = vadd.f32 %v1091, %v1194
      %v1196 = vpop.f32.mrb[0].mxu0
      %1197 = vmatprep.mubr.bf16.mxu0 0
      %1198 = vmatmul.mubr.bf16.gmra.mrb[0].mxu0 %v532
      %v1199 = vpop.f32.mrb[0].mxu0
      %v1200 = vadd.f32 %v1091, %v1199
      %v1201 = vpop.f32.mrb[0].mxu0
      %v1202 = vpop.f32.mrb[0].mxu0
      %v1203 = vadd.f32 %v1091, %v1202
      %v1204 = vpop.f32.mrb[0].mxu0
      %1205 = vmatprep.mubr.bf16.mxu0 0
      %1206 = vmatmul.mubr.bf16.gmra.mrb[0].mxu0 %v533
      %v1207 = vpop.f32.mrb[0].mxu0
      %v1208 = vadd.f32 %v1091, %v1207
      %v1209 = vpop.f32.mrb[0].mxu0
      %v1210 = vpop.f32.mrb[0].mxu0
      %v1211 = vadd.f32 %v1091, %v1210
      %v1212 = vpop.f32.mrb[0].mxu0
      %1213 = vmatprep.mubr.bf16.mxu0 0
      %1214 = vmatmul.mubr.bf16.gmra.mrb[0].mxu0 %v534
      %v1215 = vpop.f32.mrb[0].mxu0
      %v1216 = vadd.f32 %v1091, %v1215
      %v1217 = vpop.f32.mrb[0].mxu0
      %v1218 = vpop.f32.mrb[0].mxu0
      %v1219 = vadd.f32 %v1091, %v1218
      %v1220 = vpop.f32.mrb[0].mxu0
      %1221 = vmatprep.mubr.bf16.mxu0 0
      %1222 = vmatmul.mubr.bf16.gmra.mrb[0].mxu0 %v535
      %v1223 = vpop.f32.mrb[0].mxu0
      %v1224 = vadd.f32 %v1091, %v1223
      %v1225 = vpop.f32.mrb[0].mxu0
      %v1226 = vpop.f32.mrb[0].mxu0
      %v1227 = vadd.f32 %v1091, %v1226
      %v1228 = vpop.f32.mrb[0].mxu0
      %1229 = vmatprep.mubr.bf16.mxu0 0
      %1230 = vmatmul.mubr.bf16.gmra.mrb[0].mxu0 %v536
      %v1231 = vpop.f32.mrb[0].mxu0
      %v1232 = vadd.f32 %v1091, %v1231
      %v1233 = vpop.f32.mrb[0].mxu0
      %v1234 = vpop.f32.mrb[0].mxu0
      %v1235 = vadd.f32 %v1091, %v1234
      %v1236 = vpop.f32.mrb[0].mxu0
      %1237 = vmatprep.mubr.bf16.mxu0 0
      %1238 = vmatmul.mubr.bf16.gmra.mrb[0].mxu0 %v537
      %v1239 = vpop.f32.mrb[0].mxu0
      %v1240 = vadd.f32 %v1091, %v1239
      %v1241 = vpop.f32.mrb[0].mxu0
      %v1242 = vpop.f32.mrb[0].mxu0
      %v1243 = vadd.f32 %v1091, %v1242
      %v1244 = vpop.f32.mrb[0].mxu0
      %1245 = vmatprep.mubr.bf16.mxu0 0
      %1246 = vmatmul.mubr.bf16.gmra.mrb[0].mxu0 %v538
      %v1247 = vpop.f32.mrb[0].mxu0
      %v1248 = vadd.f32 %v1091, %v1247
      %v1249 = vpop.f32.mrb[0].mxu0
      %v1250 = vpop.f32.mrb[0].mxu0
      %v1251 = vadd.f32 %v1091, %v1250
      %v1252 = vpop.f32.mrb[0].mxu0
      %1253 = vmatprep.mubr.bf16.mxu0 0
      %1254 = vmatmul.mubr.bf16.gmra.mrb[0].mxu0 %v539
      %v1255 = vpop.f32.mrb[0].mxu0
      %v1256 = vadd.f32 %v1091, %v1255
      %v1257 = vpop.f32.mrb[0].mxu0
      %v1258 = vpop.f32.mrb[0].mxu0
      %v1259 = vadd.f32 %v1091, %v1258
      %v1260 = vpop.f32.mrb[0].mxu0
      %1261 = vmatprep.mubr.bf16.mxu0 0
      %1262 = vmatmul.mubr.bf16.gmra.mrb[0].mxu0 %v540
      %v1263 = vpop.f32.mrb[0].mxu0
      %v1264 = vadd.f32 %v1091, %v1263
      %v1265 = vpop.f32.mrb[0].mxu0
      %v1266 = vpop.f32.mrb[0].mxu0
      %v1267 = vadd.f32 %v1091, %v1266
      %v1268 = vpop.f32.mrb[0].mxu0
      %1269 = vmatprep.mubr.bf16.mxu0 0
      %1270 = vmatmul.mubr.bf16.gmra.mrb[0].mxu0 %v541
      %v1271 = vpop.f32.mrb[0].mxu0
      %v1272 = vadd.f32 %v1091, %v1271
      %v1273 = vpop.f32.mrb[0].mxu0
      %v1274 = vpop.f32.mrb[0].mxu0
      %v1275 = vadd.f32 %v1091, %v1274
      %v1276 = vpop.f32.mrb[0].mxu0
      %1277 = vmatprep.mubr.bf16.mxu0 0
      %1278 = vmatmul.mubr.bf16.gmra.mrb[0].mxu0 %v542
      %v1279 = vpop.f32.mrb[0].mxu0
      %v1280 = vadd.f32 %v1091, %v1279
      %v1281 = vpop.f32.mrb[0].mxu0
      %v1282 = vpop.f32.mrb[0].mxu0
      %v1283 = vadd.f32 %v1091, %v1282
      %v1284 = vpop.f32.mrb[0].mxu0
      %1285 = vmatprep.mubr.bf16.mxu0 0
      %1286 = vmatmul.mubr.bf16.gmra.mrb[0].mxu0 %v543
      %v1287 = vpop.f32.mrb[0].mxu0
      %v1288 = vadd.f32 %v1091, %v1287
      %v1289 = vpop.f32.mrb[0].mxu0
      %v1290 = vpop.f32.mrb[0].mxu0
      %v1291 = vadd.f32 %v1091, %v1290
      %v1292 = vpop.f32.mrb[0].mxu0
      %1293 = vmatprep.mubr.bf16.mxu0 0
      %1294 = vmatmul.mubr.bf16.gmra.mrb[0].mxu0 %v544
      %v1295 = vpop.f32.mrb[0].mxu0
      %v1296 = vadd.f32 %v1091, %v1295
      %v1297 = vpop.f32.mrb[0].mxu0
      %v1298 = vpop.f32.mrb[0].mxu0
      %v1299 = vadd.f32 %v1091, %v1298
      %v1300 = vpop.f32.mrb[0].mxu0
      %1301 = vdwg.mxu0
      %1302 = vst [vmem:[%s401] sm:$0xff] %v1176
      %1303 = vst [vmem:[%s401 + $0x8] sm:$0xff] %v1179
      %1304 = vst [vmem:[%s401 + $0x10] sm:$0xff] %v1184
      %1305 = vst [vmem:[%s401 + $0x18] sm:$0xff] %v1187
      %1306 = vst [vmem:[%s401 + $0x20] sm:$0xff] %v1192
      %1307 = vst [vmem:[%s401 + $0x28] sm:$0xff] %v1195
      %1308 = vst [vmem:[%s401 + $0x30] sm:$0xff] %v1200
      %1309 = vst [vmem:[%s401 + $0x38] sm:$0xff] %v1203
      %1310 = vst [vmem:[%s401 + $0x40] sm:$0xff] %v1208
      %1311 = vst [vmem:[%s401 + $0x48] sm:$0xff] %v1211
      %1312 = vst [vmem:[%s401 + $0x50] sm:$0xff] %v1216
      %1313 = vst [vmem:[%s401 + $0x58] sm:$0xff] %v1219
      %1314 = vst [vmem:[%s401 + $0x60] sm:$0xff] %v1224
      %1315 = vst [vmem:[%s401 + $0x68] sm:$0xff] %v1227
      %1316 = vst [vmem:[%s401 + $0x70] sm:$0xff] %v1232
      %1317 = vst [vmem:[%s401 + $0x78] sm:$0xff] %v1235
      %1318 = vst [vmem:[%s401 + $0x80] sm:$0xff] %v1240
      %1319 = vst [vmem:[%s401 + $0x88] sm:$0xff] %v1243
      %1320 = vst [vmem:[%s401 + $0x90] sm:$0xff] %v1248
      %1321 = vst [vmem:[%s401 + $0x98] sm:$0xff] %v1251
      %1322 = vst [vmem:[%s401 + $0xa0] sm:$0xff] %v1256
      %1323 = vst [vmem:[%s401 + $0xa8] sm:$0xff] %v1259
      %1324 = vst [vmem:[%s401 + $0xb0] sm:$0xff] %v1264
      %1325 = vst [vmem:[%s401 + $0xb8] sm:$0xff] %v1267
      %1326 = vst [vmem:[%s401 + $0xc0] sm:$0xff] %v1272
      %1327 = vst [vmem:[%s401 + $0xc8] sm:$0xff] %v1275
      %1328 = vst [vmem:[%s401 + $0xd0] sm:$0xff] %v1280
      %1329 = vst [vmem:[%s401 + $0xd8] sm:$0xff] %v1283
      %1330 = vst [vmem:[%s401 + $0xe0] sm:$0xff] %v1288
      %1331 = vst [vmem:[%s401 + $0xe8] sm:$0xff] %v1291
      %1332 = vst [vmem:[%s401 + $0xf0] sm:$0xff] %v1296
      %1333 = vst [vmem:[%s401 + $0xf8] sm:$0xff] %v1299
      %v1334 = vadd.f32 %v1176, %v1179
      %v1335 = vadd.f32 %v1334, %v1184
      %v1336 = vadd.f32 %v1335, %v1187
      %v1337 = vadd.f32 %v1336, %v1192
      %v1338 = vadd.f32 %v1337, %v1195
      %v1339 = vadd.f32 %v1338, %v1200
      %v1340 = vadd.f32 %v1339, %v1203
      %v1341 = vadd.f32 %v1340, %v1208
      %v1342 = vadd.f32 %v1341, %v1211
      %v1343 = vadd.f32 %v1342, %v1216
      %v1344 = vadd.f32 %v1343, %v1219
      %v1345 = vadd.f32 %v1344, %v1224
      %v1346 = vadd.f32 %v1345, %v1227
      %v1347 = vadd.f32 %v1346, %v1232
      %v1348 = vadd.f32 %v1347, %v1235
      %v1349 = vadd.f32 %v1348, %v1240
      %v1350 = vadd.f32 %v1349, %v1243
      %v1351 = vadd.f32 %v1350, %v1248
      %v1352 = vadd.f32 %v1351, %v1251
      %v1353 = vadd.f32 %v1352, %v1256
      %v1354 = vadd.f32 %v1353, %v1259
      %v1355 = vadd.f32 %v1354, %v1264
      %v1356 = vadd.f32 %v1355, %v1267
      %v1357 = vadd.f32 %v1356, %v1272
      %v1358 = vadd.f32 %v1357, %v1275
      %v1359 = vadd.f32 %v1358, %v1280
      %v1360 = vadd.f32 %v1359, %v1283
      %v1361 = vadd.f32 %v1360, %v1288
      %v1362 = vadd.f32 %v1361, %v1291
      %v1363 = vadd.f32 %v1362, %v1296
      %v1364 = vadd.f32 %v1363, %v1299
      %v1365 = vrot.slane %v1364, 4
      %v1366 = vadd.f32 %v1364, %v1365
      %v1367 = vrot.slane %v1366, 2
      %v1368 = vadd.f32 %v1366, %v1367
      %v1369 = vrot.slane %v1368, 1
      %v1370 = vadd.f32 %v1368, %v1369
      %1371 = vst [vmem:[%s405] sm:$0x1] %v1370
      %v1372 = vsub.f32 %v1176, %v1091
      %v1373 = vsub.f32 %v1179, %v1091
      %v1374 = vsub.f32 %v1184, %v1091
      %v1375 = vsub.f32 %v1187, %v1091
      %v1376 = vsub.f32 %v1192, %v1091
      %v1377 = vsub.f32 %v1195, %v1091
      %v1378 = vsub.f32 %v1200, %v1091
      %v1379 = vsub.f32 %v1203, %v1091
      %v1380 = vsub.f32 %v1208, %v1091
      %v1381 = vsub.f32 %v1211, %v1091
      %v1382 = vsub.f32 %v1216, %v1091
      %v1383 = vsub.f32 %v1219, %v1091
      %v1384 = vsub.f32 %v1224, %v1091
      %v1385 = vsub.f32 %v1227, %v1091
      %v1386 = vsub.f32 %v1232, %v1091
      %v1387 = vsub.f32 %v1235, %v1091
      %v1388 = vsub.f32 %v1240, %v1091
      %v1389 = vsub.f32 %v1243, %v1091
      %v1390 = vsub.f32 %v1248, %v1091
      %v1391 = vsub.f32 %v1251, %v1091
      %v1392 = vsub.f32 %v1256, %v1091
      %v1393 = vsub.f32 %v1259, %v1091
      %v1394 = vsub.f32 %v1264, %v1091
      %v1395 = vsub.f32 %v1267, %v1091
      %v1396 = vsub.f32 %v1272, %v1091
      %v1397 = vsub.f32 %v1275, %v1091
      %v1398 = vsub.f32 %v1280, %v1091
      %v1399 = vsub.f32 %v1283, %v1091
      %v1400 = vsub.f32 %v1288, %v1091
      %v1401 = vsub.f32 %v1291, %v1091
      %v1402 = vsub.f32 %v1296, %v1091
      %v1403 = vsub.f32 %v1299, %v1091
      %v1404 = vmul.f32 %v1372, %v1372
      %v1405 = vmul.f32 %v1373, %v1373
      %v1406 = vmul.f32 %v1374, %v1374
      %v1407 = vmul.f32 %v1375, %v1375
      %v1408 = vmul.f32 %v1376, %v1376
      %v1409 = vmul.f32 %v1377, %v1377
      %v1410 = vmul.f32 %v1378, %v1378
      %v1411 = vmul.f32 %v1379, %v1379
      %v1412 = vmul.f32 %v1380, %v1380
      %v1413 = vmul.f32 %v1381, %v1381
      %v1414 = vmul.f32 %v1382, %v1382
      %v1415 = vmul.f32 %v1383, %v1383
      %v1416 = vmul.f32 %v1384, %v1384
      %v1417 = vmul.f32 %v1385, %v1385
      %v1418 = vmul.f32 %v1386, %v1386
      %v1419 = vmul.f32 %v1387, %v1387
      %v1420 = vmul.f32 %v1388, %v1388
      %v1421 = vmul.f32 %v1389, %v1389
      %v1422 = vmul.f32 %v1390, %v1390
      %v1423 = vmul.f32 %v1391, %v1391
      %v1424 = vmul.f32 %v1392, %v1392
      %v1425 = vmul.f32 %v1393, %v1393
      %v1426 = vmul.f32 %v1394, %v1394
      %v1427 = vmul.f32 %v1395, %v1395
      %v1428 = vmul.f32 %v1396, %v1396
      %v1429 = vmul.f32 %v1397, %v1397
      %v1430 = vmul.f32 %v1398, %v1398
      %v1431 = vmul.f32 %v1399, %v1399
      %v1432 = vmul.f32 %v1400, %v1400
      %v1433 = vmul.f32 %v1401, %v1401
      %v1434 = vmul.f32 %v1402, %v1402
      %v1435 = vmul.f32 %v1403, %v1403
      %v1436 = vadd.f32 %v1404, %v1405
      %v1437 = vadd.f32 %v1436, %v1406
      %v1438 = vadd.f32 %v1437, %v1407
      %v1439 = vadd.f32 %v1438, %v1408
      %v1440 = vadd.f32 %v1439, %v1409
      %v1441 = vadd.f32 %v1440, %v1410
      %v1442 = vadd.f32 %v1441, %v1411
      %v1443 = vadd.f32 %v1442, %v1412
      %v1444 = vadd.f32 %v1443, %v1413
      %v1445 = vadd.f32 %v1444, %v1414
      %v1446 = vadd.f32 %v1445, %v1415
      %v1447 = vadd.f32 %v1446, %v1416
      %v1448 = vadd.f32 %v1447, %v1417
      %v1449 = vadd.f32 %v1448, %v1418
      %v1450 = vadd.f32 %v1449, %v1419
      %v1451 = vadd.f32 %v1450, %v1420
      %v1452 = vadd.f32 %v1451, %v1421
      %v1453 = vadd.f32 %v1452, %v1422
      %v1454 = vadd.f32 %v1453, %v1423
      %v1455 = vadd.f32 %v1454, %v1424
      %v1456 = vadd.f32 %v1455, %v1425
      %v1457 = vadd.f32 %v1456, %v1426
      %v1458 = vadd.f32 %v1457, %v1427
      %v1459 = vadd.f32 %v1458, %v1428
      %v1460 = vadd.f32 %v1459, %v1429
      %v1461 = vadd.f32 %v1460, %v1430
      %v1462 = vadd.f32 %v1461, %v1431
      %v1463 = vadd.f32 %v1462, %v1432
      %v1464 = vadd.f32 %v1463, %v1433
      %v1465 = vadd.f32 %v1464, %v1434
      %v1466 = vadd.f32 %v1465, %v1435
      %v1467 = vrot.slane %v1466, 4
      %v1468 = vadd.f32 %v1466, %v1467
      %v1469 = vrot.slane %v1468, 2
      %v1470 = vadd.f32 %v1468, %v1469
      %v1471 = vrot.slane %v1470, 1
      %v1472 = vadd.f32 %v1470, %v1471
      %1473 = vst [vmem:[%s408] sm:$0x1] %v1472
      %s1474 = smul.u32 32, %s22
      %p1475 = scmp.lt.s32.totalorder %s1474, 63
      %s1476 = scalar_select %p1475, %s1474, 63
      %s1477 = smul.addr %s1476, 4
      %s1478 = scalar_lea.vmem %s5, %s1477
      %p1479 = scmp.lt.s32.totalorder %s22, 1
      %s1480 = scalar_select %p1479, %s22, 1
      %s1481 = scalar_lea.vmem %s6, %s1480
      %p1482 = scmp.lt.s32.totalorder %s22, 1
      %s1483 = scalar_select %p1482, %s22, 1
      %s1484 = scalar_lea.vmem %s7, %s1483
      %s1485 = smul.u32 32, %s22
      %p1486 = scmp.lt.s32.totalorder %s1485, 63
      %s1487 = scalar_select %p1486, %s1485, 63
      %s1488 = smul.addr %s1487, 8
      %s1489 = scalar_lea.vmem %s8, %s1488
      %p1490 = scmp.lt.s32.totalorder %s22, 1
      %s1491 = scalar_select %p1490, %s22, 1
      %s1492 = scalar_lea.vmem %s9, %s1491
      %p1493 = scmp.lt.s32.totalorder %s22, 1
      %s1494 = scalar_select %p1493, %s22, 1
      %s1495 = scalar_lea.vmem %s10, %s1494
      // Predicated region
      $region41: #{encoder_forward.3} parent=39 // pred_check
        %p1496 = pneg %p150
      $region42: #{encoder_forward.3} parent=39 // pred_check_branch
        %1498 = sbr.rel (%p1496) target = $region44
      $region43: #{encoder_forward.3} parent=39 // pred_region
        %s1499 = smul.u32 32, %s22
      $region44: #{encoder_forward.3} parent=39 // pred_fallthru
        _
      // Predicated region
      $region45: #{encoder_forward.3} parent=39 // pred_check
        %p1500 = pneg %p176
      $region46: #{encoder_forward.3} parent=39 // pred_check_branch
        %1502 = sbr.rel (%p1500) target = $region48
      $region47: #{encoder_forward.3} parent=39 // pred_region
        _
      $region48: #{encoder_forward.3} parent=39 // pred_fallthru
        _
      // Predicated region
      $region49: #{encoder_forward.3} parent=39 // pred_check
        %p1503 = pneg %p202
      $region50: #{encoder_forward.3} parent=39 // pred_check_branch
        %1505 = sbr.rel (%p1503) target = $region52
      $region51: #{encoder_forward.3} parent=39 // pred_region
        _
      $region52: #{encoder_forward.3} parent=39 // pred_fallthru
        _
      // Predicated region
      $region53: #{encoder_forward.3} parent=39 // pred_check
        %p1506 = pneg %p228
      $region54: #{encoder_forward.3} parent=39 // pred_check_branch
        %1508 = sbr.rel (%p1506) target = $region56
      $region55: #{encoder_forward.3} parent=39 // pred_region
        %s1509 = smul.u32 32, %s22
      $region56: #{encoder_forward.3} parent=39 // pred_fallthru
        _
      // Predicated region
      $region57: #{encoder_forward.3} parent=39 // pred_check
        %p1510 = pneg %p254
      $region58: #{encoder_forward.3} parent=39 // pred_check_branch
        %1512 = sbr.rel (%p1510) target = $region60
      $region59: #{encoder_forward.3} parent=39 // pred_region
        _
      $region60: #{encoder_forward.3} parent=39 // pred_fallthru
        _
      // Predicated region
      $region61: #{encoder_forward.3} parent=39 // pred_check
        %p1513 = pneg %p280
      $region62: #{encoder_forward.3} parent=39 // pred_check_branch
        %1515 = sbr.rel (%p1513) target = $region64
      $region63: #{encoder_forward.3} parent=39 // pred_region
        _
      $region64: #{encoder_forward.3} parent=39 // pred_fallthru
        _
    $region40: #{encoder_forward.3} parent=5 // pred_fallthru
      _
    %p1516 = scmp.le.s32.totalorder 2, %s17
    // Predicated region
    $region65: #{encoder_forward.3} parent=5 // pred_check
      %p1517 = pneg %p1516
    $region66: #{encoder_forward.3} parent=5 // pred_check_branch
      %1519 = sbr.rel (%p1517) target = $region68
    $region67: #{encoder_forward.3} parent=5 // pred_region
      %s1520 = ssub.s32 %s17, 2
      // Predicated region
      $region69: #{encoder_forward.3} parent=67 // pred_check
        %p1521 = pneg %p156
      $region70: #{encoder_forward.3} parent=67 // pred_check_branch
        %1523 = sbr.rel (%p1521) target = $region72
      $region71: #{encoder_forward.3} parent=67 // pred_region
        %s1524 = smul.u32 32, %s23
        %p1525 = scmp.lt.s32.totalorder %s1524, 63
        %s1526 = scalar_select %p1525, %s1524, 63
        %s1527 = smul.addr %s1526, 4
        %s1528 = scalar_lea.vmem %s5, %s1527
      $region72: #{encoder_forward.3} parent=67 // pred_fallthru
        _
      // Predicated region
      $region73: #{encoder_forward.3} parent=67 // pred_check
        %p1529 = pneg %p182
      $region74: #{encoder_forward.3} parent=67 // pred_check_branch
        %1531 = sbr.rel (%p1529) target = $region76
      $region75: #{encoder_forward.3} parent=67 // pred_region
        %p1532 = scmp.lt.s32.totalorder %s23, 1
        %s1533 = scalar_select %p1532, %s23, 1
        %s1534 = scalar_lea.vmem %s6, %s1533
      $region76: #{encoder_forward.3} parent=67 // pred_fallthru
        _
      // Predicated region
      $region77: #{encoder_forward.3} parent=67 // pred_check
        %p1535 = pneg %p208
      $region78: #{encoder_forward.3} parent=67 // pred_check_branch
        %1537 = sbr.rel (%p1535) target = $region80
      $region79: #{encoder_forward.3} parent=67 // pred_region
        %p1538 = scmp.lt.s32.totalorder %s23, 1
        %s1539 = scalar_select %p1538, %s23, 1
        %s1540 = scalar_lea.vmem %s7, %s1539
      $region80: #{encoder_forward.3} parent=67 // pred_fallthru
        _
      // Predicated region
      $region81: #{encoder_forward.3} parent=67 // pred_check
        %p1541 = pneg %p234
      $region82: #{encoder_forward.3} parent=67 // pred_check_branch
        %1543 = sbr.rel (%p1541) target = $region84
      $region83: #{encoder_forward.3} parent=67 // pred_region
        %s1544 = smul.u32 32, %s23
        %p1545 = scmp.lt.s32.totalorder %s1544, 63
        %s1546 = scalar_select %p1545, %s1544, 63
        %s1547 = smul.addr %s1546, 8
        %s1548 = scalar_lea.vmem %s8, %s1547
      $region84: #{encoder_forward.3} parent=67 // pred_fallthru
        _
      // Predicated region
      $region85: #{encoder_forward.3} parent=67 // pred_check
        %p1549 = pneg %p260
      $region86: #{encoder_forward.3} parent=67 // pred_check_branch
        %1551 = sbr.rel (%p1549) target = $region88
      $region87: #{encoder_forward.3} parent=67 // pred_region
        %p1552 = scmp.lt.s32.totalorder %s23, 1
        %s1553 = scalar_select %p1552, %s23, 1
        %s1554 = scalar_lea.vmem %s9, %s1553
      $region88: #{encoder_forward.3} parent=67 // pred_fallthru
        _
      // Predicated region
      $region89: #{encoder_forward.3} parent=67 // pred_check
        %p1555 = pneg %p286
      $region90: #{encoder_forward.3} parent=67 // pred_check_branch
        %1557 = sbr.rel (%p1555) target = $region92
      $region91: #{encoder_forward.3} parent=67 // pred_region
        %p1558 = scmp.lt.s32.totalorder %s23, 1
        %s1559 = scalar_select %p1558, %s23, 1
        %s1560 = scalar_lea.vmem %s10, %s1559
      $region92: #{encoder_forward.3} parent=67 // pred_fallthru
        _
    $region68: #{encoder_forward.3} parent=5 // pred_fallthru
      _
  $region6: #{encoder_forward.3} parent=0 // loop_footer
    %s21 = sadd.s32 1, %s17
  $region7: #{encoder_forward.3} parent=0 // loop_footer_branch
    %16 = sbr.rel target = $region3
  $region8: #{encoder_forward.3} parent=0 // loop_exit
    _

// kernel: encoder_forward.5
$region0: #{encoder_forward.5}
  #allocation0 [shape = 'u32[]', space=smem, size = 0x4, offset = 0x4, fixed_abs, tag = 'smem constant byte address 0x4 - core index']
  #allocation1 [shape = 'u32[144,128]{1,0:T(1,128)}', space=vmem, size = 0x12000, scoped, tag = 'internal scratch']
  %s0 = inlined_call_operand.vmem [shape: f32[512,128], index: 0, kind: input, shape index: {}]
  %s1 = inlined_call_operand.vmem [shape: f32[1,128], index: 1, kind: input, shape index: {}]
  %s2 = inlined_call_operand.vmem [shape: f32[1,128], index: 2, kind: input, shape index: {}]
  %s3 = inlined_call_operand.vmem [shape: f32[512,128], index: 3, kind: input, shape index: {}]
  %s4 = inlined_call_operand.vmem [shape: f32[1,128], index: 4, kind: input, shape index: {}]
  %s5 = inlined_call_operand.vmem [shape: f32[1,128], index: 5, kind: input, shape index: {}]
  %s6 = inlined_call_operand.vmem [shape: f32[512,128], index: 6, kind: output, shape index: {}]
  %s7 = sld [smem:[#allocation0]]
  $region57: #{encoder_forward.5} parent=0
    _
  %s9 = ssub.s32 1, %s7
  %s10 = scalar_select 0, %s9, %s7
  loop: start=0, step=1, limit=4
  $region2: #{encoder_forward.5} parent=0 // loop_pre_header
    _
  $region3: #{encoder_forward.5} parent=0 // loop_header
    %s12 = sphi 0, %s16
    %p13 = scmp.ge.s32.totalorder %s12, 4
    %s22 = sphi 0, %s24
    %s25 = sphi 0, %s22
    %s26 = sphi 0, %s25
    %s42 = sphi 0, %s26
    %s46 = sphi 0, %s46
    %s48 = sphi 0, %s46
    %s49 = sphi 0, %s48
    %s63 = sphi 0, %s49
    %s67 = sphi 0, %s67
    %s69 = sphi 0, %s67
    %s70 = sphi 0, %s69
    %s84 = sphi 0, %s70
    %s90 = sphi 0, %s92
    %s93 = sphi 0, %s90
    %s94 = sphi 0, %s93
    %s110 = sphi 0, %s94
    %s114 = sphi 0, %s114
    %s116 = sphi 0, %s114
    %s117 = sphi 0, %s116
    %s131 = sphi 0, %s117
    %s135 = sphi 0, %s135
    %s137 = sphi 0, %s135
    %s138 = sphi 0, %s137
    %s152 = sphi 0, %s138
    %s158 = sphi 0, %s160
    %s161 = sphi 0, %s158
    %s162 = sphi 0, %s161
    %s178 = sphi 0, %s162
  $region4: #{encoder_forward.5} parent=0 // loop_header_branch
    %15 = sbr.rel (%p13) target = $region8
  $region5: #{encoder_forward.5} parent=0 // loop_body
    %s17 = ssub.s32 %s12, 1
    %s18 = ssub.s32 %s12, 2
    %s19 = sadd.s32 %s12, 1
    %s20 = ssub.s32 %s12, %s19
    %p21 = scmp.eq.s32.totalorder %s20, 0
    %s23 = sadd.s32 %s22, 1
    %s24 = scalar_select %p21, %s22, %s23
    %p27 = pneg %p21
    %p28 = scmp.eq.s32.totalorder %s12, 1
    %p29 = por %p27, %p28
    %p30 = scmp.ne.s32.totalorder %s22, %s25
    %p31 = scmp.eq.s32.totalorder %s12, 0
    %p32 = por %p30, %p31
    %p33 = scmp.ne.s32.totalorder %s22, %s25
    %p34 = scmp.eq.s32.totalorder %s17, 1
    %p35 = por %p33, %p34
    %p36 = scmp.ne.s32.totalorder %s25, %s26
    %p37 = scmp.eq.s32.totalorder %s17, 0
    %p38 = por %p36, %p37
    %p39 = scmp.ne.s32.totalorder %s25, %s26
    %p40 = scmp.eq.s32.totalorder %s18, 1
    %p41 = por %p39, %p40
    %p43 = scmp.ne.s32.totalorder %s26, %s42
    %p44 = scmp.eq.s32.totalorder %s18, 0
    %p45 = por %p43, %p44
    %s47 = sadd.s32 %s46, 1
    %p50 = scmp.eq.s32.totalorder %s12, 1
    %p51 = scmp.ne.s32.totalorder %s46, %s48
    %p52 = scmp.eq.s32.totalorder %s12, 0
    %p53 = por %p51, %p52
    %p54 = scmp.ne.s32.totalorder %s46, %s48
    %p55 = scmp.eq.s32.totalorder %s17, 1
    %p56 = por %p54, %p55
    %p57 = scmp.ne.s32.totalorder %s48, %s49
    %p58 = scmp.eq.s32.totalorder %s17, 0
    %p59 = por %p57, %p58
    %p60 = scmp.ne.s32.totalorder %s48, %s49
    %p61 = scmp.eq.s32.totalorder %s18, 1
    %p62 = por %p60, %p61
    %p64 = scmp.ne.s32.totalorder %s49, %s63
    %p65 = scmp.eq.s32.totalorder %s18, 0
    %p66 = por %p64, %p65
    %s68 = sadd.s32 %s67, 1
    %p71 = scmp.eq.s32.totalorder %s12, 1
    %p72 = scmp.ne.s32.totalorder %s67, %s69
    %p73 = scmp.eq.s32.totalorder %s12, 0
    %p74 = por %p72, %p73
    %p75 = scmp.ne.s32.totalorder %s67, %s69
    %p76 = scmp.eq.s32.totalorder %s17, 1
    %p77 = por %p75, %p76
    %p78 = scmp.ne.s32.totalorder %s69, %s70
    %p79 = scmp.eq.s32.totalorder %s17, 0
    %p80 = por %p78, %p79
    %p81 = scmp.ne.s32.totalorder %s69, %s70
    %p82 = scmp.eq.s32.totalorder %s18, 1
    %p83 = por %p81, %p82
    %p85 = scmp.ne.s32.totalorder %s70, %s84
    %p86 = scmp.eq.s32.totalorder %s18, 0
    %p87 = por %p85, %p86
    %s88 = ssub.s32 %s12, %s19
    %p89 = scmp.eq.s32.totalorder %s88, 0
    %s91 = sadd.s32 %s90, 1
    %s92 = scalar_select %p89, %s90, %s91
    %p95 = pneg %p89
    %p96 = scmp.eq.s32.totalorder %s12, 1
    %p97 = por %p95, %p96
    %p98 = scmp.ne.s32.totalorder %s90, %s93
    %p99 = scmp.eq.s32.totalorder %s12, 0
    %p100 = por %p98, %p99
    %p101 = scmp.ne.s32.totalorder %s90, %s93
    %p102 = scmp.eq.s32.totalorder %s17, 1
    %p103 = por %p101, %p102
    %p104 = scmp.ne.s32.totalorder %s93, %s94
    %p105 = scmp.eq.s32.totalorder %s17, 0
    %p106 = por %p104, %p105
    %p107 = scmp.ne.s32.totalorder %s93, %s94
    %p108 = scmp.eq.s32.totalorder %s18, 1
    %p109 = por %p107, %p108
    %p111 = scmp.ne.s32.totalorder %s94, %s110
    %p112 = scmp.eq.s32.totalorder %s18, 0
    %p113 = por %p111, %p112
    %s115 = sadd.s32 %s114, 1
    %p118 = scmp.eq.s32.totalorder %s12, 1
    %p119 = scmp.ne.s32.totalorder %s114, %s116
    %p120 = scmp.eq.s32.totalorder %s12, 0
    %p121 = por %p119, %p120
    %p122 = scmp.ne.s32.totalorder %s114, %s116
    %p123 = scmp.eq.s32.totalorder %s17, 1
    %p124 = por %p122, %p123
    %p125 = scmp.ne.s32.totalorder %s116, %s117
    %p126 = scmp.eq.s32.totalorder %s17, 0
    %p127 = por %p125, %p126
    %p128 = scmp.ne.s32.totalorder %s116, %s117
    %p129 = scmp.eq.s32.totalorder %s18, 1
    %p130 = por %p128, %p129
    %p132 = scmp.ne.s32.totalorder %s117, %s131
    %p133 = scmp.eq.s32.totalorder %s18, 0
    %p134 = por %p132, %p133
    %s136 = sadd.s32 %s135, 1
    %p139 = scmp.eq.s32.totalorder %s12, 1
    %p140 = scmp.ne.s32.totalorder %s135, %s137
    %p141 = scmp.eq.s32.totalorder %s12, 0
    %p142 = por %p140, %p141
    %p143 = scmp.ne.s32.totalorder %s135, %s137
    %p144 = scmp.eq.s32.totalorder %s17, 1
    %p145 = por %p143, %p144
    %p146 = scmp.ne.s32.totalorder %s137, %s138
    %p147 = scmp.eq.s32.totalorder %s17, 0
    %p148 = por %p146, %p147
    %p149 = scmp.ne.s32.totalorder %s137, %s138
    %p150 = scmp.eq.s32.totalorder %s18, 1
    %p151 = por %p149, %p150
    %p153 = scmp.ne.s32.totalorder %s138, %s152
    %p154 = scmp.eq.s32.totalorder %s18, 0
    %p155 = por %p153, %p154
    %s156 = ssub.s32 %s12, %s19
    %p157 = scmp.eq.s32.totalorder %s156, 0
    %s159 = sadd.s32 %s158, 1
    %s160 = scalar_select %p157, %s158, %s159
    %p163 = pneg %p157
    %p164 = scmp.eq.s32.totalorder %s12, 1
    %p165 = por %p163, %p164
    %p166 = scmp.ne.s32.totalorder %s158, %s161
    %p167 = scmp.eq.s32.totalorder %s12, 0
    %p168 = por %p166, %p167
    %p169 = scmp.ne.s32.totalorder %s158, %s161
    %p170 = scmp.eq.s32.totalorder %s17, 1
    %p171 = por %p169, %p170
    %p172 = scmp.ne.s32.totalorder %s161, %s162
    %p173 = scmp.eq.s32.totalorder %s17, 0
    %p174 = por %p172, %p173
    %p175 = scmp.ne.s32.totalorder %s161, %s162
    %p176 = scmp.eq.s32.totalorder %s18, 1
    %p177 = por %p175, %p176
    %p179 = scmp.ne.s32.totalorder %s162, %s178
    %p180 = scmp.eq.s32.totalorder %s18, 0
    %p181 = por %p179, %p180
    %p182 = scmp.le.s32.totalorder 1, %s12
    %p183 = scmp.lt.s32.totalorder %s12, 3
    %p184 = pnand %p182, %p183
    %p185 = pneg %p184
    // Predicated region
    $region9: #{encoder_forward.5} parent=5 // pred_check
      _
    $region10: #{encoder_forward.5} parent=5 // pred_check_branch
      %187 = sbr.rel (%p184) target = $region12
    $region11: #{encoder_forward.5} parent=5 // pred_region
      %s188 = ssub.s32 %s12, 1
      // Predicated region
      $region13: #{encoder_forward.5} parent=11 // pred_check
        %p189 = pneg %p59
      $region14: #{encoder_forward.5} parent=11 // pred_check_branch
        %191 = sbr.rel (%p189) target = $region16
      $region15: #{encoder_forward.5} parent=11 // pred_region
        _
      $region16: #{encoder_forward.5} parent=11 // pred_fallthru
        _
      // Predicated region
      $region17: #{encoder_forward.5} parent=11 // pred_check
        %p192 = pneg %p80
      $region18: #{encoder_forward.5} parent=11 // pred_check_branch
        %194 = sbr.rel (%p192) target = $region20
      $region19: #{encoder_forward.5} parent=11 // pred_region
        _
      $region20: #{encoder_forward.5} parent=11 // pred_fallthru
        _
      // Predicated region
      $region21: #{encoder_forward.5} parent=11 // pred_check
        %p195 = pneg %p127
      $region22: #{encoder_forward.5} parent=11 // pred_check_branch
        %197 = sbr.rel (%p195) target = $region24
      $region23: #{encoder_forward.5} parent=11 // pred_region
        _
      $region24: #{encoder_forward.5} parent=11 // pred_fallthru
        _
      // Predicated region
      $region25: #{encoder_forward.5} parent=11 // pred_check
        %p198 = pneg %p148
      $region26: #{encoder_forward.5} parent=11 // pred_check_branch
        %200 = sbr.rel (%p198) target = $region28
      $region27: #{encoder_forward.5} parent=11 // pred_region
        _
      $region28: #{encoder_forward.5} parent=11 // pred_fallthru
        _
    $region12: #{encoder_forward.5} parent=5 // pred_fallthru
      _
    %p201 = scmp.lt.s32.totalorder %s12, 2
    // Predicated region
    $region29: #{encoder_forward.5} parent=5 // pred_check
      %p202 = pneg %p201
    $region30: #{encoder_forward.5} parent=5 // pred_check_branch
      %204 = sbr.rel (%p202) target = $region32
    $region31: #{encoder_forward.5} parent=5 // pred_region
      // Predicated region
      $region33: #{encoder_forward.5} parent=31 // pred_check
        %p205 = pneg %p32
      $region34: #{encoder_forward.5} parent=31 // pred_check_branch
        %207 = sbr.rel (%p205) target = $region36
      $region35: #{encoder_forward.5} parent=31 // pred_region
        %s208 = smul.u32 32, %s12
        %p209 = scmp.lt.s32.totalorder %s208, 63
        %s210 = scalar_select %p209, %s208, 63
        %s211 = smul.addr %s210, 8
        %s212 = scalar_lea.vmem %s0, %s211
        %s213 = smul.u32 32, %s12
      $region36: #{encoder_forward.5} parent=31 // pred_fallthru
        _
      // Predicated region
      $region37: #{encoder_forward.5} parent=31 // pred_check
        %p214 = pneg %p100
      $region38: #{encoder_forward.5} parent=31 // pred_check_branch
        %216 = sbr.rel (%p214) target = $region40
      $region39: #{encoder_forward.5} parent=31 // pred_region
        %s217 = smul.u32 32, %s12
        %p218 = scmp.lt.s32.totalorder %s217, 63
        %s219 = scalar_select %p218, %s217, 63
        %s220 = smul.addr %s219, 8
        %s221 = scalar_lea.vmem %s3, %s220
        %s222 = smul.u32 32, %s12
      $region40: #{encoder_forward.5} parent=31 // pred_fallthru
        _
    $region32: #{encoder_forward.5} parent=5 // pred_fallthru
      _
    %p223 = scmp.le.s32.totalorder 1, %s12
    %p224 = scmp.lt.s32.totalorder %s12, 3
    %p225 = pnand %p223, %p224
    %p226 = pneg %p225
    // Predicated region
    $region41: #{encoder_forward.5} parent=5 // pred_check
      _
    $region42: #{encoder_forward.5} parent=5 // pred_check_branch
      %228 = sbr.rel (%p225) target = $region44
    $region43: #{encoder_forward.5} parent=5 // pred_region
      %s229 = ssub.s32 %s12, 1
      %s230 = smul.u32 32, %s17
      %p231 = scmp.lt.s32.totalorder %s230, 63
      %s232 = scalar_select %p231, %s230, 63
      %s233 = smul.addr %s232, 8
      %s234 = scalar_lea.vmem %s0, %s233
      %p235 = pneg %p38
      %p236 = pneg %p35
      %p237 = pneg %p59
      %p238 = pneg %p56
      %p239 = pneg %p80
      %p240 = pneg %p77
      %s241 = smul.u32 32, %s17
      %p242 = scmp.lt.s32.totalorder %s241, 63
      %s243 = scalar_select %p242, %s241, 63
      %s244 = smul.addr %s243, 8
      %s245 = scalar_lea.vmem %s3, %s244
      %p246 = pneg %p106
      %p247 = pneg %p103
      %p248 = pneg %p127
      %p249 = pneg %p124
      %p250 = pneg %p148
      %p251 = pneg %p145
      %p252 = pneg %p174
      %p253 = pneg %p171
      %s254 = smul.u32 32, %s17
      %p255 = scmp.lt.s32.totalorder %s254, 63
      %s256 = scalar_select %p255, %s254, 63
      %s257 = smul.addr %s256, 8
      %s258 = scalar_lea.vmem %s6, %s257
      %s259 = smul.u32 32, %s17
      %p260 = scmp.lt.s32.totalorder %s259, 63
      %s261 = scalar_select %p260, %s259, 63
      %s262 = smul.addr %s261, 8
      %s263 = scalar_lea.vmem %s0, %s262
      %s264 = smul.u32 32, %s17
      %s265 = smul.u32 32, %s17
      %p266 = scmp.lt.s32.totalorder %s265, 63
      %s267 = scalar_select %p266, %s265, 63
      %s268 = smul.addr %s267, 8
      %s269 = scalar_lea.vmem %s3, %s268
      %s270 = smul.u32 32, %s17
      %s271 = smul.u32 32, %s17
      %p272 = scmp.lt.s32.totalorder %s271, 63
      %s273 = scalar_select %p272, %s271, 63
      %s274 = smul.addr %s273, 8
      %s275 = scalar_lea.vmem %s6, %s274
      %s276 = smul.u32 32, %s17
      %v277 = vld [vmem:[%s263] sm:$0xff]
      %v278 = vld [vmem:[%s263 + $0x8] sm:$0xff]
      %v279 = vld [vmem:[%s263 + $0x10] sm:$0xff]
      %v280 = vld [vmem:[%s263 + $0x18] sm:$0xff]
      %v281 = vld [vmem:[%s263 + $0x20] sm:$0xff]
      %v282 = vld [vmem:[%s263 + $0x28] sm:$0xff]
      %v283 = vld [vmem:[%s263 + $0x30] sm:$0xff]
      %v284 = vld [vmem:[%s263 + $0x38] sm:$0xff]
      %v285 = vld [vmem:[%s263 + $0x40] sm:$0xff]
      %v286 = vld [vmem:[%s263 + $0x48] sm:$0xff]
      %v287 = vld [vmem:[%s263 + $0x50] sm:$0xff]
      %v288 = vld [vmem:[%s263 + $0x58] sm:$0xff]
      %v289 = vld [vmem:[%s263 + $0x60] sm:$0xff]
      %v290 = vld [vmem:[%s263 + $0x68] sm:$0xff]
      %v291 = vld [vmem:[%s263 + $0x70] sm:$0xff]
      %v292 = vld [vmem:[%s263 + $0x78] sm:$0xff]
      %v293 = vld [vmem:[%s263 + $0x80] sm:$0xff]
      %v294 = vld [vmem:[%s263 + $0x88] sm:$0xff]
      %v295 = vld [vmem:[%s263 + $0x90] sm:$0xff]
      %v296 = vld [vmem:[%s263 + $0x98] sm:$0xff]
      %v297 = vld [vmem:[%s263 + $0xa0] sm:$0xff]
      %v298 = vld [vmem:[%s263 + $0xa8] sm:$0xff]
      %v299 = vld [vmem:[%s263 + $0xb0] sm:$0xff]
      %v300 = vld [vmem:[%s263 + $0xb8] sm:$0xff]
      %v301 = vld [vmem:[%s263 + $0xc0] sm:$0xff]
      %v302 = vld [vmem:[%s263 + $0xc8] sm:$0xff]
      %v303 = vld [vmem:[%s263 + $0xd0] sm:$0xff]
      %v304 = vld [vmem:[%s263 + $0xd8] sm:$0xff]
      %v305 = vld [vmem:[%s263 + $0xe0] sm:$0xff]
      %v306 = vld [vmem:[%s263 + $0xe8] sm:$0xff]
      %v307 = vld [vmem:[%s263 + $0xf0] sm:$0xff]
      %v308 = vld [vmem:[%s263 + $0xf8] sm:$0xff]
      %v309 = vld [vmem:[%s1] sm:$0x1]
      %v311 = vlaneseq
      %v312 = vshrl.u32 %v311, 7
      %v313 = vsub.s32 0, %v312
      %v314 = vrot.slane %v309, %v313
      %v316 = vmul.f32 %v277, %v314
      %v317 = vmul.f32 %v278, %v314
      %v318 = vmul.f32 %v279, %v314
      %v319 = vmul.f32 %v280, %v314
      %v320 = vmul.f32 %v281, %v314
      %v321 = vmul.f32 %v282, %v314
      %v322 = vmul.f32 %v283, %v314
      %v323 = vmul.f32 %v284, %v314
      %v324 = vmul.f32 %v285, %v314
      %v325 = vmul.f32 %v286, %v314
      %v326 = vmul.f32 %v287, %v314
      %v327 = vmul.f32 %v288, %v314
      %v328 = vmul.f32 %v289, %v314
      %v329 = vmul.f32 %v290, %v314
      %v330 = vmul.f32 %v291, %v314
      %v331 = vmul.f32 %v292, %v314
      %v332 = vmul.f32 %v293, %v314
      %v333 = vmul.f32 %v294, %v314
      %v334 = vmul.f32 %v295, %v314
      %v335 = vmul.f32 %v296, %v314
      %v336 = vmul.f32 %v297, %v314
      %v337 = vmul.f32 %v298, %v314
      %v338 = vmul.f32 %v299, %v314
      %v339 = vmul.f32 %v300, %v314
      %v340 = vmul.f32 %v301, %v314
      %v341 = vmul.f32 %v302, %v314
      %v342 = vmul.f32 %v303, %v314
      %v343 = vmul.f32 %v304, %v314
      %v344 = vmul.f32 %v305, %v314
      %v345 = vmul.f32 %v306, %v314
      %v346 = vmul.f32 %v307, %v314
      %v347 = vmul.f32 %v308, %v314
      %v348 = vld [vmem:[%s2] sm:$0x1]
      %v350 = vlaneseq
      %v351 = vshrl.u32 %v350, 7
      %v352 = vsub.s32 0, %v351
      %v353 = vrot.slane %v348, %v352
      %v355 = vadd.f32 %v316, %v353
      %v356 = vadd.f32 %v317, %v353
      %v357 = vadd.f32 %v318, %v353
      %v358 = vadd.f32 %v319, %v353
      %v359 = vadd.f32 %v320, %v353
      %v360 = vadd.f32 %v321, %v353
      %v361 = vadd.f32 %v322, %v353
      %v362 = vadd.f32 %v323, %v353
      %v363 = vadd.f32 %v324, %v353
      %v364 = vadd.f32 %v325, %v353
      %v365 = vadd.f32 %v326, %v353
      %v366 = vadd.f32 %v327, %v353
      %v367 = vadd.f32 %v328, %v353
      %v368 = vadd.f32 %v329, %v353
      %v369 = vadd.f32 %v330, %v353
      %v370 = vadd.f32 %v331, %v353
      %v371 = vadd.f32 %v332, %v353
      %v372 = vadd.f32 %v333, %v353
      %v373 = vadd.f32 %v334, %v353
      %v374 = vadd.f32 %v335, %v353
      %v375 = vadd.f32 %v336, %v353
      %v376 = vadd.f32 %v337, %v353
      %v377 = vadd.f32 %v338, %v353
      %v378 = vadd.f32 %v339, %v353
      %v379 = vadd.f32 %v340, %v353
      %v380 = vadd.f32 %v341, %v353
      %v381 = vadd.f32 %v342, %v353
      %v382 = vadd.f32 %v343, %v353
      %v383 = vadd.f32 %v344, %v353
      %v384 = vadd.f32 %v345, %v353
      %v385 = vadd.f32 %v346, %v353
      %v386 = vadd.f32 %v347, %v353
      %v387 = vmax.f32 %v355, 0.0
      %v388 = vmax.f32 %v356, 0.0
      %v389 = vmax.f32 %v357, 0.0
      %v390 = vmax.f32 %v358, 0.0
      %v391 = vmax.f32 %v359, 0.0
      %v392 = vmax.f32 %v360, 0.0
      %v393 = vmax.f32 %v361, 0.0
      %v394 = vmax.f32 %v362, 0.0
      %v395 = vmax.f32 %v363, 0.0
      %v396 = vmax.f32 %v364, 0.0
      %v397 = vmax.f32 %v365, 0.0
      %v398 = vmax.f32 %v366, 0.0
      %v399 = vmax.f32 %v367, 0.0
      %v400 = vmax.f32 %v368, 0.0
      %v401 = vmax.f32 %v369, 0.0
      %v402 = vmax.f32 %v370, 0.0
      %v403 = vmax.f32 %v371, 0.0
      %v404 = vmax.f32 %v372, 0.0
      %v405 = vmax.f32 %v373, 0.0
      %v406 = vmax.f32 %v374, 0.0
      %v407 = vmax.f32 %v375, 0.0
      %v408 = vmax.f32 %v376, 0.0
      %v409 = vmax.f32 %v377, 0.0
      %v410 = vmax.f32 %v378, 0.0
      %v411 = vmax.f32 %v379, 0.0
      %v412 = vmax.f32 %v380, 0.0
      %v413 = vmax.f32 %v381, 0.0
      %v414 = vmax.f32 %v382, 0.0
      %v415 = vmax.f32 %v383, 0.0
      %v416 = vmax.f32 %v384, 0.0
      %v417 = vmax.f32 %v385, 0.0
      %v418 = vmax.f32 %v386, 0.0
      %v419 = vld [vmem:[%s269] sm:$0xff]
      %v420 = vld [vmem:[%s269 + $0x8] sm:$0xff]
      %v421 = vld [vmem:[%s269 + $0x10] sm:$0xff]
      %v422 = vld [vmem:[%s269 + $0x18] sm:$0xff]
      %v423 = vld [vmem:[%s269 + $0x20] sm:$0xff]
      %v424 = vld [vmem:[%s269 + $0x28] sm:$0xff]
      %v425 = vld [vmem:[%s269 + $0x30] sm:$0xff]
      %v426 = vld [vmem:[%s269 + $0x38] sm:$0xff]
      %v427 = vld [vmem:[%s269 + $0x40] sm:$0xff]
      %v428 = vld [vmem:[%s269 + $0x48] sm:$0xff]
      %v429 = vld [vmem:[%s269 + $0x50] sm:$0xff]
      %v430 = vld [vmem:[%s269 + $0x58] sm:$0xff]
      %v431 = vld [vmem:[%s269 + $0x60] sm:$0xff]
      %v432 = vld [vmem:[%s269 + $0x68] sm:$0xff]
      %v433 = vld [vmem:[%s269 + $0x70] sm:$0xff]
      %v434 = vld [vmem:[%s269 + $0x78] sm:$0xff]
      %v435 = vld [vmem:[%s269 + $0x80] sm:$0xff]
      %v436 = vld [vmem:[%s269 + $0x88] sm:$0xff]
      %v437 = vld [vmem:[%s269 + $0x90] sm:$0xff]
      %v438 = vld [vmem:[%s269 + $0x98] sm:$0xff]
      %v439 = vld [vmem:[%s269 + $0xa0] sm:$0xff]
      %v440 = vld [vmem:[%s269 + $0xa8] sm:$0xff]
      %v441 = vld [vmem:[%s269 + $0xb0] sm:$0xff]
      %v442 = vld [vmem:[%s269 + $0xb8] sm:$0xff]
      %v443 = vld [vmem:[%s269 + $0xc0] sm:$0xff]
      %v444 = vld [vmem:[%s269 + $0xc8] sm:$0xff]
      %v445 = vld [vmem:[%s269 + $0xd0] sm:$0xff]
      %v446 = vld [vmem:[%s269 + $0xd8] sm:$0xff]
      %v447 = vld [vmem:[%s269 + $0xe0] sm:$0xff]
      %v448 = vld [vmem:[%s269 + $0xe8] sm:$0xff]
      %v449 = vld [vmem:[%s269 + $0xf0] sm:$0xff]
      %v450 = vld [vmem:[%s269 + $0xf8] sm:$0xff]
      %v451 = vld [vmem:[%s4] sm:$0x1]
      %v453 = vlaneseq
      %v454 = vshrl.u32 %v453, 7
      %v455 = vsub.s32 0, %v454
      %v456 = vrot.slane %v451, %v455
      %v458 = vmul.f32 %v419, %v456
      %v459 = vmul.f32 %v420, %v456
      %v460 = vmul.f32 %v421, %v456
      %v461 = vmul.f32 %v422, %v456
      %v462 = vmul.f32 %v423, %v456
      %v463 = vmul.f32 %v424, %v456
      %v464 = vmul.f32 %v425, %v456
      %v465 = vmul.f32 %v426, %v456
      %v466 = vmul.f32 %v427, %v456
      %v467 = vmul.f32 %v428, %v456
      %v468 = vmul.f32 %v429, %v456
      %v469 = vmul.f32 %v430, %v456
      %v470 = vmul.f32 %v431, %v456
      %v471 = vmul.f32 %v432, %v456
      %v472 = vmul.f32 %v433, %v456
      %v473 = vmul.f32 %v434, %v456
      %v474 = vmul.f32 %v435, %v456
      %v475 = vmul.f32 %v436, %v456
      %v476 = vmul.f32 %v437, %v456
      %v477 = vmul.f32 %v438, %v456
      %v478 = vmul.f32 %v439, %v456
      %v479 = vmul.f32 %v440, %v456
      %v480 = vmul.f32 %v441, %v456
      %v481 = vmul.f32 %v442, %v456
      %v482 = vmul.f32 %v443, %v456
      %v483 = vmul.f32 %v444, %v456
      %v484 = vmul.f32 %v445, %v456
      %v485 = vmul.f32 %v446, %v456
      %v486 = vmul.f32 %v447, %v456
      %v487 = vmul.f32 %v448, %v456
      %v488 = vmul.f32 %v449, %v456
      %v489 = vmul.f32 %v450, %v456
      %v490 = vld [vmem:[%s5] sm:$0x1]
      %v492 = vlaneseq
      %v493 = vshrl.u32 %v492, 7
      %v494 = vsub.s32 0, %v493
      %v495 = vrot.slane %v490, %v494
      %v497 = vadd.f32 %v458, %v495
      %v498 = vadd.f32 %v459, %v495
      %v499 = vadd.f32 %v460, %v495
      %v500 = vadd.f32 %v461, %v495
      %v501 = vadd.f32 %v462, %v495
      %v502 = vadd.f32 %v463, %v495
      %v503 = vadd.f32 %v464, %v495
      %v504 = vadd.f32 %v465, %v495
      %v505 = vadd.f32 %v466, %v495
      %v506 = vadd.f32 %v467, %v495
      %v507 = vadd.f32 %v468, %v495
      %v508 = vadd.f32 %v469, %v495
      %v509 = vadd.f32 %v470, %v495
      %v510 = vadd.f32 %v471, %v495
      %v511 = vadd.f32 %v472, %v495
      %v512 = vadd.f32 %v473, %v495
      %v513 = vadd.f32 %v474, %v495
      %v514 = vadd.f32 %v475, %v495
      %v515 = vadd.f32 %v476, %v495
      %v516 = vadd.f32 %v477, %v495
      %v517 = vadd.f32 %v478, %v495
      %v518 = vadd.f32 %v479, %v495
      %v519 = vadd.f32 %v480, %v495
      %v520 = vadd.f32 %v481, %v495
      %v521 = vadd.f32 %v482, %v495
      %v522 = vadd.f32 %v483, %v495
      %v523 = vadd.f32 %v484, %v495
      %v524 = vadd.f32 %v485, %v495
      %v525 = vadd.f32 %v486, %v495
      %v526 = vadd.f32 %v487, %v495
      %v527 = vadd.f32 %v488, %v495
      %v528 = vadd.f32 %v489, %v495
      %v529 = vadd.f32 %v387, %v497
      %v530 = vadd.f32 %v388, %v498
      %v531 = vadd.f32 %v389, %v499
      %v532 = vadd.f32 %v390, %v500
      %v533 = vadd.f32 %v391, %v501
      %v534 = vadd.f32 %v392, %v502
      %v535 = vadd.f32 %v393, %v503
      %v536 = vadd.f32 %v394, %v504
      %v537 = vadd.f32 %v395, %v505
      %v538 = vadd.f32 %v396, %v506
      %v539 = vadd.f32 %v397, %v507
      %v540 = vadd.f32 %v398, %v508
      %v541 = vadd.f32 %v399, %v509
      %v542 = vadd.f32 %v400, %v510
      %v543 = vadd.f32 %v401, %v511
      %v544 = vadd.f32 %v402, %v512
      %v545 = vadd.f32 %v403, %v513
      %v546 = vadd.f32 %v404, %v514
      %v547 = vadd.f32 %v405, %v515
      %v548 = vadd.f32 %v406, %v516
      %v549 = vadd.f32 %v407, %v517
      %v550 = vadd.f32 %v408, %v518
      %v551 = vadd.f32 %v409, %v519
      %v552 = vadd.f32 %v410, %v520
      %v553 = vadd.f32 %v411, %v521
      %v554 = vadd.f32 %v412, %v522
      %v555 = vadd.f32 %v413, %v523
      %v556 = vadd.f32 %v414, %v524
      %v557 = vadd.f32 %v415, %v525
      %v558 = vadd.f32 %v416, %v526
      %v559 = vadd.f32 %v417, %v527
      %v560 = vadd.f32 %v418, %v528
      %v561 = vmax.f32 %v529, 0.0
      %v562 = vmax.f32 %v530, 0.0
      %v563 = vmax.f32 %v531, 0.0
      %v564 = vmax.f32 %v532, 0.0
      %v565 = vmax.f32 %v533, 0.0
      %v566 = vmax.f32 %v534, 0.0
      %v567 = vmax.f32 %v535, 0.0
      %v568 = vmax.f32 %v536, 0.0
      %v569 = vmax.f32 %v537, 0.0
      %v570 = vmax.f32 %v538, 0.0
      %v571 = vmax.f32 %v539, 0.0
      %v572 = vmax.f32 %v540, 0.0
      %v573 = vmax.f32 %v541, 0.0
      %v574 = vmax.f32 %v542, 0.0
      %v575 = vmax.f32 %v543, 0.0
      %v576 = vmax.f32 %v544, 0.0
      %v577 = vmax.f32 %v545, 0.0
      %v578 = vmax.f32 %v546, 0.0
      %v579 = vmax.f32 %v547, 0.0
      %v580 = vmax.f32 %v548, 0.0
      %v581 = vmax.f32 %v549, 0.0
      %v582 = vmax.f32 %v550, 0.0
      %v583 = vmax.f32 %v551, 0.0
      %v584 = vmax.f32 %v552, 0.0
      %v585 = vmax.f32 %v553, 0.0
      %v586 = vmax.f32 %v554, 0.0
      %v587 = vmax.f32 %v555, 0.0
      %v588 = vmax.f32 %v556, 0.0
      %v589 = vmax.f32 %v557, 0.0
      %v590 = vmax.f32 %v558, 0.0
      %v591 = vmax.f32 %v559, 0.0
      %v592 = vmax.f32 %v560, 0.0
      %593 = vst [vmem:[%s275] sm:$0xff] %v561
      %594 = vst [vmem:[%s275 + $0x8] sm:$0xff] %v562
      %595 = vst [vmem:[%s275 + $0x10] sm:$0xff] %v563
      %596 = vst [vmem:[%s275 + $0x18] sm:$0xff] %v564
      %597 = vst [vmem:[%s275 + $0x20] sm:$0xff] %v565
      %598 = vst [vmem:[%s275 + $0x28] sm:$0xff] %v566
      %599 = vst [vmem:[%s275 + $0x30] sm:$0xff] %v567
      %600 = vst [vmem:[%s275 + $0x38] sm:$0xff] %v568
      %601 = vst [vmem:[%s275 + $0x40] sm:$0xff] %v569
      %602 = vst [vmem:[%s275 + $0x48] sm:$0xff] %v570
      %603 = vst [vmem:[%s275 + $0x50] sm:$0xff] %v571
      %604 = vst [vmem:[%s275 + $0x58] sm:$0xff] %v572
      %605 = vst [vmem:[%s275 + $0x60] sm:$0xff] %v573
      %606 = vst [vmem:[%s275 + $0x68] sm:$0xff] %v574
      %607 = vst [vmem:[%s275 + $0x70] sm:$0xff] %v575
      %608 = vst [vmem:[%s275 + $0x78] sm:$0xff] %v576
      %609 = vst [vmem:[%s275 + $0x80] sm:$0xff] %v577
      %610 = vst [vmem:[%s275 + $0x88] sm:$0xff] %v578
      %611 = vst [vmem:[%s275 + $0x90] sm:$0xff] %v579
      %612 = vst [vmem:[%s275 + $0x98] sm:$0xff] %v580
      %613 = vst [vmem:[%s275 + $0xa0] sm:$0xff] %v581
      %614 = vst [vmem:[%s275 + $0xa8] sm:$0xff] %v582
      %615 = vst [vmem:[%s275 + $0xb0] sm:$0xff] %v583
      %616 = vst [vmem:[%s275 + $0xb8] sm:$0xff] %v584
      %617 = vst [vmem:[%s275 + $0xc0] sm:$0xff] %v585
      %618 = vst [vmem:[%s275 + $0xc8] sm:$0xff] %v586
      %619 = vst [vmem:[%s275 + $0xd0] sm:$0xff] %v587
      %620 = vst [vmem:[%s275 + $0xd8] sm:$0xff] %v588
      %621 = vst [vmem:[%s275 + $0xe0] sm:$0xff] %v589
      %622 = vst [vmem:[%s275 + $0xe8] sm:$0xff] %v590
      %623 = vst [vmem:[%s275 + $0xf0] sm:$0xff] %v591
      %624 = vst [vmem:[%s275 + $0xf8] sm:$0xff] %v592
      %s625 = smul.u32 32, %s17
      %p626 = scmp.lt.s32.totalorder %s625, 63
      %s627 = scalar_select %p626, %s625, 63
      %s628 = smul.addr %s627, 8
      %s629 = scalar_lea.vmem %s6, %s628
      // Predicated region
      $region45: #{encoder_forward.5} parent=43 // pred_check
        %p630 = pneg %p171
      $region46: #{encoder_forward.5} parent=43 // pred_check_branch
        %632 = sbr.rel (%p630) target = $region48
      $region47: #{encoder_forward.5} parent=43 // pred_region
        %s633 = smul.u32 32, %s17
      $region48: #{encoder_forward.5} parent=43 // pred_fallthru
        _
    $region44: #{encoder_forward.5} parent=5 // pred_fallthru
      _
    %p634 = scmp.le.s32.totalorder 2, %s12
    // Predicated region
    $region49: #{encoder_forward.5} parent=5 // pred_check
      %p635 = pneg %p634
    $region50: #{encoder_forward.5} parent=5 // pred_check_branch
      %637 = sbr.rel (%p635) target = $region52
    $region51: #{encoder_forward.5} parent=5 // pred_region
      %s638 = ssub.s32 %s12, 2
      // Predicated region
      $region53: #{encoder_forward.5} parent=51 // pred_check
        %p639 = pneg %p177
      $region54: #{encoder_forward.5} parent=51 // pred_check_branch
        %641 = sbr.rel (%p639) target = $region56
      $region55: #{encoder_forward.5} parent=51 // pred_region
        %s642 = smul.u32 32, %s18
        %p643 = scmp.lt.s32.totalorder %s642, 63
        %s644 = scalar_select %p643, %s642, 63
        %s645 = smul.addr %s644, 8
        %s646 = scalar_lea.vmem %s6, %s645
      $region56: #{encoder_forward.5} parent=51 // pred_fallthru
        _
    $region52: #{encoder_forward.5} parent=5 // pred_fallthru
      _
  $region6: #{encoder_forward.5} parent=0 // loop_footer
    %s16 = sadd.s32 1, %s12
  $region7: #{encoder_forward.5} parent=0 // loop_footer_branch
    %11 = sbr.rel target = $region3
  $region8: #{encoder_forward.5} parent=0 // loop_exit
    _

// kernel: encoder_forward.4
$region0: #{encoder_forward.4}
  #allocation0 [shape = 'u32[]', space=smem, size = 0x4, offset = 0x4, fixed_abs, tag = 'smem constant byte address 0x4 - core index']
  #allocation1 [shape = 'u32[144,128]{1,0:T(1,128)}', space=vmem, size = 0x12000, scoped, tag = 'internal scratch']
  #allocation2 [shape = 'bf16[18,18,128]{2,1,0:T(8,128)(2,1)}', space=vmem, size = 0x1b000, scoped, tag = 'scratch operand']
  %s0 = inlined_call_operand.vmem [shape: bf16[2,16,16,128], index: 0, kind: input, shape index: {}]
  %s1 = inlined_call_operand.vmem [shape: f32[1,128], index: 1, kind: input, shape index: {}]
  %s2 = inlined_call_operand.vmem [shape: f32[1,128], index: 2, kind: input, shape index: {}]
  %s3 = inlined_call_operand.vmem [shape: bf16[9,128,128], index: 3, kind: input, shape index: {}]
  %s4 = inlined_call_operand.vmem [shape: f32[1,128], index: 4, kind: input, shape index: {}]
  %s5 = inlined_call_operand.vmem [shape: f32[2,16,16,128], index: 5, kind: output, shape index: {0}]
  %s6 = inlined_call_operand.vmem [shape: f32[2,1,128], index: 6, kind: output, shape index: {1}]
  %s7 = inlined_call_operand.vmem [shape: f32[2,1,128], index: 7, kind: output, shape index: {2}]
  %8 = xla_tuple %s5, %s6, %s7
  %s9 = sld [smem:[#allocation0]]
  $region73: #{encoder_forward.4} parent=0
    _
  %s11 = ssub.s32 1, %s9
  %s12 = scalar_select 0, %s11, %s9
  loop: start=0, step=1, limit=6
  $region2: #{encoder_forward.4} parent=0 // loop_pre_header
    _
  $region3: #{encoder_forward.4} parent=0 // loop_header
    %s14 = sphi 0, %s18
    %p15 = scmp.ge.s32.totalorder %s14, 6
    %s21 = sphi 0, %s33
    %s22 = sphi 0, %s29
    %s23 = sphi 0, %s21
    %s24 = sphi 0, %s22
    %s25 = sphi 0, %s23
    %s26 = sphi 0, %s24
    %s36 = sphi 0, %s38
    %s39 = sphi 0, %s36
    %s40 = sphi 0, %s39
    %s56 = sphi 0, %s40
    %s60 = sphi 0, %s60
    %s62 = sphi 0, %s60
    %s63 = sphi 0, %s62
    %s77 = sphi 0, %s63
    %s81 = sphi 0, %s81
    %s83 = sphi 0, %s81
    %s84 = sphi 0, %s83
    %s98 = sphi 0, %s84
    %s102 = sphi 0, %s102
    %s104 = sphi 0, %s102
    %s105 = sphi 0, %s104
    %s119 = sphi 0, %s105
    %s123 = sphi 0, %s123
    %s125 = sphi 0, %s123
    %s126 = sphi 0, %s125
    %s140 = sphi 0, %s126
    %s148 = sphi 0, %s150
    %s151 = sphi 0, %s148
    %s152 = sphi 0, %s151
    %s168 = sphi 0, %s152
    %s174 = sphi 0, %s176
    %s177 = sphi 0, %s174
    %s178 = sphi 0, %s177
    %s194 = sphi 0, %s178
    %s200 = sphi 0, %s202
    %s203 = sphi 0, %s200
    %s204 = sphi 0, %s203
    %s220 = sphi 0, %s204
  $region4: #{encoder_forward.4} parent=0 // loop_header_branch
    %17 = sbr.rel (%p15) target = $region8
  $region5: #{encoder_forward.4} parent=0 // loop_body
    %s19 = ssub.s32 %s14, 1
    %s20 = ssub.s32 %s14, 2
    %s27 = sadd.s32 1, %s22
    %p28 = scmp.ge.s32.totalorder %s27, 2
    %s29 = scalar_select %p28, 0, %s27
    %s30 = sadd.s32 1, %s21
    %s31 = scalar_select %p28, %s30, %s21
    %p32 = scmp.ge.s32.totalorder %s31, 2
    %s33 = scalar_select %p32, 0, %s31
    %s34 = ssub.s32 %s21, %s33
    %p35 = scmp.eq.s32.totalorder %s34, 0
    %s37 = sadd.s32 %s36, 1
    %s38 = scalar_select %p35, %s36, %s37
    %p41 = pneg %p35
    %p42 = scmp.eq.s32.totalorder %s14, 3
    %p43 = por %p41, %p42
    %p44 = scmp.ne.s32.totalorder %s36, %s39
    %p45 = scmp.eq.s32.totalorder %s14, 0
    %p46 = por %p44, %p45
    %p47 = scmp.ne.s32.totalorder %s36, %s39
    %p48 = scmp.eq.s32.totalorder %s19, 3
    %p49 = por %p47, %p48
    %p50 = scmp.ne.s32.totalorder %s39, %s40
    %p51 = scmp.eq.s32.totalorder %s19, 0
    %p52 = por %p50, %p51
    %p53 = scmp.ne.s32.totalorder %s39, %s40
    %p54 = scmp.eq.s32.totalorder %s20, 3
    %p55 = por %p53, %p54
    %p57 = scmp.ne.s32.totalorder %s40, %s56
    %p58 = scmp.eq.s32.totalorder %s20, 0
    %p59 = por %p57, %p58
    %s61 = sadd.s32 %s60, 1
    %p64 = scmp.eq.s32.totalorder %s14, 3
    %p65 = scmp.ne.s32.totalorder %s60, %s62
    %p66 = scmp.eq.s32.totalorder %s14, 0
    %p67 = por %p65, %p66
    %p68 = scmp.ne.s32.totalorder %s60, %s62
    %p69 = scmp.eq.s32.totalorder %s19, 3
    %p70 = por %p68, %p69
    %p71 = scmp.ne.s32.totalorder %s62, %s63
    %p72 = scmp.eq.s32.totalorder %s19, 0
    %p73 = por %p71, %p72
    %p74 = scmp.ne.s32.totalorder %s62, %s63
    %p75 = scmp.eq.s32.totalorder %s20, 3
    %p76 = por %p74, %p75
    %p78 = scmp.ne.s32.totalorder %s63, %s77
    %p79 = scmp.eq.s32.totalorder %s20, 0
    %p80 = por %p78, %p79
    %s82 = sadd.s32 %s81, 1
    %p85 = scmp.eq.s32.totalorder %s14, 3
    %p86 = scmp.ne.s32.totalorder %s81, %s83
    %p87 = scmp.eq.s32.totalorder %s14, 0
    %p88 = por %p86, %p87
    %p89 = scmp.ne.s32.totalorder %s81, %s83
    %p90 = scmp.eq.s32.totalorder %s19, 3
    %p91 = por %p89, %p90
    %p92 = scmp.ne.s32.totalorder %s83, %s84
    %p93 = scmp.eq.s32.totalorder %s19, 0
    %p94 = por %p92, %p93
    %p95 = scmp.ne.s32.totalorder %s83, %s84
    %p96 = scmp.eq.s32.totalorder %s20, 3
    %p97 = por %p95, %p96
    %p99 = scmp.ne.s32.totalorder %s84, %s98
    %p100 = scmp.eq.s32.totalorder %s20, 0
    %p101 = por %p99, %p100
    %s103 = sadd.s32 %s102, 1
    %p106 = scmp.eq.s32.totalorder %s14, 3
    %p107 = scmp.ne.s32.totalorder %s102, %s104
    %p108 = scmp.eq.s32.totalorder %s14, 0
    %p109 = por %p107, %p108
    %p110 = scmp.ne.s32.totalorder %s102, %s104
    %p111 = scmp.eq.s32.totalorder %s19, 3
    %p112 = por %p110, %p111
    %p113 = scmp.ne.s32.totalorder %s104, %s105
    %p114 = scmp.eq.s32.totalorder %s19, 0
    %p115 = por %p113, %p114
    %p116 = scmp.ne.s32.totalorder %s104, %s105
    %p117 = scmp.eq.s32.totalorder %s20, 3
    %p118 = por %p116, %p117
    %p120 = scmp.ne.s32.totalorder %s105, %s119
    %p121 = scmp.eq.s32.totalorder %s20, 0
    %p122 = por %p120, %p121
    %s124 = sadd.s32 %s123, 1
    %p127 = scmp.eq.s32.totalorder %s14, 3
    %p128 = scmp.ne.s32.totalorder %s123, %s125
    %p129 = scmp.eq.s32.totalorder %s14, 0
    %p130 = por %p128, %p129
    %p131 = scmp.ne.s32.totalorder %s123, %s125
    %p132 = scmp.eq.s32.totalorder %s19, 3
    %p133 = por %p131, %p132
    %p134 = scmp.ne.s32.totalorder %s125, %s126
    %p135 = scmp.eq.s32.totalorder %s19, 0
    %p136 = por %p134, %p135
    %p137 = scmp.ne.s32.totalorder %s125, %s126
    %p138 = scmp.eq.s32.totalorder %s20, 3
    %p139 = por %p137, %p138
    %p141 = scmp.ne.s32.totalorder %s126, %s140
    %p142 = scmp.eq.s32.totalorder %s20, 0
    %p143 = por %p141, %p142
    %s144 = ssub.s32 %s21, %s33
    %s145 = ssub.s32 %s22, %s29
    %s146 = sor.u32 %s144, %s145
    %p147 = scmp.eq.s32.totalorder %s146, 0
    %s149 = sadd.s32 %s148, 1
    %s150 = scalar_select %p147, %s148, %s149
    %p153 = pneg %p147
    %p154 = scmp.eq.s32.totalorder %s14, 3
    %p155 = por %p153, %p154
    %p156 = scmp.ne.s32.totalorder %s148, %s151
    %p157 = scmp.eq.s32.totalorder %s14, 0
    %p158 = por %p156, %p157
    %p159 = scmp.ne.s32.totalorder %s148, %s151
    %p160 = scmp.eq.s32.totalorder %s19, 3
    %p161 = por %p159, %p160
    %p162 = scmp.ne.s32.totalorder %s151, %s152
    %p163 = scmp.eq.s32.totalorder %s19, 0
    %p164 = por %p162, %p163
    %p165 = scmp.ne.s32.totalorder %s151, %s152
    %p166 = scmp.eq.s32.totalorder %s20, 3
    %p167 = por %p165, %p166
    %p169 = scmp.ne.s32.totalorder %s152, %s168
    %p170 = scmp.eq.s32.totalorder %s20, 0
    %p171 = por %p169, %p170
    %s172 = ssub.s32 %s21, %s33
    %p173 = scmp.eq.s32.totalorder %s172, 0
    %s175 = sadd.s32 %s174, 1
    %s176 = scalar_select %p173, %s174, %s175
    %p179 = pneg %p173
    %p180 = scmp.eq.s32.totalorder %s14, 3
    %p181 = por %p179, %p180
    %p182 = scmp.ne.s32.totalorder %s174, %s177
    %p183 = scmp.eq.s32.totalorder %s14, 0
    %p184 = por %p182, %p183
    %p185 = scmp.ne.s32.totalorder %s174, %s177
    %p186 = scmp.eq.s32.totalorder %s19, 3
    %p187 = por %p185, %p186
    %p188 = scmp.ne.s32.totalorder %s177, %s178
    %p189 = scmp.eq.s32.totalorder %s19, 0
    %p190 = por %p188, %p189
    %p191 = scmp.ne.s32.totalorder %s177, %s178
    %p192 = scmp.eq.s32.totalorder %s20, 3
    %p193 = por %p191, %p192
    %p195 = scmp.ne.s32.totalorder %s178, %s194
    %p196 = scmp.eq.s32.totalorder %s20, 0
    %p197 = por %p195, %p196
    %s198 = ssub.s32 %s21, %s33
    %p199 = scmp.eq.s32.totalorder %s198, 0
    %s201 = sadd.s32 %s200, 1
    %s202 = scalar_select %p199, %s200, %s201
    %p205 = pneg %p199
    %p206 = scmp.eq.s32.totalorder %s14, 3
    %p207 = por %p205, %p206
    %p208 = scmp.ne.s32.totalorder %s200, %s203
    %p209 = scmp.eq.s32.totalorder %s14, 0
    %p210 = por %p208, %p209
    %p211 = scmp.ne.s32.totalorder %s200, %s203
    %p212 = scmp.eq.s32.totalorder %s19, 3
    %p213 = por %p211, %p212
    %p214 = scmp.ne.s32.totalorder %s203, %s204
    %p215 = scmp.eq.s32.totalorder %s19, 0
    %p216 = por %p214, %p215
    %p217 = scmp.ne.s32.totalorder %s203, %s204
    %p218 = scmp.eq.s32.totalorder %s20, 3
    %p219 = por %p217, %p218
    %p221 = scmp.ne.s32.totalorder %s204, %s220
    %p222 = scmp.eq.s32.totalorder %s20, 0
    %p223 = por %p221, %p222
    %p224 = scmp.le.s32.totalorder 1, %s14
    %p225 = scmp.lt.s32.totalorder %s14, 5
    %p226 = pnand %p224, %p225
    %p227 = pneg %p226
    // Predicated region
    $region9: #{encoder_forward.4} parent=5 // pred_check
      _
    $region10: #{encoder_forward.4} parent=5 // pred_check_branch
      %229 = sbr.rel (%p226) target = $region12
    $region11: #{encoder_forward.4} parent=5 // pred_region
      %s230 = ssub.s32 %s14, 1
      // Predicated region
      $region13: #{encoder_forward.4} parent=11 // pred_check
        %p231 = pneg %p73
      $region14: #{encoder_forward.4} parent=11 // pred_check_branch
        %233 = sbr.rel (%p231) target = $region16
      $region15: #{encoder_forward.4} parent=11 // pred_region
        _
      $region16: #{encoder_forward.4} parent=11 // pred_fallthru
        _
      // Predicated region
      $region17: #{encoder_forward.4} parent=11 // pred_check
        %p234 = pneg %p94
      $region18: #{encoder_forward.4} parent=11 // pred_check_branch
        %236 = sbr.rel (%p234) target = $region20
      $region19: #{encoder_forward.4} parent=11 // pred_region
        _
      $region20: #{encoder_forward.4} parent=11 // pred_fallthru
        _
      // Predicated region
      $region21: #{encoder_forward.4} parent=11 // pred_check
        %p237 = pneg %p115
      $region22: #{encoder_forward.4} parent=11 // pred_check_branch
        %239 = sbr.rel (%p237) target = $region24
      $region23: #{encoder_forward.4} parent=11 // pred_region
        _
      $region24: #{encoder_forward.4} parent=11 // pred_fallthru
        _
      // Predicated region
      $region25: #{encoder_forward.4} parent=11 // pred_check
        %p240 = pneg %p136
      $region26: #{encoder_forward.4} parent=11 // pred_check_branch
        %242 = sbr.rel (%p240) target = $region28
      $region27: #{encoder_forward.4} parent=11 // pred_region
        _
      $region28: #{encoder_forward.4} parent=11 // pred_fallthru
        _
    $region12: #{encoder_forward.4} parent=5 // pred_fallthru
      _
    %p243 = scmp.lt.s32.totalorder %s14, 4
    // Predicated region
    $region29: #{encoder_forward.4} parent=5 // pred_check
      %p244 = pneg %p243
    $region30: #{encoder_forward.4} parent=5 // pred_check_branch
      %246 = sbr.rel (%p244) target = $region32
    $region31: #{encoder_forward.4} parent=5 // pred_region
      // Predicated region
      $region33: #{encoder_forward.4} parent=31 // pred_check
        %p247 = pneg %p46
      $region34: #{encoder_forward.4} parent=31 // pred_check_branch
        %249 = sbr.rel (%p247) target = $region36
      $region35: #{encoder_forward.4} parent=31 // pred_region
        %p250 = scmp.lt.s32.totalorder %s21, 1
        %s251 = scalar_select %p250, %s21, 1
        %s252 = smul.addr %s251, 32
        %s253 = smul.addr %s252, 4
        %s254 = scalar_lea.vmem %s0, %s253
      $region36: #{encoder_forward.4} parent=31 // pred_fallthru
        _
    $region32: #{encoder_forward.4} parent=5 // pred_fallthru
      _
    %p255 = scmp.le.s32.totalorder 1, %s14
    %p256 = scmp.lt.s32.totalorder %s14, 5
    %p257 = pnand %p255, %p256
    %p258 = pneg %p257
    // Predicated region
    $region37: #{encoder_forward.4} parent=5 // pred_check
      _
    $region38: #{encoder_forward.4} parent=5 // pred_check_branch
      %260 = sbr.rel (%p257) target = $region40
    $region39: #{encoder_forward.4} parent=5 // pred_region
      %s261 = ssub.s32 %s14, 1
      %p262 = scmp.lt.s32.totalorder %s23, 1
      %s263 = scalar_select %p262, %s23, 1
      %s264 = smul.addr %s263, 32
      %s265 = smul.addr %s264, 4
      %s266 = scalar_lea.vmem %s0, %s265
      %p267 = pneg %p52
      %p268 = pneg %p49
      %p269 = pneg %p73
      %p270 = pneg %p70
      %p271 = pneg %p94
      %p272 = pneg %p91
      %p273 = pneg %p115
      %p274 = pneg %p112
      %p275 = pneg %p136
      %p276 = pneg %p133
      %p277 = pneg %p164
      %p278 = pneg %p161
      %s279 = smul.u32 8, %s24
      %p280 = scmp.lt.s32.totalorder %s23, 1
      %s281 = scalar_select %p280, %s23, 1
      %p282 = scmp.lt.s32.totalorder %s279, 15
      %s283 = scalar_select %p282, %s279, 15
      %s284 = smul.addr %s283, 2
      %s285 = smul.addr %s281, 32
      %s286 = sadd.s32 %s284, %s285
      %s287 = smul.addr %s286, 8
      %s288 = scalar_lea.vmem %s5, %s287
      %p289 = pneg %p190
      %p290 = pneg %p187
      %p291 = scmp.lt.s32.totalorder %s23, 1
      %s292 = scalar_select %p291, %s23, 1
      %s293 = scalar_lea.vmem %s6, %s292
      %p294 = pneg %p216
      %p295 = pneg %p213
      %p296 = scmp.lt.s32.totalorder %s23, 1
      %s297 = scalar_select %p296, %s23, 1
      %s298 = scalar_lea.vmem %s7, %s297
      %p299 = scmp.lt.s32.totalorder %s23, 1
      %s300 = scalar_select %p299, %s23, 1
      %s301 = smul.addr %s300, 32
      %s302 = smul.addr %s301, 4
      %s303 = scalar_lea.vmem %s0, %s302
      %s304 = smul.u32 8, %s24
      %p305 = scmp.lt.s32.totalorder %s23, 1
      %s306 = scalar_select %p305, %s23, 1
      %p307 = scmp.lt.s32.totalorder %s304, 15
      %s308 = scalar_select %p307, %s304, 15
      %s309 = smul.addr %s308, 2
      %s310 = smul.addr %s306, 32
      %s311 = sadd.s32 %s309, %s310
      %s312 = smul.addr %s311, 8
      %s313 = scalar_lea.vmem %s5, %s312
      %s314 = smul.u32 8, %s24
      %p315 = scmp.lt.s32.totalorder %s23, 1
      %s316 = scalar_select %p315, %s23, 1
      %s317 = scalar_lea.vmem %s6, %s316
      %p318 = scmp.lt.s32.totalorder %s23, 1
      %s319 = scalar_select %p318, %s23, 1
      %s320 = scalar_lea.vmem %s7, %s319
      %p322 = scmp.eq.s32.totalorder %s24, 0
      // Predicated region
      $region41: #{encoder_forward.4} parent=39 // pred_check
        %p323 = pneg %p322
      $region42: #{encoder_forward.4} parent=39 // pred_check_branch
        %325 = sbr.rel (%p323) target = $region44
      $region43: #{encoder_forward.4} parent=39 // pred_region
        %326 = vst [vmem:[%s317] sm:$0x1] 0.0
        %327 = vst [vmem:[%s320] sm:$0x1] 0.0
        %v328 = vld [vmem:[%s1] sm:$0x1]
        %v329 = vld [vmem:[%s2] sm:$0x1]
        %v330 = vld [vmem:[%s303] sm:$0xf]
        %v331 = vld [vmem:[%s303 + $0x4] sm:$0xf]
        %v332 = vld [vmem:[%s303 + $0x8] sm:$0xf]
        %v333 = vld [vmem:[%s303 + $0xc] sm:$0xf]
        %v334 = vld [vmem:[%s303 + $0x10] sm:$0xf]
        %v335 = vld [vmem:[%s303 + $0x14] sm:$0xf]
        %v336 = vld [vmem:[%s303 + $0x18] sm:$0xf]
        %v337 = vld [vmem:[%s303 + $0x1c] sm:$0xf]
        %v338 = vld [vmem:[%s303 + $0x20] sm:$0xf]
        %v339 = vld [vmem:[%s303 + $0x24] sm:$0xf]
        %v340 = vld [vmem:[%s303 + $0x28] sm:$0xf]
        %v341 = vld [vmem:[%s303 + $0x2c] sm:$0xf]
        %v342 = vld [vmem:[%s303 + $0x30] sm:$0xf]
        %v343 = vld [vmem:[%s303 + $0x34] sm:$0xf]
        %v344 = vld [vmem:[%s303 + $0x38] sm:$0xf]
        %v345 = vld [vmem:[%s303 + $0x3c] sm:$0xf]
        %v346 = vunpack.c.l.bf16 %v330
        %v347 = vunpack.c.l.bf16 %v331
        %v348 = vunpack.c.l.bf16 %v332
        %v349 = vunpack.c.l.bf16 %v333
        %v350 = vunpack.c.l.bf16 %v334
        %v351 = vunpack.c.l.bf16 %v335
        %v352 = vunpack.c.l.bf16 %v336
        %v353 = vunpack.c.l.bf16 %v337
        %v354 = vunpack.c.l.bf16 %v338
        %v355 = vunpack.c.l.bf16 %v339
        %v356 = vunpack.c.l.bf16 %v340
        %v357 = vunpack.c.l.bf16 %v341
        %v358 = vunpack.c.l.bf16 %v342
        %v359 = vunpack.c.l.bf16 %v343
        %v360 = vunpack.c.l.bf16 %v344
        %v361 = vunpack.c.l.bf16 %v345
        %v363 = vlaneseq
        %v364 = vshrl.u32 %v363, 7
        %v365 = vsub.s32 0, %v364
        %v366 = vrot.slane %v328, %v365
        %v368 = vmul.f32 %v346, %v366
        %v369 = vmul.f32 %v347, %v366
        %v370 = vmul.f32 %v348, %v366
        %v371 = vmul.f32 %v349, %v366
        %v372 = vmul.f32 %v350, %v366
        %v373 = vmul.f32 %v351, %v366
        %v374 = vmul.f32 %v352, %v366
        %v375 = vmul.f32 %v353, %v366
        %v376 = vmul.f32 %v354, %v366
        %v377 = vmul.f32 %v355, %v366
        %v378 = vmul.f32 %v356, %v366
        %v379 = vmul.f32 %v357, %v366
        %v380 = vmul.f32 %v358, %v366
        %v381 = vmul.f32 %v359, %v366
        %v382 = vmul.f32 %v360, %v366
        %v383 = vmul.f32 %v361, %v366
        %v385 = vlaneseq
        %v386 = vshrl.u32 %v385, 7
        %v387 = vsub.s32 0, %v386
        %v388 = vrot.slane %v329, %v387
        %v390 = vadd.f32 %v368, %v388
        %v391 = vadd.f32 %v369, %v388
        %v392 = vadd.f32 %v370, %v388
        %v393 = vadd.f32 %v371, %v388
        %v394 = vadd.f32 %v372, %v388
        %v395 = vadd.f32 %v373, %v388
        %v396 = vadd.f32 %v374, %v388
        %v397 = vadd.f32 %v375, %v388
        %v398 = vadd.f32 %v376, %v388
        %v399 = vadd.f32 %v377, %v388
        %v400 = vadd.f32 %v378, %v388
        %v401 = vadd.f32 %v379, %v388
        %v402 = vadd.f32 %v380, %v388
        %v403 = vadd.f32 %v381, %v388
        %v404 = vadd.f32 %v382, %v388
        %v405 = vadd.f32 %v383, %v388
        %v406 = vmax.f32 %v390, 0.0
        %v407 = vmax.f32 %v391, 0.0
        %v408 = vmax.f32 %v392, 0.0
        %v409 = vmax.f32 %v393, 0.0
        %v410 = vmax.f32 %v394, 0.0
        %v411 = vmax.f32 %v395, 0.0
        %v412 = vmax.f32 %v396, 0.0
        %v413 = vmax.f32 %v397, 0.0
        %v414 = vmax.f32 %v398, 0.0
        %v415 = vmax.f32 %v399, 0.0
        %v416 = vmax.f32 %v400, 0.0
        %v417 = vmax.f32 %v401, 0.0
        %v418 = vmax.f32 %v402, 0.0
        %v419 = vmax.f32 %v403, 0.0
        %v420 = vmax.f32 %v404, 0.0
        %v421 = vmax.f32 %v405, 0.0
        %v422 = vpack.c.bf16 %v407, %v406
        %v423 = vpack.c.bf16 %v409, %v408
        %v424 = vpack.c.bf16 %v411, %v410
        %v425 = vpack.c.bf16 %v413, %v412
        %v426 = vpack.c.bf16 %v415, %v414
        %v427 = vpack.c.bf16 %v417, %v416
        %v428 = vpack.c.bf16 %v419, %v418
        %v429 = vpack.c.bf16 %v421, %v420
        %v438 = vunpack.c.l.b16 %v422
        %v439 = vunpack.c.h.b16 %v422
        %v440 = vunpack.c.l.b16 %v423
        %v441 = vunpack.c.h.b16 %v423
        %v442 = vunpack.c.l.b16 %v424
        %v443 = vunpack.c.h.b16 %v424
        %v444 = vunpack.c.l.b16 %v425
        %v445 = vunpack.c.h.b16 %v425
        %v446 = vunpack.c.l.b16 %v426
        %v447 = vunpack.c.h.b16 %v426
        %v448 = vunpack.c.l.b16 %v427
        %v449 = vunpack.c.h.b16 %v427
        %v450 = vunpack.c.l.b16 %v428
        %v451 = vunpack.c.h.b16 %v428
        %v452 = vunpack.c.l.b16 %v429
        %v453 = vunpack.c.h.b16 %v429
        %v454 = vpack.c.b16 %v438, %v438
        %v455 = vpack.c.b16 %v439, %v439
        %v456 = vpack.c.b16 %v440, %v440
        %v457 = vpack.c.b16 %v441, %v441
        %v458 = vpack.c.b16 %v442, %v442
        %v459 = vpack.c.b16 %v443, %v443
        %v460 = vpack.c.b16 %v444, %v444
        %v461 = vpack.c.b16 %v445, %v445
        %v462 = vpack.c.b16 %v446, %v446
        %v463 = vpack.c.b16 %v447, %v447
        %v464 = vpack.c.b16 %v448, %v448
        %v465 = vpack.c.b16 %v449, %v449
        %v466 = vpack.c.b16 %v450, %v450
        %v467 = vpack.c.b16 %v451, %v451
        %v468 = vpack.c.b16 %v452, %v452
        %v469 = vpack.c.b16 %v453, %v453
        %vm470 = vsmask.f32 256
        %vm471 = vsmask.f32 4368
        %vm472 = vmor %vm470, %vm471
        %v474 = vshrl.u32 %v454, 16
        %v476 = vrot.slane %v474, 7
        %v477 = vshll.u32 %v454, 16
        %v479 = vor.u32 %v476, %v477
        %v480 = vrot.slane %v476, 4
        %v482 = vshrl.u32 %v455, 16
        %v484 = vrot.slane %v482, 7
        %v485 = vshll.u32 %v455, 16
        %v487 = vor.u32 %v484, %v485
        %v488 = vsel %vm472, %v480, %v487
        %v489 = vrot.slane %v484, 4
        %v491 = vshrl.u32 %v456, 16
        %v493 = vrot.slane %v491, 7
        %v494 = vshll.u32 %v456, 16
        %v496 = vor.u32 %v493, %v494
        %v497 = vrot.slane %v493, 4
        %v499 = vshrl.u32 %v457, 16
        %v501 = vrot.slane %v499, 7
        %v502 = vshll.u32 %v457, 16
        %v504 = vor.u32 %v501, %v502
        %v505 = vsel %vm472, %v497, %v504
        %v506 = vrot.slane %v501, 4
        %v508 = vshrl.u32 %v458, 16
        %v510 = vrot.slane %v508, 7
        %v511 = vshll.u32 %v458, 16
        %v513 = vor.u32 %v510, %v511
        %v514 = vrot.slane %v510, 4
        %v516 = vshrl.u32 %v459, 16
        %v518 = vrot.slane %v516, 7
        %v519 = vshll.u32 %v459, 16
        %v521 = vor.u32 %v518, %v519
        %v522 = vsel %vm472, %v514, %v521
        %v523 = vrot.slane %v518, 4
        %v525 = vshrl.u32 %v460, 16
        %v527 = vrot.slane %v525, 7
        %v528 = vshll.u32 %v460, 16
        %v530 = vor.u32 %v527, %v528
        %v531 = vrot.slane %v527, 4
        %v533 = vshrl.u32 %v461, 16
        %v535 = vrot.slane %v533, 7
        %v536 = vshll.u32 %v461, 16
        %v538 = vor.u32 %v535, %v536
        %v539 = vsel %vm472, %v531, %v538
        %v540 = vrot.slane %v535, 4
        %v542 = vshrl.u32 %v462, 16
        %v544 = vrot.slane %v542, 7
        %v545 = vshll.u32 %v462, 16
        %v547 = vor.u32 %v544, %v545
        %v548 = vrot.slane %v544, 4
        %v550 = vshrl.u32 %v463, 16
        %v552 = vrot.slane %v550, 7
        %v553 = vshll.u32 %v463, 16
        %v555 = vor.u32 %v552, %v553
        %v556 = vsel %vm472, %v548, %v555
        %v557 = vrot.slane %v552, 4
        %v559 = vshrl.u32 %v464, 16
        %v561 = vrot.slane %v559, 7
        %v562 = vshll.u32 %v464, 16
        %v564 = vor.u32 %v561, %v562
        %v565 = vrot.slane %v561, 4
        %v567 = vshrl.u32 %v465, 16
        %v569 = vrot.slane %v567, 7
        %v570 = vshll.u32 %v465, 16
        %v572 = vor.u32 %v569, %v570
        %v573 = vsel %vm472, %v565, %v572
        %v574 = vrot.slane %v569, 4
        %v576 = vshrl.u32 %v466, 16
        %v578 = vrot.slane %v576, 7
        %v579 = vshll.u32 %v466, 16
        %v581 = vor.u32 %v578, %v579
        %v582 = vrot.slane %v578, 4
        %v584 = vshrl.u32 %v467, 16
        %v586 = vrot.slane %v584, 7
        %v587 = vshll.u32 %v467, 16
        %v589 = vor.u32 %v586, %v587
        %v590 = vsel %vm472, %v582, %v589
        %v591 = vrot.slane %v586, 4
        %v593 = vshrl.u32 %v468, 16
        %v595 = vrot.slane %v593, 7
        %v596 = vshll.u32 %v468, 16
        %v598 = vor.u32 %v595, %v596
        %v599 = vrot.slane %v595, 4
        %v601 = vshrl.u32 %v469, 16
        %v603 = vrot.slane %v601, 7
        %v604 = vshll.u32 %v469, 16
        %v606 = vor.u32 %v603, %v604
        %v607 = vsel %vm472, %v599, %v606
        %v608 = vrot.slane %v603, 4
        %s633 = scalar_lea.vmem [#allocation2], 12
        %vm634 = vcmask 1043456
        %vm635 = vsmask.f32 7938
        %vm636 = vmand %vm634, %vm635
        %v637 = vld [vmem:[%s633] sm:$0xf]
        %v638 = vsel %vm636, %v479, %v637
        %639 = vst [vmem:[%s633] sm:$0xf] %v638
        %640 = vst [vmem:[%s633 + $0x4] sm:$0xf] %v488
        %vm641 = vcmask 1040384
        %vm642 = vmand %vm641, %vm470
        %v643 = vld [vmem:[%s633 + $0x8] sm:$0x1]
        %v644 = vsel %vm642, %v489, %v643
        %645 = vst [vmem:[%s633 + $0x8] sm:$0x1] %v644
        %v646 = vld [vmem:[%s633 + $0xc] sm:$0xf]
        %v647 = vsel %vm636, %v496, %v646
        %648 = vst [vmem:[%s633 + $0xc] sm:$0xf] %v647
        %649 = vst [vmem:[%s633 + $0x10] sm:$0xf] %v505
        %v650 = vld [vmem:[%s633 + $0x14] sm:$0x1]
        %v651 = vsel %vm642, %v506, %v650
        %652 = vst [vmem:[%s633 + $0x14] sm:$0x1] %v651
        %v653 = vld [vmem:[%s633 + $0x18] sm:$0xf]
        %v654 = vsel %vm636, %v513, %v653
        %655 = vst [vmem:[%s633 + $0x18] sm:$0xf] %v654
        %656 = vst [vmem:[%s633 + $0x1c] sm:$0xf] %v522
        %v657 = vld [vmem:[%s633 + $0x20] sm:$0x1]
        %v658 = vsel %vm642, %v523, %v657
        %659 = vst [vmem:[%s633 + $0x20] sm:$0x1] %v658
        %v660 = vld [vmem:[%s633 + $0x24] sm:$0xf]
        %v661 = vsel %vm636, %v530, %v660
        %662 = vst [vmem:[%s633 + $0x24] sm:$0xf] %v661
        %663 = vst [vmem:[%s633 + $0x28] sm:$0xf] %v539
        %v664 = vld [vmem:[%s633 + $0x2c] sm:$0x1]
        %v665 = vsel %vm642, %v540, %v664
        %666 = vst [vmem:[%s633 + $0x2c] sm:$0x1] %v665
        %v667 = vld [vmem:[%s633 + $0x30] sm:$0xf]
        %v668 = vsel %vm636, %v547, %v667
        %669 = vst [vmem:[%s633 + $0x30] sm:$0xf] %v668
        %670 = vst [vmem:[%s633 + $0x34] sm:$0xf] %v556
        %v671 = vld [vmem:[%s633 + $0x38] sm:$0x1]
        %v672 = vsel %vm642, %v557, %v671
        %673 = vst [vmem:[%s633 + $0x38] sm:$0x1] %v672
        %v674 = vld [vmem:[%s633 + $0x3c] sm:$0xf]
        %v675 = vsel %vm636, %v564, %v674
        %676 = vst [vmem:[%s633 + $0x3c] sm:$0xf] %v675
        %677 = vst [vmem:[%s633 + $0x40] sm:$0xf] %v573
        %v678 = vld [vmem:[%s633 + $0x44] sm:$0x1]
        %v679 = vsel %vm642, %v574, %v678
        %680 = vst [vmem:[%s633 + $0x44] sm:$0x1] %v679
        %v681 = vld [vmem:[%s633 + $0x48] sm:$0xf]
        %v682 = vsel %vm636, %v581, %v681
        %683 = vst [vmem:[%s633 + $0x48] sm:$0xf] %v682
        %684 = vst [vmem:[%s633 + $0x4c] sm:$0xf] %v590
        %v685 = vld [vmem:[%s633 + $0x50] sm:$0x1]
        %v686 = vsel %vm642, %v591, %v685
        %687 = vst [vmem:[%s633 + $0x50] sm:$0x1] %v686
        %v688 = vld [vmem:[%s633 + $0x54] sm:$0xf]
        %v689 = vsel %vm636, %v598, %v688
        %690 = vst [vmem:[%s633 + $0x54] sm:$0xf] %v689
        %691 = vst [vmem:[%s633 + $0x58] sm:$0xf] %v607
        %v692 = vld [vmem:[%s633 + $0x5c] sm:$0x1]
        %v693 = vsel %vm642, %v608, %v692
        %694 = vst [vmem:[%s633 + $0x5c] sm:$0x1] %v693
        %s695 = scalar_lea.vmem %s303, 64
        %v696 = vld [vmem:[%s695] sm:$0xf]
        %v697 = vld [vmem:[%s695 + $0x4] sm:$0xf]
        %v698 = vld [vmem:[%s695 + $0x8] sm:$0xf]
        %v699 = vld [vmem:[%s695 + $0xc] sm:$0xf]
        %v700 = vld [vmem:[%s695 + $0x10] sm:$0xf]
        %v701 = vld [vmem:[%s695 + $0x14] sm:$0xf]
        %v702 = vld [vmem:[%s695 + $0x18] sm:$0xf]
        %v703 = vld [vmem:[%s695 + $0x1c] sm:$0xf]
        %v704 = vld [vmem:[%s695 + $0x20] sm:$0xf]
        %v705 = vld [vmem:[%s695 + $0x24] sm:$0xf]
        %v706 = vld [vmem:[%s695 + $0x28] sm:$0xf]
        %v707 = vld [vmem:[%s695 + $0x2c] sm:$0xf]
        %v708 = vld [vmem:[%s695 + $0x30] sm:$0xf]
        %v709 = vld [vmem:[%s695 + $0x34] sm:$0xf]
        %v710 = vld [vmem:[%s695 + $0x38] sm:$0xf]
        %v711 = vld [vmem:[%s695 + $0x3c] sm:$0xf]
        %v712 = vunpack.c.l.bf16 %v696
        %v713 = vunpack.c.l.bf16 %v697
        %v714 = vunpack.c.l.bf16 %v698
        %v715 = vunpack.c.l.bf16 %v699
        %v716 = vunpack.c.l.bf16 %v700
        %v717 = vunpack.c.l.bf16 %v701
        %v718 = vunpack.c.l.bf16 %v702
        %v719 = vunpack.c.l.bf16 %v703
        %v720 = vunpack.c.l.bf16 %v704
        %v721 = vunpack.c.l.bf16 %v705
        %v722 = vunpack.c.l.bf16 %v706
        %v723 = vunpack.c.l.bf16 %v707
        %v724 = vunpack.c.l.bf16 %v708
        %v725 = vunpack.c.l.bf16 %v709
        %v726 = vunpack.c.l.bf16 %v710
        %v727 = vunpack.c.l.bf16 %v711
        %v728 = vmul.f32 %v712, %v366
        %v729 = vmul.f32 %v713, %v366
        %v730 = vmul.f32 %v714, %v366
        %v731 = vmul.f32 %v715, %v366
        %v732 = vmul.f32 %v716, %v366
        %v733 = vmul.f32 %v717, %v366
        %v734 = vmul.f32 %v718, %v366
        %v735 = vmul.f32 %v719, %v366
        %v736 = vmul.f32 %v720, %v366
        %v737 = vmul.f32 %v721, %v366
        %v738 = vmul.f32 %v722, %v366
        %v739 = vmul.f32 %v723, %v366
        %v740 = vmul.f32 %v724, %v366
        %v741 = vmul.f32 %v725, %v366
        %v742 = vmul.f32 %v726, %v366
        %v743 = vmul.f32 %v727, %v366
        %v744 = vadd.f32 %v728, %v388
        %v745 = vadd.f32 %v729, %v388
        %v746 = vadd.f32 %v730, %v388
        %v747 = vadd.f32 %v731, %v388
        %v748 = vadd.f32 %v732, %v388
        %v749 = vadd.f32 %v733, %v388
        %v750 = vadd.f32 %v734, %v388
        %v751 = vadd.f32 %v735, %v388
        %v752 = vadd.f32 %v736, %v388
        %v753 = vadd.f32 %v737, %v388
        %v754 = vadd.f32 %v738, %v388
        %v755 = vadd.f32 %v739, %v388
        %v756 = vadd.f32 %v740, %v388
        %v757 = vadd.f32 %v741, %v388
        %v758 = vadd.f32 %v742, %v388
        %v759 = vadd.f32 %v743, %v388
        %v760 = vmax.f32 %v744, 0.0
        %v761 = vmax.f32 %v745, 0.0
        %v762 = vmax.f32 %v746, 0.0
        %v763 = vmax.f32 %v747, 0.0
        %v764 = vmax.f32 %v748, 0.0
        %v765 = vmax.f32 %v749, 0.0
        %v766 = vmax.f32 %v750, 0.0
        %v767 = vmax.f32 %v751, 0.0
        %v768 = vmax.f32 %v752, 0.0
        %v769 = vmax.f32 %v753, 0.0
        %v770 = vmax.f32 %v754, 0.0
        %v771 = vmax.f32 %v755, 0.0
        %v772 = vmax.f32 %v756, 0.0
        %v773 = vmax.f32 %v757, 0.0
        %v774 = vmax.f32 %v758, 0.0
        %v775 = vmax.f32 %v759, 0.0
        %v776 = vpack.c.bf16 %v761, %v760
        %v777 = vpack.c.bf16 %v763, %v762
        %v778 = vpack.c.bf16 %v765, %v764
        %v779 = vpack.c.bf16 %v767, %v766
        %v780 = vpack.c.bf16 %v769, %v768
        %v781 = vpack.c.bf16 %v771, %v770
        %v782 = vpack.c.bf16 %v773, %v772
        %v783 = vpack.c.bf16 %v775, %v774
        %v792 = vunpack.c.l.b16 %v776
        %v793 = vunpack.c.h.b16 %v776
        %v794 = vunpack.c.l.b16 %v777
        %v795 = vunpack.c.h.b16 %v777
        %v796 = vunpack.c.l.b16 %v778
        %v797 = vunpack.c.h.b16 %v778
        %v798 = vunpack.c.l.b16 %v779
        %v799 = vunpack.c.h.b16 %v779
        %v800 = vunpack.c.l.b16 %v780
        %v801 = vunpack.c.h.b16 %v780
        %v802 = vunpack.c.l.b16 %v781
        %v803 = vunpack.c.h.b16 %v781
        %v804 = vunpack.c.l.b16 %v782
        %v805 = vunpack.c.h.b16 %v782
        %v806 = vunpack.c.l.b16 %v783
        %v807 = vunpack.c.h.b16 %v783
        %v808 = vpack.c.b16 %v792, %v792
        %v809 = vpack.c.b16 %v793, %v793
        %v810 = vpack.c.b16 %v794, %v794
        %v811 = vpack.c.b16 %v795, %v795
        %v812 = vpack.c.b16 %v796, %v796
        %v813 = vpack.c.b16 %v797, %v797
        %v814 = vpack.c.b16 %v798, %v798
        %v815 = vpack.c.b16 %v799, %v799
        %v816 = vpack.c.b16 %v800, %v800
        %v817 = vpack.c.b16 %v801, %v801
        %v818 = vpack.c.b16 %v802, %v802
        %v819 = vpack.c.b16 %v803, %v803
        %v820 = vpack.c.b16 %v804, %v804
        %v821 = vpack.c.b16 %v805, %v805
        %v822 = vpack.c.b16 %v806, %v806
        %v823 = vpack.c.b16 %v807, %v807
        %v825 = vshrl.u32 %v808, 16
        %v827 = vrot.slane %v825, 7
        %v828 = vshll.u32 %v808, 16
        %v830 = vor.u32 %v827, %v828
        %v831 = vrot.slane %v827, 4
        %v833 = vshrl.u32 %v809, 16
        %v835 = vrot.slane %v833, 7
        %v836 = vshll.u32 %v809, 16
        %v838 = vor.u32 %v835, %v836
        %v839 = vsel %vm472, %v831, %v838
        %v840 = vrot.slane %v835, 4
        %v842 = vshrl.u32 %v810, 16
        %v844 = vrot.slane %v842, 7
        %v845 = vshll.u32 %v810, 16
        %v847 = vor.u32 %v844, %v845
        %v848 = vrot.slane %v844, 4
        %v850 = vshrl.u32 %v811, 16
        %v852 = vrot.slane %v850, 7
        %v853 = vshll.u32 %v811, 16
        %v855 = vor.u32 %v852, %v853
        %v856 = vsel %vm472, %v848, %v855
        %v857 = vrot.slane %v852, 4
        %v859 = vshrl.u32 %v812, 16
        %v861 = vrot.slane %v859, 7
        %v862 = vshll.u32 %v812, 16
        %v864 = vor.u32 %v861, %v862
        %v865 = vrot.slane %v861, 4
        %v867 = vshrl.u32 %v813, 16
        %v869 = vrot.slane %v867, 7
        %v870 = vshll.u32 %v813, 16
        %v872 = vor.u32 %v869, %v870
        %v873 = vsel %vm472, %v865, %v872
        %v874 = vrot.slane %v869, 4
        %v876 = vshrl.u32 %v814, 16
        %v878 = vrot.slane %v876, 7
        %v879 = vshll.u32 %v814, 16
        %v881 = vor.u32 %v878, %v879
        %v882 = vrot.slane %v878, 4
        %v884 = vshrl.u32 %v815, 16
        %v886 = vrot.slane %v884, 7
        %v887 = vshll.u32 %v815, 16
        %v889 = vor.u32 %v886, %v887
        %v890 = vsel %vm472, %v882, %v889
        %v891 = vrot.slane %v886, 4
        %v893 = vshrl.u32 %v816, 16
        %v895 = vrot.slane %v893, 7
        %v896 = vshll.u32 %v816, 16
        %v898 = vor.u32 %v895, %v896
        %v899 = vrot.slane %v895, 4
        %v901 = vshrl.u32 %v817, 16
        %v903 = vrot.slane %v901, 7
        %v904 = vshll.u32 %v817, 16
        %v906 = vor.u32 %v903, %v904
        %v907 = vsel %vm472, %v899, %v906
        %v908 = vrot.slane %v903, 4
        %v910 = vshrl.u32 %v818, 16
        %v912 = vrot.slane %v910, 7
        %v913 = vshll.u32 %v818, 16
        %v915 = vor.u32 %v912, %v913
        %v916 = vrot.slane %v912, 4
        %v918 = vshrl.u32 %v819, 16
        %v920 = vrot.slane %v918, 7
        %v921 = vshll.u32 %v819, 16
        %v923 = vor.u32 %v920, %v921
        %v924 = vsel %vm472, %v916, %v923
        %v925 = vrot.slane %v920, 4
        %v927 = vshrl.u32 %v820, 16
        %v929 = vrot.slane %v927, 7
        %v930 = vshll.u32 %v820, 16
        %v932 = vor.u32 %v929, %v930
        %v933 = vrot.slane %v929, 4
        %v935 = vshrl.u32 %v821, 16
        %v937 = vrot.slane %v935, 7
        %v938 = vshll.u32 %v821, 16
        %v940 = vor.u32 %v937, %v938
        %v941 = vsel %vm472, %v933, %v940
        %v942 = vrot.slane %v937, 4
        %v944 = vshrl.u32 %v822, 16
        %v946 = vrot.slane %v944, 7
        %v947 = vshll.u32 %v822, 16
        %v949 = vor.u32 %v946, %v947
        %v950 = vrot.slane %v946, 4
        %v952 = vshrl.u32 %v823, 16
        %v954 = vrot.slane %v952, 7
        %v955 = vshll.u32 %v823, 16
        %v957 = vor.u32 %v954, %v955
        %v958 = vsel %vm472, %v950, %v957
        %v959 = vrot.slane %v954, 4
        %s984 = scalar_lea.vmem [#allocation2], 108
        %v985 = vld [vmem:[%s984] sm:$0xf]
        %v986 = vsel %vm636, %v830, %v985
        %987 = vst [vmem:[%s984] sm:$0xf] %v986
        %988 = vst [vmem:[%s984 + $0x4] sm:$0xf] %v839
        %v989 = vld [vmem:[%s984 + $0x8] sm:$0x1]
        %v990 = vsel %vm642, %v840, %v989
        %991 = vst [vmem:[%s984 + $0x8] sm:$0x1] %v990
        %v992 = vld [vmem:[%s984 + $0xc] sm:$0xf]
        %v993 = vsel %vm636, %v847, %v992
        %994 = vst [vmem:[%s984 + $0xc] sm:$0xf] %v993
        %995 = vst [vmem:[%s984 + $0x10] sm:$0xf] %v856
        %v996 = vld [vmem:[%s984 + $0x14] sm:$0x1]
        %v997 = vsel %vm642, %v857, %v996
        %998 = vst [vmem:[%s984 + $0x14] sm:$0x1] %v997
        %v999 = vld [vmem:[%s984 + $0x18] sm:$0xf]
        %v1000 = vsel %vm636, %v864, %v999
        %1001 = vst [vmem:[%s984 + $0x18] sm:$0xf] %v1000
        %1002 = vst [vmem:[%s984 + $0x1c] sm:$0xf] %v873
        %v1003 = vld [vmem:[%s984 + $0x20] sm:$0x1]
        %v1004 = vsel %vm642, %v874, %v1003
        %1005 = vst [vmem:[%s984 + $0x20] sm:$0x1] %v1004
        %v1006 = vld [vmem:[%s984 + $0x24] sm:$0xf]
        %v1007 = vsel %vm636, %v881, %v1006
        %1008 = vst [vmem:[%s984 + $0x24] sm:$0xf] %v1007
        %1009 = vst [vmem:[%s984 + $0x28] sm:$0xf] %v890
        %v1010 = vld [vmem:[%s984 + $0x2c] sm:$0x1]
        %v1011 = vsel %vm642, %v891, %v1010
        %1012 = vst [vmem:[%s984 + $0x2c] sm:$0x1] %v1011
        %v1013 = vld [vmem:[%s984 + $0x30] sm:$0xf]
        %v1014 = vsel %vm636, %v898, %v1013
        %1015 = vst [vmem:[%s984 + $0x30] sm:$0xf] %v1014
        %1016 = vst [vmem:[%s984 + $0x34] sm:$0xf] %v907
        %v1017 = vld [vmem:[%s984 + $0x38] sm:$0x1]
        %v1018 = vsel %vm642, %v908, %v1017
        %1019 = vst [vmem:[%s984 + $0x38] sm:$0x1] %v1018
        %v1020 = vld [vmem:[%s984 + $0x3c] sm:$0xf]
        %v1021 = vsel %vm636, %v915, %v1020
        %1022 = vst [vmem:[%s984 + $0x3c] sm:$0xf] %v1021
        %1023 = vst [vmem:[%s984 + $0x40] sm:$0xf] %v924
        %v1024 = vld [vmem:[%s984 + $0x44] sm:$0x1]
        %v1025 = vsel %vm642, %v925, %v1024
        %1026 = vst [vmem:[%s984 + $0x44] sm:$0x1] %v1025
        %v1027 = vld [vmem:[%s984 + $0x48] sm:$0xf]
        %v1028 = vsel %vm636, %v932, %v1027
        %1029 = vst [vmem:[%s984 + $0x48] sm:$0xf] %v1028
        %1030 = vst [vmem:[%s984 + $0x4c] sm:$0xf] %v941
        %v1031 = vld [vmem:[%s984 + $0x50] sm:$0x1]
        %v1032 = vsel %vm642, %v942, %v1031
        %1033 = vst [vmem:[%s984 + $0x50] sm:$0x1] %v1032
        %v1034 = vld [vmem:[%s984 + $0x54] sm:$0xf]
        %v1035 = vsel %vm636, %v949, %v1034
        %1036 = vst [vmem:[%s984 + $0x54] sm:$0xf] %v1035
        %1037 = vst [vmem:[%s984 + $0x58] sm:$0xf] %v958
        %v1038 = vld [vmem:[%s984 + $0x5c] sm:$0x1]
        %v1039 = vsel %vm642, %v959, %v1038
        %1040 = vst [vmem:[%s984 + $0x5c] sm:$0x1] %v1039
        %1041 = vst [vmem:[#allocation2] sm:$0xf] 0
        %1042 = vst [vmem:[#allocation2 + $0x4] sm:$0xf] 0
        %1043 = vst [vmem:[#allocation2 + $0x8] sm:$0x1] 0
        %s1044 = scalar_lea.vmem [#allocation2], 204
        %1045 = vst [vmem:[%s1044] sm:$0xf] 0
        %1046 = vst [vmem:[%s1044 + $0x4] sm:$0xf] 0
        %1047 = vst [vmem:[%s1044 + $0x8] sm:$0x1] 0
        %v1048 = vld [vmem:[%s633] sm:$0x1]
        %v1049 = vsel %vm642, 0, %v1048
        %1050 = vst [vmem:[%s633] sm:$0x1] %v1049
        %v1051 = vld [vmem:[%s633 + $0xc] sm:$0x1]
        %v1052 = vsel %vm642, 0, %v1051
        %1053 = vst [vmem:[%s633 + $0xc] sm:$0x1] %v1052
        %v1054 = vld [vmem:[%s633 + $0x18] sm:$0x1]
        %v1055 = vsel %vm642, 0, %v1054
        %1056 = vst [vmem:[%s633 + $0x18] sm:$0x1] %v1055
        %v1057 = vld [vmem:[%s633 + $0x24] sm:$0x1]
        %v1058 = vsel %vm642, 0, %v1057
        %1059 = vst [vmem:[%s633 + $0x24] sm:$0x1] %v1058
        %v1060 = vld [vmem:[%s633 + $0x30] sm:$0x1]
        %v1061 = vsel %vm642, 0, %v1060
        %1062 = vst [vmem:[%s633 + $0x30] sm:$0x1] %v1061
        %v1063 = vld [vmem:[%s633 + $0x3c] sm:$0x1]
        %v1064 = vsel %vm642, 0, %v1063
        %1065 = vst [vmem:[%s633 + $0x3c] sm:$0x1] %v1064
        %v1066 = vld [vmem:[%s633 + $0x48] sm:$0x1]
        %v1067 = vsel %vm642, 0, %v1066
        %1068 = vst [vmem:[%s633 + $0x48] sm:$0x1] %v1067
        %v1069 = vld [vmem:[%s633 + $0x54] sm:$0x1]
        %v1070 = vsel %vm642, 0, %v1069
        %1071 = vst [vmem:[%s633 + $0x54] sm:$0x1] %v1070
        %v1072 = vld [vmem:[%s633 + $0x60] sm:$0x1]
        %v1073 = vsel %vm642, 0, %v1072
        %1074 = vst [vmem:[%s633 + $0x60] sm:$0x1] %v1073
        %v1075 = vld [vmem:[%s633 + $0x6c] sm:$0x1]
        %v1076 = vsel %vm642, 0, %v1075
        %1077 = vst [vmem:[%s633 + $0x6c] sm:$0x1] %v1076
        %v1078 = vld [vmem:[%s633 + $0x78] sm:$0x1]
        %v1079 = vsel %vm642, 0, %v1078
        %1080 = vst [vmem:[%s633 + $0x78] sm:$0x1] %v1079
        %v1081 = vld [vmem:[%s633 + $0x84] sm:$0x1]
        %v1082 = vsel %vm642, 0, %v1081
        %1083 = vst [vmem:[%s633 + $0x84] sm:$0x1] %v1082
        %v1084 = vld [vmem:[%s633 + $0x90] sm:$0x1]
        %v1085 = vsel %vm642, 0, %v1084
        %1086 = vst [vmem:[%s633 + $0x90] sm:$0x1] %v1085
        %v1087 = vld [vmem:[%s633 + $0x9c] sm:$0x1]
        %v1088 = vsel %vm642, 0, %v1087
        %1089 = vst [vmem:[%s633 + $0x9c] sm:$0x1] %v1088
        %v1090 = vld [vmem:[%s633 + $0xa8] sm:$0x1]
        %v1091 = vsel %vm642, 0, %v1090
        %1092 = vst [vmem:[%s633 + $0xa8] sm:$0x1] %v1091
        %v1093 = vld [vmem:[%s633 + $0xb4] sm:$0x1]
        %v1094 = vsel %vm642, 0, %v1093
        %1095 = vst [vmem:[%s633 + $0xb4] sm:$0x1] %v1094
        %vm1096 = vmand %vm641, %vm635
        %v1097 = vld [vmem:[%s633 + $0x8] sm:$0x1]
        %v1098 = vsel %vm1096, 0, %v1097
        %1099 = vst [vmem:[%s633 + $0x8] sm:$0x1] %v1098
        %v1100 = vld [vmem:[%s633 + $0x14] sm:$0x1]
        %v1101 = vsel %vm1096, 0, %v1100
        %1102 = vst [vmem:[%s633 + $0x14] sm:$0x1] %v1101
        %v1103 = vld [vmem:[%s633 + $0x20] sm:$0x1]
        %v1104 = vsel %vm1096, 0, %v1103
        %1105 = vst [vmem:[%s633 + $0x20] sm:$0x1] %v1104
        %v1106 = vld [vmem:[%s633 + $0x2c] sm:$0x1]
        %v1107 = vsel %vm1096, 0, %v1106
        %1108 = vst [vmem:[%s633 + $0x2c] sm:$0x1] %v1107
        %v1109 = vld [vmem:[%s633 + $0x38] sm:$0x1]
        %v1110 = vsel %vm1096, 0, %v1109
        %1111 = vst [vmem:[%s633 + $0x38] sm:$0x1] %v1110
        %v1112 = vld [vmem:[%s633 + $0x44] sm:$0x1]
        %v1113 = vsel %vm1096, 0, %v1112
        %1114 = vst [vmem:[%s633 + $0x44] sm:$0x1] %v1113
        %v1115 = vld [vmem:[%s633 + $0x50] sm:$0x1]
        %v1116 = vsel %vm1096, 0, %v1115
        %1117 = vst [vmem:[%s633 + $0x50] sm:$0x1] %v1116
        %v1118 = vld [vmem:[%s633 + $0x5c] sm:$0x1]
        %v1119 = vsel %vm1096, 0, %v1118
        %1120 = vst [vmem:[%s633 + $0x5c] sm:$0x1] %v1119
        %v1121 = vld [vmem:[%s633 + $0x68] sm:$0x1]
        %v1122 = vsel %vm1096, 0, %v1121
        %1123 = vst [vmem:[%s633 + $0x68] sm:$0x1] %v1122
        %v1124 = vld [vmem:[%s633 + $0x74] sm:$0x1]
        %v1125 = vsel %vm1096, 0, %v1124
        %1126 = vst [vmem:[%s633 + $0x74] sm:$0x1] %v1125
        %v1127 = vld [vmem:[%s633 + $0x80] sm:$0x1]
        %v1128 = vsel %vm1096, 0, %v1127
        %1129 = vst [vmem:[%s633 + $0x80] sm:$0x1] %v1128
        %v1130 = vld [vmem:[%s633 + $0x8c] sm:$0x1]
        %v1131 = vsel %vm1096, 0, %v1130
        %1132 = vst [vmem:[%s633 + $0x8c] sm:$0x1] %v1131
        %v1133 = vld [vmem:[%s633 + $0x98] sm:$0x1]
        %v1134 = vsel %vm1096, 0, %v1133
        %1135 = vst [vmem:[%s633 + $0x98] sm:$0x1] %v1134
        %v1136 = vld [vmem:[%s633 + $0xa4] sm:$0x1]
        %v1137 = vsel %vm1096, 0, %v1136
        %1138 = vst [vmem:[%s633 + $0xa4] sm:$0x1] %v1137
        %v1139 = vld [vmem:[%s633 + $0xb0] sm:$0x1]
        %v1140 = vsel %vm1096, 0, %v1139
        %1141 = vst [vmem:[%s633 + $0xb0] sm:$0x1] %v1140
        %v1142 = vld [vmem:[%s633 + $0xbc] sm:$0x1]
        %v1143 = vsel %vm1096, 0, %v1142
        %1144 = vst [vmem:[%s633 + $0xbc] sm:$0x1] %v1143
      $region44: #{encoder_forward.4} parent=39 // pred_fallthru
        _
      %v1145 = vld [vmem:[%s4] sm:$0x1]
      %s1146 = smul.u32 %s24, 8
      %s1147 = smul.u32 %s1146, 3
      %s1148 = smul.addr %s1147, 4
      %s1149 = scalar_lea.vmem [#allocation2], %s1148
      %v1150 = vld [vmem:[%s1149] sm:$0xf]
      %v1151 = vld [vmem:[%s1149 + $0x4] sm:$0xf]
      %v1152 = vld [vmem:[%s1149 + $0xc] sm:$0xf]
      %v1153 = vld [vmem:[%s1149 + $0x10] sm:$0xf]
      %v1154 = vld [vmem:[%s1149 + $0x18] sm:$0xf]
      %v1155 = vld [vmem:[%s1149 + $0x1c] sm:$0xf]
      %v1156 = vld [vmem:[%s1149 + $0x24] sm:$0xf]
      %v1157 = vld [vmem:[%s1149 + $0x28] sm:$0xf]
      %v1158 = vld [vmem:[%s1149 + $0x30] sm:$0xf]
      %v1159 = vld [vmem:[%s1149 + $0x34] sm:$0xf]
      %v1160 = vld [vmem:[%s1149 + $0x3c] sm:$0xf]
      %v1161 = vld [vmem:[%s1149 + $0x40] sm:$0xf]
      %v1162 = vld [vmem:[%s1149 + $0x48] sm:$0xf]
      %v1163 = vld [vmem:[%s1149 + $0x4c] sm:$0xf]
      %v1164 = vld [vmem:[%s1149 + $0x54] sm:$0xf]
      %v1165 = vld [vmem:[%s1149 + $0x58] sm:$0xf]
      %v1166 = vld [vmem:[%s3] sm:$0xf]
      %v1167 = vld [vmem:[%s3 + $0x4] sm:$0xf]
      %v1168 = vld [vmem:[%s3 + $0x8] sm:$0xf]
      %v1169 = vld [vmem:[%s3 + $0xc] sm:$0xf]
      %v1170 = vld [vmem:[%s3 + $0x10] sm:$0xf]
      %v1171 = vld [vmem:[%s3 + $0x14] sm:$0xf]
      %v1172 = vld [vmem:[%s3 + $0x18] sm:$0xf]
      %v1173 = vld [vmem:[%s3 + $0x1c] sm:$0xf]
      %v1174 = vld [vmem:[%s3 + $0x20] sm:$0xf]
      %v1175 = vld [vmem:[%s3 + $0x24] sm:$0xf]
      %v1176 = vld [vmem:[%s3 + $0x28] sm:$0xf]
      %v1177 = vld [vmem:[%s3 + $0x2c] sm:$0xf]
      %v1178 = vld [vmem:[%s3 + $0x30] sm:$0xf]
      %v1179 = vld [vmem:[%s3 + $0x34] sm:$0xf]
      %v1180 = vld [vmem:[%s3 + $0x38] sm:$0xf]
      %v1181 = vld [vmem:[%s3 + $0x3c] sm:$0xf]
      %v1182 = vld [vmem:[%s1149 + $0x8] sm:$0x1]
      %v1183 = vld [vmem:[%s1149 + $0x14] sm:$0x1]
      %v1184 = vld [vmem:[%s1149 + $0x20] sm:$0x1]
      %v1185 = vld [vmem:[%s1149 + $0x2c] sm:$0x1]
      %v1186 = vld [vmem:[%s1149 + $0x38] sm:$0x1]
      %v1187 = vld [vmem:[%s1149 + $0x44] sm:$0x1]
      %v1188 = vld [vmem:[%s1149 + $0x50] sm:$0x1]
      %v1189 = vld [vmem:[%s1149 + $0x5c] sm:$0x1]
      %vm1190 = vsmask.f32 3328
      %vm1191 = vsmask.f32 7440
      %vm1192 = vmor %vm1190, %vm1191
      %v1194 = vshrl.u32 %v1150, 16
      %v1196 = vrot.slane %v1194, 4
      %v1197 = vshll.u32 %v1150, 16
      %v1199 = vrot.slane %v1197, 5
      %v1200 = vor.u32 %v1196, %v1199
      %v1201 = vrot.slane %v1200, 4
      %v1203 = vshll.u32 %v1151, 16
      %v1205 = vrot.slane %v1203, 5
      %v1206 = vsel %vm1192, %v1201, %v1205
      %v1207 = vshrl.u32 %v1151, 16
      %v1209 = vrot.slane %v1207, 4
      %v1210 = vor.u32 %v1209, %v1205
      %v1211 = vrot.slane %v1210, 4
      %v1213 = vshll.u32 %v1182, 16
      %v1215 = vrot.slane %v1213, 5
      %v1216 = vsel %vm1192, %v1211, %v1215
      %v1218 = vshrl.u32 %v1152, 16
      %v1220 = vrot.slane %v1218, 4
      %v1221 = vshll.u32 %v1152, 16
      %v1223 = vrot.slane %v1221, 5
      %v1224 = vor.u32 %v1220, %v1223
      %v1225 = vrot.slane %v1224, 4
      %v1227 = vshll.u32 %v1153, 16
      %v1229 = vrot.slane %v1227, 5
      %v1230 = vsel %vm1192, %v1225, %v1229
      %v1231 = vshrl.u32 %v1153, 16
      %v1233 = vrot.slane %v1231, 4
      %v1234 = vor.u32 %v1233, %v1229
      %v1235 = vrot.slane %v1234, 4
      %v1237 = vshll.u32 %v1183, 16
      %v1239 = vrot.slane %v1237, 5
      %v1240 = vsel %vm1192, %v1235, %v1239
      %v1242 = vshrl.u32 %v1154, 16
      %v1244 = vrot.slane %v1242, 4
      %v1245 = vshll.u32 %v1154, 16
      %v1247 = vrot.slane %v1245, 5
      %v1248 = vor.u32 %v1244, %v1247
      %v1249 = vrot.slane %v1248, 4
      %v1251 = vshll.u32 %v1155, 16
      %v1253 = vrot.slane %v1251, 5
      %v1254 = vsel %vm1192, %v1249, %v1253
      %v1255 = vshrl.u32 %v1155, 16
      %v1257 = vrot.slane %v1255, 4
      %v1258 = vor.u32 %v1257, %v1253
      %v1259 = vrot.slane %v1258, 4
      %v1261 = vshll.u32 %v1184, 16
      %v1263 = vrot.slane %v1261, 5
      %v1264 = vsel %vm1192, %v1259, %v1263
      %v1266 = vshrl.u32 %v1156, 16
      %v1268 = vrot.slane %v1266, 4
      %v1269 = vshll.u32 %v1156, 16
      %v1271 = vrot.slane %v1269, 5
      %v1272 = vor.u32 %v1268, %v1271
      %v1273 = vrot.slane %v1272, 4
      %v1275 = vshll.u32 %v1157, 16
      %v1277 = vrot.slane %v1275, 5
      %v1278 = vsel %vm1192, %v1273, %v1277
      %v1279 = vshrl.u32 %v1157, 16
      %v1281 = vrot.slane %v1279, 4
      %v1282 = vor.u32 %v1281, %v1277
      %v1283 = vrot.slane %v1282, 4
      %v1285 = vshll.u32 %v1185, 16
      %v1287 = vrot.slane %v1285, 5
      %v1288 = vsel %vm1192, %v1283, %v1287
      %v1290 = vshrl.u32 %v1158, 16
      %v1292 = vrot.slane %v1290, 4
      %v1293 = vshll.u32 %v1158, 16
      %v1295 = vrot.slane %v1293, 5
      %v1296 = vor.u32 %v1292, %v1295
      %v1297 = vrot.slane %v1296, 4
      %v1299 = vshll.u32 %v1159, 16
      %v1301 = vrot.slane %v1299, 5
      %v1302 = vsel %vm1192, %v1297, %v1301
      %v1303 = vshrl.u32 %v1159, 16
      %v1305 = vrot.slane %v1303, 4
      %v1306 = vor.u32 %v1305, %v1301
      %v1307 = vrot.slane %v1306, 4
      %v1309 = vshll.u32 %v1186, 16
      %v1311 = vrot.slane %v1309, 5
      %v1312 = vsel %vm1192, %v1307, %v1311
      %v1314 = vshrl.u32 %v1160, 16
      %v1316 = vrot.slane %v1314, 4
      %v1317 = vshll.u32 %v1160, 16
      %v1319 = vrot.slane %v1317, 5
      %v1320 = vor.u32 %v1316, %v1319
      %v1321 = vrot.slane %v1320, 4
      %v1323 = vshll.u32 %v1161, 16
      %v1325 = vrot.slane %v1323, 5
      %v1326 = vsel %vm1192, %v1321, %v1325
      %v1327 = vshrl.u32 %v1161, 16
      %v1329 = vrot.slane %v1327, 4
      %v1330 = vor.u32 %v1329, %v1325
      %v1331 = vrot.slane %v1330, 4
      %v1333 = vshll.u32 %v1187, 16
      %v1335 = vrot.slane %v1333, 5
      %v1336 = vsel %vm1192, %v1331, %v1335
      %v1338 = vshrl.u32 %v1162, 16
      %v1340 = vrot.slane %v1338, 4
      %v1341 = vshll.u32 %v1162, 16
      %v1343 = vrot.slane %v1341, 5
      %v1344 = vor.u32 %v1340, %v1343
      %v1345 = vrot.slane %v1344, 4
      %v1347 = vshll.u32 %v1163, 16
      %v1349 = vrot.slane %v1347, 5
      %v1350 = vsel %vm1192, %v1345, %v1349
      %v1351 = vshrl.u32 %v1163, 16
      %v1353 = vrot.slane %v1351, 4
      %v1354 = vor.u32 %v1353, %v1349
      %v1355 = vrot.slane %v1354, 4
      %v1357 = vshll.u32 %v1188, 16
      %v1359 = vrot.slane %v1357, 5
      %v1360 = vsel %vm1192, %v1355, %v1359
      %v1362 = vshrl.u32 %v1164, 16
      %v1364 = vrot.slane %v1362, 4
      %v1365 = vshll.u32 %v1164, 16
      %v1367 = vrot.slane %v1365, 5
      %v1368 = vor.u32 %v1364, %v1367
      %v1369 = vrot.slane %v1368, 4
      %v1371 = vshll.u32 %v1165, 16
      %v1373 = vrot.slane %v1371, 5
      %v1374 = vsel %vm1192, %v1369, %v1373
      %v1375 = vshrl.u32 %v1165, 16
      %v1377 = vrot.slane %v1375, 4
      %v1378 = vor.u32 %v1377, %v1373
      %v1379 = vrot.slane %v1378, 4
      %v1381 = vshll.u32 %v1189, 16
      %v1383 = vrot.slane %v1381, 5
      %v1384 = vsel %vm1192, %v1379, %v1383
      %s1385 = scalar_lea.vmem %s3, 64
      %v1386 = vld [vmem:[%s1385] sm:$0xf]
      %v1387 = vld [vmem:[%s1385 + $0x4] sm:$0xf]
      %v1388 = vld [vmem:[%s1385 + $0x8] sm:$0xf]
      %v1389 = vld [vmem:[%s1385 + $0xc] sm:$0xf]
      %v1390 = vld [vmem:[%s1385 + $0x10] sm:$0xf]
      %v1391 = vld [vmem:[%s1385 + $0x14] sm:$0xf]
      %v1392 = vld [vmem:[%s1385 + $0x18] sm:$0xf]
      %v1393 = vld [vmem:[%s1385 + $0x1c] sm:$0xf]
      %v1394 = vld [vmem:[%s1385 + $0x20] sm:$0xf]
      %v1395 = vld [vmem:[%s1385 + $0x24] sm:$0xf]
      %v1396 = vld [vmem:[%s1385 + $0x28] sm:$0xf]
      %v1397 = vld [vmem:[%s1385 + $0x2c] sm:$0xf]
      %v1398 = vld [vmem:[%s1385 + $0x30] sm:$0xf]
      %v1399 = vld [vmem:[%s1385 + $0x34] sm:$0xf]
      %v1400 = vld [vmem:[%s1385 + $0x38] sm:$0xf]
      %v1401 = vld [vmem:[%s1385 + $0x3c] sm:$0xf]
      %v1402 = vunpack.c.l.b16 %v1206
      %v1403 = vunpack.c.l.b16 %v1216
      %v1404 = vunpack.c.l.b16 %v1230
      %v1405 = vunpack.c.l.b16 %v1240
      %v1406 = vunpack.c.l.b16 %v1254
      %v1407 = vunpack.c.l.b16 %v1264
      %v1408 = vunpack.c.l.b16 %v1278
      %v1409 = vunpack.c.l.b16 %v1288
      %v1410 = vunpack.c.l.b16 %v1302
      %v1411 = vunpack.c.l.b16 %v1312
      %v1412 = vunpack.c.l.b16 %v1326
      %v1413 = vunpack.c.l.b16 %v1336
      %v1414 = vunpack.c.l.b16 %v1350
      %v1415 = vunpack.c.l.b16 %v1360
      %v1416 = vunpack.c.l.b16 %v1374
      %v1417 = vunpack.c.l.b16 %v1384
      %v1418 = vpack.c.b16 %v1403, %v1402
      %v1419 = vpack.c.b16 %v1405, %v1404
      %v1420 = vpack.c.b16 %v1407, %v1406
      %v1421 = vpack.c.b16 %v1409, %v1408
      %v1422 = vpack.c.b16 %v1411, %v1410
      %v1423 = vpack.c.b16 %v1413, %v1412
      %v1424 = vpack.c.b16 %v1415, %v1414
      %v1425 = vpack.c.b16 %v1417, %v1416
      %v1450 = vunpack.c.l.b16 %v1386
      %v1451 = vunpack.c.l.b16 %v1387
      %v1452 = vunpack.c.l.b16 %v1388
      %v1453 = vunpack.c.l.b16 %v1389
      %v1454 = vunpack.c.l.b16 %v1390
      %v1455 = vunpack.c.l.b16 %v1391
      %v1456 = vunpack.c.l.b16 %v1392
      %v1457 = vunpack.c.l.b16 %v1393
      %v1458 = vunpack.c.l.b16 %v1394
      %v1459 = vunpack.c.l.b16 %v1395
      %v1460 = vunpack.c.l.b16 %v1396
      %v1461 = vunpack.c.l.b16 %v1397
      %v1462 = vunpack.c.l.b16 %v1398
      %v1463 = vunpack.c.l.b16 %v1399
      %v1464 = vunpack.c.l.b16 %v1400
      %v1465 = vunpack.c.l.b16 %v1401
      %v1466 = vpack.c.b16 %v1451, %v1450
      %v1467 = vpack.c.b16 %v1453, %v1452
      %v1468 = vpack.c.b16 %v1455, %v1454
      %v1469 = vpack.c.b16 %v1457, %v1456
      %v1470 = vpack.c.b16 %v1459, %v1458
      %v1471 = vpack.c.b16 %v1461, %v1460
      %v1472 = vpack.c.b16 %v1463, %v1462
      %v1473 = vpack.c.b16 %v1465, %v1464
      %1482 = vmatprep.subr.bf16.mxu0 0
      %1483 = vmatpush1.bf16.msra.mxu0 %v1466
      %1484 = vmatprep.subr.bf16.mxu0 0
      %1485 = vmatpush1.bf16.msra.mxu0 %v1467
      %1486 = vmatprep.subr.bf16.mxu0 0
      %1487 = vmatpush1.bf16.msra.mxu0 %v1468
      %1488 = vmatprep.subr.bf16.mxu0 0
      %1489 = vmatpush1.bf16.msra.mxu0 %v1469
      %1490 = vmatprep.subr.bf16.mxu0 0
      %1491 = vmatpush1.bf16.msra.mxu0 %v1470
      %1492 = vmatprep.subr.bf16.mxu0 0
      %1493 = vmatpush1.bf16.msra.mxu0 %v1471
      %1494 = vmatprep.subr.bf16.mxu0 0
      %1495 = vmatpush1.bf16.msra.mxu0 %v1472
      %1496 = vmatprep.subr.bf16.mxu0 0
      %1497 = vmatpush1.bf16.msra.mxu0 %v1473
      %1498 = vmatprep.subr.bf16.mxu0 0
      %1499 = vmatpush1.bf16.msra.mxu0 0
      %1500 = vmatprep.subr.bf16.mxu0 0
      %1501 = vmatpush1.bf16.msra.mxu0 0
      %1502 = vmatprep.subr.bf16.mxu0 0
      %1503 = vmatpush1.bf16.msra.mxu0 0
      %1504 = vmatprep.subr.bf16.mxu0 0
      %1505 = vmatpush1.bf16.msra.mxu0 0
      %1506 = vmatprep.subr.bf16.mxu0 0
      %1507 = vmatpush1.bf16.msra.mxu0 0
      %1508 = vmatprep.subr.bf16.mxu0 0
      %1509 = vmatpush1.bf16.msra.mxu0 0
      %1510 = vmatprep.subr.bf16.mxu0 0
      %1511 = vmatpush1.bf16.msra.mxu0 0
      %1512 = vmatprep.subr.bf16.mxu0 0
      %1513 = vmatpush1.bf16.msra.mxu0 0
      %1514 = vmatprep.mubr.bf16.mxu0 0
      %1515 = vmatmul.mubr.bf16.gmra.mrb[0].mxu0 %v1418
      %v1516 = vpop.f32.mrb[0].mxu0
      %v1517 = vadd.f32 0.0, %v1516
      %v1518 = vpop.f32.mrb[0].mxu0
      %v1519 = vpop.f32.mrb[0].mxu0
      %v1520 = vadd.f32 0.0, %v1519
      %v1521 = vpop.f32.mrb[0].mxu0
      %1522 = vmatprep.mubr.bf16.mxu0 0
      %1523 = vmatmul.mubr.bf16.gmra.mrb[0].mxu0 %v1419
      %v1524 = vpop.f32.mrb[0].mxu0
      %v1525 = vadd.f32 0.0, %v1524
      %v1526 = vpop.f32.mrb[0].mxu0
      %v1527 = vpop.f32.mrb[0].mxu0
      %v1528 = vadd.f32 0.0, %v1527
      %v1529 = vpop.f32.mrb[0].mxu0
      %1530 = vmatprep.mubr.bf16.mxu0 0
      %1531 = vmatmul.mubr.bf16.gmra.mrb[0].mxu0 %v1420
      %v1532 = vpop.f32.mrb[0].mxu0
      %v1533 = vadd.f32 0.0, %v1532
      %v1534 = vpop.f32.mrb[0].mxu0
      %v1535 = vpop.f32.mrb[0].mxu0
      %v1536 = vadd.f32 0.0, %v1535
      %v1537 = vpop.f32.mrb[0].mxu0
      %1538 = vmatprep.mubr.bf16.mxu0 0
      %1539 = vmatmul.mubr.bf16.gmra.mrb[0].mxu0 %v1421
      %v1540 = vpop.f32.mrb[0].mxu0
      %v1541 = vadd.f32 0.0, %v1540
      %v1542 = vpop.f32.mrb[0].mxu0
      %v1543 = vpop.f32.mrb[0].mxu0
      %v1544 = vadd.f32 0.0, %v1543
      %v1545 = vpop.f32.mrb[0].mxu0
      %1546 = vmatprep.mubr.bf16.mxu0 0
      %1547 = vmatmul.mubr.bf16.gmra.mrb[0].mxu0 %v1422
      %v1548 = vpop.f32.mrb[0].mxu0
      %v1549 = vadd.f32 0.0, %v1548
      %v1550 = vpop.f32.mrb[0].mxu0
      %v1551 = vpop.f32.mrb[0].mxu0
      %v1552 = vadd.f32 0.0, %v1551
      %v1553 = vpop.f32.mrb[0].mxu0
      %1554 = vmatprep.mubr.bf16.mxu0 0
      %1555 = vmatmul.mubr.bf16.gmra.mrb[0].mxu0 %v1423
      %v1556 = vpop.f32.mrb[0].mxu0
      %v1557 = vadd.f32 0.0, %v1556
      %v1558 = vpop.f32.mrb[0].mxu0
      %v1559 = vpop.f32.mrb[0].mxu0
      %v1560 = vadd.f32 0.0, %v1559
      %v1561 = vpop.f32.mrb[0].mxu0
      %1562 = vmatprep.mubr.bf16.mxu0 0
      %1563 = vmatmul.mubr.bf16.gmra.mrb[0].mxu0 %v1424
      %v1564 = vpop.f32.mrb[0].mxu0
      %v1565 = vadd.f32 0.0, %v1564
      %v1566 = vpop.f32.mrb[0].mxu0
      %v1567 = vpop.f32.mrb[0].mxu0
      %v1568 = vadd.f32 0.0, %v1567
      %v1569 = vpop.f32.mrb[0].mxu0
      %1570 = vmatprep.mubr.bf16.mxu0 0
      %1571 = vmatmul.mubr.bf16.gmra.mrb[0].mxu0 %v1425
      %v1572 = vpop.f32.mrb[0].mxu0
      %v1573 = vadd.f32 0.0, %v1572
      %v1574 = vpop.f32.mrb[0].mxu0
      %v1575 = vpop.f32.mrb[0].mxu0
      %v1576 = vadd.f32 0.0, %v1575
      %v1577 = vpop.f32.mrb[0].mxu0
      %1578 = vdwg.mxu0
      %v1595 = vunpack.c.l.b16 %v1150
      %v1596 = vunpack.c.l.b16 %v1151
      %v1597 = vunpack.c.l.b16 %v1152
      %v1598 = vunpack.c.l.b16 %v1153
      %v1599 = vunpack.c.l.b16 %v1154
      %v1600 = vunpack.c.l.b16 %v1155
      %v1601 = vunpack.c.l.b16 %v1156
      %v1602 = vunpack.c.l.b16 %v1157
      %v1603 = vunpack.c.l.b16 %v1158
      %v1604 = vunpack.c.l.b16 %v1159
      %v1605 = vunpack.c.l.b16 %v1160
      %v1606 = vunpack.c.l.b16 %v1161
      %v1607 = vunpack.c.l.b16 %v1162
      %v1608 = vunpack.c.l.b16 %v1163
      %v1609 = vunpack.c.l.b16 %v1164
      %v1610 = vunpack.c.l.b16 %v1165
      %v1611 = vpack.c.b16 %v1596, %v1595
      %v1612 = vpack.c.b16 %v1598, %v1597
      %v1613 = vpack.c.b16 %v1600, %v1599
      %v1614 = vpack.c.b16 %v1602, %v1601
      %v1615 = vpack.c.b16 %v1604, %v1603
      %v1616 = vpack.c.b16 %v1606, %v1605
      %v1617 = vpack.c.b16 %v1608, %v1607
      %v1618 = vpack.c.b16 %v1610, %v1609
      %v1643 = vunpack.c.l.b16 %v1166
      %v1644 = vunpack.c.l.b16 %v1167
      %v1645 = vunpack.c.l.b16 %v1168
      %v1646 = vunpack.c.l.b16 %v1169
      %v1647 = vunpack.c.l.b16 %v1170
      %v1648 = vunpack.c.l.b16 %v1171
      %v1649 = vunpack.c.l.b16 %v1172
      %v1650 = vunpack.c.l.b16 %v1173
      %v1651 = vunpack.c.l.b16 %v1174
      %v1652 = vunpack.c.l.b16 %v1175
      %v1653 = vunpack.c.l.b16 %v1176
      %v1654 = vunpack.c.l.b16 %v1177
      %v1655 = vunpack.c.l.b16 %v1178
      %v1656 = vunpack.c.l.b16 %v1179
      %v1657 = vunpack.c.l.b16 %v1180
      %v1658 = vunpack.c.l.b16 %v1181
      %v1659 = vpack.c.b16 %v1644, %v1643
      %v1660 = vpack.c.b16 %v1646, %v1645
      %v1661 = vpack.c.b16 %v1648, %v1647
      %v1662 = vpack.c.b16 %v1650, %v1649
      %v1663 = vpack.c.b16 %v1652, %v1651
      %v1664 = vpack.c.b16 %v1654, %v1653
      %v1665 = vpack.c.b16 %v1656, %v1655
      %v1666 = vpack.c.b16 %v1658, %v1657
      %1675 = vmatprep.subr.bf16.mxu0 0
      %1676 = vmatpush1.bf16.msra.mxu0 %v1659
      %1677 = vmatprep.subr.bf16.mxu0 0
      %1678 = vmatpush1.bf16.msra.mxu0 %v1660
      %1679 = vmatprep.subr.bf16.mxu0 0
      %1680 = vmatpush1.bf16.msra.mxu0 %v1661
      %1681 = vmatprep.subr.bf16.mxu0 0
      %1682 = vmatpush1.bf16.msra.mxu0 %v1662
      %1683 = vmatprep.subr.bf16.mxu0 0
      %1684 = vmatpush1.bf16.msra.mxu0 %v1663
      %1685 = vmatprep.subr.bf16.mxu0 0
      %1686 = vmatpush1.bf16.msra.mxu0 %v1664
      %1687 = vmatprep.subr.bf16.mxu0 0
      %1688 = vmatpush1.bf16.msra.mxu0 %v1665
      %1689 = vmatprep.subr.bf16.mxu0 0
      %1690 = vmatpush1.bf16.msra.mxu0 %v1666
      %1691 = vmatprep.subr.bf16.mxu0 0
      %1692 = vmatpush1.bf16.msra.mxu0 0
      %1693 = vmatprep.subr.bf16.mxu0 0
      %1694 = vmatpush1.bf16.msra.mxu0 0
      %1695 = vmatprep.subr.bf16.mxu0 0
      %1696 = vmatpush1.bf16.msra.mxu0 0
      %1697 = vmatprep.subr.bf16.mxu0 0
      %1698 = vmatpush1.bf16.msra.mxu0 0
      %1699 = vmatprep.subr.bf16.mxu0 0
      %1700 = vmatpush1.bf16.msra.mxu0 0
      %1701 = vmatprep.subr.bf16.mxu0 0
      %1702 = vmatpush1.bf16.msra.mxu0 0
      %1703 = vmatprep.subr.bf16.mxu0 0
      %1704 = vmatpush1.bf16.msra.mxu0 0
      %1705 = vmatprep.subr.bf16.mxu0 0
      %1706 = vmatpush1.bf16.msra.mxu0 0
      %1707 = vmatprep.mubr.bf16.mxu0 0
      %1708 = vmatmul.mubr.bf16.gmra.mrb[0].mxu0 %v1611
      %v1709 = vpop.f32.mrb[0].mxu0
      %v1710 = vadd.f32 %v1517, %v1709
      %v1711 = vpop.f32.mrb[0].mxu0
      %v1712 = vpop.f32.mrb[0].mxu0
      %v1713 = vadd.f32 %v1520, %v1712
      %v1714 = vpop.f32.mrb[0].mxu0
      %1715 = vmatprep.mubr.bf16.mxu0 0
      %1716 = vmatmul.mubr.bf16.gmra.mrb[0].mxu0 %v1612
      %v1717 = vpop.f32.mrb[0].mxu0
      %v1718 = vadd.f32 %v1525, %v1717
      %v1719 = vpop.f32.mrb[0].mxu0
      %v1720 = vpop.f32.mrb[0].mxu0
      %v1721 = vadd.f32 %v1528, %v1720
      %v1722 = vpop.f32.mrb[0].mxu0
      %1723 = vmatprep.mubr.bf16.mxu0 0
      %1724 = vmatmul.mubr.bf16.gmra.mrb[0].mxu0 %v1613
      %v1725 = vpop.f32.mrb[0].mxu0
      %v1726 = vadd.f32 %v1533, %v1725
      %v1727 = vpop.f32.mrb[0].mxu0
      %v1728 = vpop.f32.mrb[0].mxu0
      %v1729 = vadd.f32 %v1536, %v1728
      %v1730 = vpop.f32.mrb[0].mxu0
      %1731 = vmatprep.mubr.bf16.mxu0 0
      %1732 = vmatmul.mubr.bf16.gmra.mrb[0].mxu0 %v1614
      %v1733 = vpop.f32.mrb[0].mxu0
      %v1734 = vadd.f32 %v1541, %v1733
      %v1735 = vpop.f32.mrb[0].mxu0
      %v1736 = vpop.f32.mrb[0].mxu0
      %v1737 = vadd.f32 %v1544, %v1736
      %v1738 = vpop.f32.mrb[0].mxu0
      %1739 = vmatprep.mubr.bf16.mxu0 0
      %1740 = vmatmul.mubr.bf16.gmra.mrb[0].mxu0 %v1615
      %v1741 = vpop.f32.mrb[0].mxu0
      %v1742 = vadd.f32 %v1549, %v1741
      %v1743 = vpop.f32.mrb[0].mxu0
      %v1744 = vpop.f32.mrb[0].mxu0
      %v1745 = vadd.f32 %v1552, %v1744
      %v1746 = vpop.f32.mrb[0].mxu0
      %1747 = vmatprep.mubr.bf16.mxu0 0
      %1748 = vmatmul.mubr.bf16.gmra.mrb[0].mxu0 %v1616
      %v1749 = vpop.f32.mrb[0].mxu0
      %v1750 = vadd.f32 %v1557, %v1749
      %v1751 = vpop.f32.mrb[0].mxu0
      %v1752 = vpop.f32.mrb[0].mxu0
      %v1753 = vadd.f32 %v1560, %v1752
      %v1754 = vpop.f32.mrb[0].mxu0
      %1755 = vmatprep.mubr.bf16.mxu0 0
      %1756 = vmatmul.mubr.bf16.gmra.mrb[0].mxu0 %v1617
      %v1757 = vpop.f32.mrb[0].mxu0
      %v1758 = vadd.f32 %v1565, %v1757
      %v1759 = vpop.f32.mrb[0].mxu0
      %v1760 = vpop.f32.mrb[0].mxu0
      %v1761 = vadd.f32 %v1568, %v1760
      %v1762 = vpop.f32.mrb[0].mxu0
      %1763 = vmatprep.mubr.bf16.mxu0 0
      %1764 = vmatmul.mubr.bf16.gmra.mrb[0].mxu0 %v1618
      %v1765 = vpop.f32.mrb[0].mxu0
      %v1766 = vadd.f32 %v1573, %v1765
      %v1767 = vpop.f32.mrb[0].mxu0
      %v1768 = vpop.f32.mrb[0].mxu0
      %v1769 = vadd.f32 %v1576, %v1768
      %v1770 = vpop.f32.mrb[0].mxu0
      %1771 = vdwg.mxu0
      %v1772 = vld [vmem:[%s1149] sm:$0xe]
      %v1773 = vld [vmem:[%s1149 + $0xc] sm:$0xe]
      %v1774 = vld [vmem:[%s1149 + $0x18] sm:$0xe]
      %v1775 = vld [vmem:[%s1149 + $0x24] sm:$0xe]
      %v1776 = vld [vmem:[%s1149 + $0x30] sm:$0xe]
      %v1777 = vld [vmem:[%s1149 + $0x3c] sm:$0xe]
      %v1778 = vld [vmem:[%s1149 + $0x48] sm:$0xe]
      %v1779 = vld [vmem:[%s1149 + $0x54] sm:$0xe]
      %vm1796 = vcmask 1042432
      %vm1797 = vcmask 1046532
      %vm1798 = vmor %vm1796, %vm1797
      %v1799 = vrot.slane %v1772, 5
      %v1800 = vrot.slane %v1799, 4
      %v1801 = vrot.slane %v1151, 5
      %v1802 = vsel %vm1798, %v1800, %v1801
      %v1803 = vrot.slane %v1801, 4
      %v1804 = vrot.slane %v1182, 5
      %v1805 = vsel %vm1798, %v1803, %v1804
      %v1806 = vrot.slane %v1773, 5
      %v1807 = vrot.slane %v1806, 4
      %v1808 = vrot.slane %v1153, 5
      %v1809 = vsel %vm1798, %v1807, %v1808
      %v1810 = vrot.slane %v1808, 4
      %v1811 = vrot.slane %v1183, 5
      %v1812 = vsel %vm1798, %v1810, %v1811
      %v1813 = vrot.slane %v1774, 5
      %v1814 = vrot.slane %v1813, 4
      %v1815 = vrot.slane %v1155, 5
      %v1816 = vsel %vm1798, %v1814, %v1815
      %v1817 = vrot.slane %v1815, 4
      %v1818 = vrot.slane %v1184, 5
      %v1819 = vsel %vm1798, %v1817, %v1818
      %v1820 = vrot.slane %v1775, 5
      %v1821 = vrot.slane %v1820, 4
      %v1822 = vrot.slane %v1157, 5
      %v1823 = vsel %vm1798, %v1821, %v1822
      %v1824 = vrot.slane %v1822, 4
      %v1825 = vrot.slane %v1185, 5
      %v1826 = vsel %vm1798, %v1824, %v1825
      %v1827 = vrot.slane %v1776, 5
      %v1828 = vrot.slane %v1827, 4
      %v1829 = vrot.slane %v1159, 5
      %v1830 = vsel %vm1798, %v1828, %v1829
      %v1831 = vrot.slane %v1829, 4
      %v1832 = vrot.slane %v1186, 5
      %v1833 = vsel %vm1798, %v1831, %v1832
      %v1834 = vrot.slane %v1777, 5
      %v1835 = vrot.slane %v1834, 4
      %v1836 = vrot.slane %v1161, 5
      %v1837 = vsel %vm1798, %v1835, %v1836
      %v1838 = vrot.slane %v1836, 4
      %v1839 = vrot.slane %v1187, 5
      %v1840 = vsel %vm1798, %v1838, %v1839
      %v1841 = vrot.slane %v1778, 5
      %v1842 = vrot.slane %v1841, 4
      %v1843 = vrot.slane %v1163, 5
      %v1844 = vsel %vm1798, %v1842, %v1843
      %v1845 = vrot.slane %v1843, 4
      %v1846 = vrot.slane %v1188, 5
      %v1847 = vsel %vm1798, %v1845, %v1846
      %v1848 = vrot.slane %v1779, 5
      %v1849 = vrot.slane %v1848, 4
      %v1850 = vrot.slane %v1165, 5
      %v1851 = vsel %vm1798, %v1849, %v1850
      %v1852 = vrot.slane %v1850, 4
      %v1853 = vrot.slane %v1189, 5
      %v1854 = vsel %vm1798, %v1852, %v1853
      %s1855 = scalar_lea.vmem %s3, 128
      %v1856 = vld [vmem:[%s1855] sm:$0xf]
      %v1857 = vld [vmem:[%s1855 + $0x4] sm:$0xf]
      %v1858 = vld [vmem:[%s1855 + $0x8] sm:$0xf]
      %v1859 = vld [vmem:[%s1855 + $0xc] sm:$0xf]
      %v1860 = vld [vmem:[%s1855 + $0x10] sm:$0xf]
      %v1861 = vld [vmem:[%s1855 + $0x14] sm:$0xf]
      %v1862 = vld [vmem:[%s1855 + $0x18] sm:$0xf]
      %v1863 = vld [vmem:[%s1855 + $0x1c] sm:$0xf]
      %v1864 = vld [vmem:[%s1855 + $0x20] sm:$0xf]
      %v1865 = vld [vmem:[%s1855 + $0x24] sm:$0xf]
      %v1866 = vld [vmem:[%s1855 + $0x28] sm:$0xf]
      %v1867 = vld [vmem:[%s1855 + $0x2c] sm:$0xf]
      %v1868 = vld [vmem:[%s1855 + $0x30] sm:$0xf]
      %v1869 = vld [vmem:[%s1855 + $0x34] sm:$0xf]
      %v1870 = vld [vmem:[%s1855 + $0x38] sm:$0xf]
      %v1871 = vld [vmem:[%s1855 + $0x3c] sm:$0xf]
      %v1872 = vunpack.c.l.b16 %v1802
      %v1873 = vunpack.c.l.b16 %v1805
      %v1874 = vunpack.c.l.b16 %v1809
      %v1875 = vunpack.c.l.b16 %v1812
      %v1876 = vunpack.c.l.b16 %v1816
      %v1877 = vunpack.c.l.b16 %v1819
      %v1878 = vunpack.c.l.b16 %v1823
      %v1879 = vunpack.c.l.b16 %v1826
      %v1880 = vunpack.c.l.b16 %v1830
      %v1881 = vunpack.c.l.b16 %v1833
      %v1882 = vunpack.c.l.b16 %v1837
      %v1883 = vunpack.c.l.b16 %v1840
      %v1884 = vunpack.c.l.b16 %v1844
      %v1885 = vunpack.c.l.b16 %v1847
      %v1886 = vunpack.c.l.b16 %v1851
      %v1887 = vunpack.c.l.b16 %v1854
      %v1888 = vpack.c.b16 %v1873, %v1872
      %v1889 = vpack.c.b16 %v1875, %v1874
      %v1890 = vpack.c.b16 %v1877, %v1876
      %v1891 = vpack.c.b16 %v1879, %v1878
      %v1892 = vpack.c.b16 %v1881, %v1880
      %v1893 = vpack.c.b16 %v1883, %v1882
      %v1894 = vpack.c.b16 %v1885, %v1884
      %v1895 = vpack.c.b16 %v1887, %v1886
      %v1920 = vunpack.c.l.b16 %v1856
      %v1921 = vunpack.c.l.b16 %v1857
      %v1922 = vunpack.c.l.b16 %v1858
      %v1923 = vunpack.c.l.b16 %v1859
      %v1924 = vunpack.c.l.b16 %v1860
      %v1925 = vunpack.c.l.b16 %v1861
      %v1926 = vunpack.c.l.b16 %v1862
      %v1927 = vunpack.c.l.b16 %v1863
      %v1928 = vunpack.c.l.b16 %v1864
      %v1929 = vunpack.c.l.b16 %v1865
      %v1930 = vunpack.c.l.b16 %v1866
      %v1931 = vunpack.c.l.b16 %v1867
      %v1932 = vunpack.c.l.b16 %v1868
      %v1933 = vunpack.c.l.b16 %v1869
      %v1934 = vunpack.c.l.b16 %v1870
      %v1935 = vunpack.c.l.b16 %v1871
      %v1936 = vpack.c.b16 %v1921, %v1920
      %v1937 = vpack.c.b16 %v1923, %v1922
      %v1938 = vpack.c.b16 %v1925, %v1924
      %v1939 = vpack.c.b16 %v1927, %v1926
      %v1940 = vpack.c.b16 %v1929, %v1928
      %v1941 = vpack.c.b16 %v1931, %v1930
      %v1942 = vpack.c.b16 %v1933, %v1932
      %v1943 = vpack.c.b16 %v1935, %v1934
      %1952 = vmatprep.subr.bf16.mxu0 0
      %1953 = vmatpush1.bf16.msra.mxu0 %v1936
      %1954 = vmatprep.subr.bf16.mxu0 0
      %1955 = vmatpush1.bf16.msra.mxu0 %v1937
      %1956 = vmatprep.subr.bf16.mxu0 0
      %1957 = vmatpush1.bf16.msra.mxu0 %v1938
      %1958 = vmatprep.subr.bf16.mxu0 0
      %1959 = vmatpush1.bf16.msra.mxu0 %v1939
      %1960 = vmatprep.subr.bf16.mxu0 0
      %1961 = vmatpush1.bf16.msra.mxu0 %v1940
      %1962 = vmatprep.subr.bf16.mxu0 0
      %1963 = vmatpush1.bf16.msra.mxu0 %v1941
      %1964 = vmatprep.subr.bf16.mxu0 0
      %1965 = vmatpush1.bf16.msra.mxu0 %v1942
      %1966 = vmatprep.subr.bf16.mxu0 0
      %1967 = vmatpush1.bf16.msra.mxu0 %v1943
      %1968 = vmatprep.subr.bf16.mxu0 0
      %1969 = vmatpush1.bf16.msra.mxu0 0
      %1970 = vmatprep.subr.bf16.mxu0 0
      %1971 = vmatpush1.bf16.msra.mxu0 0
      %1972 = vmatprep.subr.bf16.mxu0 0
      %1973 = vmatpush1.bf16.msra.mxu0 0
      %1974 = vmatprep.subr.bf16.mxu0 0
      %1975 = vmatpush1.bf16.msra.mxu0 0
      %1976 = vmatprep.subr.bf16.mxu0 0
      %1977 = vmatpush1.bf16.msra.mxu0 0
      %1978 = vmatprep.subr.bf16.mxu0 0
      %1979 = vmatpush1.bf16.msra.mxu0 0
      %1980 = vmatprep.subr.bf16.mxu0 0
      %1981 = vmatpush1.bf16.msra.mxu0 0
      %1982 = vmatprep.subr.bf16.mxu0 0
      %1983 = vmatpush1.bf16.msra.mxu0 0
      %1984 = vmatprep.mubr.bf16.mxu0 0
      %1985 = vmatmul.mubr.bf16.gmra.mrb[0].mxu0 %v1888
      %v1986 = vpop.f32.mrb[0].mxu0
      %v1987 = vadd.f32 0.0, %v1986
      %v1988 = vpop.f32.mrb[0].mxu0
      %v1989 = vpop.f32.mrb[0].mxu0
      %v1990 = vadd.f32 0.0, %v1989
      %v1991 = vpop.f32.mrb[0].mxu0
      %1992 = vmatprep.mubr.bf16.mxu0 0
      %1993 = vmatmul.mubr.bf16.gmra.mrb[0].mxu0 %v1889
      %v1994 = vpop.f32.mrb[0].mxu0
      %v1995 = vadd.f32 0.0, %v1994
      %v1996 = vpop.f32.mrb[0].mxu0
      %v1997 = vpop.f32.mrb[0].mxu0
      %v1998 = vadd.f32 0.0, %v1997
      %v1999 = vpop.f32.mrb[0].mxu0
      %2000 = vmatprep.mubr.bf16.mxu0 0
      %2001 = vmatmul.mubr.bf16.gmra.mrb[0].mxu0 %v1890
      %v2002 = vpop.f32.mrb[0].mxu0
      %v2003 = vadd.f32 0.0, %v2002
      %v2004 = vpop.f32.mrb[0].mxu0
      %v2005 = vpop.f32.mrb[0].mxu0
      %v2006 = vadd.f32 0.0, %v2005
      %v2007 = vpop.f32.mrb[0].mxu0
      %2008 = vmatprep.mubr.bf16.mxu0 0
      %2009 = vmatmul.mubr.bf16.gmra.mrb[0].mxu0 %v1891
      %v2010 = vpop.f32.mrb[0].mxu0
      %v2011 = vadd.f32 0.0, %v2010
      %v2012 = vpop.f32.mrb[0].mxu0
      %v2013 = vpop.f32.mrb[0].mxu0
      %v2014 = vadd.f32 0.0, %v2013
      %v2015 = vpop.f32.mrb[0].mxu0
      %2016 = vmatprep.mubr.bf16.mxu0 0
      %2017 = vmatmul.mubr.bf16.gmra.mrb[0].mxu0 %v1892
      %v2018 = vpop.f32.mrb[0].mxu0
      %v2019 = vadd.f32 0.0, %v2018
      %v2020 = vpop.f32.mrb[0].mxu0
      %v2021 = vpop.f32.mrb[0].mxu0
      %v2022 = vadd.f32 0.0, %v2021
      %v2023 = vpop.f32.mrb[0].mxu0
      %2024 = vmatprep.mubr.bf16.mxu0 0
      %2025 = vmatmul.mubr.bf16.gmra.mrb[0].mxu0 %v1893
      %v2026 = vpop.f32.mrb[0].mxu0
      %v2027 = vadd.f32 0.0, %v2026
      %v2028 = vpop.f32.mrb[0].mxu0
      %v2029 = vpop.f32.mrb[0].mxu0
      %v2030 = vadd.f32 0.0, %v2029
      %v2031 = vpop.f32.mrb[0].mxu0
      %2032 = vmatprep.mubr.bf16.mxu0 0
      %2033 = vmatmul.mubr.bf16.gmra.mrb[0].mxu0 %v1894
      %v2034 = vpop.f32.mrb[0].mxu0
      %v2035 = vadd.f32 0.0, %v2034
      %v2036 = vpop.f32.mrb[0].mxu0
      %v2037 = vpop.f32.mrb[0].mxu0
      %v2038 = vadd.f32 0.0, %v2037
      %v2039 = vpop.f32.mrb[0].mxu0
      %2040 = vmatprep.mubr.bf16.mxu0 0
      %2041 = vmatmul.mubr.bf16.gmra.mrb[0].mxu0 %v1895
      %v2042 = vpop.f32.mrb[0].mxu0
      %v2043 = vadd.f32 0.0, %v2042
      %v2044 = vpop.f32.mrb[0].mxu0
      %v2045 = vpop.f32.mrb[0].mxu0
      %v2046 = vadd.f32 0.0, %v2045
      %v2047 = vpop.f32.mrb[0].mxu0
      %2048 = vdwg.mxu0
      %v2049 = vadd.f32 %v1710, %v1987
      %v2050 = vadd.f32 %v1713, %v1990
      %v2051 = vadd.f32 %v1718, %v1995
      %v2052 = vadd.f32 %v1721, %v1998
      %v2053 = vadd.f32 %v1726, %v2003
      %v2054 = vadd.f32 %v1729, %v2006
      %v2055 = vadd.f32 %v1734, %v2011
      %v2056 = vadd.f32 %v1737, %v2014
      %v2057 = vadd.f32 %v1742, %v2019
      %v2058 = vadd.f32 %v1745, %v2022
      %v2059 = vadd.f32 %v1750, %v2027
      %v2060 = vadd.f32 %v1753, %v2030
      %v2061 = vadd.f32 %v1758, %v2035
      %v2062 = vadd.f32 %v1761, %v2038
      %v2063 = vadd.f32 %v1766, %v2043
      %v2064 = vadd.f32 %v1769, %v2046
      %s2065 = sadd.s32 %s1146, 1
      %s2066 = smul.u32 %s2065, 3
      %s2067 = smul.addr %s2066, 4
      %s2068 = scalar_lea.vmem [#allocation2], %s2067
      %v2069 = vld [vmem:[%s2068] sm:$0xf]
      %v2070 = vld [vmem:[%s2068 + $0x4] sm:$0xf]
      %v2071 = vld [vmem:[%s2068 + $0xc] sm:$0xf]
      %v2072 = vld [vmem:[%s2068 + $0x10] sm:$0xf]
      %v2073 = vld [vmem:[%s2068 + $0x18] sm:$0xf]
      %v2074 = vld [vmem:[%s2068 + $0x1c] sm:$0xf]
      %v2075 = vld [vmem:[%s2068 + $0x24] sm:$0xf]
      %v2076 = vld [vmem:[%s2068 + $0x28] sm:$0xf]
      %v2077 = vld [vmem:[%s2068 + $0x30] sm:$0xf]
      %v2078 = vld [vmem:[%s2068 + $0x34] sm:$0xf]
      %v2079 = vld [vmem:[%s2068 + $0x3c] sm:$0xf]
      %v2080 = vld [vmem:[%s2068 + $0x40] sm:$0xf]
      %v2081 = vld [vmem:[%s2068 + $0x48] sm:$0xf]
      %v2082 = vld [vmem:[%s2068 + $0x4c] sm:$0xf]
      %v2083 = vld [vmem:[%s2068 + $0x54] sm:$0xf]
      %v2084 = vld [vmem:[%s2068 + $0x58] sm:$0xf]
      %s2085 = scalar_lea.vmem %s3, 192
      %v2086 = vld [vmem:[%s2085] sm:$0xf]
      %v2087 = vld [vmem:[%s2085 + $0x4] sm:$0xf]
      %v2088 = vld [vmem:[%s2085 + $0x8] sm:$0xf]
      %v2089 = vld [vmem:[%s2085 + $0xc] sm:$0xf]
      %v2090 = vld [vmem:[%s2085 + $0x10] sm:$0xf]
      %v2091 = vld [vmem:[%s2085 + $0x14] sm:$0xf]
      %v2092 = vld [vmem:[%s2085 + $0x18] sm:$0xf]
      %v2093 = vld [vmem:[%s2085 + $0x1c] sm:$0xf]
      %v2094 = vld [vmem:[%s2085 + $0x20] sm:$0xf]
      %v2095 = vld [vmem:[%s2085 + $0x24] sm:$0xf]
      %v2096 = vld [vmem:[%s2085 + $0x28] sm:$0xf]
      %v2097 = vld [vmem:[%s2085 + $0x2c] sm:$0xf]
      %v2098 = vld [vmem:[%s2085 + $0x30] sm:$0xf]
      %v2099 = vld [vmem:[%s2085 + $0x34] sm:$0xf]
      %v2100 = vld [vmem:[%s2085 + $0x38] sm:$0xf]
      %v2101 = vld [vmem:[%s2085 + $0x3c] sm:$0xf]
      %v2118 = vunpack.c.l.b16 %v2069
      %v2119 = vunpack.c.l.b16 %v2070
      %v2120 = vunpack.c.l.b16 %v2071
      %v2121 = vunpack.c.l.b16 %v2072
      %v2122 = vunpack.c.l.b16 %v2073
      %v2123 = vunpack.c.l.b16 %v2074
      %v2124 = vunpack.c.l.b16 %v2075
      %v2125 = vunpack.c.l.b16 %v2076
      %v2126 = vunpack.c.l.b16 %v2077
      %v2127 = vunpack.c.l.b16 %v2078
      %v2128 = vunpack.c.l.b16 %v2079
      %v2129 = vunpack.c.l.b16 %v2080
      %v2130 = vunpack.c.l.b16 %v2081
      %v2131 = vunpack.c.l.b16 %v2082
      %v2132 = vunpack.c.l.b16 %v2083
      %v2133 = vunpack.c.l.b16 %v2084
      %v2134 = vpack.c.b16 %v2119, %v2118
      %v2135 = vpack.c.b16 %v2121, %v2120
      %v2136 = vpack.c.b16 %v2123, %v2122
      %v2137 = vpack.c.b16 %v2125, %v2124
      %v2138 = vpack.c.b16 %v2127, %v2126
      %v2139 = vpack.c.b16 %v2129, %v2128
      %v2140 = vpack.c.b16 %v2131, %v2130
      %v2141 = vpack.c.b16 %v2133, %v2132
      %v2166 = vunpack.c.l.b16 %v2086
      %v2167 = vunpack.c.l.b16 %v2087
      %v2168 = vunpack.c.l.b16 %v2088
      %v2169 = vunpack.c.l.b16 %v2089
      %v2170 = vunpack.c.l.b16 %v2090
      %v2171 = vunpack.c.l.b16 %v2091
      %v2172 = vunpack.c.l.b16 %v2092
      %v2173 = vunpack.c.l.b16 %v2093
      %v2174 = vunpack.c.l.b16 %v2094
      %v2175 = vunpack.c.l.b16 %v2095
      %v2176 = vunpack.c.l.b16 %v2096
      %v2177 = vunpack.c.l.b16 %v2097
      %v2178 = vunpack.c.l.b16 %v2098
      %v2179 = vunpack.c.l.b16 %v2099
      %v2180 = vunpack.c.l.b16 %v2100
      %v2181 = vunpack.c.l.b16 %v2101
      %v2182 = vpack.c.b16 %v2167, %v2166
      %v2183 = vpack.c.b16 %v2169, %v2168
      %v2184 = vpack.c.b16 %v2171, %v2170
      %v2185 = vpack.c.b16 %v2173, %v2172
      %v2186 = vpack.c.b16 %v2175, %v2174
      %v2187 = vpack.c.b16 %v2177, %v2176
      %v2188 = vpack.c.b16 %v2179, %v2178
      %v2189 = vpack.c.b16 %v2181, %v2180
      %2198 = vmatprep.subr.bf16.mxu0 0
      %2199 = vmatpush1.bf16.msra.mxu0 %v2182
      %2200 = vmatprep.subr.bf16.mxu0 0
      %2201 = vmatpush1.bf16.msra.mxu0 %v2183
      %2202 = vmatprep.subr.bf16.mxu0 0
      %2203 = vmatpush1.bf16.msra.mxu0 %v2184
      %2204 = vmatprep.subr.bf16.mxu0 0
      %2205 = vmatpush1.bf16.msra.mxu0 %v2185
      %2206 = vmatprep.subr.bf16.mxu0 0
      %2207 = vmatpush1.bf16.msra.mxu0 %v2186
      %2208 = vmatprep.subr.bf16.mxu0 0
      %2209 = vmatpush1.bf16.msra.mxu0 %v2187
      %2210 = vmatprep.subr.bf16.mxu0 0
      %2211 = vmatpush1.bf16.msra.mxu0 %v2188
      %2212 = vmatprep.subr.bf16.mxu0 0
      %2213 = vmatpush1.bf16.msra.mxu0 %v2189
      %2214 = vmatprep.subr.bf16.mxu0 0
      %2215 = vmatpush1.bf16.msra.mxu0 0
      %2216 = vmatprep.subr.bf16.mxu0 0
      %2217 = vmatpush1.bf16.msra.mxu0 0
      %2218 = vmatprep.subr.bf16.mxu0 0
      %2219 = vmatpush1.bf16.msra.mxu0 0
      %2220 = vmatprep.subr.bf16.mxu0 0
      %2221 = vmatpush1.bf16.msra.mxu0 0
      %2222 = vmatprep.subr.bf16.mxu0 0
      %2223 = vmatpush1.bf16.msra.mxu0 0
      %2224 = vmatprep.subr.bf16.mxu0 0
      %2225 = vmatpush1.bf16.msra.mxu0 0
      %2226 = vmatprep.subr.bf16.mxu0 0
      %2227 = vmatpush1.bf16.msra.mxu0 0
      %2228 = vmatprep.subr.bf16.mxu0 0
      %2229 = vmatpush1.bf16.msra.mxu0 0
      %2230 = vmatprep.mubr.bf16.mxu0 0
      %2231 = vmatmul.mubr.bf16.gmra.mrb[0].mxu0 %v2134
      %v2232 = vpop.f32.mrb[0].mxu0
      %v2233 = vadd.f32 0.0, %v2232
      %v2234 = vpop.f32.mrb[0].mxu0
      %v2235 = vpop.f32.mrb[0].mxu0
      %v2236 = vadd.f32 0.0, %v2235
      %v2237 = vpop.f32.mrb[0].mxu0
      %2238 = vmatprep.mubr.bf16.mxu0 0
      %2239 = vmatmul.mubr.bf16.gmra.mrb[0].mxu0 %v2135
      %v2240 = vpop.f32.mrb[0].mxu0
      %v2241 = vadd.f32 0.0, %v2240
      %v2242 = vpop.f32.mrb[0].mxu0
      %v2243 = vpop.f32.mrb[0].mxu0
      %v2244 = vadd.f32 0.0, %v2243
      %v2245 = vpop.f32.mrb[0].mxu0
      %2246 = vmatprep.mubr.bf16.mxu0 0
      %2247 = vmatmul.mubr.bf16.gmra.mrb[0].mxu0 %v2136
      %v2248 = vpop.f32.mrb[0].mxu0
      %v2249 = vadd.f32 0.0, %v2248
      %v2250 = vpop.f32.mrb[0].mxu0
      %v2251 = vpop.f32.mrb[0].mxu0
      %v2252 = vadd.f32 0.0, %v2251
      %v2253 = vpop.f32.mrb[0].mxu0
      %2254 = vmatprep.mubr.bf16.mxu0 0
      %2255 = vmatmul.mubr.bf16.gmra.mrb[0].mxu0 %v2137
      %v2256 = vpop.f32.mrb[0].mxu0
      %v2257 = vadd.f32 0.0, %v2256
      %v2258 = vpop.f32.mrb[0].mxu0
      %v2259 = vpop.f32.mrb[0].mxu0
      %v2260 = vadd.f32 0.0, %v2259
      %v2261 = vpop.f32.mrb[0].mxu0
      %2262 = vmatprep.mubr.bf16.mxu0 0
      %2263 = vmatmul.mubr.bf16.gmra.mrb[0].mxu0 %v2138
      %v2264 = vpop.f32.mrb[0].mxu0
      %v2265 = vadd.f32 0.0, %v2264
      %v2266 = vpop.f32.mrb[0].mxu0
      %v2267 = vpop.f32.mrb[0].mxu0
      %v2268 = vadd.f32 0.0, %v2267
      %v2269 = vpop.f32.mrb[0].mxu0
      %2270 = vmatprep.mubr.bf16.mxu0 0
      %2271 = vmatmul.mubr.bf16.gmra.mrb[0].mxu0 %v2139
      %v2272 = vpop.f32.mrb[0].mxu0
      %v2273 = vadd.f32 0.0, %v2272
      %v2274 = vpop.f32.mrb[0].mxu0
      %v2275 = vpop.f32.mrb[0].mxu0
      %v2276 = vadd.f32 0.0, %v2275
      %v2277 = vpop.f32.mrb[0].mxu0
      %2278 = vmatprep.mubr.bf16.mxu0 0
      %2279 = vmatmul.mubr.bf16.gmra.mrb[0].mxu0 %v2140
      %v2280 = vpop.f32.mrb[0].mxu0
      %v2281 = vadd.f32 0.0, %v2280
      %v2282 = vpop.f32.mrb[0].mxu0
      %v2283 = vpop.f32.mrb[0].mxu0
      %v2284 = vadd.f32 0.0, %v2283
      %v2285 = vpop.f32.mrb[0].mxu0
      %2286 = vmatprep.mubr.bf16.mxu0 0
      %2287 = vmatmul.mubr.bf16.gmra.mrb[0].mxu0 %v2141
      %v2288 = vpop.f32.mrb[0].mxu0
      %v2289 = vadd.f32 0.0, %v2288
      %v2290 = vpop.f32.mrb[0].mxu0
      %v2291 = vpop.f32.mrb[0].mxu0
      %v2292 = vadd.f32 0.0, %v2291
      %v2293 = vpop.f32.mrb[0].mxu0
      %2294 = vdwg.mxu0
      %v2295 = vadd.f32 %v2049, %v2233
      %v2296 = vadd.f32 %v2050, %v2236
      %v2297 = vadd.f32 %v2051, %v2241
      %v2298 = vadd.f32 %v2052, %v2244
      %v2299 = vadd.f32 %v2053, %v2249
      %v2300 = vadd.f32 %v2054, %v2252
      %v2301 = vadd.f32 %v2055, %v2257
      %v2302 = vadd.f32 %v2056, %v2260
      %v2303 = vadd.f32 %v2057, %v2265
      %v2304 = vadd.f32 %v2058, %v2268
      %v2305 = vadd.f32 %v2059, %v2273
      %v2306 = vadd.f32 %v2060, %v2276
      %v2307 = vadd.f32 %v2061, %v2281
      %v2308 = vadd.f32 %v2062, %v2284
      %v2309 = vadd.f32 %v2063, %v2289
      %v2310 = vadd.f32 %v2064, %v2292
      %v2311 = vld [vmem:[%s2068] sm:$0xf]
      %v2312 = vld [vmem:[%s2068 + $0x4] sm:$0xf]
      %v2313 = vld [vmem:[%s2068 + $0x8] sm:$0x1]
      %v2314 = vld [vmem:[%s2068 + $0xc] sm:$0xf]
      %v2315 = vld [vmem:[%s2068 + $0x10] sm:$0xf]
      %v2316 = vld [vmem:[%s2068 + $0x14] sm:$0x1]
      %v2317 = vld [vmem:[%s2068 + $0x18] sm:$0xf]
      %v2318 = vld [vmem:[%s2068 + $0x1c] sm:$0xf]
      %v2319 = vld [vmem:[%s2068 + $0x20] sm:$0x1]
      %v2320 = vld [vmem:[%s2068 + $0x24] sm:$0xf]
      %v2321 = vld [vmem:[%s2068 + $0x28] sm:$0xf]
      %v2322 = vld [vmem:[%s2068 + $0x2c] sm:$0x1]
      %v2323 = vld [vmem:[%s2068 + $0x30] sm:$0xf]
      %v2324 = vld [vmem:[%s2068 + $0x34] sm:$0xf]
      %v2325 = vld [vmem:[%s2068 + $0x38] sm:$0x1]
      %v2326 = vld [vmem:[%s2068 + $0x3c] sm:$0xf]
      %v2327 = vld [vmem:[%s2068 + $0x40] sm:$0xf]
      %v2328 = vld [vmem:[%s2068 + $0x44] sm:$0x1]
      %v2329 = vld [vmem:[%s2068 + $0x48] sm:$0xf]
      %v2330 = vld [vmem:[%s2068 + $0x4c] sm:$0xf]
      %v2331 = vld [vmem:[%s2068 + $0x50] sm:$0x1]
      %v2332 = vld [vmem:[%s2068 + $0x54] sm:$0xf]
      %v2333 = vld [vmem:[%s2068 + $0x58] sm:$0xf]
      %v2334 = vld [vmem:[%s2068 + $0x5c] sm:$0x1]
      %v2336 = vshrl.u32 %v2311, 16
      %v2338 = vrot.slane %v2336, 4
      %v2339 = vshll.u32 %v2311, 16
      %v2341 = vrot.slane %v2339, 5
      %v2342 = vor.u32 %v2338, %v2341
      %v2343 = vrot.slane %v2342, 4
      %v2345 = vshll.u32 %v2312, 16
      %v2347 = vrot.slane %v2345, 5
      %v2348 = vsel %vm1192, %v2343, %v2347
      %v2349 = vshrl.u32 %v2312, 16
      %v2351 = vrot.slane %v2349, 4
      %v2352 = vor.u32 %v2351, %v2347
      %v2353 = vrot.slane %v2352, 4
      %v2355 = vshll.u32 %v2313, 16
      %v2357 = vrot.slane %v2355, 5
      %v2358 = vsel %vm1192, %v2353, %v2357
      %v2360 = vshrl.u32 %v2314, 16
      %v2362 = vrot.slane %v2360, 4
      %v2363 = vshll.u32 %v2314, 16
      %v2365 = vrot.slane %v2363, 5
      %v2366 = vor.u32 %v2362, %v2365
      %v2367 = vrot.slane %v2366, 4
      %v2369 = vshll.u32 %v2315, 16
      %v2371 = vrot.slane %v2369, 5
      %v2372 = vsel %vm1192, %v2367, %v2371
      %v2373 = vshrl.u32 %v2315, 16
      %v2375 = vrot.slane %v2373, 4
      %v2376 = vor.u32 %v2375, %v2371
      %v2377 = vrot.slane %v2376, 4
      %v2379 = vshll.u32 %v2316, 16
      %v2381 = vrot.slane %v2379, 5
      %v2382 = vsel %vm1192, %v2377, %v2381
      %v2384 = vshrl.u32 %v2317, 16
      %v2386 = vrot.slane %v2384, 4
      %v2387 = vshll.u32 %v2317, 16
      %v2389 = vrot.slane %v2387, 5
      %v2390 = vor.u32 %v2386, %v2389
      %v2391 = vrot.slane %v2390, 4
      %v2393 = vshll.u32 %v2318, 16
      %v2395 = vrot.slane %v2393, 5
      %v2396 = vsel %vm1192, %v2391, %v2395
      %v2397 = vshrl.u32 %v2318, 16
      %v2399 = vrot.slane %v2397, 4
      %v2400 = vor.u32 %v2399, %v2395
      %v2401 = vrot.slane %v2400, 4
      %v2403 = vshll.u32 %v2319, 16
      %v2405 = vrot.slane %v2403, 5
      %v2406 = vsel %vm1192, %v2401, %v2405
      %v2408 = vshrl.u32 %v2320, 16
      %v2410 = vrot.slane %v2408, 4
      %v2411 = vshll.u32 %v2320, 16
      %v2413 = vrot.slane %v2411, 5
      %v2414 = vor.u32 %v2410, %v2413
      %v2415 = vrot.slane %v2414, 4
      %v2417 = vshll.u32 %v2321, 16
      %v2419 = vrot.slane %v2417, 5
      %v2420 = vsel %vm1192, %v2415, %v2419
      %v2421 = vshrl.u32 %v2321, 16
      %v2423 = vrot.slane %v2421, 4
      %v2424 = vor.u32 %v2423, %v2419
      %v2425 = vrot.slane %v2424, 4
      %v2427 = vshll.u32 %v2322, 16
      %v2429 = vrot.slane %v2427, 5
      %v2430 = vsel %vm1192, %v2425, %v2429
      %v2432 = vshrl.u32 %v2323, 16
      %v2434 = vrot.slane %v2432, 4
      %v2435 = vshll.u32 %v2323, 16
      %v2437 = vrot.slane %v2435, 5
      %v2438 = vor.u32 %v2434, %v2437
      %v2439 = vrot.slane %v2438, 4
      %v2441 = vshll.u32 %v2324, 16
      %v2443 = vrot.slane %v2441, 5
      %v2444 = vsel %vm1192, %v2439, %v2443
      %v2445 = vshrl.u32 %v2324, 16
      %v2447 = vrot.slane %v2445, 4
      %v2448 = vor.u32 %v2447, %v2443
      %v2449 = vrot.slane %v2448, 4
      %v2451 = vshll.u32 %v2325, 16
      %v2453 = vrot.slane %v2451, 5
      %v2454 = vsel %vm1192, %v2449, %v2453
      %v2456 = vshrl.u32 %v2326, 16
      %v2458 = vrot.slane %v2456, 4
      %v2459 = vshll.u32 %v2326, 16
      %v2461 = vrot.slane %v2459, 5
      %v2462 = vor.u32 %v2458, %v2461
      %v2463 = vrot.slane %v2462, 4
      %v2465 = vshll.u32 %v2327, 16
      %v2467 = vrot.slane %v2465, 5
      %v2468 = vsel %vm1192, %v2463, %v2467
      %v2469 = vshrl.u32 %v2327, 16
      %v2471 = vrot.slane %v2469, 4
      %v2472 = vor.u32 %v2471, %v2467
      %v2473 = vrot.slane %v2472, 4
      %v2475 = vshll.u32 %v2328, 16
      %v2477 = vrot.slane %v2475, 5
      %v2478 = vsel %vm1192, %v2473, %v2477
      %v2480 = vshrl.u32 %v2329, 16
      %v2482 = vrot.slane %v2480, 4
      %v2483 = vshll.u32 %v2329, 16
      %v2485 = vrot.slane %v2483, 5
      %v2486 = vor.u32 %v2482, %v2485
      %v2487 = vrot.slane %v2486, 4
      %v2489 = vshll.u32 %v2330, 16
      %v2491 = vrot.slane %v2489, 5
      %v2492 = vsel %vm1192, %v2487, %v2491
      %v2493 = vshrl.u32 %v2330, 16
      %v2495 = vrot.slane %v2493, 4
      %v2496 = vor.u32 %v2495, %v2491
      %v2497 = vrot.slane %v2496, 4
      %v2499 = vshll.u32 %v2331, 16
      %v2501 = vrot.slane %v2499, 5
      %v2502 = vsel %vm1192, %v2497, %v2501
      %v2504 = vshrl.u32 %v2332, 16
      %v2506 = vrot.slane %v2504, 4
      %v2507 = vshll.u32 %v2332, 16
      %v2509 = vrot.slane %v2507, 5
      %v2510 = vor.u32 %v2506, %v2509
      %v2511 = vrot.slane %v2510, 4
      %v2513 = vshll.u32 %v2333, 16
      %v2515 = vrot.slane %v2513, 5
      %v2516 = vsel %vm1192, %v2511, %v2515
      %v2517 = vshrl.u32 %v2333, 16
      %v2519 = vrot.slane %v2517, 4
      %v2520 = vor.u32 %v2519, %v2515
      %v2521 = vrot.slane %v2520, 4
      %v2523 = vshll.u32 %v2334, 16
      %v2525 = vrot.slane %v2523, 5
      %v2526 = vsel %vm1192, %v2521, %v2525
      %s2527 = scalar_lea.vmem %s3, 256
      %v2528 = vld [vmem:[%s2527] sm:$0xf]
      %v2529 = vld [vmem:[%s2527 + $0x4] sm:$0xf]
      %v2530 = vld [vmem:[%s2527 + $0x8] sm:$0xf]
      %v2531 = vld [vmem:[%s2527 + $0xc] sm:$0xf]
      %v2532 = vld [vmem:[%s2527 + $0x10] sm:$0xf]
      %v2533 = vld [vmem:[%s2527 + $0x14] sm:$0xf]
      %v2534 = vld [vmem:[%s2527 + $0x18] sm:$0xf]
      %v2535 = vld [vmem:[%s2527 + $0x1c] sm:$0xf]
      %v2536 = vld [vmem:[%s2527 + $0x20] sm:$0xf]
      %v2537 = vld [vmem:[%s2527 + $0x24] sm:$0xf]
      %v2538 = vld [vmem:[%s2527 + $0x28] sm:$0xf]
      %v2539 = vld [vmem:[%s2527 + $0x2c] sm:$0xf]
      %v2540 = vld [vmem:[%s2527 + $0x30] sm:$0xf]
      %v2541 = vld [vmem:[%s2527 + $0x34] sm:$0xf]
      %v2542 = vld [vmem:[%s2527 + $0x38] sm:$0xf]
      %v2543 = vld [vmem:[%s2527 + $0x3c] sm:$0xf]
      %v2544 = vunpack.c.l.b16 %v2348
      %v2545 = vunpack.c.l.b16 %v2358
      %v2546 = vunpack.c.l.b16 %v2372
      %v2547 = vunpack.c.l.b16 %v2382
      %v2548 = vunpack.c.l.b16 %v2396
      %v2549 = vunpack.c.l.b16 %v2406
      %v2550 = vunpack.c.l.b16 %v2420
      %v2551 = vunpack.c.l.b16 %v2430
      %v2552 = vunpack.c.l.b16 %v2444
      %v2553 = vunpack.c.l.b16 %v2454
      %v2554 = vunpack.c.l.b16 %v2468
      %v2555 = vunpack.c.l.b16 %v2478
      %v2556 = vunpack.c.l.b16 %v2492
      %v2557 = vunpack.c.l.b16 %v2502
      %v2558 = vunpack.c.l.b16 %v2516
      %v2559 = vunpack.c.l.b16 %v2526
      %v2560 = vpack.c.b16 %v2545, %v2544
      %v2561 = vpack.c.b16 %v2547, %v2546
      %v2562 = vpack.c.b16 %v2549, %v2548
      %v2563 = vpack.c.b16 %v2551, %v2550
      %v2564 = vpack.c.b16 %v2553, %v2552
      %v2565 = vpack.c.b16 %v2555, %v2554
      %v2566 = vpack.c.b16 %v2557, %v2556
      %v2567 = vpack.c.b16 %v2559, %v2558
      %v2592 = vunpack.c.l.b16 %v2528
      %v2593 = vunpack.c.l.b16 %v2529
      %v2594 = vunpack.c.l.b16 %v2530
      %v2595 = vunpack.c.l.b16 %v2531
      %v2596 = vunpack.c.l.b16 %v2532
      %v2597 = vunpack.c.l.b16 %v2533
      %v2598 = vunpack.c.l.b16 %v2534
      %v2599 = vunpack.c.l.b16 %v2535
      %v2600 = vunpack.c.l.b16 %v2536
      %v2601 = vunpack.c.l.b16 %v2537
      %v2602 = vunpack.c.l.b16 %v2538
      %v2603 = vunpack.c.l.b16 %v2539
      %v2604 = vunpack.c.l.b16 %v2540
      %v2605 = vunpack.c.l.b16 %v2541
      %v2606 = vunpack.c.l.b16 %v2542
      %v2607 = vunpack.c.l.b16 %v2543
      %v2608 = vpack.c.b16 %v2593, %v2592
      %v2609 = vpack.c.b16 %v2595, %v2594
      %v2610 = vpack.c.b16 %v2597, %v2596
      %v2611 = vpack.c.b16 %v2599, %v2598
      %v2612 = vpack.c.b16 %v2601, %v2600
      %v2613 = vpack.c.b16 %v2603, %v2602
      %v2614 = vpack.c.b16 %v2605, %v2604
      %v2615 = vpack.c.b16 %v2607, %v2606
      %2624 = vmatprep.subr.bf16.mxu0 0
      %2625 = vmatpush1.bf16.msra.mxu0 %v2608
      %2626 = vmatprep.subr.bf16.mxu0 0
      %2627 = vmatpush1.bf16.msra.mxu0 %v2609
      %2628 = vmatprep.subr.bf16.mxu0 0
      %2629 = vmatpush1.bf16.msra.mxu0 %v2610
      %2630 = vmatprep.subr.bf16.mxu0 0
      %2631 = vmatpush1.bf16.msra.mxu0 %v2611
      %2632 = vmatprep.subr.bf16.mxu0 0
      %2633 = vmatpush1.bf16.msra.mxu0 %v2612
      %2634 = vmatprep.subr.bf16.mxu0 0
      %2635 = vmatpush1.bf16.msra.mxu0 %v2613
      %2636 = vmatprep.subr.bf16.mxu0 0
      %2637 = vmatpush1.bf16.msra.mxu0 %v2614
      %2638 = vmatprep.subr.bf16.mxu0 0
      %2639 = vmatpush1.bf16.msra.mxu0 %v2615
      %2640 = vmatprep.subr.bf16.mxu0 0
      %2641 = vmatpush1.bf16.msra.mxu0 0
      %2642 = vmatprep.subr.bf16.mxu0 0
      %2643 = vmatpush1.bf16.msra.mxu0 0
      %2644 = vmatprep.subr.bf16.mxu0 0
      %2645 = vmatpush1.bf16.msra.mxu0 0
      %2646 = vmatprep.subr.bf16.mxu0 0
      %2647 = vmatpush1.bf16.msra.mxu0 0
      %2648 = vmatprep.subr.bf16.mxu0 0
      %2649 = vmatpush1.bf16.msra.mxu0 0
      %2650 = vmatprep.subr.bf16.mxu0 0
      %2651 = vmatpush1.bf16.msra.mxu0 0
      %2652 = vmatprep.subr.bf16.mxu0 0
      %2653 = vmatpush1.bf16.msra.mxu0 0
      %2654 = vmatprep.subr.bf16.mxu0 0
      %2655 = vmatpush1.bf16.msra.mxu0 0
      %2656 = vmatprep.mubr.bf16.mxu0 0
      %2657 = vmatmul.mubr.bf16.gmra.mrb[0].mxu0 %v2560
      %v2658 = vpop.f32.mrb[0].mxu0
      %v2659 = vadd.f32 0.0, %v2658
      %v2660 = vpop.f32.mrb[0].mxu0
      %v2661 = vpop.f32.mrb[0].mxu0
      %v2662 = vadd.f32 0.0, %v2661
      %v2663 = vpop.f32.mrb[0].mxu0
      %2664 = vmatprep.mubr.bf16.mxu0 0
      %2665 = vmatmul.mubr.bf16.gmra.mrb[0].mxu0 %v2561
      %v2666 = vpop.f32.mrb[0].mxu0
      %v2667 = vadd.f32 0.0, %v2666
      %v2668 = vpop.f32.mrb[0].mxu0
      %v2669 = vpop.f32.mrb[0].mxu0
      %v2670 = vadd.f32 0.0, %v2669
      %v2671 = vpop.f32.mrb[0].mxu0
      %2672 = vmatprep.mubr.bf16.mxu0 0
      %2673 = vmatmul.mubr.bf16.gmra.mrb[0].mxu0 %v2562
      %v2674 = vpop.f32.mrb[0].mxu0
      %v2675 = vadd.f32 0.0, %v2674
      %v2676 = vpop.f32.mrb[0].mxu0
      %v2677 = vpop.f32.mrb[0].mxu0
      %v2678 = vadd.f32 0.0, %v2677
      %v2679 = vpop.f32.mrb[0].mxu0
      %2680 = vmatprep.mubr.bf16.mxu0 0
      %2681 = vmatmul.mubr.bf16.gmra.mrb[0].mxu0 %v2563
      %v2682 = vpop.f32.mrb[0].mxu0
      %v2683 = vadd.f32 0.0, %v2682
      %v2684 = vpop.f32.mrb[0].mxu0
      %v2685 = vpop.f32.mrb[0].mxu0
      %v2686 = vadd.f32 0.0, %v2685
      %v2687 = vpop.f32.mrb[0].mxu0
      %2688 = vmatprep.mubr.bf16.mxu0 0
      %2689 = vmatmul.mubr.bf16.gmra.mrb[0].mxu0 %v2564
      %v2690 = vpop.f32.mrb[0].mxu0
      %v2691 = vadd.f32 0.0, %v2690
      %v2692 = vpop.f32.mrb[0].mxu0
      %v2693 = vpop.f32.mrb[0].mxu0
      %v2694 = vadd.f32 0.0, %v2693
      %v2695 = vpop.f32.mrb[0].mxu0
      %2696 = vmatprep.mubr.bf16.mxu0 0
      %2697 = vmatmul.mubr.bf16.gmra.mrb[0].mxu0 %v2565
      %v2698 = vpop.f32.mrb[0].mxu0
      %v2699 = vadd.f32 0.0, %v2698
      %v2700 = vpop.f32.mrb[0].mxu0
      %v2701 = vpop.f32.mrb[0].mxu0
      %v2702 = vadd.f32 0.0, %v2701
      %v2703 = vpop.f32.mrb[0].mxu0
      %2704 = vmatprep.mubr.bf16.mxu0 0
      %2705 = vmatmul.mubr.bf16.gmra.mrb[0].mxu0 %v2566
      %v2706 = vpop.f32.mrb[0].mxu0
      %v2707 = vadd.f32 0.0, %v2706
      %v2708 = vpop.f32.mrb[0].mxu0
      %v2709 = vpop.f32.mrb[0].mxu0
      %v2710 = vadd.f32 0.0, %v2709
      %v2711 = vpop.f32.mrb[0].mxu0
      %2712 = vmatprep.mubr.bf16.mxu0 0
      %2713 = vmatmul.mubr.bf16.gmra.mrb[0].mxu0 %v2567
      %v2714 = vpop.f32.mrb[0].mxu0
      %v2715 = vadd.f32 0.0, %v2714
      %v2716 = vpop.f32.mrb[0].mxu0
      %v2717 = vpop.f32.mrb[0].mxu0
      %v2718 = vadd.f32 0.0, %v2717
      %v2719 = vpop.f32.mrb[0].mxu0
      %2720 = vdwg.mxu0
      %v2721 = vadd.f32 %v2295, %v2659
      %v2722 = vadd.f32 %v2296, %v2662
      %v2723 = vadd.f32 %v2297, %v2667
      %v2724 = vadd.f32 %v2298, %v2670
      %v2725 = vadd.f32 %v2299, %v2675
      %v2726 = vadd.f32 %v2300, %v2678
      %v2727 = vadd.f32 %v2301, %v2683
      %v2728 = vadd.f32 %v2302, %v2686
      %v2729 = vadd.f32 %v2303, %v2691
      %v2730 = vadd.f32 %v2304, %v2694
      %v2731 = vadd.f32 %v2305, %v2699
      %v2732 = vadd.f32 %v2306, %v2702
      %v2733 = vadd.f32 %v2307, %v2707
      %v2734 = vadd.f32 %v2308, %v2710
      %v2735 = vadd.f32 %v2309, %v2715
      %v2736 = vadd.f32 %v2310, %v2718
      %v2737 = vld [vmem:[%s2068] sm:$0xe]
      %v2738 = vld [vmem:[%s2068 + $0xc] sm:$0xe]
      %v2739 = vld [vmem:[%s2068 + $0x18] sm:$0xe]
      %v2740 = vld [vmem:[%s2068 + $0x24] sm:$0xe]
      %v2741 = vld [vmem:[%s2068 + $0x30] sm:$0xe]
      %v2742 = vld [vmem:[%s2068 + $0x3c] sm:$0xe]
      %v2743 = vld [vmem:[%s2068 + $0x48] sm:$0xe]
      %v2744 = vld [vmem:[%s2068 + $0x54] sm:$0xe]
      %v2769 = vrot.slane %v2737, 5
      %v2770 = vrot.slane %v2769, 4
      %v2771 = vrot.slane %v2312, 5
      %v2772 = vsel %vm1798, %v2770, %v2771
      %v2773 = vrot.slane %v2771, 4
      %v2774 = vrot.slane %v2313, 5
      %v2775 = vsel %vm1798, %v2773, %v2774
      %v2776 = vrot.slane %v2738, 5
      %v2777 = vrot.slane %v2776, 4
      %v2778 = vrot.slane %v2315, 5
      %v2779 = vsel %vm1798, %v2777, %v2778
      %v2780 = vrot.slane %v2778, 4
      %v2781 = vrot.slane %v2316, 5
      %v2782 = vsel %vm1798, %v2780, %v2781
      %v2783 = vrot.slane %v2739, 5
      %v2784 = vrot.slane %v2783, 4
      %v2785 = vrot.slane %v2318, 5
      %v2786 = vsel %vm1798, %v2784, %v2785
      %v2787 = vrot.slane %v2785, 4
      %v2788 = vrot.slane %v2319, 5
      %v2789 = vsel %vm1798, %v2787, %v2788
      %v2790 = vrot.slane %v2740, 5
      %v2791 = vrot.slane %v2790, 4
      %v2792 = vrot.slane %v2321, 5
      %v2793 = vsel %vm1798, %v2791, %v2792
      %v2794 = vrot.slane %v2792, 4
      %v2795 = vrot.slane %v2322, 5
      %v2796 = vsel %vm1798, %v2794, %v2795
      %v2797 = vrot.slane %v2741, 5
      %v2798 = vrot.slane %v2797, 4
      %v2799 = vrot.slane %v2324, 5
      %v2800 = vsel %vm1798, %v2798, %v2799
      %v2801 = vrot.slane %v2799, 4
      %v2802 = vrot.slane %v2325, 5
      %v2803 = vsel %vm1798, %v2801, %v2802
      %v2804 = vrot.slane %v2742, 5
      %v2805 = vrot.slane %v2804, 4
      %v2806 = vrot.slane %v2327, 5
      %v2807 = vsel %vm1798, %v2805, %v2806
      %v2808 = vrot.slane %v2806, 4
      %v2809 = vrot.slane %v2328, 5
      %v2810 = vsel %vm1798, %v2808, %v2809
      %v2811 = vrot.slane %v2743, 5
      %v2812 = vrot.slane %v2811, 4
      %v2813 = vrot.slane %v2330, 5
      %v2814 = vsel %vm1798, %v2812, %v2813
      %v2815 = vrot.slane %v2813, 4
      %v2816 = vrot.slane %v2331, 5
      %v2817 = vsel %vm1798, %v2815, %v2816
      %v2818 = vrot.slane %v2744, 5
      %v2819 = vrot.slane %v2818, 4
      %v2820 = vrot.slane %v2333, 5
      %v2821 = vsel %vm1798, %v2819, %v2820
      %v2822 = vrot.slane %v2820, 4
      %v2823 = vrot.slane %v2334, 5
      %v2824 = vsel %vm1798, %v2822, %v2823
      %s2825 = scalar_lea.vmem %s3, 320
      %v2826 = vld [vmem:[%s2825] sm:$0xf]
      %v2827 = vld [vmem:[%s2825 + $0x4] sm:$0xf]
      %v2828 = vld [vmem:[%s2825 + $0x8] sm:$0xf]
      %v2829 = vld [vmem:[%s2825 + $0xc] sm:$0xf]
      %v2830 = vld [vmem:[%s2825 + $0x10] sm:$0xf]
      %v2831 = vld [vmem:[%s2825 + $0x14] sm:$0xf]
      %v2832 = vld [vmem:[%s2825 + $0x18] sm:$0xf]
      %v2833 = vld [vmem:[%s2825 + $0x1c] sm:$0xf]
      %v2834 = vld [vmem:[%s2825 + $0x20] sm:$0xf]
      %v2835 = vld [vmem:[%s2825 + $0x24] sm:$0xf]
      %v2836 = vld [vmem:[%s2825 + $0x28] sm:$0xf]
      %v2837 = vld [vmem:[%s2825 + $0x2c] sm:$0xf]
      %v2838 = vld [vmem:[%s2825 + $0x30] sm:$0xf]
      %v2839 = vld [vmem:[%s2825 + $0x34] sm:$0xf]
      %v2840 = vld [vmem:[%s2825 + $0x38] sm:$0xf]
      %v2841 = vld [vmem:[%s2825 + $0x3c] sm:$0xf]
      %v2842 = vunpack.c.l.b16 %v2772
      %v2843 = vunpack.c.l.b16 %v2775
      %v2844 = vunpack.c.l.b16 %v2779
      %v2845 = vunpack.c.l.b16 %v2782
      %v2846 = vunpack.c.l.b16 %v2786
      %v2847 = vunpack.c.l.b16 %v2789
      %v2848 = vunpack.c.l.b16 %v2793
      %v2849 = vunpack.c.l.b16 %v2796
      %v2850 = vunpack.c.l.b16 %v2800
      %v2851 = vunpack.c.l.b16 %v2803
      %v2852 = vunpack.c.l.b16 %v2807
      %v2853 = vunpack.c.l.b16 %v2810
      %v2854 = vunpack.c.l.b16 %v2814
      %v2855 = vunpack.c.l.b16 %v2817
      %v2856 = vunpack.c.l.b16 %v2821
      %v2857 = vunpack.c.l.b16 %v2824
      %v2858 = vpack.c.b16 %v2843, %v2842
      %v2859 = vpack.c.b16 %v2845, %v2844
      %v2860 = vpack.c.b16 %v2847, %v2846
      %v2861 = vpack.c.b16 %v2849, %v2848
      %v2862 = vpack.c.b16 %v2851, %v2850
      %v2863 = vpack.c.b16 %v2853, %v2852
      %v2864 = vpack.c.b16 %v2855, %v2854
      %v2865 = vpack.c.b16 %v2857, %v2856
      %v2890 = vunpack.c.l.b16 %v2826
      %v2891 = vunpack.c.l.b16 %v2827
      %v2892 = vunpack.c.l.b16 %v2828
      %v2893 = vunpack.c.l.b16 %v2829
      %v2894 = vunpack.c.l.b16 %v2830
      %v2895 = vunpack.c.l.b16 %v2831
      %v2896 = vunpack.c.l.b16 %v2832
      %v2897 = vunpack.c.l.b16 %v2833
      %v2898 = vunpack.c.l.b16 %v2834
      %v2899 = vunpack.c.l.b16 %v2835
      %v2900 = vunpack.c.l.b16 %v2836
      %v2901 = vunpack.c.l.b16 %v2837
      %v2902 = vunpack.c.l.b16 %v2838
      %v2903 = vunpack.c.l.b16 %v2839
      %v2904 = vunpack.c.l.b16 %v2840
      %v2905 = vunpack.c.l.b16 %v2841
      %v2906 = vpack.c.b16 %v2891, %v2890
      %v2907 = vpack.c.b16 %v2893, %v2892
      %v2908 = vpack.c.b16 %v2895, %v2894
      %v2909 = vpack.c.b16 %v2897, %v2896
      %v2910 = vpack.c.b16 %v2899, %v2898
      %v2911 = vpack.c.b16 %v2901, %v2900
      %v2912 = vpack.c.b16 %v2903, %v2902
      %v2913 = vpack.c.b16 %v2905, %v2904
      %2922 = vmatprep.subr.bf16.mxu0 0
      %2923 = vmatpush1.bf16.msra.mxu0 %v2906
      %2924 = vmatprep.subr.bf16.mxu0 0
      %2925 = vmatpush1.bf16.msra.mxu0 %v2907
      %2926 = vmatprep.subr.bf16.mxu0 0
      %2927 = vmatpush1.bf16.msra.mxu0 %v2908
      %2928 = vmatprep.subr.bf16.mxu0 0
      %2929 = vmatpush1.bf16.msra.mxu0 %v2909
      %2930 = vmatprep.subr.bf16.mxu0 0
      %2931 = vmatpush1.bf16.msra.mxu0 %v2910
      %2932 = vmatprep.subr.bf16.mxu0 0
      %2933 = vmatpush1.bf16.msra.mxu0 %v2911
      %2934 = vmatprep.subr.bf16.mxu0 0
      %2935 = vmatpush1.bf16.msra.mxu0 %v2912
      %2936 = vmatprep.subr.bf16.mxu0 0
      %2937 = vmatpush1.bf16.msra.mxu0 %v2913
      %2938 = vmatprep.subr.bf16.mxu0 0
      %2939 = vmatpush1.bf16.msra.mxu0 0
      %2940 = vmatprep.subr.bf16.mxu0 0
      %2941 = vmatpush1.bf16.msra.mxu0 0
      %2942 = vmatprep.subr.bf16.mxu0 0
      %2943 = vmatpush1.bf16.msra.mxu0 0
      %2944 = vmatprep.subr.bf16.mxu0 0
      %2945 = vmatpush1.bf16.msra.mxu0 0
      %2946 = vmatprep.subr.bf16.mxu0 0
      %2947 = vmatpush1.bf16.msra.mxu0 0
      %2948 = vmatprep.subr.bf16.mxu0 0
      %2949 = vmatpush1.bf16.msra.mxu0 0
      %2950 = vmatprep.subr.bf16.mxu0 0
      %2951 = vmatpush1.bf16.msra.mxu0 0
      %2952 = vmatprep.subr.bf16.mxu0 0
      %2953 = vmatpush1.bf16.msra.mxu0 0
      %2954 = vmatprep.mubr.bf16.mxu0 0
      %2955 = vmatmul.mubr.bf16.gmra.mrb[0].mxu0 %v2858
      %v2956 = vpop.f32.mrb[0].mxu0
      %v2957 = vadd.f32 0.0, %v2956
      %v2958 = vpop.f32.mrb[0].mxu0
      %v2959 = vpop.f32.mrb[0].mxu0
      %v2960 = vadd.f32 0.0, %v2959
      %v2961 = vpop.f32.mrb[0].mxu0
      %2962 = vmatprep.mubr.bf16.mxu0 0
      %2963 = vmatmul.mubr.bf16.gmra.mrb[0].mxu0 %v2859
      %v2964 = vpop.f32.mrb[0].mxu0
      %v2965 = vadd.f32 0.0, %v2964
      %v2966 = vpop.f32.mrb[0].mxu0
      %v2967 = vpop.f32.mrb[0].mxu0
      %v2968 = vadd.f32 0.0, %v2967
      %v2969 = vpop.f32.mrb[0].mxu0
      %2970 = vmatprep.mubr.bf16.mxu0 0
      %2971 = vmatmul.mubr.bf16.gmra.mrb[0].mxu0 %v2860
      %v2972 = vpop.f32.mrb[0].mxu0
      %v2973 = vadd.f32 0.0, %v2972
      %v2974 = vpop.f32.mrb[0].mxu0
      %v2975 = vpop.f32.mrb[0].mxu0
      %v2976 = vadd.f32 0.0, %v2975
      %v2977 = vpop.f32.mrb[0].mxu0
      %2978 = vmatprep.mubr.bf16.mxu0 0
      %2979 = vmatmul.mubr.bf16.gmra.mrb[0].mxu0 %v2861
      %v2980 = vpop.f32.mrb[0].mxu0
      %v2981 = vadd.f32 0.0, %v2980
      %v2982 = vpop.f32.mrb[0].mxu0
      %v2983 = vpop.f32.mrb[0].mxu0
      %v2984 = vadd.f32 0.0, %v2983
      %v2985 = vpop.f32.mrb[0].mxu0
      %2986 = vmatprep.mubr.bf16.mxu0 0
      %2987 = vmatmul.mubr.bf16.gmra.mrb[0].mxu0 %v2862
      %v2988 = vpop.f32.mrb[0].mxu0
      %v2989 = vadd.f32 0.0, %v2988
      %v2990 = vpop.f32.mrb[0].mxu0
      %v2991 = vpop.f32.mrb[0].mxu0
      %v2992 = vadd.f32 0.0, %v2991
      %v2993 = vpop.f32.mrb[0].mxu0
      %2994 = vmatprep.mubr.bf16.mxu0 0
      %2995 = vmatmul.mubr.bf16.gmra.mrb[0].mxu0 %v2863
      %v2996 = vpop.f32.mrb[0].mxu0
      %v2997 = vadd.f32 0.0, %v2996
      %v2998 = vpop.f32.mrb[0].mxu0
      %v2999 = vpop.f32.mrb[0].mxu0
      %v3000 = vadd.f32 0.0, %v2999
      %v3001 = vpop.f32.mrb[0].mxu0
      %3002 = vmatprep.mubr.bf16.mxu0 0
      %3003 = vmatmul.mubr.bf16.gmra.mrb[0].mxu0 %v2864
      %v3004 = vpop.f32.mrb[0].mxu0
      %v3005 = vadd.f32 0.0, %v3004
      %v3006 = vpop.f32.mrb[0].mxu0
      %v3007 = vpop.f32.mrb[0].mxu0
      %v3008 = vadd.f32 0.0, %v3007
      %v3009 = vpop.f32.mrb[0].mxu0
      %3010 = vmatprep.mubr.bf16.mxu0 0
      %3011 = vmatmul.mubr.bf16.gmra.mrb[0].mxu0 %v2865
      %v3012 = vpop.f32.mrb[0].mxu0
      %v3013 = vadd.f32 0.0, %v3012
      %v3014 = vpop.f32.mrb[0].mxu0
      %v3015 = vpop.f32.mrb[0].mxu0
      %v3016 = vadd.f32 0.0, %v3015
      %v3017 = vpop.f32.mrb[0].mxu0
      %3018 = vdwg.mxu0
      %v3019 = vadd.f32 %v2721, %v2957
      %v3020 = vadd.f32 %v2722, %v2960
      %v3021 = vadd.f32 %v2723, %v2965
      %v3022 = vadd.f32 %v2724, %v2968
      %v3023 = vadd.f32 %v2725, %v2973
      %v3024 = vadd.f32 %v2726, %v2976
      %v3025 = vadd.f32 %v2727, %v2981
      %v3026 = vadd.f32 %v2728, %v2984
      %v3027 = vadd.f32 %v2729, %v2989
      %v3028 = vadd.f32 %v2730, %v2992
      %v3029 = vadd.f32 %v2731, %v2997
      %v3030 = vadd.f32 %v2732, %v3000
      %v3031 = vadd.f32 %v2733, %v3005
      %v3032 = vadd.f32 %v2734, %v3008
      %v3033 = vadd.f32 %v2735, %v3013
      %v3034 = vadd.f32 %v2736, %v3016
      %s3035 = sadd.s32 %s1146, 2
      %s3036 = smul.u32 %s3035, 3
      %s3037 = smul.addr %s3036, 4
      %s3038 = scalar_lea.vmem [#allocation2], %s3037
      %v3039 = vld [vmem:[%s3038] sm:$0xf]
      %v3040 = vld [vmem:[%s3038 + $0x4] sm:$0xf]
      %v3041 = vld [vmem:[%s3038 + $0xc] sm:$0xf]
      %v3042 = vld [vmem:[%s3038 + $0x10] sm:$0xf]
      %v3043 = vld [vmem:[%s3038 + $0x18] sm:$0xf]
      %v3044 = vld [vmem:[%s3038 + $0x1c] sm:$0xf]
      %v3045 = vld [vmem:[%s3038 + $0x24] sm:$0xf]
      %v3046 = vld [vmem:[%s3038 + $0x28] sm:$0xf]
      %v3047 = vld [vmem:[%s3038 + $0x30] sm:$0xf]
      %v3048 = vld [vmem:[%s3038 + $0x34] sm:$0xf]
      %v3049 = vld [vmem:[%s3038 + $0x3c] sm:$0xf]
      %v3050 = vld [vmem:[%s3038 + $0x40] sm:$0xf]
      %v3051 = vld [vmem:[%s3038 + $0x48] sm:$0xf]
      %v3052 = vld [vmem:[%s3038 + $0x4c] sm:$0xf]
      %v3053 = vld [vmem:[%s3038 + $0x54] sm:$0xf]
      %v3054 = vld [vmem:[%s3038 + $0x58] sm:$0xf]
      %s3055 = scalar_lea.vmem %s3, 384
      %v3056 = vld [vmem:[%s3055] sm:$0xf]
      %v3057 = vld [vmem:[%s3055 + $0x4] sm:$0xf]
      %v3058 = vld [vmem:[%s3055 + $0x8] sm:$0xf]
      %v3059 = vld [vmem:[%s3055 + $0xc] sm:$0xf]
      %v3060 = vld [vmem:[%s3055 + $0x10] sm:$0xf]
      %v3061 = vld [vmem:[%s3055 + $0x14] sm:$0xf]
      %v3062 = vld [vmem:[%s3055 + $0x18] sm:$0xf]
      %v3063 = vld [vmem:[%s3055 + $0x1c] sm:$0xf]
      %v3064 = vld [vmem:[%s3055 + $0x20] sm:$0xf]
      %v3065 = vld [vmem:[%s3055 + $0x24] sm:$0xf]
      %v3066 = vld [vmem:[%s3055 + $0x28] sm:$0xf]
      %v3067 = vld [vmem:[%s3055 + $0x2c] sm:$0xf]
      %v3068 = vld [vmem:[%s3055 + $0x30] sm:$0xf]
      %v3069 = vld [vmem:[%s3055 + $0x34] sm:$0xf]
      %v3070 = vld [vmem:[%s3055 + $0x38] sm:$0xf]
      %v3071 = vld [vmem:[%s3055 + $0x3c] sm:$0xf]
      %v3088 = vunpack.c.l.b16 %v3039
      %v3089 = vunpack.c.l.b16 %v3040
      %v3090 = vunpack.c.l.b16 %v3041
      %v3091 = vunpack.c.l.b16 %v3042
      %v3092 = vunpack.c.l.b16 %v3043
      %v3093 = vunpack.c.l.b16 %v3044
      %v3094 = vunpack.c.l.b16 %v3045
      %v3095 = vunpack.c.l.b16 %v3046
      %v3096 = vunpack.c.l.b16 %v3047
      %v3097 = vunpack.c.l.b16 %v3048
      %v3098 = vunpack.c.l.b16 %v3049
      %v3099 = vunpack.c.l.b16 %v3050
      %v3100 = vunpack.c.l.b16 %v3051
      %v3101 = vunpack.c.l.b16 %v3052
      %v3102 = vunpack.c.l.b16 %v3053
      %v3103 = vunpack.c.l.b16 %v3054
      %v3104 = vpack.c.b16 %v3089, %v3088
      %v3105 = vpack.c.b16 %v3091, %v3090
      %v3106 = vpack.c.b16 %v3093, %v3092
      %v3107 = vpack.c.b16 %v3095, %v3094
      %v3108 = vpack.c.b16 %v3097, %v3096
      %v3109 = vpack.c.b16 %v3099, %v3098
      %v3110 = vpack.c.b16 %v3101, %v3100
      %v3111 = vpack.c.b16 %v3103, %v3102
      %v3136 = vunpack.c.l.b16 %v3056
      %v3137 = vunpack.c.l.b16 %v3057
      %v3138 = vunpack.c.l.b16 %v3058
      %v3139 = vunpack.c.l.b16 %v3059
      %v3140 = vunpack.c.l.b16 %v3060
      %v3141 = vunpack.c.l.b16 %v3061
      %v3142 = vunpack.c.l.b16 %v3062
      %v3143 = vunpack.c.l.b16 %v3063
      %v3144 = vunpack.c.l.b16 %v3064
      %v3145 = vunpack.c.l.b16 %v3065
      %v3146 = vunpack.c.l.b16 %v3066
      %v3147 = vunpack.c.l.b16 %v3067
      %v3148 = vunpack.c.l.b16 %v3068
      %v3149 = vunpack.c.l.b16 %v3069
      %v3150 = vunpack.c.l.b16 %v3070
      %v3151 = vunpack.c.l.b16 %v3071
      %v3152 = vpack.c.b16 %v3137, %v3136
      %v3153 = vpack.c.b16 %v3139, %v3138
      %v3154 = vpack.c.b16 %v3141, %v3140
      %v3155 = vpack.c.b16 %v3143, %v3142
      %v3156 = vpack.c.b16 %v3145, %v3144
      %v3157 = vpack.c.b16 %v3147, %v3146
      %v3158 = vpack.c.b16 %v3149, %v3148
      %v3159 = vpack.c.b16 %v3151, %v3150
      %3168 = vmatprep.subr.bf16.mxu0 0
      %3169 = vmatpush1.bf16.msra.mxu0 %v3152
      %3170 = vmatprep.subr.bf16.mxu0 0
      %3171 = vmatpush1.bf16.msra.mxu0 %v3153
      %3172 = vmatprep.subr.bf16.mxu0 0
      %3173 = vmatpush1.bf16.msra.mxu0 %v3154
      %3174 = vmatprep.subr.bf16.mxu0 0
      %3175 = vmatpush1.bf16.msra.mxu0 %v3155
      %3176 = vmatprep.subr.bf16.mxu0 0
      %3177 = vmatpush1.bf16.msra.mxu0 %v3156
      %3178 = vmatprep.subr.bf16.mxu0 0
      %3179 = vmatpush1.bf16.msra.mxu0 %v3157
      %3180 = vmatprep.subr.bf16.mxu0 0
      %3181 = vmatpush1.bf16.msra.mxu0 %v3158
      %3182 = vmatprep.subr.bf16.mxu0 0
      %3183 = vmatpush1.bf16.msra.mxu0 %v3159
      %3184 = vmatprep.subr.bf16.mxu0 0
      %3185 = vmatpush1.bf16.msra.mxu0 0
      %3186 = vmatprep.subr.bf16.mxu0 0
      %3187 = vmatpush1.bf16.msra.mxu0 0
      %3188 = vmatprep.subr.bf16.mxu0 0
      %3189 = vmatpush1.bf16.msra.mxu0 0
      %3190 = vmatprep.subr.bf16.mxu0 0
      %3191 = vmatpush1.bf16.msra.mxu0 0
      %3192 = vmatprep.subr.bf16.mxu0 0
      %3193 = vmatpush1.bf16.msra.mxu0 0
      %3194 = vmatprep.subr.bf16.mxu0 0
      %3195 = vmatpush1.bf16.msra.mxu0 0
      %3196 = vmatprep.subr.bf16.mxu0 0
      %3197 = vmatpush1.bf16.msra.mxu0 0
      %3198 = vmatprep.subr.bf16.mxu0 0
      %3199 = vmatpush1.bf16.msra.mxu0 0
      %3200 = vmatprep.mubr.bf16.mxu0 0
      %3201 = vmatmul.mubr.bf16.gmra.mrb[0].mxu0 %v3104
      %v3202 = vpop.f32.mrb[0].mxu0
      %v3203 = vadd.f32 0.0, %v3202
      %v3204 = vpop.f32.mrb[0].mxu0
      %v3205 = vpop.f32.mrb[0].mxu0
      %v3206 = vadd.f32 0.0, %v3205
      %v3207 = vpop.f32.mrb[0].mxu0
      %3208 = vmatprep.mubr.bf16.mxu0 0
      %3209 = vmatmul.mubr.bf16.gmra.mrb[0].mxu0 %v3105
      %v3210 = vpop.f32.mrb[0].mxu0
      %v3211 = vadd.f32 0.0, %v3210
      %v3212 = vpop.f32.mrb[0].mxu0
      %v3213 = vpop.f32.mrb[0].mxu0
      %v3214 = vadd.f32 0.0, %v3213
      %v3215 = vpop.f32.mrb[0].mxu0
      %3216 = vmatprep.mubr.bf16.mxu0 0
      %3217 = vmatmul.mubr.bf16.gmra.mrb[0].mxu0 %v3106
      %v3218 = vpop.f32.mrb[0].mxu0
      %v3219 = vadd.f32 0.0, %v3218
      %v3220 = vpop.f32.mrb[0].mxu0
      %v3221 = vpop.f32.mrb[0].mxu0
      %v3222 = vadd.f32 0.0, %v3221
      %v3223 = vpop.f32.mrb[0].mxu0
      %3224 = vmatprep.mubr.bf16.mxu0 0
      %3225 = vmatmul.mubr.bf16.gmra.mrb[0].mxu0 %v3107
      %v3226 = vpop.f32.mrb[0].mxu0
      %v3227 = vadd.f32 0.0, %v3226
      %v3228 = vpop.f32.mrb[0].mxu0
      %v3229 = vpop.f32.mrb[0].mxu0
      %v3230 = vadd.f32 0.0, %v3229
      %v3231 = vpop.f32.mrb[0].mxu0
      %3232 = vmatprep.mubr.bf16.mxu0 0
      %3233 = vmatmul.mubr.bf16.gmra.mrb[0].mxu0 %v3108
      %v3234 = vpop.f32.mrb[0].mxu0
      %v3235 = vadd.f32 0.0, %v3234
      %v3236 = vpop.f32.mrb[0].mxu0
      %v3237 = vpop.f32.mrb[0].mxu0
      %v3238 = vadd.f32 0.0, %v3237
      %v3239 = vpop.f32.mrb[0].mxu0
      %3240 = vmatprep.mubr.bf16.mxu0 0
      %3241 = vmatmul.mubr.bf16.gmra.mrb[0].mxu0 %v3109
      %v3242 = vpop.f32.mrb[0].mxu0
      %v3243 = vadd.f32 0.0, %v3242
      %v3244 = vpop.f32.mrb[0].mxu0
      %v3245 = vpop.f32.mrb[0].mxu0
      %v3246 = vadd.f32 0.0, %v3245
      %v3247 = vpop.f32.mrb[0].mxu0
      %3248 = vmatprep.mubr.bf16.mxu0 0
      %3249 = vmatmul.mubr.bf16.gmra.mrb[0].mxu0 %v3110
      %v3250 = vpop.f32.mrb[0].mxu0
      %v3251 = vadd.f32 0.0, %v3250
      %v3252 = vpop.f32.mrb[0].mxu0
      %v3253 = vpop.f32.mrb[0].mxu0
      %v3254 = vadd.f32 0.0, %v3253
      %v3255 = vpop.f32.mrb[0].mxu0
      %3256 = vmatprep.mubr.bf16.mxu0 0
      %3257 = vmatmul.mubr.bf16.gmra.mrb[0].mxu0 %v3111
      %v3258 = vpop.f32.mrb[0].mxu0
      %v3259 = vadd.f32 0.0, %v3258
      %v3260 = vpop.f32.mrb[0].mxu0
      %v3261 = vpop.f32.mrb[0].mxu0
      %v3262 = vadd.f32 0.0, %v3261
      %v3263 = vpop.f32.mrb[0].mxu0
      %3264 = vdwg.mxu0
      %v3265 = vadd.f32 %v3019, %v3203
      %v3266 = vadd.f32 %v3020, %v3206
      %v3267 = vadd.f32 %v3021, %v3211
      %v3268 = vadd.f32 %v3022, %v3214
      %v3269 = vadd.f32 %v3023, %v3219
      %v3270 = vadd.f32 %v3024, %v3222
      %v3271 = vadd.f32 %v3025, %v3227
      %v3272 = vadd.f32 %v3026, %v3230
      %v3273 = vadd.f32 %v3027, %v3235
      %v3274 = vadd.f32 %v3028, %v3238
      %v3275 = vadd.f32 %v3029, %v3243
      %v3276 = vadd.f32 %v3030, %v3246
      %v3277 = vadd.f32 %v3031, %v3251
      %v3278 = vadd.f32 %v3032, %v3254
      %v3279 = vadd.f32 %v3033, %v3259
      %v3280 = vadd.f32 %v3034, %v3262
      %v3281 = vld [vmem:[%s3038] sm:$0xf]
      %v3282 = vld [vmem:[%s3038 + $0x4] sm:$0xf]
      %v3283 = vld [vmem:[%s3038 + $0x8] sm:$0x1]
      %v3284 = vld [vmem:[%s3038 + $0xc] sm:$0xf]
      %v3285 = vld [vmem:[%s3038 + $0x10] sm:$0xf]
      %v3286 = vld [vmem:[%s3038 + $0x14] sm:$0x1]
      %v3287 = vld [vmem:[%s3038 + $0x18] sm:$0xf]
      %v3288 = vld [vmem:[%s3038 + $0x1c] sm:$0xf]
      %v3289 = vld [vmem:[%s3038 + $0x20] sm:$0x1]
      %v3290 = vld [vmem:[%s3038 + $0x24] sm:$0xf]
      %v3291 = vld [vmem:[%s3038 + $0x28] sm:$0xf]
      %v3292 = vld [vmem:[%s3038 + $0x2c] sm:$0x1]
      %v3293 = vld [vmem:[%s3038 + $0x30] sm:$0xf]
      %v3294 = vld [vmem:[%s3038 + $0x34] sm:$0xf]
      %v3295 = vld [vmem:[%s3038 + $0x38] sm:$0x1]
      %v3296 = vld [vmem:[%s3038 + $0x3c] sm:$0xf]
      %v3297 = vld [vmem:[%s3038 + $0x40] sm:$0xf]
      %v3298 = vld [vmem:[%s3038 + $0x44] sm:$0x1]
      %v3299 = vld [vmem:[%s3038 + $0x48] sm:$0xf]
      %v3300 = vld [vmem:[%s3038 + $0x4c] sm:$0xf]
      %v3301 = vld [vmem:[%s3038 + $0x50] sm:$0x1]
      %v3302 = vld [vmem:[%s3038 + $0x54] sm:$0xf]
      %v3303 = vld [vmem:[%s3038 + $0x58] sm:$0xf]
      %v3304 = vld [vmem:[%s3038 + $0x5c] sm:$0x1]
      %v3306 = vshrl.u32 %v3281, 16
      %v3308 = vrot.slane %v3306, 4
      %v3309 = vshll.u32 %v3281, 16
      %v3311 = vrot.slane %v3309, 5
      %v3312 = vor.u32 %v3308, %v3311
      %v3313 = vrot.slane %v3312, 4
      %v3315 = vshll.u32 %v3282, 16
      %v3317 = vrot.slane %v3315, 5
      %v3318 = vsel %vm1192, %v3313, %v3317
      %v3319 = vshrl.u32 %v3282, 16
      %v3321 = vrot.slane %v3319, 4
      %v3322 = vor.u32 %v3321, %v3317
      %v3323 = vrot.slane %v3322, 4
      %v3325 = vshll.u32 %v3283, 16
      %v3327 = vrot.slane %v3325, 5
      %v3328 = vsel %vm1192, %v3323, %v3327
      %v3330 = vshrl.u32 %v3284, 16
      %v3332 = vrot.slane %v3330, 4
      %v3333 = vshll.u32 %v3284, 16
      %v3335 = vrot.slane %v3333, 5
      %v3336 = vor.u32 %v3332, %v3335
      %v3337 = vrot.slane %v3336, 4
      %v3339 = vshll.u32 %v3285, 16
      %v3341 = vrot.slane %v3339, 5
      %v3342 = vsel %vm1192, %v3337, %v3341
      %v3343 = vshrl.u32 %v3285, 16
      %v3345 = vrot.slane %v3343, 4
      %v3346 = vor.u32 %v3345, %v3341
      %v3347 = vrot.slane %v3346, 4
      %v3349 = vshll.u32 %v3286, 16
      %v3351 = vrot.slane %v3349, 5
      %v3352 = vsel %vm1192, %v3347, %v3351
      %v3354 = vshrl.u32 %v3287, 16
      %v3356 = vrot.slane %v3354, 4
      %v3357 = vshll.u32 %v3287, 16
      %v3359 = vrot.slane %v3357, 5
      %v3360 = vor.u32 %v3356, %v3359
      %v3361 = vrot.slane %v3360, 4
      %v3363 = vshll.u32 %v3288, 16
      %v3365 = vrot.slane %v3363, 5
      %v3366 = vsel %vm1192, %v3361, %v3365
      %v3367 = vshrl.u32 %v3288, 16
      %v3369 = vrot.slane %v3367, 4
      %v3370 = vor.u32 %v3369, %v3365
      %v3371 = vrot.slane %v3370, 4
      %v3373 = vshll.u32 %v3289, 16
      %v3375 = vrot.slane %v3373, 5
      %v3376 = vsel %vm1192, %v3371, %v3375
      %v3378 = vshrl.u32 %v3290, 16
      %v3380 = vrot.slane %v3378, 4
      %v3381 = vshll.u32 %v3290, 16
      %v3383 = vrot.slane %v3381, 5
      %v3384 = vor.u32 %v3380, %v3383
      %v3385 = vrot.slane %v3384, 4
      %v3387 = vshll.u32 %v3291, 16
      %v3389 = vrot.slane %v3387, 5
      %v3390 = vsel %vm1192, %v3385, %v3389
      %v3391 = vshrl.u32 %v3291, 16
      %v3393 = vrot.slane %v3391, 4
      %v3394 = vor.u32 %v3393, %v3389
      %v3395 = vrot.slane %v3394, 4
      %v3397 = vshll.u32 %v3292, 16
      %v3399 = vrot.slane %v3397, 5
      %v3400 = vsel %vm1192, %v3395, %v3399
      %v3402 = vshrl.u32 %v3293, 16
      %v3404 = vrot.slane %v3402, 4
      %v3405 = vshll.u32 %v3293, 16
      %v3407 = vrot.slane %v3405, 5
      %v3408 = vor.u32 %v3404, %v3407
      %v3409 = vrot.slane %v3408, 4
      %v3411 = vshll.u32 %v3294, 16
      %v3413 = vrot.slane %v3411, 5
      %v3414 = vsel %vm1192, %v3409, %v3413
      %v3415 = vshrl.u32 %v3294, 16
      %v3417 = vrot.slane %v3415, 4
      %v3418 = vor.u32 %v3417, %v3413
      %v3419 = vrot.slane %v3418, 4
      %v3421 = vshll.u32 %v3295, 16
      %v3423 = vrot.slane %v3421, 5
      %v3424 = vsel %vm1192, %v3419, %v3423
      %v3426 = vshrl.u32 %v3296, 16
      %v3428 = vrot.slane %v3426, 4
      %v3429 = vshll.u32 %v3296, 16
      %v3431 = vrot.slane %v3429, 5
      %v3432 = vor.u32 %v3428, %v3431
      %v3433 = vrot.slane %v3432, 4
      %v3435 = vshll.u32 %v3297, 16
      %v3437 = vrot.slane %v3435, 5
      %v3438 = vsel %vm1192, %v3433, %v3437
      %v3439 = vshrl.u32 %v3297, 16
      %v3441 = vrot.slane %v3439, 4
      %v3442 = vor.u32 %v3441, %v3437
      %v3443 = vrot.slane %v3442, 4
      %v3445 = vshll.u32 %v3298, 16
      %v3447 = vrot.slane %v3445, 5
      %v3448 = vsel %vm1192, %v3443, %v3447
      %v3450 = vshrl.u32 %v3299, 16
      %v3452 = vrot.slane %v3450, 4
      %v3453 = vshll.u32 %v3299, 16
      %v3455 = vrot.slane %v3453, 5
      %v3456 = vor.u32 %v3452, %v3455
      %v3457 = vrot.slane %v3456, 4
      %v3459 = vshll.u32 %v3300, 16
      %v3461 = vrot.slane %v3459, 5
      %v3462 = vsel %vm1192, %v3457, %v3461
      %v3463 = vshrl.u32 %v3300, 16
      %v3465 = vrot.slane %v3463, 4
      %v3466 = vor.u32 %v3465, %v3461
      %v3467 = vrot.slane %v3466, 4
      %v3469 = vshll.u32 %v3301, 16
      %v3471 = vrot.slane %v3469, 5
      %v3472 = vsel %vm1192, %v3467, %v3471
      %v3474 = vshrl.u32 %v3302, 16
      %v3476 = vrot.slane %v3474, 4
      %v3477 = vshll.u32 %v3302, 16
      %v3479 = vrot.slane %v3477, 5
      %v3480 = vor.u32 %v3476, %v3479
      %v3481 = vrot.slane %v3480, 4
      %v3483 = vshll.u32 %v3303, 16
      %v3485 = vrot.slane %v3483, 5
      %v3486 = vsel %vm1192, %v3481, %v3485
      %v3487 = vshrl.u32 %v3303, 16
      %v3489 = vrot.slane %v3487, 4
      %v3490 = vor.u32 %v3489, %v3485
      %v3491 = vrot.slane %v3490, 4
      %v3493 = vshll.u32 %v3304, 16
      %v3495 = vrot.slane %v3493, 5
      %v3496 = vsel %vm1192, %v3491, %v3495
      %s3497 = scalar_lea.vmem %s3, 448
      %v3498 = vld [vmem:[%s3497] sm:$0xf]
      %v3499 = vld [vmem:[%s3497 + $0x4] sm:$0xf]
      %v3500 = vld [vmem:[%s3497 + $0x8] sm:$0xf]
      %v3501 = vld [vmem:[%s3497 + $0xc] sm:$0xf]
      %v3502 = vld [vmem:[%s3497 + $0x10] sm:$0xf]
      %v3503 = vld [vmem:[%s3497 + $0x14] sm:$0xf]
      %v3504 = vld [vmem:[%s3497 + $0x18] sm:$0xf]
      %v3505 = vld [vmem:[%s3497 + $0x1c] sm:$0xf]
      %v3506 = vld [vmem:[%s3497 + $0x20] sm:$0xf]
      %v3507 = vld [vmem:[%s3497 + $0x24] sm:$0xf]
      %v3508 = vld [vmem:[%s3497 + $0x28] sm:$0xf]
      %v3509 = vld [vmem:[%s3497 + $0x2c] sm:$0xf]
      %v3510 = vld [vmem:[%s3497 + $0x30] sm:$0xf]
      %v3511 = vld [vmem:[%s3497 + $0x34] sm:$0xf]
      %v3512 = vld [vmem:[%s3497 + $0x38] sm:$0xf]
      %v3513 = vld [vmem:[%s3497 + $0x3c] sm:$0xf]
      %v3514 = vunpack.c.l.b16 %v3318
      %v3515 = vunpack.c.l.b16 %v3328
      %v3516 = vunpack.c.l.b16 %v3342
      %v3517 = vunpack.c.l.b16 %v3352
      %v3518 = vunpack.c.l.b16 %v3366
      %v3519 = vunpack.c.l.b16 %v3376
      %v3520 = vunpack.c.l.b16 %v3390
      %v3521 = vunpack.c.l.b16 %v3400
      %v3522 = vunpack.c.l.b16 %v3414
      %v3523 = vunpack.c.l.b16 %v3424
      %v3524 = vunpack.c.l.b16 %v3438
      %v3525 = vunpack.c.l.b16 %v3448
      %v3526 = vunpack.c.l.b16 %v3462
      %v3527 = vunpack.c.l.b16 %v3472
      %v3528 = vunpack.c.l.b16 %v3486
      %v3529 = vunpack.c.l.b16 %v3496
      %v3530 = vpack.c.b16 %v3515, %v3514
      %v3531 = vpack.c.b16 %v3517, %v3516
      %v3532 = vpack.c.b16 %v3519, %v3518
      %v3533 = vpack.c.b16 %v3521, %v3520
      %v3534 = vpack.c.b16 %v3523, %v3522
      %v3535 = vpack.c.b16 %v3525, %v3524
      %v3536 = vpack.c.b16 %v3527, %v3526
      %v3537 = vpack.c.b16 %v3529, %v3528
      %v3562 = vunpack.c.l.b16 %v3498
      %v3563 = vunpack.c.l.b16 %v3499
      %v3564 = vunpack.c.l.b16 %v3500
      %v3565 = vunpack.c.l.b16 %v3501
      %v3566 = vunpack.c.l.b16 %v3502
      %v3567 = vunpack.c.l.b16 %v3503
      %v3568 = vunpack.c.l.b16 %v3504
      %v3569 = vunpack.c.l.b16 %v3505
      %v3570 = vunpack.c.l.b16 %v3506
      %v3571 = vunpack.c.l.b16 %v3507
      %v3572 = vunpack.c.l.b16 %v3508
      %v3573 = vunpack.c.l.b16 %v3509
      %v3574 = vunpack.c.l.b16 %v3510
      %v3575 = vunpack.c.l.b16 %v3511
      %v3576 = vunpack.c.l.b16 %v3512
      %v3577 = vunpack.c.l.b16 %v3513
      %v3578 = vpack.c.b16 %v3563, %v3562
      %v3579 = vpack.c.b16 %v3565, %v3564
      %v3580 = vpack.c.b16 %v3567, %v3566
      %v3581 = vpack.c.b16 %v3569, %v3568
      %v3582 = vpack.c.b16 %v3571, %v3570
      %v3583 = vpack.c.b16 %v3573, %v3572
      %v3584 = vpack.c.b16 %v3575, %v3574
      %v3585 = vpack.c.b16 %v3577, %v3576
      %3594 = vmatprep.subr.bf16.mxu0 0
      %3595 = vmatpush1.bf16.msra.mxu0 %v3578
      %3596 = vmatprep.subr.bf16.mxu0 0
      %3597 = vmatpush1.bf16.msra.mxu0 %v3579
      %3598 = vmatprep.subr.bf16.mxu0 0
      %3599 = vmatpush1.bf16.msra.mxu0 %v3580
      %3600 = vmatprep.subr.bf16.mxu0 0
      %3601 = vmatpush1.bf16.msra.mxu0 %v3581
      %3602 = vmatprep.subr.bf16.mxu0 0
      %3603 = vmatpush1.bf16.msra.mxu0 %v3582
      %3604 = vmatprep.subr.bf16.mxu0 0
      %3605 = vmatpush1.bf16.msra.mxu0 %v3583
      %3606 = vmatprep.subr.bf16.mxu0 0
      %3607 = vmatpush1.bf16.msra.mxu0 %v3584
      %3608 = vmatprep.subr.bf16.mxu0 0
      %3609 = vmatpush1.bf16.msra.mxu0 %v3585
      %3610 = vmatprep.subr.bf16.mxu0 0
      %3611 = vmatpush1.bf16.msra.mxu0 0
      %3612 = vmatprep.subr.bf16.mxu0 0
      %3613 = vmatpush1.bf16.msra.mxu0 0
      %3614 = vmatprep.subr.bf16.mxu0 0
      %3615 = vmatpush1.bf16.msra.mxu0 0
      %3616 = vmatprep.subr.bf16.mxu0 0
      %3617 = vmatpush1.bf16.msra.mxu0 0
      %3618 = vmatprep.subr.bf16.mxu0 0
      %3619 = vmatpush1.bf16.msra.mxu0 0
      %3620 = vmatprep.subr.bf16.mxu0 0
      %3621 = vmatpush1.bf16.msra.mxu0 0
      %3622 = vmatprep.subr.bf16.mxu0 0
      %3623 = vmatpush1.bf16.msra.mxu0 0
      %3624 = vmatprep.subr.bf16.mxu0 0
      %3625 = vmatpush1.bf16.msra.mxu0 0
      %3626 = vmatprep.mubr.bf16.mxu0 0
      %3627 = vmatmul.mubr.bf16.gmra.mrb[0].mxu0 %v3530
      %v3628 = vpop.f32.mrb[0].mxu0
      %v3629 = vadd.f32 0.0, %v3628
      %v3630 = vpop.f32.mrb[0].mxu0
      %v3631 = vpop.f32.mrb[0].mxu0
      %v3632 = vadd.f32 0.0, %v3631
      %v3633 = vpop.f32.mrb[0].mxu0
      %3634 = vmatprep.mubr.bf16.mxu0 0
      %3635 = vmatmul.mubr.bf16.gmra.mrb[0].mxu0 %v3531
      %v3636 = vpop.f32.mrb[0].mxu0
      %v3637 = vadd.f32 0.0, %v3636
      %v3638 = vpop.f32.mrb[0].mxu0
      %v3639 = vpop.f32.mrb[0].mxu0
      %v3640 = vadd.f32 0.0, %v3639
      %v3641 = vpop.f32.mrb[0].mxu0
      %3642 = vmatprep.mubr.bf16.mxu0 0
      %3643 = vmatmul.mubr.bf16.gmra.mrb[0].mxu0 %v3532
      %v3644 = vpop.f32.mrb[0].mxu0
      %v3645 = vadd.f32 0.0, %v3644
      %v3646 = vpop.f32.mrb[0].mxu0
      %v3647 = vpop.f32.mrb[0].mxu0
      %v3648 = vadd.f32 0.0, %v3647
      %v3649 = vpop.f32.mrb[0].mxu0
      %3650 = vmatprep.mubr.bf16.mxu0 0
      %3651 = vmatmul.mubr.bf16.gmra.mrb[0].mxu0 %v3533
      %v3652 = vpop.f32.mrb[0].mxu0
      %v3653 = vadd.f32 0.0, %v3652
      %v3654 = vpop.f32.mrb[0].mxu0
      %v3655 = vpop.f32.mrb[0].mxu0
      %v3656 = vadd.f32 0.0, %v3655
      %v3657 = vpop.f32.mrb[0].mxu0
      %3658 = vmatprep.mubr.bf16.mxu0 0
      %3659 = vmatmul.mubr.bf16.gmra.mrb[0].mxu0 %v3534
      %v3660 = vpop.f32.mrb[0].mxu0
      %v3661 = vadd.f32 0.0, %v3660
      %v3662 = vpop.f32.mrb[0].mxu0
      %v3663 = vpop.f32.mrb[0].mxu0
      %v3664 = vadd.f32 0.0, %v3663
      %v3665 = vpop.f32.mrb[0].mxu0
      %3666 = vmatprep.mubr.bf16.mxu0 0
      %3667 = vmatmul.mubr.bf16.gmra.mrb[0].mxu0 %v3535
      %v3668 = vpop.f32.mrb[0].mxu0
      %v3669 = vadd.f32 0.0, %v3668
      %v3670 = vpop.f32.mrb[0].mxu0
      %v3671 = vpop.f32.mrb[0].mxu0
      %v3672 = vadd.f32 0.0, %v3671
      %v3673 = vpop.f32.mrb[0].mxu0
      %3674 = vmatprep.mubr.bf16.mxu0 0
      %3675 = vmatmul.mubr.bf16.gmra.mrb[0].mxu0 %v3536
      %v3676 = vpop.f32.mrb[0].mxu0
      %v3677 = vadd.f32 0.0, %v3676
      %v3678 = vpop.f32.mrb[0].mxu0
      %v3679 = vpop.f32.mrb[0].mxu0
      %v3680 = vadd.f32 0.0, %v3679
      %v3681 = vpop.f32.mrb[0].mxu0
      %3682 = vmatprep.mubr.bf16.mxu0 0
      %3683 = vmatmul.mubr.bf16.gmra.mrb[0].mxu0 %v3537
      %v3684 = vpop.f32.mrb[0].mxu0
      %v3685 = vadd.f32 0.0, %v3684
      %v3686 = vpop.f32.mrb[0].mxu0
      %v3687 = vpop.f32.mrb[0].mxu0
      %v3688 = vadd.f32 0.0, %v3687
      %v3689 = vpop.f32.mrb[0].mxu0
      %3690 = vdwg.mxu0
      %v3691 = vadd.f32 %v3265, %v3629
      %v3692 = vadd.f32 %v3266, %v3632
      %v3693 = vadd.f32 %v3267, %v3637
      %v3694 = vadd.f32 %v3268, %v3640
      %v3695 = vadd.f32 %v3269, %v3645
      %v3696 = vadd.f32 %v3270, %v3648
      %v3697 = vadd.f32 %v3271, %v3653
      %v3698 = vadd.f32 %v3272, %v3656
      %v3699 = vadd.f32 %v3273, %v3661
      %v3700 = vadd.f32 %v3274, %v3664
      %v3701 = vadd.f32 %v3275, %v3669
      %v3702 = vadd.f32 %v3276, %v3672
      %v3703 = vadd.f32 %v3277, %v3677
      %v3704 = vadd.f32 %v3278, %v3680
      %v3705 = vadd.f32 %v3279, %v3685
      %v3706 = vadd.f32 %v3280, %v3688
      %v3707 = vld [vmem:[%s3038] sm:$0xe]
      %v3708 = vld [vmem:[%s3038 + $0xc] sm:$0xe]
      %v3709 = vld [vmem:[%s3038 + $0x18] sm:$0xe]
      %v3710 = vld [vmem:[%s3038 + $0x24] sm:$0xe]
      %v3711 = vld [vmem:[%s3038 + $0x30] sm:$0xe]
      %v3712 = vld [vmem:[%s3038 + $0x3c] sm:$0xe]
      %v3713 = vld [vmem:[%s3038 + $0x48] sm:$0xe]
      %v3714 = vld [vmem:[%s3038 + $0x54] sm:$0xe]
      %v3739 = vrot.slane %v3707, 5
      %v3740 = vrot.slane %v3739, 4
      %v3741 = vrot.slane %v3282, 5
      %v3742 = vsel %vm1798, %v3740, %v3741
      %v3743 = vrot.slane %v3741, 4
      %v3744 = vrot.slane %v3283, 5
      %v3745 = vsel %vm1798, %v3743, %v3744
      %v3746 = vrot.slane %v3708, 5
      %v3747 = vrot.slane %v3746, 4
      %v3748 = vrot.slane %v3285, 5
      %v3749 = vsel %vm1798, %v3747, %v3748
      %v3750 = vrot.slane %v3748, 4
      %v3751 = vrot.slane %v3286, 5
      %v3752 = vsel %vm1798, %v3750, %v3751
      %v3753 = vrot.slane %v3709, 5
      %v3754 = vrot.slane %v3753, 4
      %v3755 = vrot.slane %v3288, 5
      %v3756 = vsel %vm1798, %v3754, %v3755
      %v3757 = vrot.slane %v3755, 4
      %v3758 = vrot.slane %v3289, 5
      %v3759 = vsel %vm1798, %v3757, %v3758
      %v3760 = vrot.slane %v3710, 5
      %v3761 = vrot.slane %v3760, 4
      %v3762 = vrot.slane %v3291, 5
      %v3763 = vsel %vm1798, %v3761, %v3762
      %v3764 = vrot.slane %v3762, 4
      %v3765 = vrot.slane %v3292, 5
      %v3766 = vsel %vm1798, %v3764, %v3765
      %v3767 = vrot.slane %v3711, 5
      %v3768 = vrot.slane %v3767, 4
      %v3769 = vrot.slane %v3294, 5
      %v3770 = vsel %vm1798, %v3768, %v3769
      %v3771 = vrot.slane %v3769, 4
      %v3772 = vrot.slane %v3295, 5
      %v3773 = vsel %vm1798, %v3771, %v3772
      %v3774 = vrot.slane %v3712, 5
      %v3775 = vrot.slane %v3774, 4
      %v3776 = vrot.slane %v3297, 5
      %v3777 = vsel %vm1798, %v3775, %v3776
      %v3778 = vrot.slane %v3776, 4
      %v3779 = vrot.slane %v3298, 5
      %v3780 = vsel %vm1798, %v3778, %v3779
      %v3781 = vrot.slane %v3713, 5
      %v3782 = vrot.slane %v3781, 4
      %v3783 = vrot.slane %v3300, 5
      %v3784 = vsel %vm1798, %v3782, %v3783
      %v3785 = vrot.slane %v3783, 4
      %v3786 = vrot.slane %v3301, 5
      %v3787 = vsel %vm1798, %v3785, %v3786
      %v3788 = vrot.slane %v3714, 5
      %v3789 = vrot.slane %v3788, 4
      %v3790 = vrot.slane %v3303, 5
      %v3791 = vsel %vm1798, %v3789, %v3790
      %v3792 = vrot.slane %v3790, 4
      %v3793 = vrot.slane %v3304, 5
      %v3794 = vsel %vm1798, %v3792, %v3793
      %s3795 = scalar_lea.vmem %s3, 512
      %v3796 = vld [vmem:[%s3795] sm:$0xf]
      %v3797 = vld [vmem:[%s3795 + $0x4] sm:$0xf]
      %v3798 = vld [vmem:[%s3795 + $0x8] sm:$0xf]
      %v3799 = vld [vmem:[%s3795 + $0xc] sm:$0xf]
      %v3800 = vld [vmem:[%s3795 + $0x10] sm:$0xf]
      %v3801 = vld [vmem:[%s3795 + $0x14] sm:$0xf]
      %v3802 = vld [vmem:[%s3795 + $0x18] sm:$0xf]
      %v3803 = vld [vmem:[%s3795 + $0x1c] sm:$0xf]
      %v3804 = vld [vmem:[%s3795 + $0x20] sm:$0xf]
      %v3805 = vld [vmem:[%s3795 + $0x24] sm:$0xf]
      %v3806 = vld [vmem:[%s3795 + $0x28] sm:$0xf]
      %v3807 = vld [vmem:[%s3795 + $0x2c] sm:$0xf]
      %v3808 = vld [vmem:[%s3795 + $0x30] sm:$0xf]
      %v3809 = vld [vmem:[%s3795 + $0x34] sm:$0xf]
      %v3810 = vld [vmem:[%s3795 + $0x38] sm:$0xf]
      %v3811 = vld [vmem:[%s3795 + $0x3c] sm:$0xf]
      %v3812 = vunpack.c.l.b16 %v3742
      %v3813 = vunpack.c.l.b16 %v3745
      %v3814 = vunpack.c.l.b16 %v3749
      %v3815 = vunpack.c.l.b16 %v3752
      %v3816 = vunpack.c.l.b16 %v3756
      %v3817 = vunpack.c.l.b16 %v3759
      %v3818 = vunpack.c.l.b16 %v3763
      %v3819 = vunpack.c.l.b16 %v3766
      %v3820 = vunpack.c.l.b16 %v3770
      %v3821 = vunpack.c.l.b16 %v3773
      %v3822 = vunpack.c.l.b16 %v3777
      %v3823 = vunpack.c.l.b16 %v3780
      %v3824 = vunpack.c.l.b16 %v3784
      %v3825 = vunpack.c.l.b16 %v3787
      %v3826 = vunpack.c.l.b16 %v3791
      %v3827 = vunpack.c.l.b16 %v3794
      %v3828 = vpack.c.b16 %v3813, %v3812
      %v3829 = vpack.c.b16 %v3815, %v3814
      %v3830 = vpack.c.b16 %v3817, %v3816
      %v3831 = vpack.c.b16 %v3819, %v3818
      %v3832 = vpack.c.b16 %v3821, %v3820
      %v3833 = vpack.c.b16 %v3823, %v3822
      %v3834 = vpack.c.b16 %v3825, %v3824
      %v3835 = vpack.c.b16 %v3827, %v3826
      %v3860 = vunpack.c.l.b16 %v3796
      %v3861 = vunpack.c.l.b16 %v3797
      %v3862 = vunpack.c.l.b16 %v3798
      %v3863 = vunpack.c.l.b16 %v3799
      %v3864 = vunpack.c.l.b16 %v3800
      %v3865 = vunpack.c.l.b16 %v3801
      %v3866 = vunpack.c.l.b16 %v3802
      %v3867 = vunpack.c.l.b16 %v3803
      %v3868 = vunpack.c.l.b16 %v3804
      %v3869 = vunpack.c.l.b16 %v3805
      %v3870 = vunpack.c.l.b16 %v3806
      %v3871 = vunpack.c.l.b16 %v3807
      %v3872 = vunpack.c.l.b16 %v3808
      %v3873 = vunpack.c.l.b16 %v3809
      %v3874 = vunpack.c.l.b16 %v3810
      %v3875 = vunpack.c.l.b16 %v3811
      %v3876 = vpack.c.b16 %v3861, %v3860
      %v3877 = vpack.c.b16 %v3863, %v3862
      %v3878 = vpack.c.b16 %v3865, %v3864
      %v3879 = vpack.c.b16 %v3867, %v3866
      %v3880 = vpack.c.b16 %v3869, %v3868
      %v3881 = vpack.c.b16 %v3871, %v3870
      %v3882 = vpack.c.b16 %v3873, %v3872
      %v3883 = vpack.c.b16 %v3875, %v3874
      %3892 = vmatprep.subr.bf16.mxu0 0
      %3893 = vmatpush1.bf16.msra.mxu0 %v3876
      %3894 = vmatprep.subr.bf16.mxu0 0
      %3895 = vmatpush1.bf16.msra.mxu0 %v3877
      %3896 = vmatprep.subr.bf16.mxu0 0
      %3897 = vmatpush1.bf16.msra.mxu0 %v3878
      %3898 = vmatprep.subr.bf16.mxu0 0
      %3899 = vmatpush1.bf16.msra.mxu0 %v3879
      %3900 = vmatprep.subr.bf16.mxu0 0
      %3901 = vmatpush1.bf16.msra.mxu0 %v3880
      %3902 = vmatprep.subr.bf16.mxu0 0
      %3903 = vmatpush1.bf16.msra.mxu0 %v3881
      %3904 = vmatprep.subr.bf16.mxu0 0
      %3905 = vmatpush1.bf16.msra.mxu0 %v3882
      %3906 = vmatprep.subr.bf16.mxu0 0
      %3907 = vmatpush1.bf16.msra.mxu0 %v3883
      %3908 = vmatprep.subr.bf16.mxu0 0
      %3909 = vmatpush1.bf16.msra.mxu0 0
      %3910 = vmatprep.subr.bf16.mxu0 0
      %3911 = vmatpush1.bf16.msra.mxu0 0
      %3912 = vmatprep.subr.bf16.mxu0 0
      %3913 = vmatpush1.bf16.msra.mxu0 0
      %3914 = vmatprep.subr.bf16.mxu0 0
      %3915 = vmatpush1.bf16.msra.mxu0 0
      %3916 = vmatprep.subr.bf16.mxu0 0
      %3917 = vmatpush1.bf16.msra.mxu0 0
      %3918 = vmatprep.subr.bf16.mxu0 0
      %3919 = vmatpush1.bf16.msra.mxu0 0
      %3920 = vmatprep.subr.bf16.mxu0 0
      %3921 = vmatpush1.bf16.msra.mxu0 0
      %3922 = vmatprep.subr.bf16.mxu0 0
      %3923 = vmatpush1.bf16.msra.mxu0 0
      %3924 = vmatprep.mubr.bf16.mxu0 0
      %3925 = vmatmul.mubr.bf16.gmra.mrb[0].mxu0 %v3828
      %v3926 = vpop.f32.mrb[0].mxu0
      %v3927 = vadd.f32 0.0, %v3926
      %v3928 = vpop.f32.mrb[0].mxu0
      %v3929 = vpop.f32.mrb[0].mxu0
      %v3930 = vadd.f32 0.0, %v3929
      %v3931 = vpop.f32.mrb[0].mxu0
      %3932 = vmatprep.mubr.bf16.mxu0 0
      %3933 = vmatmul.mubr.bf16.gmra.mrb[0].mxu0 %v3829
      %v3934 = vpop.f32.mrb[0].mxu0
      %v3935 = vadd.f32 0.0, %v3934
      %v3936 = vpop.f32.mrb[0].mxu0
      %v3937 = vpop.f32.mrb[0].mxu0
      %v3938 = vadd.f32 0.0, %v3937
      %v3939 = vpop.f32.mrb[0].mxu0
      %3940 = vmatprep.mubr.bf16.mxu0 0
      %3941 = vmatmul.mubr.bf16.gmra.mrb[0].mxu0 %v3830
      %v3942 = vpop.f32.mrb[0].mxu0
      %v3943 = vadd.f32 0.0, %v3942
      %v3944 = vpop.f32.mrb[0].mxu0
      %v3945 = vpop.f32.mrb[0].mxu0
      %v3946 = vadd.f32 0.0, %v3945
      %v3947 = vpop.f32.mrb[0].mxu0
      %3948 = vmatprep.mubr.bf16.mxu0 0
      %3949 = vmatmul.mubr.bf16.gmra.mrb[0].mxu0 %v3831
      %v3950 = vpop.f32.mrb[0].mxu0
      %v3951 = vadd.f32 0.0, %v3950
      %v3952 = vpop.f32.mrb[0].mxu0
      %v3953 = vpop.f32.mrb[0].mxu0
      %v3954 = vadd.f32 0.0, %v3953
      %v3955 = vpop.f32.mrb[0].mxu0
      %3956 = vmatprep.mubr.bf16.mxu0 0
      %3957 = vmatmul.mubr.bf16.gmra.mrb[0].mxu0 %v3832
      %v3958 = vpop.f32.mrb[0].mxu0
      %v3959 = vadd.f32 0.0, %v3958
      %v3960 = vpop.f32.mrb[0].mxu0
      %v3961 = vpop.f32.mrb[0].mxu0
      %v3962 = vadd.f32 0.0, %v3961
      %v3963 = vpop.f32.mrb[0].mxu0
      %3964 = vmatprep.mubr.bf16.mxu0 0
      %3965 = vmatmul.mubr.bf16.gmra.mrb[0].mxu0 %v3833
      %v3966 = vpop.f32.mrb[0].mxu0
      %v3967 = vadd.f32 0.0, %v3966
      %v3968 = vpop.f32.mrb[0].mxu0
      %v3969 = vpop.f32.mrb[0].mxu0
      %v3970 = vadd.f32 0.0, %v3969
      %v3971 = vpop.f32.mrb[0].mxu0
      %3972 = vmatprep.mubr.bf16.mxu0 0
      %3973 = vmatmul.mubr.bf16.gmra.mrb[0].mxu0 %v3834
      %v3974 = vpop.f32.mrb[0].mxu0
      %v3975 = vadd.f32 0.0, %v3974
      %v3976 = vpop.f32.mrb[0].mxu0
      %v3977 = vpop.f32.mrb[0].mxu0
      %v3978 = vadd.f32 0.0, %v3977
      %v3979 = vpop.f32.mrb[0].mxu0
      %3980 = vmatprep.mubr.bf16.mxu0 0
      %3981 = vmatmul.mubr.bf16.gmra.mrb[0].mxu0 %v3835
      %v3982 = vpop.f32.mrb[0].mxu0
      %v3983 = vadd.f32 0.0, %v3982
      %v3984 = vpop.f32.mrb[0].mxu0
      %v3985 = vpop.f32.mrb[0].mxu0
      %v3986 = vadd.f32 0.0, %v3985
      %v3987 = vpop.f32.mrb[0].mxu0
      %3988 = vdwg.mxu0
      %v3989 = vadd.f32 %v3691, %v3927
      %v3990 = vadd.f32 %v3692, %v3930
      %v3991 = vadd.f32 %v3693, %v3935
      %v3992 = vadd.f32 %v3694, %v3938
      %v3993 = vadd.f32 %v3695, %v3943
      %v3994 = vadd.f32 %v3696, %v3946
      %v3995 = vadd.f32 %v3697, %v3951
      %v3996 = vadd.f32 %v3698, %v3954
      %v3997 = vadd.f32 %v3699, %v3959
      %v3998 = vadd.f32 %v3700, %v3962
      %v3999 = vadd.f32 %v3701, %v3967
      %v4000 = vadd.f32 %v3702, %v3970
      %v4001 = vadd.f32 %v3703, %v3975
      %v4002 = vadd.f32 %v3704, %v3978
      %v4003 = vadd.f32 %v3705, %v3983
      %v4004 = vadd.f32 %v3706, %v3986
      %v4006 = vlaneseq
      %v4007 = vshrl.u32 %v4006, 7
      %v4008 = vsub.s32 0, %v4007
      %v4009 = vrot.slane %v1145, %v4008
      %v4011 = vadd.f32 %v3989, %v4009
      %v4012 = vadd.f32 %v3990, %v4009
      %v4013 = vadd.f32 %v3991, %v4009
      %v4014 = vadd.f32 %v3992, %v4009
      %v4015 = vadd.f32 %v3993, %v4009
      %v4016 = vadd.f32 %v3994, %v4009
      %v4017 = vadd.f32 %v3995, %v4009
      %v4018 = vadd.f32 %v3996, %v4009
      %v4019 = vadd.f32 %v3997, %v4009
      %v4020 = vadd.f32 %v3998, %v4009
      %v4021 = vadd.f32 %v3999, %v4009
      %v4022 = vadd.f32 %v4000, %v4009
      %v4023 = vadd.f32 %v4001, %v4009
      %v4024 = vadd.f32 %v4002, %v4009
      %v4025 = vadd.f32 %v4003, %v4009
      %v4026 = vadd.f32 %v4004, %v4009
      %4027 = vst [vmem:[%s313] sm:$0xff] %v4011
      %4028 = vst [vmem:[%s313 + $0x8] sm:$0xff] %v4012
      %4029 = vst [vmem:[%s313 + $0x10] sm:$0xff] %v4013
      %4030 = vst [vmem:[%s313 + $0x18] sm:$0xff] %v4014
      %4031 = vst [vmem:[%s313 + $0x20] sm:$0xff] %v4015
      %4032 = vst [vmem:[%s313 + $0x28] sm:$0xff] %v4016
      %4033 = vst [vmem:[%s313 + $0x30] sm:$0xff] %v4017
      %4034 = vst [vmem:[%s313 + $0x38] sm:$0xff] %v4018
      %4035 = vst [vmem:[%s313 + $0x40] sm:$0xff] %v4019
      %4036 = vst [vmem:[%s313 + $0x48] sm:$0xff] %v4020
      %4037 = vst [vmem:[%s313 + $0x50] sm:$0xff] %v4021
      %4038 = vst [vmem:[%s313 + $0x58] sm:$0xff] %v4022
      %4039 = vst [vmem:[%s313 + $0x60] sm:$0xff] %v4023
      %4040 = vst [vmem:[%s313 + $0x68] sm:$0xff] %v4024
      %4041 = vst [vmem:[%s313 + $0x70] sm:$0xff] %v4025
      %4042 = vst [vmem:[%s313 + $0x78] sm:$0xff] %v4026
      %v4043 = vld [vmem:[%s317] sm:$0x1]
      %v4044 = vadd.f32 %v4011, %v4012
      %v4045 = vadd.f32 %v4044, %v4013
      %v4046 = vadd.f32 %v4045, %v4014
      %v4047 = vadd.f32 %v4046, %v4015
      %v4048 = vadd.f32 %v4047, %v4016
      %v4049 = vadd.f32 %v4048, %v4017
      %v4050 = vadd.f32 %v4049, %v4018
      %v4051 = vadd.f32 %v4050, %v4019
      %v4052 = vadd.f32 %v4051, %v4020
      %v4053 = vadd.f32 %v4052, %v4021
      %v4054 = vadd.f32 %v4053, %v4022
      %v4055 = vadd.f32 %v4054, %v4023
      %v4056 = vadd.f32 %v4055, %v4024
      %v4057 = vadd.f32 %v4056, %v4025
      %v4058 = vadd.f32 %v4057, %v4026
      %v4059 = vrot.slane %v4058, 4
      %v4060 = vadd.f32 %v4058, %v4059
      %v4061 = vrot.slane %v4060, 2
      %v4062 = vadd.f32 %v4060, %v4061
      %v4063 = vrot.slane %v4062, 1
      %v4064 = vadd.f32 %v4062, %v4063
      %v4065 = vadd.f32 %v4043, %v4064
      %4066 = vst [vmem:[%s317] sm:$0x1] %v4065
      %v4067 = vsub.f32 %v4011, %v4009
      %v4068 = vsub.f32 %v4012, %v4009
      %v4069 = vsub.f32 %v4013, %v4009
      %v4070 = vsub.f32 %v4014, %v4009
      %v4071 = vsub.f32 %v4015, %v4009
      %v4072 = vsub.f32 %v4016, %v4009
      %v4073 = vsub.f32 %v4017, %v4009
      %v4074 = vsub.f32 %v4018, %v4009
      %v4075 = vsub.f32 %v4019, %v4009
      %v4076 = vsub.f32 %v4020, %v4009
      %v4077 = vsub.f32 %v4021, %v4009
      %v4078 = vsub.f32 %v4022, %v4009
      %v4079 = vsub.f32 %v4023, %v4009
      %v4080 = vsub.f32 %v4024, %v4009
      %v4081 = vsub.f32 %v4025, %v4009
      %v4082 = vsub.f32 %v4026, %v4009
      %v4083 = vld [vmem:[%s320] sm:$0x1]
      %v4084 = vmul.f32 %v4067, %v4067
      %v4085 = vmul.f32 %v4068, %v4068
      %v4086 = vmul.f32 %v4069, %v4069
      %v4087 = vmul.f32 %v4070, %v4070
      %v4088 = vmul.f32 %v4071, %v4071
      %v4089 = vmul.f32 %v4072, %v4072
      %v4090 = vmul.f32 %v4073, %v4073
      %v4091 = vmul.f32 %v4074, %v4074
      %v4092 = vmul.f32 %v4075, %v4075
      %v4093 = vmul.f32 %v4076, %v4076
      %v4094 = vmul.f32 %v4077, %v4077
      %v4095 = vmul.f32 %v4078, %v4078
      %v4096 = vmul.f32 %v4079, %v4079
      %v4097 = vmul.f32 %v4080, %v4080
      %v4098 = vmul.f32 %v4081, %v4081
      %v4099 = vmul.f32 %v4082, %v4082
      %v4100 = vadd.f32 %v4084, %v4085
      %v4101 = vadd.f32 %v4100, %v4086
      %v4102 = vadd.f32 %v4101, %v4087
      %v4103 = vadd.f32 %v4102, %v4088
      %v4104 = vadd.f32 %v4103, %v4089
      %v4105 = vadd.f32 %v4104, %v4090
      %v4106 = vadd.f32 %v4105, %v4091
      %v4107 = vadd.f32 %v4106, %v4092
      %v4108 = vadd.f32 %v4107, %v4093
      %v4109 = vadd.f32 %v4108, %v4094
      %v4110 = vadd.f32 %v4109, %v4095
      %v4111 = vadd.f32 %v4110, %v4096
      %v4112 = vadd.f32 %v4111, %v4097
      %v4113 = vadd.f32 %v4112, %v4098
      %v4114 = vadd.f32 %v4113, %v4099
      %v4115 = vrot.slane %v4114, 4
      %v4116 = vadd.f32 %v4114, %v4115
      %v4117 = vrot.slane %v4116, 2
      %v4118 = vadd.f32 %v4116, %v4117
      %v4119 = vrot.slane %v4118, 1
      %v4120 = vadd.f32 %v4118, %v4119
      %v4121 = vadd.f32 %v4083, %v4120
      %4122 = vst [vmem:[%s320] sm:$0x1] %v4121
      %s4123 = smul.u32 8, %s24
      %p4124 = scmp.lt.s32.totalorder %s23, 1
      %s4125 = scalar_select %p4124, %s23, 1
      %p4126 = scmp.lt.s32.totalorder %s4123, 15
      %s4127 = scalar_select %p4126, %s4123, 15
      %s4128 = smul.addr %s4127, 2
      %s4129 = smul.addr %s4125, 32
      %s4130 = sadd.s32 %s4128, %s4129
      %s4131 = smul.addr %s4130, 8
      %s4132 = scalar_lea.vmem %s5, %s4131
      %p4133 = scmp.lt.s32.totalorder %s23, 1
      %s4134 = scalar_select %p4133, %s23, 1
      %s4135 = scalar_lea.vmem %s6, %s4134
      %p4136 = scmp.lt.s32.totalorder %s23, 1
      %s4137 = scalar_select %p4136, %s23, 1
      %s4138 = scalar_lea.vmem %s7, %s4137
      // Predicated region
      $region45: #{encoder_forward.4} parent=39 // pred_check
        %p4139 = pneg %p161
      $region46: #{encoder_forward.4} parent=39 // pred_check_branch
        %4141 = sbr.rel (%p4139) target = $region48
      $region47: #{encoder_forward.4} parent=39 // pred_region
        %s4142 = smul.u32 8, %s24
      $region48: #{encoder_forward.4} parent=39 // pred_fallthru
        _
      // Predicated region
      $region49: #{encoder_forward.4} parent=39 // pred_check
        %p4143 = pneg %p187
      $region50: #{encoder_forward.4} parent=39 // pred_check_branch
        %4145 = sbr.rel (%p4143) target = $region52
      $region51: #{encoder_forward.4} parent=39 // pred_region
        _
      $region52: #{encoder_forward.4} parent=39 // pred_fallthru
        _
      // Predicated region
      $region53: #{encoder_forward.4} parent=39 // pred_check
        %p4146 = pneg %p213
      $region54: #{encoder_forward.4} parent=39 // pred_check_branch
        %4148 = sbr.rel (%p4146) target = $region56
      $region55: #{encoder_forward.4} parent=39 // pred_region
        _
      $region56: #{encoder_forward.4} parent=39 // pred_fallthru
        _
    $region40: #{encoder_forward.4} parent=5 // pred_fallthru
      _
    %p4149 = scmp.le.s32.totalorder 2, %s14
    // Predicated region
    $region57: #{encoder_forward.4} parent=5 // pred_check
      %p4150 = pneg %p4149
    $region58: #{encoder_forward.4} parent=5 // pred_check_branch
      %4152 = sbr.rel (%p4150) target = $region60
    $region59: #{encoder_forward.4} parent=5 // pred_region
      %s4153 = ssub.s32 %s14, 2
      // Predicated region
      $region61: #{encoder_forward.4} parent=59 // pred_check
        %p4154 = pneg %p167
      $region62: #{encoder_forward.4} parent=59 // pred_check_branch
        %4156 = sbr.rel (%p4154) target = $region64
      $region63: #{encoder_forward.4} parent=59 // pred_region
        %s4157 = smul.u32 8, %s26
        %p4158 = scmp.lt.s32.totalorder %s25, 1
        %s4159 = scalar_select %p4158, %s25, 1
        %p4160 = scmp.lt.s32.totalorder %s4157, 15
        %s4161 = scalar_select %p4160, %s4157, 15
        %s4162 = smul.addr %s4161, 2
        %s4163 = smul.addr %s4159, 32
        %s4164 = sadd.s32 %s4162, %s4163
        %s4165 = smul.addr %s4164, 8
        %s4166 = scalar_lea.vmem %s5, %s4165
      $region64: #{encoder_forward.4} parent=59 // pred_fallthru
        _
      // Predicated region
      $region65: #{encoder_forward.4} parent=59 // pred_check
        %p4167 = pneg %p193
      $region66: #{encoder_forward.4} parent=59 // pred_check_branch
        %4169 = sbr.rel (%p4167) target = $region68
      $region67: #{encoder_forward.4} parent=59 // pred_region
        %p4170 = scmp.lt.s32.totalorder %s25, 1
        %s4171 = scalar_select %p4170, %s25, 1
        %s4172 = scalar_lea.vmem %s6, %s4171
      $region68: #{encoder_forward.4} parent=59 // pred_fallthru
        _
      // Predicated region
      $region69: #{encoder_forward.4} parent=59 // pred_check
        %p4173 = pneg %p219
      $region70: #{encoder_forward.4} parent=59 // pred_check_branch
        %4175 = sbr.rel (%p4173) target = $region72
      $region71: #{encoder_forward.4} parent=59 // pred_region
        %p4176 = scmp.lt.s32.totalorder %s25, 1
        %s4177 = scalar_select %p4176, %s25, 1
        %s4178 = scalar_lea.vmem %s7, %s4177
      $region72: #{encoder_forward.4} parent=59 // pred_fallthru
        _
    $region60: #{encoder_forward.4} parent=5 // pred_fallthru
      _
  $region6: #{encoder_forward.4} parent=0 // loop_footer
    %s18 = sadd.s32 1, %s14
  $region7: #{encoder_forward.4} parent=0 // loop_footer_branch
    %13 = sbr.rel target = $region3
  $region8: #{encoder_forward.4} parent=0 // loop_exit
    _

</llo_original>
